<compile_context>
chip_gen: v7x
topology: tpu7x:2x2x1
jax: 0.10.0
libtpu: 0.0.40
codegen_flags: <defaults>
</compile_context>

<pallas_src>
import functools

import jax
import jax.numpy as jnp
from jax.experimental import pallas as pl
from jax.experimental.pallas import tpu as pltpu

# -----------------------------------------------------------------------------
# Config (real module uses FEAT=2048, COND=512; batch is small)
# -----------------------------------------------------------------------------
FEAT = 2048       # num_features of the encoder tokens / FiLMLayer
COND = 512        # latent_goal (language) embedding dim
KSIZE = 3
STRIDE = 2
PAD = 1
KPAD = 32         # im2col contraction dim 3*3*3 = 27 padded up to 32 (8-aligned)
FILM_TN = 512     # output-feature tile for the fused FiLM-layer kernel

_VMEM_LIMIT = 32 << 20   # well under v7x's 64 MiB physical VMEM


# -----------------------------------------------------------------------------
# Kernel 1: fused multi-camera encoder (stand-in for FiLMResNet50Policy)
#   conv-as-matmul + FiLM(lang) + ReLU + global average pool -> one token.
# -----------------------------------------------------------------------------
def _encoder_kernel(patches_ref, w_ref, b_ref, gb_ref, out_ref):
    # patches_ref: (1, 1, HW, KPAD) f32     w_ref: (1, KPAD, FEAT) bf16
    # b_ref:       (1, 1, FEAT)     f32     gb_ref: (1, 1, 1, 2*FEAT) f32
    # out_ref:     (1, 1, 1, FEAT)  f32
    x = patches_ref[0, 0].astype(jnp.bfloat16)                       # [HW, KPAD]
    conv = jnp.dot(x, w_ref[0],
                   preferred_element_type=jnp.float32) + b_ref[0]    # [HW, FEAT]
    gb = gb_ref[0, 0]                                                # [1, 2*FEAT]
    gamma = gb[:, :FEAT]
    beta = gb[:, FEAT:]
    y = jnp.maximum((1.0 + gamma) * conv + beta, 0.0)                # FiLM + ReLU
    out_ref[0, 0] = jnp.mean(y, axis=0, keepdims=True)               # global avg pool


# -----------------------------------------------------------------------------
# Kernel 2: per-camera gamma/beta generation (hoisted out of the encoder)
#   one batched [B, COND] x [COND, 2*FEAT] matmul per camera.
# -----------------------------------------------------------------------------
def _film_gen_kernel(lang_ref, w_ref, b_ref, out_ref):
    # lang_ref: (B, COND) f32   w_ref: (1, COND, 2*FEAT) bf16   b_ref: (1, 1, 2*FEAT)
    lang = lang_ref[...].astype(jnp.bfloat16)
    out_ref[0] = jnp.dot(lang, w_ref[0],
                         preferred_element_type=jnp.float32) + b_ref[0]


# -----------------------------------------------------------------------------
# Kernel 3: fused FiLMLayer stack  x = (1 + Linear_g(cond)) * x + Linear_b(cond)
#   gamma_w / beta_w are interleaved per output tile -> single dot per step.
# -----------------------------------------------------------------------------
def _film_fused_kernel(tn, x_ref, cond_ref, w_ref, b_ref, out_ref):
    # x_ref: (1, B, tn)   cond_ref: (1, B, D)   w_ref: (1, D, 2*tn) bf16
    # b_ref: (1, 1, 2*tn) out_ref: (1, B, tn)
    cond = cond_ref[0].astype(jnp.bfloat16)                          # [B, D]
    gb = jnp.dot(cond, w_ref[0],
                 preferred_element_type=jnp.float32) + b_ref[0]      # [B, 2*tn]
    gamma = gb[:, :tn]
    beta = gb[:, tn:]
    out_ref[0] = (1.0 + gamma) * x_ref[0] + beta


# -----------------------------------------------------------------------------
# Wrappers
# -----------------------------------------------------------------------------
def encoders_forward(patches, lang, conv_w, conv_b, gb_w, gb_b):
    """patches: [NC, B, HW, KPAD] f32; lang: [B, COND] f32 -> tokens [NC, B, FEAT]."""
    NC, B, HW, K = patches.shape

    # Stage 1: gamma/beta for all cameras in one call (grid over cameras).
    gamma_beta = pl.pallas_call(
        _film_gen_kernel,
        out_shape=jax.ShapeDtypeStruct((NC, B, 2 * FEAT), jnp.float32),
        grid_spec=pltpu.PrefetchScalarGridSpec(
            num_scalar_prefetch=0,
            grid=(NC,),
            in_specs=[
                pl.BlockSpec((B, COND), lambda c: (0, 0)),
                pl.BlockSpec((1, COND, 2 * FEAT), lambda c: (c, 0, 0)),
                pl.BlockSpec((1, 1, 2 * FEAT), lambda c: (c, 0, 0)),
            ],
            out_specs=pl.BlockSpec((1, B, 2 * FEAT), lambda c: (c, 0, 0)),
        ),
        compiler_params=pltpu.CompilerParams(
            dimension_semantics=("parallel",),
            vmem_limit_bytes=_VMEM_LIMIT,
        ),
    )(lang, gb_w, gb_b)
    gb4 = gamma_beta.reshape(NC, B, 1, 2 * FEAT)

    # Stage 2: conv + FiLM + ReLU + pool, fused over (camera, batch).
    tokens = pl.pallas_call(
        _encoder_kernel,
        out_shape=jax.ShapeDtypeStruct((NC, B, 1, FEAT), jnp.float32),
        grid_spec=pltpu.PrefetchScalarGridSpec(
            num_scalar_prefetch=0,
            grid=(NC, B),
            in_specs=[
                pl.BlockSpec((1, 1, HW, K), lambda c, b: (c, b, 0, 0)),
                pl.BlockSpec((1, K, FEAT), lambda c, b: (c, 0, 0)),
                pl.BlockSpec((1, 1, FEAT), lambda c, b: (c, 0, 0)),
                pl.BlockSpec((1, 1, 1, 2 * FEAT), lambda c, b: (c, b, 0, 0)),
            ],
            out_specs=pl.BlockSpec((1, 1, 1, FEAT), lambda c, b: (c, b, 0, 0)),
        ),
        compiler_params=pltpu.CompilerParams(
            dimension_semantics=("parallel", "parallel"),
            vmem_limit_bytes=_VMEM_LIMIT,
        ),
    )(patches, conv_w, conv_b, gb4)
    return tokens.reshape(NC, B, FEAT)


def film_layers_fused(x_stack, cond_stack, w_stack, b_stack, tn=FILM_TN):
    """x_stack/cond_stack: [NL, B, F] f32; w_stack: [NL, D, 2F] bf16 (per-tile
    [gamma|beta] layout); b_stack: [NL, 1, 2F] f32  ->  [NL, B, F] f32."""
    NL, B, F = x_stack.shape
    D = cond_stack.shape[-1]
    assert F % tn == 0
    nt = F // tn
    kernel = functools.partial(_film_fused_kernel, tn)
    return pl.pallas_call(
        kernel,
        out_shape=jax.ShapeDtypeStruct((NL, B, F), jnp.float32),
        grid_spec=pltpu.PrefetchScalarGridSpec(
            num_scalar_prefetch=0,
            grid=(NL, nt),
            in_specs=[
                pl.BlockSpec((1, B, tn), lambda c, j: (c, 0, j)),
                pl.BlockSpec((1, B, D), lambda c, j: (c, 0, 0)),
                pl.BlockSpec((1, D, 2 * tn), lambda c, j: (c, 0, j)),
                pl.BlockSpec((1, 1, 2 * tn), lambda c, j: (c, 0, j)),
            ],
            out_specs=pl.BlockSpec((1, B, tn), lambda c, j: (c, 0, j)),
        ),
        compiler_params=pltpu.CompilerParams(
            dimension_semantics=("parallel", "parallel"),
            vmem_limit_bytes=_VMEM_LIMIT,
        ),
    )(x_stack, cond_stack, w_stack, b_stack)


# -----------------------------------------------------------------------------
# Glue: im2col (with K padded to KPAD) and weight-layout helpers
# -----------------------------------------------------------------------------
def _im2col(x_nchw, ksize, stride, pad, k_pad):
    x = jnp.transpose(x_nchw, (0, 2, 3, 1))                          # NHWC
    x = jnp.pad(x, ((0, 0), (pad, pad), (pad, pad), (0, 0)))
    B, H, W, C = x.shape
    Ho = (H - ksize) // stride + 1
    Wo = (W - ksize) // stride + 1
    cols = []
    for i in range(ksize):
        for j in range(ksize):
            cols.append(x[:, i:i + stride * Ho:stride, j:j + stride * Wo:stride, :])
    p = jnp.stack(cols, axis=3)                                      # [B,Ho,Wo,k*k,C]
    p = p.reshape(B, Ho * Wo, ksize * ksize * C)
    K = ksize * ksize * C
    if k_pad > K:
        p = jnp.pad(p, ((0, 0), (0, 0), (0, k_pad - K)))
    return p


def _interleave_cols(gamma, beta, tn):
    """[..., F] x2 -> [..., 2F] laid out per-tn-tile as [gamma_tile | beta_tile]."""
    lead = gamma.shape[:-1]
    F = gamma.shape[-1]
    nt = F // tn
    g = gamma.reshape(*lead, nt, tn)
    b = beta.reshape(*lead, nt, tn)
    return jnp.concatenate([g, b], axis=-1).reshape(*lead, 2 * F)


# -----------------------------------------------------------------------------
# Parameter construction (deterministic, in-script)
# -----------------------------------------------------------------------------
def make_encoder_params(key, cin=3):
    k1, k2, k3 = jax.random.split(key, 3)
    K = KSIZE * KSIZE * cin
    conv_w = 0.05 * jax.random.normal(k1, (K, FEAT), jnp.float32)
    conv_w = jnp.pad(conv_w, ((0, KPAD - K), (0, 0)))                # zero-pad K->KPAD
    return {
        "conv_w": conv_w,
        "conv_b": jnp.zeros((1, FEAT), jnp.float32),
        "gamma_w": 0.02 * jax.random.normal(k2, (COND, FEAT), jnp.float32),
        "gamma_b": jnp.zeros((1, FEAT), jnp.float32),
        "beta_w": 0.02 * jax.random.normal(k3, (COND, FEAT), jnp.float32),
        "beta_b": jnp.zeros((1, FEAT), jnp.float32),
    }


def make_film_params(num_features=FEAT, condition_dim=FEAT):
    # Matches PyTorch FiLMLayer: zero-initialized weights and biases (identity).
    return {
        "gamma_w": jnp.zeros((condition_dim, num_features), jnp.float32),
        "gamma_b": jnp.zeros((1, num_features), jnp.float32),
        "beta_w": jnp.zeros((condition_dim, num_features), jnp.float32),
        "beta_b": jnp.zeros((1, num_features), jnp.float32),
    }


# -----------------------------------------------------------------------------
# Conv_fusion forward
# -----------------------------------------------------------------------------
class ConvFusionPallas:
    # TODO(synk): FiLMResNet50Policy's ResNet50 backbone is not defined in the
    # reference; it is stood in by one FiLM-conditioned conv + global-avg-pool
    # encoder per camera.

    _ENC_ORDER = ("rgb_static", "rgb_gripper", "pc_static", "pc_gripper")

    def __init__(self, fuse_type="cross_cond", key=jax.random.PRNGKey(0)):
        ks = jax.random.split(key, 4)
        self.fuse_type = fuse_type
        enc = {
            "rgb_static": make_encoder_params(ks[0]),
            "rgb_gripper": make_encoder_params(ks[1]),
            "pc_static": make_encoder_params(ks[2]),
            "pc_gripper": make_encoder_params(ks[3]),
        }
        self.enc_params = enc

        # Camera-stacked encoder weights (big matrices in bf16).
        self.enc_conv_w = jnp.stack(
            [enc[n]["conv_w"] for n in self._ENC_ORDER]).astype(jnp.bfloat16)
        self.enc_conv_b = jnp.stack([enc[n]["conv_b"] for n in self._ENC_ORDER])
        self.enc_gb_w = jnp.stack([
            jnp.concatenate([enc[n]["gamma_w"], enc[n]["beta_w"]], axis=1)
            for n in self._ENC_ORDER]).astype(jnp.bfloat16)          # [4, COND, 2F]
        self.enc_gb_b = jnp.stack([
            jnp.concatenate([enc[n]["gamma_b"], enc[n]["beta_b"]], axis=1)
            for n in self._ENC_ORDER])                               # [4, 1, 2F]

        if fuse_type == "pc_cond_rgb":
            film_names = ["film_pc_static", "film_pc_gripper"]
        elif fuse_type == "rgb_cond_pc":
            film_names = ["film_rgb_static", "film_rgb_gripper"]
        elif fuse_type == "cross_cond":
            # order == output camera order of the fused FiLM stack
            film_names = ["film_rgb_static", "film_pc_static",
                          "film_rgb_gripper", "film_pc_gripper"]
        else:
            film_names = []
        self.film_names = film_names

        if film_names:
            fps = {n: make_film_params() for n in set(film_names)}
            self.film_params = fps
            self.film_w = jnp.stack([
                _interleave_cols(fps[n]["gamma_w"], fps[n]["beta_w"], FILM_TN)
                for n in film_names]).astype(jnp.bfloat16)           # [NL, F, 2F]
            self.film_b = jnp.stack([
                _interleave_cols(fps[n]["gamma_b"], fps[n]["beta_b"], FILM_TN)
                for n in film_names])                                # [NL, 1, 2F]

    def __call__(self, x):
        lang = x["latent_goal"]                                      # [B, COND]
        patches = jnp.stack(
            [_im2col(x[n], KSIZE, STRIDE, PAD, KPAD) for n in self._ENC_ORDER],
            axis=0)                                                  # [4, B, HW, KPAD]
        tokens = encoders_forward(patches, lang, self.enc_conv_w, self.enc_conv_b,
                                  self.enc_gb_w, self.enc_gb_b)      # [4, B, FEAT]
        static, gripper, pc_static, pc_gripper = (
            tokens[0], tokens[1], tokens[2], tokens[3])

        if self.fuse_type == "pc_cond_rgb":
            x_st = jnp.stack([pc_static, pc_gripper], axis=0)
            c_st = jnp.stack([static, gripper], axis=0)
            f = film_layers_fused(x_st, c_st, self.film_w, self.film_b)
            cam = jnp.stack([static, f[0], gripper, f[1]], axis=1)
        elif self.fuse_type == "rgb_cond_pc":
            x_st = jnp.stack([static, gripper], axis=0)
            c_st = jnp.stack([pc_static, pc_gripper], axis=0)
            f = film_layers_fused(x_st, c_st, self.film_w, self.film_b)
            cam = jnp.stack([f[0], pc_static, f[1], pc_gripper], axis=1)
        elif self.fuse_type == "cross_cond":
            # fused stack order: [cond_static, cond_pc_static,
            #                     cond_gripper, cond_pc_gripper]
            x_st = jnp.stack([static, pc_static, gripper, pc_gripper], axis=0)
            c_st = jnp.stack([pc_static, static, pc_gripper, gripper], axis=0)
            f = film_layers_fused(x_st, c_st, self.film_w, self.film_b)  # [4,B,F]
            cam = jnp.transpose(f, (1, 0, 2))                        # [B, 4, F]
        elif self.fuse_type == "add":
            # Tiny (B, 2048) elementwise add: plain jnp so XLA fuses it for free;
            # a dedicated pallas_call costs more in launch overhead than the add.
            cam = jnp.stack([static + pc_static, gripper + pc_gripper], axis=1)
        elif self.fuse_type == "cat":
            cam = jnp.stack([static, pc_static, gripper, pc_gripper], axis=1)
        else:
            raise ValueError(self.fuse_type)
        return cam


# -----------------------------------------------------------------------------
# Pure-XLA reference tokens (same bf16 weight casts) for a sanity check
# -----------------------------------------------------------------------------
def _reference_tokens(model, x):
    lang = x["latent_goal"].astype(jnp.bfloat16)
    toks = {}
    for n in ConvFusionPallas._ENC_ORDER:
        p = model.enc_params[n]
        patches = _im2col(x[n], KSIZE, STRIDE, PAD, KPAD).astype(jnp.bfloat16)
        conv = jnp.einsum("bhk,kf->bhf", patches, p["conv_w"].astype(jnp.bfloat16),
                          preferred_element_type=jnp.float32) + p["conv_b"]
        gamma = jnp.dot(lang, p["gamma_w"].astype(jnp.bfloat16),
                        preferred_element_type=jnp.float32) + p["gamma_b"]
        beta = jnp.dot(lang, p["beta_w"].astype(jnp.bfloat16),
                       preferred_element_type=jnp.float32) + p["beta_b"]
        y = jnp.maximum((1.0 + gamma[:, None, :]) * conv + beta[:, None, :], 0.0)
        toks[n] = jnp.mean(y, axis=1)
    return toks


# -----------------------------------------------------------------------------
if __name__ == "__main__":
    key = jax.random.PRNGKey(0)
    k_imgs, k_lang, k_params = jax.random.split(key, 3)
    ki = jax.random.split(k_imgs, 4)

    B, CIN, H, W = 2, 3, 16, 16
    x = {
        "rgb_static": jax.random.normal(ki[0], (B, CIN, H, W), jnp.float32),
        "rgb_gripper": jax.random.normal(ki[1], (B, CIN, H, W), jnp.float32),
        "pc_static": jax.random.normal(ki[2], (B, CIN, H, W), jnp.float32),
        "pc_gripper": jax.random.normal(ki[3], (B, CIN, H, W), jnp.float32),
        "latent_goal": jax.random.normal(k_lang, (B, COND), jnp.float32),
    }

    model = ConvFusionPallas(fuse_type="cross_cond", key=k_params)
    cam_features = model(x)
    jax.block_until_ready(cam_features)
    assert cam_features.shape == (B, 4, FEAT), cam_features.shape

    # FiLM layers are zero-initialized (identity), so the cross_cond output must
    # equal the raw token stack; compare against the pure-XLA reference.
    ref_t = _reference_tokens(model, x)
    ref = jnp.stack([ref_t["rgb_static"], ref_t["pc_static"],
                     ref_t["rgb_gripper"], ref_t["pc_gripper"]], axis=1)
    max_err = float(jnp.max(jnp.abs(cam_features - ref)))
    assert jnp.allclose(cam_features, ref, atol=2e-2, rtol=2e-2), max_err

    # also exercise the 'add' fusion path (2 camera slots)
    model_add = ConvFusionPallas(fuse_type="add", key=k_params)
    cam_add = model_add(x)
    jax.block_until_ready(cam_add)
    assert cam_add.shape == (B, 2, FEAT), cam_add.shape

    print("KERNEL_OK")
</pallas_src>

<mosaic_0001>
module attributes {stable_mosaic.version = 11 : i64} {
  func.func @_film_gen_kernel(%arg0: i32, %arg1: memref<2x512xf32, #tpu.memory_space<vmem>>, %arg2: memref<1x512x4096xbf16, #tpu.memory_space<vmem>>, %arg3: memref<1x1x4096xf32, #tpu.memory_space<vmem>>, %arg4: memref<1x2x4096xf32, #tpu.memory_space<vmem>>) attributes {dimension_semantics = [#tpu.dimension_semantics<parallel>], iteration_bounds = array<i64: 4>, scalar_prefetch = 0 : i64, scratch_operands = 0 : i64, tpu.core_type = #tpu.core_type<tc>, window_params = [{pipeline_mode = #tpu.pipeline_mode<synchronous>, transform_indices = @transform_0, window_bounds = array<i64: 2, 512>}, {transform_indices = @transform_1, window_bounds = array<i64: 1, 512, 4096>}, {transform_indices = @transform_2, window_bounds = array<i64: 1, 1, 4096>}, {transform_indices = @transform_3, window_bounds = array<i64: 1, 2, 4096>}]} {
    %c0 = arith.constant 0 : index
    %c0_0 = arith.constant 0 : index
    %0 = vector.load %arg1[%c0, %c0_0] : memref<2x512xf32, #tpu.memory_space<vmem>>, vector<2x512xf32>
    %1 = arith.truncf %0 : vector<2x512xf32> to vector<2x512xbf16>
    %c0_1 = arith.constant 0 : index
    %c0_2 = arith.constant 0 : index
    %c0_3 = arith.constant 0 : index
    %2 = vector.load %arg2[%c0_1, %c0_2, %c0_3] : memref<1x512x4096xbf16, #tpu.memory_space<vmem>>, vector<1x512x4096xbf16>
    %3 = vector.shape_cast %2 : vector<1x512x4096xbf16> to vector<512x4096xbf16>
    %cst = arith.constant dense<0.000000e+00> : vector<2x4096xf32>
    %4 = tpu.matmul %1, %3, %cst {dimension_numbers = #tpu.dot_dimension_numbers<[1], [0], [0], [1], [0, 0, 1, 1], [], []>} : vector<2x512xbf16>, vector<512x4096xbf16>, vector<2x4096xf32> -> vector<2x4096xf32>
    %c0_4 = arith.constant 0 : index
    %c0_5 = arith.constant 0 : index
    %c0_6 = arith.constant 0 : index
    %5 = vector.load %arg3[%c0_4, %c0_5, %c0_6] : memref<1x1x4096xf32, #tpu.memory_space<vmem>>, vector<1x1x4096xf32>
    %6 = vector.shape_cast %5 : vector<1x1x4096xf32> to vector<1x4096xf32>
    %7 = vector.broadcast %6 : vector<1x4096xf32> to vector<2x4096xf32>
    %8 = arith.addf %4, %7 : vector<2x4096xf32>
    %c0_7 = arith.constant 0 : index
    %c0_8 = arith.constant 0 : index
    %c0_9 = arith.constant 0 : index
    %9 = vector.load %arg4[%c0_7, %c0_8, %c0_9] : memref<1x2x4096xf32, #tpu.memory_space<vmem>>, vector<1x2x4096xf32>
    %10 = vector.shape_cast %9 : vector<1x2x4096xf32> to vector<2x4096xf32>
    %11 = vector.shape_cast %8 : vector<2x4096xf32> to vector<1x2x4096xf32>
    tpu.vector_store %arg4[%c0_7, %c0_8, %c0_9], %11 {strides = array<i32>} : memref<1x2x4096xf32, #tpu.memory_space<vmem>>, vector<1x2x4096xf32>,
    return
  }
  func.func @transform_0(%arg0: i32) -> (i32, i32) {
    %c0_i32 = arith.constant 0 : i32
    %c0_i32_0 = arith.constant 0 : i32
    %c0_i32_1 = arith.constant 0 : i32
    return %c0_i32, %c0_i32_0 : i32, i32
  }
  func.func @transform_1(%arg0: i32) -> (i32, i32, i32) {
    %c0_i32 = arith.constant 0 : i32
    %c0_i32_0 = arith.constant 0 : i32
    %c0_i32_1 = arith.constant 0 : i32
    return %arg0, %c0_i32, %c0_i32_0 : i32, i32, i32
  }
  func.func @transform_2(%arg0: i32) -> (i32, i32, i32) {
    %c0_i32 = arith.constant 0 : i32
    %c0_i32_0 = arith.constant 0 : i32
    %c0_i32_1 = arith.constant 0 : i32
    return %arg0, %c0_i32, %c0_i32_0 : i32, i32, i32
  }
  func.func @transform_3(%arg0: i32) -> (i32, i32, i32) {
    %c0_i32 = arith.constant 0 : i32
    %c0_i32_0 = arith.constant 0 : i32
    %c0_i32_1 = arith.constant 0 : i32
    return %arg0, %c0_i32, %c0_i32_0 : i32, i32, i32
  }
}

</mosaic_0001>

<llo_original>
// kernel: tpu_custom_call.1
$region0: #{tpu_custom_call.1}
  #allocation0 [shape = 'u32[]', space=smem, size = 0x4, offset = 0x4, fixed_abs, tag = 'smem constant byte address 0x4 - core index']
  #allocation1 [shape = 'u32[144,128]{1,0:T(1,128)}', space=vmem, size = 0x12000, scoped, tag = 'internal scratch']
  %s0 = inlined_call_operand.hbm [shape: f32[2,512], index: 0, kind: input, shape index: {}]
  %s1 = inlined_call_operand.hbm [shape: bf16[4,512,4096], index: 1, kind: input, shape index: {}]
  %s2 = inlined_call_operand.hbm [shape: f32[4,1,4096], index: 2, kind: input, shape index: {}]
  %s3 = inlined_call_operand.hbm [shape: f32[4,2,4096], index: 3, kind: output, shape index: {}]
  %s4 = sld [smem:[#allocation0]]
  $region57: #{tpu_custom_call.1} parent=0
    _
  %s6 = ssub.s32 1, %s4
  %s7 = scalar_select 0, %s6, %s4
  $region1: #{tpu_custom_call.1} parent=0
    #allocation2 [shape = 'u8[4096]{0}', space=vmem, size = 0x1000, scoped, tag = 'input window, operand 0, single buffered']
    #allocation3 [shape = 's32[2]{0}', space=sflag, size = 0x8, scoped, tag = 'scoped memory for tpu_custom_call.1']
    #allocation4 [shape = 's32[2]{0}', space=sflag, size = 0x8, scoped, tag = 'scoped memory for tpu_custom_call.1']
    #allocation5 [shape = 'u8[8388608]{0}', space=vmem, size = 0x800000, scoped, tag = 'input window, operand 1']
    #allocation6 [shape = 's32[2]{0}', space=sflag, size = 0x8, scoped, tag = 'scoped memory for tpu_custom_call.1']
    #allocation7 [shape = 'u8[32768]{0}', space=vmem, size = 0x8000, scoped, tag = 'input window, operand 2']
    #allocation8 [shape = 'u8[65536]{0}', space=vmem, size = 0x10000, scoped, tag = 'output window, operand 0']
    %8 = vsyncpa [#allocation3], 0
    %9 = vsyncpa [#allocation6], 0
    %s10 = scalar_lea.sflag [#allocation6], 1
    %11 = vsyncpa %s10, 0
    %12 = vsyncpa [#allocation4], 0
    %s13 = scalar_lea.sflag [#allocation4], 1
    %14 = vsyncpa %s13, 0
    loop: start=0, step=1, limit=6
    $region2: #{tpu_custom_call.1} parent=1 // loop_pre_header
      _
    $region3: #{tpu_custom_call.1} parent=1 // loop_header
      %s16 = sphi 0, %s20
      %p17 = scmp.ge.s32.totalorder %s16, 6
      %s24 = sphi 0, %s24
      %s26 = sphi 0, %s24
      %s27 = sphi 0, %s26
      %s41 = sphi 0, %s27
      %s47 = sphi 0, %s49
      %s50 = sphi 0, %s47
      %s51 = sphi 0, %s50
      %s67 = sphi 0, %s51
      %s73 = sphi 0, %s75
      %s76 = sphi 0, %s73
      %s77 = sphi 0, %s76
      %s93 = sphi 0, %s77
      %s99 = sphi 0, %s101
      %s102 = sphi 0, %s99
      %s103 = sphi 0, %s102
      %s119 = sphi 0, %s103
    $region4: #{tpu_custom_call.1} parent=1 // loop_header_branch
      %19 = sbr.rel (%p17) target = $region8
    $region5: #{tpu_custom_call.1} parent=1 // loop_body
      %s21 = ssub.s32 %s16, 1
      %s22 = ssub.s32 %s16, 2
      %s23 = sadd.s32 %s16, 1
      %s25 = sadd.s32 %s24, 1
      %p28 = scmp.eq.s32.totalorder %s16, 3
      %p29 = scmp.ne.s32.totalorder %s24, %s26
      %p30 = scmp.eq.s32.totalorder %s16, 0
      %p31 = por %p29, %p30
      %p32 = scmp.ne.s32.totalorder %s24, %s26
      %p33 = scmp.eq.s32.totalorder %s21, 3
      %p34 = por %p32, %p33
      %p35 = scmp.ne.s32.totalorder %s26, %s27
      %p36 = scmp.eq.s32.totalorder %s21, 0
      %p37 = por %p35, %p36
      %p38 = scmp.ne.s32.totalorder %s26, %s27
      %p39 = scmp.eq.s32.totalorder %s22, 3
      %p40 = por %p38, %p39
      %p42 = scmp.ne.s32.totalorder %s27, %s41
      %p43 = scmp.eq.s32.totalorder %s22, 0
      %p44 = por %p42, %p43
      %s45 = ssub.s32 %s16, %s23
      %p46 = scmp.eq.s32.totalorder %s45, 0
      %s48 = sadd.s32 %s47, 1
      %s49 = scalar_select %p46, %s47, %s48
      %p52 = pneg %p46
      %p53 = scmp.eq.s32.totalorder %s16, 3
      %p54 = por %p52, %p53
      %p55 = scmp.ne.s32.totalorder %s47, %s50
      %p56 = scmp.eq.s32.totalorder %s16, 0
      %p57 = por %p55, %p56
      %p58 = scmp.ne.s32.totalorder %s47, %s50
      %p59 = scmp.eq.s32.totalorder %s21, 3
      %p60 = por %p58, %p59
      %p61 = scmp.ne.s32.totalorder %s50, %s51
      %p62 = scmp.eq.s32.totalorder %s21, 0
      %p63 = por %p61, %p62
      %p64 = scmp.ne.s32.totalorder %s50, %s51
      %p65 = scmp.eq.s32.totalorder %s22, 3
      %p66 = por %p64, %p65
      %p68 = scmp.ne.s32.totalorder %s51, %s67
      %p69 = scmp.eq.s32.totalorder %s22, 0
      %p70 = por %p68, %p69
      %s71 = ssub.s32 %s16, %s23
      %p72 = scmp.eq.s32.totalorder %s71, 0
      %s74 = sadd.s32 %s73, 1
      %s75 = scalar_select %p72, %s73, %s74
      %p78 = pneg %p72
      %p79 = scmp.eq.s32.totalorder %s16, 3
      %p80 = por %p78, %p79
      %p81 = scmp.ne.s32.totalorder %s73, %s76
      %p82 = scmp.eq.s32.totalorder %s16, 0
      %p83 = por %p81, %p82
      %p84 = scmp.ne.s32.totalorder %s73, %s76
      %p85 = scmp.eq.s32.totalorder %s21, 3
      %p86 = por %p84, %p85
      %p87 = scmp.ne.s32.totalorder %s76, %s77
      %p88 = scmp.eq.s32.totalorder %s21, 0
      %p89 = por %p87, %p88
      %p90 = scmp.ne.s32.totalorder %s76, %s77
      %p91 = scmp.eq.s32.totalorder %s22, 3
      %p92 = por %p90, %p91
      %p94 = scmp.ne.s32.totalorder %s77, %s93
      %p95 = scmp.eq.s32.totalorder %s22, 0
      %p96 = por %p94, %p95
      %s97 = ssub.s32 %s16, %s23
      %p98 = scmp.eq.s32.totalorder %s97, 0
      %s100 = sadd.s32 %s99, 1
      %s101 = scalar_select %p98, %s99, %s100
      %p104 = pneg %p98
      %p105 = scmp.eq.s32.totalorder %s16, 3
      %p106 = por %p104, %p105
      %p107 = scmp.ne.s32.totalorder %s99, %s102
      %p108 = scmp.eq.s32.totalorder %s16, 0
      %p109 = por %p107, %p108
      %p110 = scmp.ne.s32.totalorder %s99, %s102
      %p111 = scmp.eq.s32.totalorder %s21, 3
      %p112 = por %p110, %p111
      %p113 = scmp.ne.s32.totalorder %s102, %s103
      %p114 = scmp.eq.s32.totalorder %s21, 0
      %p115 = por %p113, %p114
      %p116 = scmp.ne.s32.totalorder %s102, %s103
      %p117 = scmp.eq.s32.totalorder %s22, 3
      %p118 = por %p116, %p117
      %p120 = scmp.ne.s32.totalorder %s103, %s119
      %p121 = scmp.eq.s32.totalorder %s22, 0
      %p122 = por %p120, %p121
      %p123 = scmp.le.s32.totalorder 1, %s16
      %p124 = scmp.lt.s32.totalorder %s16, 5
      %p125 = pnand %p123, %p124
      %p126 = pneg %p125
      // Predicated region
      $region9: #{tpu_custom_call.1} parent=5 // pred_check
        _
      $region10: #{tpu_custom_call.1} parent=5 // pred_check_branch
        %128 = sbr.rel (%p125) target = $region12
      $region11: #{tpu_custom_call.1} parent=5 // pred_region
        %s129 = ssub.s32 %s16, 1
        // Predicated region
        $region13: #{tpu_custom_call.1} parent=11 // pred_check
          %p130 = pneg %p37
        $region14: #{tpu_custom_call.1} parent=11 // pred_check_branch
          %132 = sbr.rel (%p130) target = $region16
        $region15: #{tpu_custom_call.1} parent=11 // pred_region
          %s134 = ssub.s32 128, 128
          %135 = vsyncadd [#allocation3], %s134
          %s137 = sshll.u32 [#allocation2], 4
          %s138 = int_to_ptr.vmem [resolvable:$true] %s137
          %140 = dma.hbm_to_vmem [thread:$0]  %s0, 128, %s138, [#allocation3]
        $region16: #{tpu_custom_call.1} parent=11 // pred_fallthru
          _
      $region12: #{tpu_custom_call.1} parent=5 // pred_fallthru
        _
      %p141 = scmp.lt.s32.totalorder %s16, 4
      // Predicated region
      $region17: #{tpu_custom_call.1} parent=5 // pred_check
        %p142 = pneg %p141
      $region18: #{tpu_custom_call.1} parent=5 // pred_check_branch
        %144 = sbr.rel (%p142) target = $region20
      $region19: #{tpu_custom_call.1} parent=5 // pred_region
        // Predicated region
        $region21: #{tpu_custom_call.1} parent=19 // pred_check
          %p145 = pneg %p57
        $region22: #{tpu_custom_call.1} parent=19 // pred_check_branch
          %147 = sbr.rel (%p145) target = $region24
        $region23: #{tpu_custom_call.1} parent=19 // pred_region
          %s148 = sand.u32 %s16, 1
          %s149 = scalar_lea.sflag [#allocation6], %s148
          %s150 = sand.u32 %s47, 1
          %s151 = smul.addr %s150, 8192
          %s152 = scalar_lea.vmem [#allocation5], %s151
          %s154 = ssub.s32 131072, 131072
          %155 = vsyncadd %s149, %s154
          %s156 = smul.addr %s16, 2048
          %s157 = smul.addr %s156, 64
          %s158 = scalar_lea.hbm %s1, %s157
          %s159 = sshll.u32 %s152, 4
          %s160 = int_to_ptr.vmem [resolvable:$true] %s159
          %165 = dma.hbm_to_vmem [thread:$0]  %s158, 131072, %s160, %s149, 2048, 2048, 128
        $region24: #{tpu_custom_call.1} parent=19 // pred_fallthru
          _
        // Predicated region
        $region25: #{tpu_custom_call.1} parent=19 // pred_check
          %p166 = pneg %p83
        $region26: #{tpu_custom_call.1} parent=19 // pred_check_branch
          %168 = sbr.rel (%p166) target = $region28
        $region27: #{tpu_custom_call.1} parent=19 // pred_region
          %s169 = sand.u32 %s16, 1
          %s170 = scalar_lea.sflag [#allocation6], %s169
          %s171 = sand.u32 %s73, 1
          %s172 = smul.addr %s171, 32
          %s173 = scalar_lea.vmem [#allocation7], %s172
          %s175 = ssub.s32 512, 512
          %176 = vsyncadd %s170, %s175
          %s177 = smul.addr %s16, 32
          %s178 = smul.addr %s177, 16
          %s179 = scalar_lea.hbm %s2, %s178
          %s181 = sshll.u32 %s173, 4
          %s182 = int_to_ptr.vmem [resolvable:$true] %s181
          %184 = dma.hbm_to_vmem [thread:$0]  %s179, 512, %s182, %s170
        $region28: #{tpu_custom_call.1} parent=19 // pred_fallthru
          _
      $region20: #{tpu_custom_call.1} parent=5 // pred_fallthru
        _
      %p185 = scmp.le.s32.totalorder 1, %s16
      %p186 = scmp.lt.s32.totalorder %s16, 5
      %p187 = pnand %p185, %p186
      %p188 = pneg %p187
      // Predicated region
      $region29: #{tpu_custom_call.1} parent=5 // pred_check
        _
      $region30: #{tpu_custom_call.1} parent=5 // pred_check_branch
        %190 = sbr.rel (%p187) target = $region32
      $region31: #{tpu_custom_call.1} parent=5 // pred_region
        %s191 = ssub.s32 %s16, 1
        // Predicated region
        $region33: #{tpu_custom_call.1} parent=31 // pred_check
          %p192 = pneg %p37
        $region34: #{tpu_custom_call.1} parent=31 // pred_check_branch
          %194 = sbr.rel (%p192) target = $region36
        $region35: #{tpu_custom_call.1} parent=31 // pred_region
          %195 = dma.done [#allocation3], 128
        $region36: #{tpu_custom_call.1} parent=31 // pred_fallthru
          _
        %s196 = sand.u32 %s21, 1
        %s197 = scalar_lea.sflag [#allocation6], %s196
        %s198 = sand.u32 %s50, 1
        %s199 = smul.addr %s198, 8192
        %s200 = scalar_lea.vmem [#allocation5], %s199
        // Predicated region
        $region37: #{tpu_custom_call.1} parent=31 // pred_check
          %p201 = pneg %p63
        $region38: #{tpu_custom_call.1} parent=31 // pred_check_branch
          %203 = sbr.rel (%p201) target = $region40
        $region39: #{tpu_custom_call.1} parent=31 // pred_region
          %204 = dma.done %s197, 131072
        $region40: #{tpu_custom_call.1} parent=31 // pred_fallthru
          _
        %s205 = sand.u32 %s21, 1
        %s206 = scalar_lea.sflag [#allocation6], %s205
        %s207 = sand.u32 %s76, 1
        %s208 = smul.addr %s207, 32
        %s209 = scalar_lea.vmem [#allocation7], %s208
        // Predicated region
        $region41: #{tpu_custom_call.1} parent=31 // pred_check
          %p210 = pneg %p89
        $region42: #{tpu_custom_call.1} parent=31 // pred_check_branch
          %212 = sbr.rel (%p210) target = $region44
        $region43: #{tpu_custom_call.1} parent=31 // pred_region
          %213 = dma.done %s206, 512
        $region44: #{tpu_custom_call.1} parent=31 // pred_fallthru
          _
        %p214 = pneg %p37
        %p215 = pneg %p34
        %s216 = sand.u32 %s21, 1
        %s217 = scalar_lea.sflag [#allocation6], %s216
        %s218 = sand.u32 %s50, 1
        %s219 = smul.addr %s218, 8192
        %s220 = scalar_lea.vmem [#allocation5], %s219
        %p221 = pneg %p63
        %p222 = pneg %p60
        %s223 = sand.u32 %s21, 1
        %s224 = scalar_lea.sflag [#allocation6], %s223
        %s225 = sand.u32 %s76, 1
        %s226 = smul.addr %s225, 32
        %s227 = scalar_lea.vmem [#allocation7], %s226
        %p228 = pneg %p89
        %p229 = pneg %p86
        %p230 = pneg %p115
        %p231 = pneg %p112
        %s232 = sand.u32 %s102, 1
        %s233 = scalar_lea.sflag [#allocation4], %s232
        %s234 = sand.u32 %s102, 1
        %s235 = smul.addr %s234, 64
        %s236 = scalar_lea.vmem [#allocation8], %s235
        %v237 = vld [vmem:[#allocation2] sm:$0xff]
        %v239 = vcombine.high %v237, %v237
        %v241 = vunpack.c.l.s4 1983009808
        %v242 = vunpack.c.0.s8 %v241
        %v243 = vlaneseq
        %v244 = vshrl.u32 %v243, 7
        %v245 = vsub.s32 %v242, %v244
        %v246 = vrot.slane %v237, %v245
        %v248 = vunpack.c.l.s4 1983009808
        %v249 = vunpack.c.0.s8 %v248
        %v250 = vlaneseq
        %v251 = vshrl.u32 %v250, 7
        %v252 = vsub.s32 %v249, %v251
        %v253 = vrot.slane %v239, %v252
        %v254 = vcombine.high %v246, %v246
        %v255 = vcombine.high %v253, %v253
        %v260 = vpack.c.bf16 %v246, %v246
        %v261 = vpack.c.bf16 %v254, %v254
        %v262 = vpack.c.bf16 %v253, %v253
        %v263 = vpack.c.bf16 %v255, %v255
        %v264 = vld [vmem:[%s200] sm:$0xff]
        %v265 = vld [vmem:[%s200 + $0x8] sm:$0xff]
        %v266 = vld [vmem:[%s200 + $0x10] sm:$0xff]
        %v267 = vld [vmem:[%s200 + $0x18] sm:$0xff]
        %v268 = vld [vmem:[%s200 + $0x20] sm:$0xff]
        %v269 = vld [vmem:[%s200 + $0x28] sm:$0xff]
        %v270 = vld [vmem:[%s200 + $0x30] sm:$0xff]
        %v271 = vld [vmem:[%s200 + $0x38] sm:$0xff]
        %v272 = vld [vmem:[%s200 + $0x40] sm:$0xff]
        %v273 = vld [vmem:[%s200 + $0x48] sm:$0xff]
        %v274 = vld [vmem:[%s200 + $0x50] sm:$0xff]
        %v275 = vld [vmem:[%s200 + $0x58] sm:$0xff]
        %v276 = vld [vmem:[%s200 + $0x60] sm:$0xff]
        %v277 = vld [vmem:[%s200 + $0x68] sm:$0xff]
        %v278 = vld [vmem:[%s200 + $0x70] sm:$0xff]
        %v279 = vld [vmem:[%s200 + $0x78] sm:$0xff]
        %v280 = vld [vmem:[%s200 + $0x80] sm:$0xff]
        %v281 = vld [vmem:[%s200 + $0x88] sm:$0xff]
        %v282 = vld [vmem:[%s200 + $0x90] sm:$0xff]
        %v283 = vld [vmem:[%s200 + $0x98] sm:$0xff]
        %v284 = vld [vmem:[%s200 + $0xa0] sm:$0xff]
        %v285 = vld [vmem:[%s200 + $0xa8] sm:$0xff]
        %v286 = vld [vmem:[%s200 + $0xb0] sm:$0xff]
        %v287 = vld [vmem:[%s200 + $0xb8] sm:$0xff]
        %v288 = vld [vmem:[%s200 + $0xc0] sm:$0xff]
        %v289 = vld [vmem:[%s200 + $0xc8] sm:$0xff]
        %v290 = vld [vmem:[%s200 + $0xd0] sm:$0xff]
        %v291 = vld [vmem:[%s200 + $0xd8] sm:$0xff]
        %v292 = vld [vmem:[%s200 + $0xe0] sm:$0xff]
        %v293 = vld [vmem:[%s200 + $0xe8] sm:$0xff]
        %v294 = vld [vmem:[%s200 + $0xf0] sm:$0xff]
        %v295 = vld [vmem:[%s200 + $0xf8] sm:$0xff]
        %v296 = vld [vmem:[%s200 + $0x100] sm:$0xff]
        %v297 = vld [vmem:[%s200 + $0x108] sm:$0xff]
        %v298 = vld [vmem:[%s200 + $0x110] sm:$0xff]
        %v299 = vld [vmem:[%s200 + $0x118] sm:$0xff]
        %v300 = vld [vmem:[%s200 + $0x120] sm:$0xff]
        %v301 = vld [vmem:[%s200 + $0x128] sm:$0xff]
        %v302 = vld [vmem:[%s200 + $0x130] sm:$0xff]
        %v303 = vld [vmem:[%s200 + $0x138] sm:$0xff]
        %v304 = vld [vmem:[%s200 + $0x140] sm:$0xff]
        %v305 = vld [vmem:[%s200 + $0x148] sm:$0xff]
        %v306 = vld [vmem:[%s200 + $0x150] sm:$0xff]
        %v307 = vld [vmem:[%s200 + $0x158] sm:$0xff]
        %v308 = vld [vmem:[%s200 + $0x160] sm:$0xff]
        %v309 = vld [vmem:[%s200 + $0x168] sm:$0xff]
        %v310 = vld [vmem:[%s200 + $0x170] sm:$0xff]
        %v311 = vld [vmem:[%s200 + $0x178] sm:$0xff]
        %v312 = vld [vmem:[%s200 + $0x180] sm:$0xff]
        %v313 = vld [vmem:[%s200 + $0x188] sm:$0xff]
        %v314 = vld [vmem:[%s200 + $0x190] sm:$0xff]
        %v315 = vld [vmem:[%s200 + $0x198] sm:$0xff]
        %v316 = vld [vmem:[%s200 + $0x1a0] sm:$0xff]
        %v317 = vld [vmem:[%s200 + $0x1a8] sm:$0xff]
        %v318 = vld [vmem:[%s200 + $0x1b0] sm:$0xff]
        %v319 = vld [vmem:[%s200 + $0x1b8] sm:$0xff]
        %v320 = vld [vmem:[%s200 + $0x1c0] sm:$0xff]
        %v321 = vld [vmem:[%s200 + $0x1c8] sm:$0xff]
        %v322 = vld [vmem:[%s200 + $0x1d0] sm:$0xff]
        %v323 = vld [vmem:[%s200 + $0x1d8] sm:$0xff]
        %v324 = vld [vmem:[%s200 + $0x1e0] sm:$0xff]
        %v325 = vld [vmem:[%s200 + $0x1e8] sm:$0xff]
        %v326 = vld [vmem:[%s200 + $0x1f0] sm:$0xff]
        %v327 = vld [vmem:[%s200 + $0x1f8] sm:$0xff]
        %v328 = vld [vmem:[%s200 + $0x200] sm:$0xff]
        %v329 = vld [vmem:[%s200 + $0x208] sm:$0xff]
        %v330 = vld [vmem:[%s200 + $0x210] sm:$0xff]
        %v331 = vld [vmem:[%s200 + $0x218] sm:$0xff]
        %v332 = vld [vmem:[%s200 + $0x220] sm:$0xff]
        %v333 = vld [vmem:[%s200 + $0x228] sm:$0xff]
        %v334 = vld [vmem:[%s200 + $0x230] sm:$0xff]
        %v335 = vld [vmem:[%s200 + $0x238] sm:$0xff]
        %v336 = vld [vmem:[%s200 + $0x240] sm:$0xff]
        %v337 = vld [vmem:[%s200 + $0x248] sm:$0xff]
        %v338 = vld [vmem:[%s200 + $0x250] sm:$0xff]
        %v339 = vld [vmem:[%s200 + $0x258] sm:$0xff]
        %v340 = vld [vmem:[%s200 + $0x260] sm:$0xff]
        %v341 = vld [vmem:[%s200 + $0x268] sm:$0xff]
        %v342 = vld [vmem:[%s200 + $0x270] sm:$0xff]
        %v343 = vld [vmem:[%s200 + $0x278] sm:$0xff]
        %v344 = vld [vmem:[%s200 + $0x280] sm:$0xff]
        %v345 = vld [vmem:[%s200 + $0x288] sm:$0xff]
        %v346 = vld [vmem:[%s200 + $0x290] sm:$0xff]
        %v347 = vld [vmem:[%s200 + $0x298] sm:$0xff]
        %v348 = vld [vmem:[%s200 + $0x2a0] sm:$0xff]
        %v349 = vld [vmem:[%s200 + $0x2a8] sm:$0xff]
        %v350 = vld [vmem:[%s200 + $0x2b0] sm:$0xff]
        %v351 = vld [vmem:[%s200 + $0x2b8] sm:$0xff]
        %v352 = vld [vmem:[%s200 + $0x2c0] sm:$0xff]
        %v353 = vld [vmem:[%s200 + $0x2c8] sm:$0xff]
        %v354 = vld [vmem:[%s200 + $0x2d0] sm:$0xff]
        %v355 = vld [vmem:[%s200 + $0x2d8] sm:$0xff]
        %v356 = vld [vmem:[%s200 + $0x2e0] sm:$0xff]
        %v357 = vld [vmem:[%s200 + $0x2e8] sm:$0xff]
        %v358 = vld [vmem:[%s200 + $0x2f0] sm:$0xff]
        %v359 = vld [vmem:[%s200 + $0x2f8] sm:$0xff]
        %v360 = vld [vmem:[%s200 + $0x300] sm:$0xff]
        %v361 = vld [vmem:[%s200 + $0x308] sm:$0xff]
        %v362 = vld [vmem:[%s200 + $0x310] sm:$0xff]
        %v363 = vld [vmem:[%s200 + $0x318] sm:$0xff]
        %v364 = vld [vmem:[%s200 + $0x320] sm:$0xff]
        %v365 = vld [vmem:[%s200 + $0x328] sm:$0xff]
        %v366 = vld [vmem:[%s200 + $0x330] sm:$0xff]
        %v367 = vld [vmem:[%s200 + $0x338] sm:$0xff]
        %v368 = vld [vmem:[%s200 + $0x340] sm:$0xff]
        %v369 = vld [vmem:[%s200 + $0x348] sm:$0xff]
        %v370 = vld [vmem:[%s200 + $0x350] sm:$0xff]
        %v371 = vld [vmem:[%s200 + $0x358] sm:$0xff]
        %v372 = vld [vmem:[%s200 + $0x360] sm:$0xff]
        %v373 = vld [vmem:[%s200 + $0x368] sm:$0xff]
        %v374 = vld [vmem:[%s200 + $0x370] sm:$0xff]
        %v375 = vld [vmem:[%s200 + $0x378] sm:$0xff]
        %v376 = vld [vmem:[%s200 + $0x380] sm:$0xff]
        %v377 = vld [vmem:[%s200 + $0x388] sm:$0xff]
        %v378 = vld [vmem:[%s200 + $0x390] sm:$0xff]
        %v379 = vld [vmem:[%s200 + $0x398] sm:$0xff]
        %v380 = vld [vmem:[%s200 + $0x3a0] sm:$0xff]
        %v381 = vld [vmem:[%s200 + $0x3a8] sm:$0xff]
        %v382 = vld [vmem:[%s200 + $0x3b0] sm:$0xff]
        %v383 = vld [vmem:[%s200 + $0x3b8] sm:$0xff]
        %v384 = vld [vmem:[%s200 + $0x3c0] sm:$0xff]
        %v385 = vld [vmem:[%s200 + $0x3c8] sm:$0xff]
        %v386 = vld [vmem:[%s200 + $0x3d0] sm:$0xff]
        %v387 = vld [vmem:[%s200 + $0x3d8] sm:$0xff]
        %v388 = vld [vmem:[%s200 + $0x3e0] sm:$0xff]
        %v389 = vld [vmem:[%s200 + $0x3e8] sm:$0xff]
        %v390 = vld [vmem:[%s200 + $0x3f0] sm:$0xff]
        %v391 = vld [vmem:[%s200 + $0x3f8] sm:$0xff]
        %v392 = vld [vmem:[%s200 + $0x400] sm:$0xff]
        %v393 = vld [vmem:[%s200 + $0x408] sm:$0xff]
        %v394 = vld [vmem:[%s200 + $0x410] sm:$0xff]
        %v395 = vld [vmem:[%s200 + $0x418] sm:$0xff]
        %v396 = vld [vmem:[%s200 + $0x420] sm:$0xff]
        %v397 = vld [vmem:[%s200 + $0x428] sm:$0xff]
        %v398 = vld [vmem:[%s200 + $0x430] sm:$0xff]
        %v399 = vld [vmem:[%s200 + $0x438] sm:$0xff]
        %v400 = vld [vmem:[%s200 + $0x440] sm:$0xff]
        %v401 = vld [vmem:[%s200 + $0x448] sm:$0xff]
        %v402 = vld [vmem:[%s200 + $0x450] sm:$0xff]
        %v403 = vld [vmem:[%s200 + $0x458] sm:$0xff]
        %v404 = vld [vmem:[%s200 + $0x460] sm:$0xff]
        %v405 = vld [vmem:[%s200 + $0x468] sm:$0xff]
        %v406 = vld [vmem:[%s200 + $0x470] sm:$0xff]
        %v407 = vld [vmem:[%s200 + $0x478] sm:$0xff]
        %v408 = vld [vmem:[%s200 + $0x480] sm:$0xff]
        %v409 = vld [vmem:[%s200 + $0x488] sm:$0xff]
        %v410 = vld [vmem:[%s200 + $0x490] sm:$0xff]
        %v411 = vld [vmem:[%s200 + $0x498] sm:$0xff]
        %v412 = vld [vmem:[%s200 + $0x4a0] sm:$0xff]
        %v413 = vld [vmem:[%s200 + $0x4a8] sm:$0xff]
        %v414 = vld [vmem:[%s200 + $0x4b0] sm:$0xff]
        %v415 = vld [vmem:[%s200 + $0x4b8] sm:$0xff]
        %v416 = vld [vmem:[%s200 + $0x4c0] sm:$0xff]
        %v417 = vld [vmem:[%s200 + $0x4c8] sm:$0xff]
        %v418 = vld [vmem:[%s200 + $0x4d0] sm:$0xff]
        %v419 = vld [vmem:[%s200 + $0x4d8] sm:$0xff]
        %v420 = vld [vmem:[%s200 + $0x4e0] sm:$0xff]
        %v421 = vld [vmem:[%s200 + $0x4e8] sm:$0xff]
        %v422 = vld [vmem:[%s200 + $0x4f0] sm:$0xff]
        %v423 = vld [vmem:[%s200 + $0x4f8] sm:$0xff]
        %v424 = vld [vmem:[%s200 + $0x500] sm:$0xff]
        %v425 = vld [vmem:[%s200 + $0x508] sm:$0xff]
        %v426 = vld [vmem:[%s200 + $0x510] sm:$0xff]
        %v427 = vld [vmem:[%s200 + $0x518] sm:$0xff]
        %v428 = vld [vmem:[%s200 + $0x520] sm:$0xff]
        %v429 = vld [vmem:[%s200 + $0x528] sm:$0xff]
        %v430 = vld [vmem:[%s200 + $0x530] sm:$0xff]
        %v431 = vld [vmem:[%s200 + $0x538] sm:$0xff]
        %v432 = vld [vmem:[%s200 + $0x540] sm:$0xff]
        %v433 = vld [vmem:[%s200 + $0x548] sm:$0xff]
        %v434 = vld [vmem:[%s200 + $0x550] sm:$0xff]
        %v435 = vld [vmem:[%s200 + $0x558] sm:$0xff]
        %v436 = vld [vmem:[%s200 + $0x560] sm:$0xff]
        %v437 = vld [vmem:[%s200 + $0x568] sm:$0xff]
        %v438 = vld [vmem:[%s200 + $0x570] sm:$0xff]
        %v439 = vld [vmem:[%s200 + $0x578] sm:$0xff]
        %v440 = vld [vmem:[%s200 + $0x580] sm:$0xff]
        %v441 = vld [vmem:[%s200 + $0x588] sm:$0xff]
        %v442 = vld [vmem:[%s200 + $0x590] sm:$0xff]
        %v443 = vld [vmem:[%s200 + $0x598] sm:$0xff]
        %v444 = vld [vmem:[%s200 + $0x5a0] sm:$0xff]
        %v445 = vld [vmem:[%s200 + $0x5a8] sm:$0xff]
        %v446 = vld [vmem:[%s200 + $0x5b0] sm:$0xff]
        %v447 = vld [vmem:[%s200 + $0x5b8] sm:$0xff]
        %v448 = vld [vmem:[%s200 + $0x5c0] sm:$0xff]
        %v449 = vld [vmem:[%s200 + $0x5c8] sm:$0xff]
        %v450 = vld [vmem:[%s200 + $0x5d0] sm:$0xff]
        %v451 = vld [vmem:[%s200 + $0x5d8] sm:$0xff]
        %v452 = vld [vmem:[%s200 + $0x5e0] sm:$0xff]
        %v453 = vld [vmem:[%s200 + $0x5e8] sm:$0xff]
        %v454 = vld [vmem:[%s200 + $0x5f0] sm:$0xff]
        %v455 = vld [vmem:[%s200 + $0x5f8] sm:$0xff]
        %v456 = vld [vmem:[%s200 + $0x600] sm:$0xff]
        %v457 = vld [vmem:[%s200 + $0x608] sm:$0xff]
        %v458 = vld [vmem:[%s200 + $0x610] sm:$0xff]
        %v459 = vld [vmem:[%s200 + $0x618] sm:$0xff]
        %v460 = vld [vmem:[%s200 + $0x620] sm:$0xff]
        %v461 = vld [vmem:[%s200 + $0x628] sm:$0xff]
        %v462 = vld [vmem:[%s200 + $0x630] sm:$0xff]
        %v463 = vld [vmem:[%s200 + $0x638] sm:$0xff]
        %v464 = vld [vmem:[%s200 + $0x640] sm:$0xff]
        %v465 = vld [vmem:[%s200 + $0x648] sm:$0xff]
        %v466 = vld [vmem:[%s200 + $0x650] sm:$0xff]
        %v467 = vld [vmem:[%s200 + $0x658] sm:$0xff]
        %v468 = vld [vmem:[%s200 + $0x660] sm:$0xff]
        %v469 = vld [vmem:[%s200 + $0x668] sm:$0xff]
        %v470 = vld [vmem:[%s200 + $0x670] sm:$0xff]
        %v471 = vld [vmem:[%s200 + $0x678] sm:$0xff]
        %v472 = vld [vmem:[%s200 + $0x680] sm:$0xff]
        %v473 = vld [vmem:[%s200 + $0x688] sm:$0xff]
        %v474 = vld [vmem:[%s200 + $0x690] sm:$0xff]
        %v475 = vld [vmem:[%s200 + $0x698] sm:$0xff]
        %v476 = vld [vmem:[%s200 + $0x6a0] sm:$0xff]
        %v477 = vld [vmem:[%s200 + $0x6a8] sm:$0xff]
        %v478 = vld [vmem:[%s200 + $0x6b0] sm:$0xff]
        %v479 = vld [vmem:[%s200 + $0x6b8] sm:$0xff]
        %v480 = vld [vmem:[%s200 + $0x6c0] sm:$0xff]
        %v481 = vld [vmem:[%s200 + $0x6c8] sm:$0xff]
        %v482 = vld [vmem:[%s200 + $0x6d0] sm:$0xff]
        %v483 = vld [vmem:[%s200 + $0x6d8] sm:$0xff]
        %v484 = vld [vmem:[%s200 + $0x6e0] sm:$0xff]
        %v485 = vld [vmem:[%s200 + $0x6e8] sm:$0xff]
        %v486 = vld [vmem:[%s200 + $0x6f0] sm:$0xff]
        %v487 = vld [vmem:[%s200 + $0x6f8] sm:$0xff]
        %v488 = vld [vmem:[%s200 + $0x700] sm:$0xff]
        %v489 = vld [vmem:[%s200 + $0x708] sm:$0xff]
        %v490 = vld [vmem:[%s200 + $0x710] sm:$0xff]
        %v491 = vld [vmem:[%s200 + $0x718] sm:$0xff]
        %v492 = vld [vmem:[%s200 + $0x720] sm:$0xff]
        %v493 = vld [vmem:[%s200 + $0x728] sm:$0xff]
        %v494 = vld [vmem:[%s200 + $0x730] sm:$0xff]
        %v495 = vld [vmem:[%s200 + $0x738] sm:$0xff]
        %v496 = vld [vmem:[%s200 + $0x740] sm:$0xff]
        %v497 = vld [vmem:[%s200 + $0x748] sm:$0xff]
        %v498 = vld [vmem:[%s200 + $0x750] sm:$0xff]
        %v499 = vld [vmem:[%s200 + $0x758] sm:$0xff]
        %v500 = vld [vmem:[%s200 + $0x760] sm:$0xff]
        %v501 = vld [vmem:[%s200 + $0x768] sm:$0xff]
        %v502 = vld [vmem:[%s200 + $0x770] sm:$0xff]
        %v503 = vld [vmem:[%s200 + $0x778] sm:$0xff]
        %v504 = vld [vmem:[%s200 + $0x780] sm:$0xff]
        %v505 = vld [vmem:[%s200 + $0x788] sm:$0xff]
        %v506 = vld [vmem:[%s200 + $0x790] sm:$0xff]
        %v507 = vld [vmem:[%s200 + $0x798] sm:$0xff]
        %v508 = vld [vmem:[%s200 + $0x7a0] sm:$0xff]
        %v509 = vld [vmem:[%s200 + $0x7a8] sm:$0xff]
        %v510 = vld [vmem:[%s200 + $0x7b0] sm:$0xff]
        %v511 = vld [vmem:[%s200 + $0x7b8] sm:$0xff]
        %v512 = vld [vmem:[%s200 + $0x7c0] sm:$0xff]
        %v513 = vld [vmem:[%s200 + $0x7c8] sm:$0xff]
        %v514 = vld [vmem:[%s200 + $0x7d0] sm:$0xff]
        %v515 = vld [vmem:[%s200 + $0x7d8] sm:$0xff]
        %v516 = vld [vmem:[%s200 + $0x7e0] sm:$0xff]
        %v517 = vld [vmem:[%s200 + $0x7e8] sm:$0xff]
        %v518 = vld [vmem:[%s200 + $0x7f0] sm:$0xff]
        %v519 = vld [vmem:[%s200 + $0x7f8] sm:$0xff]
        %v520 = vld [vmem:[%s200 + $0x800] sm:$0xff]
        %v521 = vld [vmem:[%s200 + $0x808] sm:$0xff]
        %v522 = vld [vmem:[%s200 + $0x810] sm:$0xff]
        %v523 = vld [vmem:[%s200 + $0x818] sm:$0xff]
        %v524 = vld [vmem:[%s200 + $0x820] sm:$0xff]
        %v525 = vld [vmem:[%s200 + $0x828] sm:$0xff]
        %v526 = vld [vmem:[%s200 + $0x830] sm:$0xff]
        %v527 = vld [vmem:[%s200 + $0x838] sm:$0xff]
        %v528 = vld [vmem:[%s200 + $0x840] sm:$0xff]
        %v529 = vld [vmem:[%s200 + $0x848] sm:$0xff]
        %v530 = vld [vmem:[%s200 + $0x850] sm:$0xff]
        %v531 = vld [vmem:[%s200 + $0x858] sm:$0xff]
        %v532 = vld [vmem:[%s200 + $0x860] sm:$0xff]
        %v533 = vld [vmem:[%s200 + $0x868] sm:$0xff]
        %v534 = vld [vmem:[%s200 + $0x870] sm:$0xff]
        %v535 = vld [vmem:[%s200 + $0x878] sm:$0xff]
        %v536 = vld [vmem:[%s200 + $0x880] sm:$0xff]
        %v537 = vld [vmem:[%s200 + $0x888] sm:$0xff]
        %v538 = vld [vmem:[%s200 + $0x890] sm:$0xff]
        %v539 = vld [vmem:[%s200 + $0x898] sm:$0xff]
        %v540 = vld [vmem:[%s200 + $0x8a0] sm:$0xff]
        %v541 = vld [vmem:[%s200 + $0x8a8] sm:$0xff]
        %v542 = vld [vmem:[%s200 + $0x8b0] sm:$0xff]
        %v543 = vld [vmem:[%s200 + $0x8b8] sm:$0xff]
        %v544 = vld [vmem:[%s200 + $0x8c0] sm:$0xff]
        %v545 = vld [vmem:[%s200 + $0x8c8] sm:$0xff]
        %v546 = vld [vmem:[%s200 + $0x8d0] sm:$0xff]
        %v547 = vld [vmem:[%s200 + $0x8d8] sm:$0xff]
        %v548 = vld [vmem:[%s200 + $0x8e0] sm:$0xff]
        %v549 = vld [vmem:[%s200 + $0x8e8] sm:$0xff]
        %v550 = vld [vmem:[%s200 + $0x8f0] sm:$0xff]
        %v551 = vld [vmem:[%s200 + $0x8f8] sm:$0xff]
        %v552 = vld [vmem:[%s200 + $0x900] sm:$0xff]
        %v553 = vld [vmem:[%s200 + $0x908] sm:$0xff]
        %v554 = vld [vmem:[%s200 + $0x910] sm:$0xff]
        %v555 = vld [vmem:[%s200 + $0x918] sm:$0xff]
        %v556 = vld [vmem:[%s200 + $0x920] sm:$0xff]
        %v557 = vld [vmem:[%s200 + $0x928] sm:$0xff]
        %v558 = vld [vmem:[%s200 + $0x930] sm:$0xff]
        %v559 = vld [vmem:[%s200 + $0x938] sm:$0xff]
        %v560 = vld [vmem:[%s200 + $0x940] sm:$0xff]
        %v561 = vld [vmem:[%s200 + $0x948] sm:$0xff]
        %v562 = vld [vmem:[%s200 + $0x950] sm:$0xff]
        %v563 = vld [vmem:[%s200 + $0x958] sm:$0xff]
        %v564 = vld [vmem:[%s200 + $0x960] sm:$0xff]
        %v565 = vld [vmem:[%s200 + $0x968] sm:$0xff]
        %v566 = vld [vmem:[%s200 + $0x970] sm:$0xff]
        %v567 = vld [vmem:[%s200 + $0x978] sm:$0xff]
        %v568 = vld [vmem:[%s200 + $0x980] sm:$0xff]
        %v569 = vld [vmem:[%s200 + $0x988] sm:$0xff]
        %v570 = vld [vmem:[%s200 + $0x990] sm:$0xff]
        %v571 = vld [vmem:[%s200 + $0x998] sm:$0xff]
        %v572 = vld [vmem:[%s200 + $0x9a0] sm:$0xff]
        %v573 = vld [vmem:[%s200 + $0x9a8] sm:$0xff]
        %v574 = vld [vmem:[%s200 + $0x9b0] sm:$0xff]
        %v575 = vld [vmem:[%s200 + $0x9b8] sm:$0xff]
        %v576 = vld [vmem:[%s200 + $0x9c0] sm:$0xff]
        %v577 = vld [vmem:[%s200 + $0x9c8] sm:$0xff]
        %v578 = vld [vmem:[%s200 + $0x9d0] sm:$0xff]
        %v579 = vld [vmem:[%s200 + $0x9d8] sm:$0xff]
        %v580 = vld [vmem:[%s200 + $0x9e0] sm:$0xff]
        %v581 = vld [vmem:[%s200 + $0x9e8] sm:$0xff]
        %v582 = vld [vmem:[%s200 + $0x9f0] sm:$0xff]
        %v583 = vld [vmem:[%s200 + $0x9f8] sm:$0xff]
        %v584 = vld [vmem:[%s200 + $0xa00] sm:$0xff]
        %v585 = vld [vmem:[%s200 + $0xa08] sm:$0xff]
        %v586 = vld [vmem:[%s200 + $0xa10] sm:$0xff]
        %v587 = vld [vmem:[%s200 + $0xa18] sm:$0xff]
        %v588 = vld [vmem:[%s200 + $0xa20] sm:$0xff]
        %v589 = vld [vmem:[%s200 + $0xa28] sm:$0xff]
        %v590 = vld [vmem:[%s200 + $0xa30] sm:$0xff]
        %v591 = vld [vmem:[%s200 + $0xa38] sm:$0xff]
        %v592 = vld [vmem:[%s200 + $0xa40] sm:$0xff]
        %v593 = vld [vmem:[%s200 + $0xa48] sm:$0xff]
        %v594 = vld [vmem:[%s200 + $0xa50] sm:$0xff]
        %v595 = vld [vmem:[%s200 + $0xa58] sm:$0xff]
        %v596 = vld [vmem:[%s200 + $0xa60] sm:$0xff]
        %v597 = vld [vmem:[%s200 + $0xa68] sm:$0xff]
        %v598 = vld [vmem:[%s200 + $0xa70] sm:$0xff]
        %v599 = vld [vmem:[%s200 + $0xa78] sm:$0xff]
        %v600 = vld [vmem:[%s200 + $0xa80] sm:$0xff]
        %v601 = vld [vmem:[%s200 + $0xa88] sm:$0xff]
        %v602 = vld [vmem:[%s200 + $0xa90] sm:$0xff]
        %v603 = vld [vmem:[%s200 + $0xa98] sm:$0xff]
        %v604 = vld [vmem:[%s200 + $0xaa0] sm:$0xff]
        %v605 = vld [vmem:[%s200 + $0xaa8] sm:$0xff]
        %v606 = vld [vmem:[%s200 + $0xab0] sm:$0xff]
        %v607 = vld [vmem:[%s200 + $0xab8] sm:$0xff]
        %v608 = vld [vmem:[%s200 + $0xac0] sm:$0xff]
        %v609 = vld [vmem:[%s200 + $0xac8] sm:$0xff]
        %v610 = vld [vmem:[%s200 + $0xad0] sm:$0xff]
        %v611 = vld [vmem:[%s200 + $0xad8] sm:$0xff]
        %v612 = vld [vmem:[%s200 + $0xae0] sm:$0xff]
        %v613 = vld [vmem:[%s200 + $0xae8] sm:$0xff]
        %v614 = vld [vmem:[%s200 + $0xaf0] sm:$0xff]
        %v615 = vld [vmem:[%s200 + $0xaf8] sm:$0xff]
        %v616 = vld [vmem:[%s200 + $0xb00] sm:$0xff]
        %v617 = vld [vmem:[%s200 + $0xb08] sm:$0xff]
        %v618 = vld [vmem:[%s200 + $0xb10] sm:$0xff]
        %v619 = vld [vmem:[%s200 + $0xb18] sm:$0xff]
        %v620 = vld [vmem:[%s200 + $0xb20] sm:$0xff]
        %v621 = vld [vmem:[%s200 + $0xb28] sm:$0xff]
        %v622 = vld [vmem:[%s200 + $0xb30] sm:$0xff]
        %v623 = vld [vmem:[%s200 + $0xb38] sm:$0xff]
        %v624 = vld [vmem:[%s200 + $0xb40] sm:$0xff]
        %v625 = vld [vmem:[%s200 + $0xb48] sm:$0xff]
        %v626 = vld [vmem:[%s200 + $0xb50] sm:$0xff]
        %v627 = vld [vmem:[%s200 + $0xb58] sm:$0xff]
        %v628 = vld [vmem:[%s200 + $0xb60] sm:$0xff]
        %v629 = vld [vmem:[%s200 + $0xb68] sm:$0xff]
        %v630 = vld [vmem:[%s200 + $0xb70] sm:$0xff]
        %v631 = vld [vmem:[%s200 + $0xb78] sm:$0xff]
        %v632 = vld [vmem:[%s200 + $0xb80] sm:$0xff]
        %v633 = vld [vmem:[%s200 + $0xb88] sm:$0xff]
        %v634 = vld [vmem:[%s200 + $0xb90] sm:$0xff]
        %v635 = vld [vmem:[%s200 + $0xb98] sm:$0xff]
        %v636 = vld [vmem:[%s200 + $0xba0] sm:$0xff]
        %v637 = vld [vmem:[%s200 + $0xba8] sm:$0xff]
        %v638 = vld [vmem:[%s200 + $0xbb0] sm:$0xff]
        %v639 = vld [vmem:[%s200 + $0xbb8] sm:$0xff]
        %v640 = vld [vmem:[%s200 + $0xbc0] sm:$0xff]
        %v641 = vld [vmem:[%s200 + $0xbc8] sm:$0xff]
        %v642 = vld [vmem:[%s200 + $0xbd0] sm:$0xff]
        %v643 = vld [vmem:[%s200 + $0xbd8] sm:$0xff]
        %v644 = vld [vmem:[%s200 + $0xbe0] sm:$0xff]
        %v645 = vld [vmem:[%s200 + $0xbe8] sm:$0xff]
        %v646 = vld [vmem:[%s200 + $0xbf0] sm:$0xff]
        %v647 = vld [vmem:[%s200 + $0xbf8] sm:$0xff]
        %v648 = vld [vmem:[%s200 + $0xc00] sm:$0xff]
        %v649 = vld [vmem:[%s200 + $0xc08] sm:$0xff]
        %v650 = vld [vmem:[%s200 + $0xc10] sm:$0xff]
        %v651 = vld [vmem:[%s200 + $0xc18] sm:$0xff]
        %v652 = vld [vmem:[%s200 + $0xc20] sm:$0xff]
        %v653 = vld [vmem:[%s200 + $0xc28] sm:$0xff]
        %v654 = vld [vmem:[%s200 + $0xc30] sm:$0xff]
        %v655 = vld [vmem:[%s200 + $0xc38] sm:$0xff]
        %v656 = vld [vmem:[%s200 + $0xc40] sm:$0xff]
        %v657 = vld [vmem:[%s200 + $0xc48] sm:$0xff]
        %v658 = vld [vmem:[%s200 + $0xc50] sm:$0xff]
        %v659 = vld [vmem:[%s200 + $0xc58] sm:$0xff]
        %v660 = vld [vmem:[%s200 + $0xc60] sm:$0xff]
        %v661 = vld [vmem:[%s200 + $0xc68] sm:$0xff]
        %v662 = vld [vmem:[%s200 + $0xc70] sm:$0xff]
        %v663 = vld [vmem:[%s200 + $0xc78] sm:$0xff]
        %v664 = vld [vmem:[%s200 + $0xc80] sm:$0xff]
        %v665 = vld [vmem:[%s200 + $0xc88] sm:$0xff]
        %v666 = vld [vmem:[%s200 + $0xc90] sm:$0xff]
        %v667 = vld [vmem:[%s200 + $0xc98] sm:$0xff]
        %v668 = vld [vmem:[%s200 + $0xca0] sm:$0xff]
        %v669 = vld [vmem:[%s200 + $0xca8] sm:$0xff]
        %v670 = vld [vmem:[%s200 + $0xcb0] sm:$0xff]
        %v671 = vld [vmem:[%s200 + $0xcb8] sm:$0xff]
        %v672 = vld [vmem:[%s200 + $0xcc0] sm:$0xff]
        %v673 = vld [vmem:[%s200 + $0xcc8] sm:$0xff]
        %v674 = vld [vmem:[%s200 + $0xcd0] sm:$0xff]
        %v675 = vld [vmem:[%s200 + $0xcd8] sm:$0xff]
        %v676 = vld [vmem:[%s200 + $0xce0] sm:$0xff]
        %v677 = vld [vmem:[%s200 + $0xce8] sm:$0xff]
        %v678 = vld [vmem:[%s200 + $0xcf0] sm:$0xff]
        %v679 = vld [vmem:[%s200 + $0xcf8] sm:$0xff]
        %v680 = vld [vmem:[%s200 + $0xd00] sm:$0xff]
        %v681 = vld [vmem:[%s200 + $0xd08] sm:$0xff]
        %v682 = vld [vmem:[%s200 + $0xd10] sm:$0xff]
        %v683 = vld [vmem:[%s200 + $0xd18] sm:$0xff]
        %v684 = vld [vmem:[%s200 + $0xd20] sm:$0xff]
        %v685 = vld [vmem:[%s200 + $0xd28] sm:$0xff]
        %v686 = vld [vmem:[%s200 + $0xd30] sm:$0xff]
        %v687 = vld [vmem:[%s200 + $0xd38] sm:$0xff]
        %v688 = vld [vmem:[%s200 + $0xd40] sm:$0xff]
        %v689 = vld [vmem:[%s200 + $0xd48] sm:$0xff]
        %v690 = vld [vmem:[%s200 + $0xd50] sm:$0xff]
        %v691 = vld [vmem:[%s200 + $0xd58] sm:$0xff]
        %v692 = vld [vmem:[%s200 + $0xd60] sm:$0xff]
        %v693 = vld [vmem:[%s200 + $0xd68] sm:$0xff]
        %v694 = vld [vmem:[%s200 + $0xd70] sm:$0xff]
        %v695 = vld [vmem:[%s200 + $0xd78] sm:$0xff]
        %v696 = vld [vmem:[%s200 + $0xd80] sm:$0xff]
        %v697 = vld [vmem:[%s200 + $0xd88] sm:$0xff]
        %v698 = vld [vmem:[%s200 + $0xd90] sm:$0xff]
        %v699 = vld [vmem:[%s200 + $0xd98] sm:$0xff]
        %v700 = vld [vmem:[%s200 + $0xda0] sm:$0xff]
        %v701 = vld [vmem:[%s200 + $0xda8] sm:$0xff]
        %v702 = vld [vmem:[%s200 + $0xdb0] sm:$0xff]
        %v703 = vld [vmem:[%s200 + $0xdb8] sm:$0xff]
        %v704 = vld [vmem:[%s200 + $0xdc0] sm:$0xff]
        %v705 = vld [vmem:[%s200 + $0xdc8] sm:$0xff]
        %v706 = vld [vmem:[%s200 + $0xdd0] sm:$0xff]
        %v707 = vld [vmem:[%s200 + $0xdd8] sm:$0xff]
        %v708 = vld [vmem:[%s200 + $0xde0] sm:$0xff]
        %v709 = vld [vmem:[%s200 + $0xde8] sm:$0xff]
        %v710 = vld [vmem:[%s200 + $0xdf0] sm:$0xff]
        %v711 = vld [vmem:[%s200 + $0xdf8] sm:$0xff]
        %v712 = vld [vmem:[%s200 + $0xe00] sm:$0xff]
        %v713 = vld [vmem:[%s200 + $0xe08] sm:$0xff]
        %v714 = vld [vmem:[%s200 + $0xe10] sm:$0xff]
        %v715 = vld [vmem:[%s200 + $0xe18] sm:$0xff]
        %v716 = vld [vmem:[%s200 + $0xe20] sm:$0xff]
        %v717 = vld [vmem:[%s200 + $0xe28] sm:$0xff]
        %v718 = vld [vmem:[%s200 + $0xe30] sm:$0xff]
        %v719 = vld [vmem:[%s200 + $0xe38] sm:$0xff]
        %v720 = vld [vmem:[%s200 + $0xe40] sm:$0xff]
        %v721 = vld [vmem:[%s200 + $0xe48] sm:$0xff]
        %v722 = vld [vmem:[%s200 + $0xe50] sm:$0xff]
        %v723 = vld [vmem:[%s200 + $0xe58] sm:$0xff]
        %v724 = vld [vmem:[%s200 + $0xe60] sm:$0xff]
        %v725 = vld [vmem:[%s200 + $0xe68] sm:$0xff]
        %v726 = vld [vmem:[%s200 + $0xe70] sm:$0xff]
        %v727 = vld [vmem:[%s200 + $0xe78] sm:$0xff]
        %v728 = vld [vmem:[%s200 + $0xe80] sm:$0xff]
        %v729 = vld [vmem:[%s200 + $0xe88] sm:$0xff]
        %v730 = vld [vmem:[%s200 + $0xe90] sm:$0xff]
        %v731 = vld [vmem:[%s200 + $0xe98] sm:$0xff]
        %v732 = vld [vmem:[%s200 + $0xea0] sm:$0xff]
        %v733 = vld [vmem:[%s200 + $0xea8] sm:$0xff]
        %v734 = vld [vmem:[%s200 + $0xeb0] sm:$0xff]
        %v735 = vld [vmem:[%s200 + $0xeb8] sm:$0xff]
        %v736 = vld [vmem:[%s200 + $0xec0] sm:$0xff]
        %v737 = vld [vmem:[%s200 + $0xec8] sm:$0xff]
        %v738 = vld [vmem:[%s200 + $0xed0] sm:$0xff]
        %v739 = vld [vmem:[%s200 + $0xed8] sm:$0xff]
        %v740 = vld [vmem:[%s200 + $0xee0] sm:$0xff]
        %v741 = vld [vmem:[%s200 + $0xee8] sm:$0xff]
        %v742 = vld [vmem:[%s200 + $0xef0] sm:$0xff]
        %v743 = vld [vmem:[%s200 + $0xef8] sm:$0xff]
        %v744 = vld [vmem:[%s200 + $0xf00] sm:$0xff]
        %v745 = vld [vmem:[%s200 + $0xf08] sm:$0xff]
        %v746 = vld [vmem:[%s200 + $0xf10] sm:$0xff]
        %v747 = vld [vmem:[%s200 + $0xf18] sm:$0xff]
        %v748 = vld [vmem:[%s200 + $0xf20] sm:$0xff]
        %v749 = vld [vmem:[%s200 + $0xf28] sm:$0xff]
        %v750 = vld [vmem:[%s200 + $0xf30] sm:$0xff]
        %v751 = vld [vmem:[%s200 + $0xf38] sm:$0xff]
        %v752 = vld [vmem:[%s200 + $0xf40] sm:$0xff]
        %v753 = vld [vmem:[%s200 + $0xf48] sm:$0xff]
        %v754 = vld [vmem:[%s200 + $0xf50] sm:$0xff]
        %v755 = vld [vmem:[%s200 + $0xf58] sm:$0xff]
        %v756 = vld [vmem:[%s200 + $0xf60] sm:$0xff]
        %v757 = vld [vmem:[%s200 + $0xf68] sm:$0xff]
        %v758 = vld [vmem:[%s200 + $0xf70] sm:$0xff]
        %v759 = vld [vmem:[%s200 + $0xf78] sm:$0xff]
        %v760 = vld [vmem:[%s200 + $0xf80] sm:$0xff]
        %v761 = vld [vmem:[%s200 + $0xf88] sm:$0xff]
        %v762 = vld [vmem:[%s200 + $0xf90] sm:$0xff]
        %v763 = vld [vmem:[%s200 + $0xf98] sm:$0xff]
        %v764 = vld [vmem:[%s200 + $0xfa0] sm:$0xff]
        %v765 = vld [vmem:[%s200 + $0xfa8] sm:$0xff]
        %v766 = vld [vmem:[%s200 + $0xfb0] sm:$0xff]
        %v767 = vld [vmem:[%s200 + $0xfb8] sm:$0xff]
        %v768 = vld [vmem:[%s200 + $0xfc0] sm:$0xff]
        %v769 = vld [vmem:[%s200 + $0xfc8] sm:$0xff]
        %v770 = vld [vmem:[%s200 + $0xfd0] sm:$0xff]
        %v771 = vld [vmem:[%s200 + $0xfd8] sm:$0xff]
        %v772 = vld [vmem:[%s200 + $0xfe0] sm:$0xff]
        %v773 = vld [vmem:[%s200 + $0xfe8] sm:$0xff]
        %v774 = vld [vmem:[%s200 + $0xff0] sm:$0xff]
        %v775 = vld [vmem:[%s200 + $0xff8] sm:$0xff]
        %v776 = vld [vmem:[%s200 + $0x1000] sm:$0xff]
        %v777 = vld [vmem:[%s200 + $0x1008] sm:$0xff]
        %v778 = vld [vmem:[%s200 + $0x1010] sm:$0xff]
        %v779 = vld [vmem:[%s200 + $0x1018] sm:$0xff]
        %v780 = vld [vmem:[%s200 + $0x1020] sm:$0xff]
        %v781 = vld [vmem:[%s200 + $0x1028] sm:$0xff]
        %v782 = vld [vmem:[%s200 + $0x1030] sm:$0xff]
        %v783 = vld [vmem:[%s200 + $0x1038] sm:$0xff]
        %v784 = vld [vmem:[%s200 + $0x1040] sm:$0xff]
        %v785 = vld [vmem:[%s200 + $0x1048] sm:$0xff]
        %v786 = vld [vmem:[%s200 + $0x1050] sm:$0xff]
        %v787 = vld [vmem:[%s200 + $0x1058] sm:$0xff]
        %v788 = vld [vmem:[%s200 + $0x1060] sm:$0xff]
        %v789 = vld [vmem:[%s200 + $0x1068] sm:$0xff]
        %v790 = vld [vmem:[%s200 + $0x1070] sm:$0xff]
        %v791 = vld [vmem:[%s200 + $0x1078] sm:$0xff]
        %v792 = vld [vmem:[%s200 + $0x1080] sm:$0xff]
        %v793 = vld [vmem:[%s200 + $0x1088] sm:$0xff]
        %v794 = vld [vmem:[%s200 + $0x1090] sm:$0xff]
        %v795 = vld [vmem:[%s200 + $0x1098] sm:$0xff]
        %v796 = vld [vmem:[%s200 + $0x10a0] sm:$0xff]
        %v797 = vld [vmem:[%s200 + $0x10a8] sm:$0xff]
        %v798 = vld [vmem:[%s200 + $0x10b0] sm:$0xff]
        %v799 = vld [vmem:[%s200 + $0x10b8] sm:$0xff]
        %v800 = vld [vmem:[%s200 + $0x10c0] sm:$0xff]
        %v801 = vld [vmem:[%s200 + $0x10c8] sm:$0xff]
        %v802 = vld [vmem:[%s200 + $0x10d0] sm:$0xff]
        %v803 = vld [vmem:[%s200 + $0x10d8] sm:$0xff]
        %v804 = vld [vmem:[%s200 + $0x10e0] sm:$0xff]
        %v805 = vld [vmem:[%s200 + $0x10e8] sm:$0xff]
        %v806 = vld [vmem:[%s200 + $0x10f0] sm:$0xff]
        %v807 = vld [vmem:[%s200 + $0x10f8] sm:$0xff]
        %v808 = vld [vmem:[%s200 + $0x1100] sm:$0xff]
        %v809 = vld [vmem:[%s200 + $0x1108] sm:$0xff]
        %v810 = vld [vmem:[%s200 + $0x1110] sm:$0xff]
        %v811 = vld [vmem:[%s200 + $0x1118] sm:$0xff]
        %v812 = vld [vmem:[%s200 + $0x1120] sm:$0xff]
        %v813 = vld [vmem:[%s200 + $0x1128] sm:$0xff]
        %v814 = vld [vmem:[%s200 + $0x1130] sm:$0xff]
        %v815 = vld [vmem:[%s200 + $0x1138] sm:$0xff]
        %v816 = vld [vmem:[%s200 + $0x1140] sm:$0xff]
        %v817 = vld [vmem:[%s200 + $0x1148] sm:$0xff]
        %v818 = vld [vmem:[%s200 + $0x1150] sm:$0xff]
        %v819 = vld [vmem:[%s200 + $0x1158] sm:$0xff]
        %v820 = vld [vmem:[%s200 + $0x1160] sm:$0xff]
        %v821 = vld [vmem:[%s200 + $0x1168] sm:$0xff]
        %v822 = vld [vmem:[%s200 + $0x1170] sm:$0xff]
        %v823 = vld [vmem:[%s200 + $0x1178] sm:$0xff]
        %v824 = vld [vmem:[%s200 + $0x1180] sm:$0xff]
        %v825 = vld [vmem:[%s200 + $0x1188] sm:$0xff]
        %v826 = vld [vmem:[%s200 + $0x1190] sm:$0xff]
        %v827 = vld [vmem:[%s200 + $0x1198] sm:$0xff]
        %v828 = vld [vmem:[%s200 + $0x11a0] sm:$0xff]
        %v829 = vld [vmem:[%s200 + $0x11a8] sm:$0xff]
        %v830 = vld [vmem:[%s200 + $0x11b0] sm:$0xff]
        %v831 = vld [vmem:[%s200 + $0x11b8] sm:$0xff]
        %v832 = vld [vmem:[%s200 + $0x11c0] sm:$0xff]
        %v833 = vld [vmem:[%s200 + $0x11c8] sm:$0xff]
        %v834 = vld [vmem:[%s200 + $0x11d0] sm:$0xff]
        %v835 = vld [vmem:[%s200 + $0x11d8] sm:$0xff]
        %v836 = vld [vmem:[%s200 + $0x11e0] sm:$0xff]
        %v837 = vld [vmem:[%s200 + $0x11e8] sm:$0xff]
        %v838 = vld [vmem:[%s200 + $0x11f0] sm:$0xff]
        %v839 = vld [vmem:[%s200 + $0x11f8] sm:$0xff]
        %v840 = vld [vmem:[%s200 + $0x1200] sm:$0xff]
        %v841 = vld [vmem:[%s200 + $0x1208] sm:$0xff]
        %v842 = vld [vmem:[%s200 + $0x1210] sm:$0xff]
        %v843 = vld [vmem:[%s200 + $0x1218] sm:$0xff]
        %v844 = vld [vmem:[%s200 + $0x1220] sm:$0xff]
        %v845 = vld [vmem:[%s200 + $0x1228] sm:$0xff]
        %v846 = vld [vmem:[%s200 + $0x1230] sm:$0xff]
        %v847 = vld [vmem:[%s200 + $0x1238] sm:$0xff]
        %v848 = vld [vmem:[%s200 + $0x1240] sm:$0xff]
        %v849 = vld [vmem:[%s200 + $0x1248] sm:$0xff]
        %v850 = vld [vmem:[%s200 + $0x1250] sm:$0xff]
        %v851 = vld [vmem:[%s200 + $0x1258] sm:$0xff]
        %v852 = vld [vmem:[%s200 + $0x1260] sm:$0xff]
        %v853 = vld [vmem:[%s200 + $0x1268] sm:$0xff]
        %v854 = vld [vmem:[%s200 + $0x1270] sm:$0xff]
        %v855 = vld [vmem:[%s200 + $0x1278] sm:$0xff]
        %v856 = vld [vmem:[%s200 + $0x1280] sm:$0xff]
        %v857 = vld [vmem:[%s200 + $0x1288] sm:$0xff]
        %v858 = vld [vmem:[%s200 + $0x1290] sm:$0xff]
        %v859 = vld [vmem:[%s200 + $0x1298] sm:$0xff]
        %v860 = vld [vmem:[%s200 + $0x12a0] sm:$0xff]
        %v861 = vld [vmem:[%s200 + $0x12a8] sm:$0xff]
        %v862 = vld [vmem:[%s200 + $0x12b0] sm:$0xff]
        %v863 = vld [vmem:[%s200 + $0x12b8] sm:$0xff]
        %v864 = vld [vmem:[%s200 + $0x12c0] sm:$0xff]
        %v865 = vld [vmem:[%s200 + $0x12c8] sm:$0xff]
        %v866 = vld [vmem:[%s200 + $0x12d0] sm:$0xff]
        %v867 = vld [vmem:[%s200 + $0x12d8] sm:$0xff]
        %v868 = vld [vmem:[%s200 + $0x12e0] sm:$0xff]
        %v869 = vld [vmem:[%s200 + $0x12e8] sm:$0xff]
        %v870 = vld [vmem:[%s200 + $0x12f0] sm:$0xff]
        %v871 = vld [vmem:[%s200 + $0x12f8] sm:$0xff]
        %v872 = vld [vmem:[%s200 + $0x1300] sm:$0xff]
        %v873 = vld [vmem:[%s200 + $0x1308] sm:$0xff]
        %v874 = vld [vmem:[%s200 + $0x1310] sm:$0xff]
        %v875 = vld [vmem:[%s200 + $0x1318] sm:$0xff]
        %v876 = vld [vmem:[%s200 + $0x1320] sm:$0xff]
        %v877 = vld [vmem:[%s200 + $0x1328] sm:$0xff]
        %v878 = vld [vmem:[%s200 + $0x1330] sm:$0xff]
        %v879 = vld [vmem:[%s200 + $0x1338] sm:$0xff]
        %v880 = vld [vmem:[%s200 + $0x1340] sm:$0xff]
        %v881 = vld [vmem:[%s200 + $0x1348] sm:$0xff]
        %v882 = vld [vmem:[%s200 + $0x1350] sm:$0xff]
        %v883 = vld [vmem:[%s200 + $0x1358] sm:$0xff]
        %v884 = vld [vmem:[%s200 + $0x1360] sm:$0xff]
        %v885 = vld [vmem:[%s200 + $0x1368] sm:$0xff]
        %v886 = vld [vmem:[%s200 + $0x1370] sm:$0xff]
        %v887 = vld [vmem:[%s200 + $0x1378] sm:$0xff]
        %v888 = vld [vmem:[%s200 + $0x1380] sm:$0xff]
        %v889 = vld [vmem:[%s200 + $0x1388] sm:$0xff]
        %v890 = vld [vmem:[%s200 + $0x1390] sm:$0xff]
        %v891 = vld [vmem:[%s200 + $0x1398] sm:$0xff]
        %v892 = vld [vmem:[%s200 + $0x13a0] sm:$0xff]
        %v893 = vld [vmem:[%s200 + $0x13a8] sm:$0xff]
        %v894 = vld [vmem:[%s200 + $0x13b0] sm:$0xff]
        %v895 = vld [vmem:[%s200 + $0x13b8] sm:$0xff]
        %v896 = vld [vmem:[%s200 + $0x13c0] sm:$0xff]
        %v897 = vld [vmem:[%s200 + $0x13c8] sm:$0xff]
        %v898 = vld [vmem:[%s200 + $0x13d0] sm:$0xff]
        %v899 = vld [vmem:[%s200 + $0x13d8] sm:$0xff]
        %v900 = vld [vmem:[%s200 + $0x13e0] sm:$0xff]
        %v901 = vld [vmem:[%s200 + $0x13e8] sm:$0xff]
        %v902 = vld [vmem:[%s200 + $0x13f0] sm:$0xff]
        %v903 = vld [vmem:[%s200 + $0x13f8] sm:$0xff]
        %v904 = vld [vmem:[%s200 + $0x1400] sm:$0xff]
        %v905 = vld [vmem:[%s200 + $0x1408] sm:$0xff]
        %v906 = vld [vmem:[%s200 + $0x1410] sm:$0xff]
        %v907 = vld [vmem:[%s200 + $0x1418] sm:$0xff]
        %v908 = vld [vmem:[%s200 + $0x1420] sm:$0xff]
        %v909 = vld [vmem:[%s200 + $0x1428] sm:$0xff]
        %v910 = vld [vmem:[%s200 + $0x1430] sm:$0xff]
        %v911 = vld [vmem:[%s200 + $0x1438] sm:$0xff]
        %v912 = vld [vmem:[%s200 + $0x1440] sm:$0xff]
        %v913 = vld [vmem:[%s200 + $0x1448] sm:$0xff]
        %v914 = vld [vmem:[%s200 + $0x1450] sm:$0xff]
        %v915 = vld [vmem:[%s200 + $0x1458] sm:$0xff]
        %v916 = vld [vmem:[%s200 + $0x1460] sm:$0xff]
        %v917 = vld [vmem:[%s200 + $0x1468] sm:$0xff]
        %v918 = vld [vmem:[%s200 + $0x1470] sm:$0xff]
        %v919 = vld [vmem:[%s200 + $0x1478] sm:$0xff]
        %v920 = vld [vmem:[%s200 + $0x1480] sm:$0xff]
        %v921 = vld [vmem:[%s200 + $0x1488] sm:$0xff]
        %v922 = vld [vmem:[%s200 + $0x1490] sm:$0xff]
        %v923 = vld [vmem:[%s200 + $0x1498] sm:$0xff]
        %v924 = vld [vmem:[%s200 + $0x14a0] sm:$0xff]
        %v925 = vld [vmem:[%s200 + $0x14a8] sm:$0xff]
        %v926 = vld [vmem:[%s200 + $0x14b0] sm:$0xff]
        %v927 = vld [vmem:[%s200 + $0x14b8] sm:$0xff]
        %v928 = vld [vmem:[%s200 + $0x14c0] sm:$0xff]
        %v929 = vld [vmem:[%s200 + $0x14c8] sm:$0xff]
        %v930 = vld [vmem:[%s200 + $0x14d0] sm:$0xff]
        %v931 = vld [vmem:[%s200 + $0x14d8] sm:$0xff]
        %v932 = vld [vmem:[%s200 + $0x14e0] sm:$0xff]
        %v933 = vld [vmem:[%s200 + $0x14e8] sm:$0xff]
        %v934 = vld [vmem:[%s200 + $0x14f0] sm:$0xff]
        %v935 = vld [vmem:[%s200 + $0x14f8] sm:$0xff]
        %v936 = vld [vmem:[%s200 + $0x1500] sm:$0xff]
        %v937 = vld [vmem:[%s200 + $0x1508] sm:$0xff]
        %v938 = vld [vmem:[%s200 + $0x1510] sm:$0xff]
        %v939 = vld [vmem:[%s200 + $0x1518] sm:$0xff]
        %v940 = vld [vmem:[%s200 + $0x1520] sm:$0xff]
        %v941 = vld [vmem:[%s200 + $0x1528] sm:$0xff]
        %v942 = vld [vmem:[%s200 + $0x1530] sm:$0xff]
        %v943 = vld [vmem:[%s200 + $0x1538] sm:$0xff]
        %v944 = vld [vmem:[%s200 + $0x1540] sm:$0xff]
        %v945 = vld [vmem:[%s200 + $0x1548] sm:$0xff]
        %v946 = vld [vmem:[%s200 + $0x1550] sm:$0xff]
        %v947 = vld [vmem:[%s200 + $0x1558] sm:$0xff]
        %v948 = vld [vmem:[%s200 + $0x1560] sm:$0xff]
        %v949 = vld [vmem:[%s200 + $0x1568] sm:$0xff]
        %v950 = vld [vmem:[%s200 + $0x1570] sm:$0xff]
        %v951 = vld [vmem:[%s200 + $0x1578] sm:$0xff]
        %v952 = vld [vmem:[%s200 + $0x1580] sm:$0xff]
        %v953 = vld [vmem:[%s200 + $0x1588] sm:$0xff]
        %v954 = vld [vmem:[%s200 + $0x1590] sm:$0xff]
        %v955 = vld [vmem:[%s200 + $0x1598] sm:$0xff]
        %v956 = vld [vmem:[%s200 + $0x15a0] sm:$0xff]
        %v957 = vld [vmem:[%s200 + $0x15a8] sm:$0xff]
        %v958 = vld [vmem:[%s200 + $0x15b0] sm:$0xff]
        %v959 = vld [vmem:[%s200 + $0x15b8] sm:$0xff]
        %v960 = vld [vmem:[%s200 + $0x15c0] sm:$0xff]
        %v961 = vld [vmem:[%s200 + $0x15c8] sm:$0xff]
        %v962 = vld [vmem:[%s200 + $0x15d0] sm:$0xff]
        %v963 = vld [vmem:[%s200 + $0x15d8] sm:$0xff]
        %v964 = vld [vmem:[%s200 + $0x15e0] sm:$0xff]
        %v965 = vld [vmem:[%s200 + $0x15e8] sm:$0xff]
        %v966 = vld [vmem:[%s200 + $0x15f0] sm:$0xff]
        %v967 = vld [vmem:[%s200 + $0x15f8] sm:$0xff]
        %v968 = vld [vmem:[%s200 + $0x1600] sm:$0xff]
        %v969 = vld [vmem:[%s200 + $0x1608] sm:$0xff]
        %v970 = vld [vmem:[%s200 + $0x1610] sm:$0xff]
        %v971 = vld [vmem:[%s200 + $0x1618] sm:$0xff]
        %v972 = vld [vmem:[%s200 + $0x1620] sm:$0xff]
        %v973 = vld [vmem:[%s200 + $0x1628] sm:$0xff]
        %v974 = vld [vmem:[%s200 + $0x1630] sm:$0xff]
        %v975 = vld [vmem:[%s200 + $0x1638] sm:$0xff]
        %v976 = vld [vmem:[%s200 + $0x1640] sm:$0xff]
        %v977 = vld [vmem:[%s200 + $0x1648] sm:$0xff]
        %v978 = vld [vmem:[%s200 + $0x1650] sm:$0xff]
        %v979 = vld [vmem:[%s200 + $0x1658] sm:$0xff]
        %v980 = vld [vmem:[%s200 + $0x1660] sm:$0xff]
        %v981 = vld [vmem:[%s200 + $0x1668] sm:$0xff]
        %v982 = vld [vmem:[%s200 + $0x1670] sm:$0xff]
        %v983 = vld [vmem:[%s200 + $0x1678] sm:$0xff]
        %v984 = vld [vmem:[%s200 + $0x1680] sm:$0xff]
        %v985 = vld [vmem:[%s200 + $0x1688] sm:$0xff]
        %v986 = vld [vmem:[%s200 + $0x1690] sm:$0xff]
        %v987 = vld [vmem:[%s200 + $0x1698] sm:$0xff]
        %v988 = vld [vmem:[%s200 + $0x16a0] sm:$0xff]
        %v989 = vld [vmem:[%s200 + $0x16a8] sm:$0xff]
        %v990 = vld [vmem:[%s200 + $0x16b0] sm:$0xff]
        %v991 = vld [vmem:[%s200 + $0x16b8] sm:$0xff]
        %v992 = vld [vmem:[%s200 + $0x16c0] sm:$0xff]
        %v993 = vld [vmem:[%s200 + $0x16c8] sm:$0xff]
        %v994 = vld [vmem:[%s200 + $0x16d0] sm:$0xff]
        %v995 = vld [vmem:[%s200 + $0x16d8] sm:$0xff]
        %v996 = vld [vmem:[%s200 + $0x16e0] sm:$0xff]
        %v997 = vld [vmem:[%s200 + $0x16e8] sm:$0xff]
        %v998 = vld [vmem:[%s200 + $0x16f0] sm:$0xff]
        %v999 = vld [vmem:[%s200 + $0x16f8] sm:$0xff]
        %v1000 = vld [vmem:[%s200 + $0x1700] sm:$0xff]
        %v1001 = vld [vmem:[%s200 + $0x1708] sm:$0xff]
        %v1002 = vld [vmem:[%s200 + $0x1710] sm:$0xff]
        %v1003 = vld [vmem:[%s200 + $0x1718] sm:$0xff]
        %v1004 = vld [vmem:[%s200 + $0x1720] sm:$0xff]
        %v1005 = vld [vmem:[%s200 + $0x1728] sm:$0xff]
        %v1006 = vld [vmem:[%s200 + $0x1730] sm:$0xff]
        %v1007 = vld [vmem:[%s200 + $0x1738] sm:$0xff]
        %v1008 = vld [vmem:[%s200 + $0x1740] sm:$0xff]
        %v1009 = vld [vmem:[%s200 + $0x1748] sm:$0xff]
        %v1010 = vld [vmem:[%s200 + $0x1750] sm:$0xff]
        %v1011 = vld [vmem:[%s200 + $0x1758] sm:$0xff]
        %v1012 = vld [vmem:[%s200 + $0x1760] sm:$0xff]
        %v1013 = vld [vmem:[%s200 + $0x1768] sm:$0xff]
        %v1014 = vld [vmem:[%s200 + $0x1770] sm:$0xff]
        %v1015 = vld [vmem:[%s200 + $0x1778] sm:$0xff]
        %v1016 = vld [vmem:[%s200 + $0x1780] sm:$0xff]
        %v1017 = vld [vmem:[%s200 + $0x1788] sm:$0xff]
        %v1018 = vld [vmem:[%s200 + $0x1790] sm:$0xff]
        %v1019 = vld [vmem:[%s200 + $0x1798] sm:$0xff]
        %v1020 = vld [vmem:[%s200 + $0x17a0] sm:$0xff]
        %v1021 = vld [vmem:[%s200 + $0x17a8] sm:$0xff]
        %v1022 = vld [vmem:[%s200 + $0x17b0] sm:$0xff]
        %v1023 = vld [vmem:[%s200 + $0x17b8] sm:$0xff]
        %v1024 = vld [vmem:[%s200 + $0x17c0] sm:$0xff]
        %v1025 = vld [vmem:[%s200 + $0x17c8] sm:$0xff]
        %v1026 = vld [vmem:[%s200 + $0x17d0] sm:$0xff]
        %v1027 = vld [vmem:[%s200 + $0x17d8] sm:$0xff]
        %v1028 = vld [vmem:[%s200 + $0x17e0] sm:$0xff]
        %v1029 = vld [vmem:[%s200 + $0x17e8] sm:$0xff]
        %v1030 = vld [vmem:[%s200 + $0x17f0] sm:$0xff]
        %v1031 = vld [vmem:[%s200 + $0x17f8] sm:$0xff]
        %v1032 = vld [vmem:[%s200 + $0x1800] sm:$0xff]
        %v1033 = vld [vmem:[%s200 + $0x1808] sm:$0xff]
        %v1034 = vld [vmem:[%s200 + $0x1810] sm:$0xff]
        %v1035 = vld [vmem:[%s200 + $0x1818] sm:$0xff]
        %v1036 = vld [vmem:[%s200 + $0x1820] sm:$0xff]
        %v1037 = vld [vmem:[%s200 + $0x1828] sm:$0xff]
        %v1038 = vld [vmem:[%s200 + $0x1830] sm:$0xff]
        %v1039 = vld [vmem:[%s200 + $0x1838] sm:$0xff]
        %v1040 = vld [vmem:[%s200 + $0x1840] sm:$0xff]
        %v1041 = vld [vmem:[%s200 + $0x1848] sm:$0xff]
        %v1042 = vld [vmem:[%s200 + $0x1850] sm:$0xff]
        %v1043 = vld [vmem:[%s200 + $0x1858] sm:$0xff]
        %v1044 = vld [vmem:[%s200 + $0x1860] sm:$0xff]
        %v1045 = vld [vmem:[%s200 + $0x1868] sm:$0xff]
        %v1046 = vld [vmem:[%s200 + $0x1870] sm:$0xff]
        %v1047 = vld [vmem:[%s200 + $0x1878] sm:$0xff]
        %v1048 = vld [vmem:[%s200 + $0x1880] sm:$0xff]
        %v1049 = vld [vmem:[%s200 + $0x1888] sm:$0xff]
        %v1050 = vld [vmem:[%s200 + $0x1890] sm:$0xff]
        %v1051 = vld [vmem:[%s200 + $0x1898] sm:$0xff]
        %v1052 = vld [vmem:[%s200 + $0x18a0] sm:$0xff]
        %v1053 = vld [vmem:[%s200 + $0x18a8] sm:$0xff]
        %v1054 = vld [vmem:[%s200 + $0x18b0] sm:$0xff]
        %v1055 = vld [vmem:[%s200 + $0x18b8] sm:$0xff]
        %v1056 = vld [vmem:[%s200 + $0x18c0] sm:$0xff]
        %v1057 = vld [vmem:[%s200 + $0x18c8] sm:$0xff]
        %v1058 = vld [vmem:[%s200 + $0x18d0] sm:$0xff]
        %v1059 = vld [vmem:[%s200 + $0x18d8] sm:$0xff]
        %v1060 = vld [vmem:[%s200 + $0x18e0] sm:$0xff]
        %v1061 = vld [vmem:[%s200 + $0x18e8] sm:$0xff]
        %v1062 = vld [vmem:[%s200 + $0x18f0] sm:$0xff]
        %v1063 = vld [vmem:[%s200 + $0x18f8] sm:$0xff]
        %v1064 = vld [vmem:[%s200 + $0x1900] sm:$0xff]
        %v1065 = vld [vmem:[%s200 + $0x1908] sm:$0xff]
        %v1066 = vld [vmem:[%s200 + $0x1910] sm:$0xff]
        %v1067 = vld [vmem:[%s200 + $0x1918] sm:$0xff]
        %v1068 = vld [vmem:[%s200 + $0x1920] sm:$0xff]
        %v1069 = vld [vmem:[%s200 + $0x1928] sm:$0xff]
        %v1070 = vld [vmem:[%s200 + $0x1930] sm:$0xff]
        %v1071 = vld [vmem:[%s200 + $0x1938] sm:$0xff]
        %v1072 = vld [vmem:[%s200 + $0x1940] sm:$0xff]
        %v1073 = vld [vmem:[%s200 + $0x1948] sm:$0xff]
        %v1074 = vld [vmem:[%s200 + $0x1950] sm:$0xff]
        %v1075 = vld [vmem:[%s200 + $0x1958] sm:$0xff]
        %v1076 = vld [vmem:[%s200 + $0x1960] sm:$0xff]
        %v1077 = vld [vmem:[%s200 + $0x1968] sm:$0xff]
        %v1078 = vld [vmem:[%s200 + $0x1970] sm:$0xff]
        %v1079 = vld [vmem:[%s200 + $0x1978] sm:$0xff]
        %v1080 = vld [vmem:[%s200 + $0x1980] sm:$0xff]
        %v1081 = vld [vmem:[%s200 + $0x1988] sm:$0xff]
        %v1082 = vld [vmem:[%s200 + $0x1990] sm:$0xff]
        %v1083 = vld [vmem:[%s200 + $0x1998] sm:$0xff]
        %v1084 = vld [vmem:[%s200 + $0x19a0] sm:$0xff]
        %v1085 = vld [vmem:[%s200 + $0x19a8] sm:$0xff]
        %v1086 = vld [vmem:[%s200 + $0x19b0] sm:$0xff]
        %v1087 = vld [vmem:[%s200 + $0x19b8] sm:$0xff]
        %v1088 = vld [vmem:[%s200 + $0x19c0] sm:$0xff]
        %v1089 = vld [vmem:[%s200 + $0x19c8] sm:$0xff]
        %v1090 = vld [vmem:[%s200 + $0x19d0] sm:$0xff]
        %v1091 = vld [vmem:[%s200 + $0x19d8] sm:$0xff]
        %v1092 = vld [vmem:[%s200 + $0x19e0] sm:$0xff]
        %v1093 = vld [vmem:[%s200 + $0x19e8] sm:$0xff]
        %v1094 = vld [vmem:[%s200 + $0x19f0] sm:$0xff]
        %v1095 = vld [vmem:[%s200 + $0x19f8] sm:$0xff]
        %v1096 = vld [vmem:[%s200 + $0x1a00] sm:$0xff]
        %v1097 = vld [vmem:[%s200 + $0x1a08] sm:$0xff]
        %v1098 = vld [vmem:[%s200 + $0x1a10] sm:$0xff]
        %v1099 = vld [vmem:[%s200 + $0x1a18] sm:$0xff]
        %v1100 = vld [vmem:[%s200 + $0x1a20] sm:$0xff]
        %v1101 = vld [vmem:[%s200 + $0x1a28] sm:$0xff]
        %v1102 = vld [vmem:[%s200 + $0x1a30] sm:$0xff]
        %v1103 = vld [vmem:[%s200 + $0x1a38] sm:$0xff]
        %v1104 = vld [vmem:[%s200 + $0x1a40] sm:$0xff]
        %v1105 = vld [vmem:[%s200 + $0x1a48] sm:$0xff]
        %v1106 = vld [vmem:[%s200 + $0x1a50] sm:$0xff]
        %v1107 = vld [vmem:[%s200 + $0x1a58] sm:$0xff]
        %v1108 = vld [vmem:[%s200 + $0x1a60] sm:$0xff]
        %v1109 = vld [vmem:[%s200 + $0x1a68] sm:$0xff]
        %v1110 = vld [vmem:[%s200 + $0x1a70] sm:$0xff]
        %v1111 = vld [vmem:[%s200 + $0x1a78] sm:$0xff]
        %v1112 = vld [vmem:[%s200 + $0x1a80] sm:$0xff]
        %v1113 = vld [vmem:[%s200 + $0x1a88] sm:$0xff]
        %v1114 = vld [vmem:[%s200 + $0x1a90] sm:$0xff]
        %v1115 = vld [vmem:[%s200 + $0x1a98] sm:$0xff]
        %v1116 = vld [vmem:[%s200 + $0x1aa0] sm:$0xff]
        %v1117 = vld [vmem:[%s200 + $0x1aa8] sm:$0xff]
        %v1118 = vld [vmem:[%s200 + $0x1ab0] sm:$0xff]
        %v1119 = vld [vmem:[%s200 + $0x1ab8] sm:$0xff]
        %v1120 = vld [vmem:[%s200 + $0x1ac0] sm:$0xff]
        %v1121 = vld [vmem:[%s200 + $0x1ac8] sm:$0xff]
        %v1122 = vld [vmem:[%s200 + $0x1ad0] sm:$0xff]
        %v1123 = vld [vmem:[%s200 + $0x1ad8] sm:$0xff]
        %v1124 = vld [vmem:[%s200 + $0x1ae0] sm:$0xff]
        %v1125 = vld [vmem:[%s200 + $0x1ae8] sm:$0xff]
        %v1126 = vld [vmem:[%s200 + $0x1af0] sm:$0xff]
        %v1127 = vld [vmem:[%s200 + $0x1af8] sm:$0xff]
        %v1128 = vld [vmem:[%s200 + $0x1b00] sm:$0xff]
        %v1129 = vld [vmem:[%s200 + $0x1b08] sm:$0xff]
        %v1130 = vld [vmem:[%s200 + $0x1b10] sm:$0xff]
        %v1131 = vld [vmem:[%s200 + $0x1b18] sm:$0xff]
        %v1132 = vld [vmem:[%s200 + $0x1b20] sm:$0xff]
        %v1133 = vld [vmem:[%s200 + $0x1b28] sm:$0xff]
        %v1134 = vld [vmem:[%s200 + $0x1b30] sm:$0xff]
        %v1135 = vld [vmem:[%s200 + $0x1b38] sm:$0xff]
        %v1136 = vld [vmem:[%s200 + $0x1b40] sm:$0xff]
        %v1137 = vld [vmem:[%s200 + $0x1b48] sm:$0xff]
        %v1138 = vld [vmem:[%s200 + $0x1b50] sm:$0xff]
        %v1139 = vld [vmem:[%s200 + $0x1b58] sm:$0xff]
        %v1140 = vld [vmem:[%s200 + $0x1b60] sm:$0xff]
        %v1141 = vld [vmem:[%s200 + $0x1b68] sm:$0xff]
        %v1142 = vld [vmem:[%s200 + $0x1b70] sm:$0xff]
        %v1143 = vld [vmem:[%s200 + $0x1b78] sm:$0xff]
        %v1144 = vld [vmem:[%s200 + $0x1b80] sm:$0xff]
        %v1145 = vld [vmem:[%s200 + $0x1b88] sm:$0xff]
        %v1146 = vld [vmem:[%s200 + $0x1b90] sm:$0xff]
        %v1147 = vld [vmem:[%s200 + $0x1b98] sm:$0xff]
        %v1148 = vld [vmem:[%s200 + $0x1ba0] sm:$0xff]
        %v1149 = vld [vmem:[%s200 + $0x1ba8] sm:$0xff]
        %v1150 = vld [vmem:[%s200 + $0x1bb0] sm:$0xff]
        %v1151 = vld [vmem:[%s200 + $0x1bb8] sm:$0xff]
        %v1152 = vld [vmem:[%s200 + $0x1bc0] sm:$0xff]
        %v1153 = vld [vmem:[%s200 + $0x1bc8] sm:$0xff]
        %v1154 = vld [vmem:[%s200 + $0x1bd0] sm:$0xff]
        %v1155 = vld [vmem:[%s200 + $0x1bd8] sm:$0xff]
        %v1156 = vld [vmem:[%s200 + $0x1be0] sm:$0xff]
        %v1157 = vld [vmem:[%s200 + $0x1be8] sm:$0xff]
        %v1158 = vld [vmem:[%s200 + $0x1bf0] sm:$0xff]
        %v1159 = vld [vmem:[%s200 + $0x1bf8] sm:$0xff]
        %v1160 = vld [vmem:[%s200 + $0x1c00] sm:$0xff]
        %v1161 = vld [vmem:[%s200 + $0x1c08] sm:$0xff]
        %v1162 = vld [vmem:[%s200 + $0x1c10] sm:$0xff]
        %v1163 = vld [vmem:[%s200 + $0x1c18] sm:$0xff]
        %v1164 = vld [vmem:[%s200 + $0x1c20] sm:$0xff]
        %v1165 = vld [vmem:[%s200 + $0x1c28] sm:$0xff]
        %v1166 = vld [vmem:[%s200 + $0x1c30] sm:$0xff]
        %v1167 = vld [vmem:[%s200 + $0x1c38] sm:$0xff]
        %v1168 = vld [vmem:[%s200 + $0x1c40] sm:$0xff]
        %v1169 = vld [vmem:[%s200 + $0x1c48] sm:$0xff]
        %v1170 = vld [vmem:[%s200 + $0x1c50] sm:$0xff]
        %v1171 = vld [vmem:[%s200 + $0x1c58] sm:$0xff]
        %v1172 = vld [vmem:[%s200 + $0x1c60] sm:$0xff]
        %v1173 = vld [vmem:[%s200 + $0x1c68] sm:$0xff]
        %v1174 = vld [vmem:[%s200 + $0x1c70] sm:$0xff]
        %v1175 = vld [vmem:[%s200 + $0x1c78] sm:$0xff]
        %v1176 = vld [vmem:[%s200 + $0x1c80] sm:$0xff]
        %v1177 = vld [vmem:[%s200 + $0x1c88] sm:$0xff]
        %v1178 = vld [vmem:[%s200 + $0x1c90] sm:$0xff]
        %v1179 = vld [vmem:[%s200 + $0x1c98] sm:$0xff]
        %v1180 = vld [vmem:[%s200 + $0x1ca0] sm:$0xff]
        %v1181 = vld [vmem:[%s200 + $0x1ca8] sm:$0xff]
        %v1182 = vld [vmem:[%s200 + $0x1cb0] sm:$0xff]
        %v1183 = vld [vmem:[%s200 + $0x1cb8] sm:$0xff]
        %v1184 = vld [vmem:[%s200 + $0x1cc0] sm:$0xff]
        %v1185 = vld [vmem:[%s200 + $0x1cc8] sm:$0xff]
        %v1186 = vld [vmem:[%s200 + $0x1cd0] sm:$0xff]
        %v1187 = vld [vmem:[%s200 + $0x1cd8] sm:$0xff]
        %v1188 = vld [vmem:[%s200 + $0x1ce0] sm:$0xff]
        %v1189 = vld [vmem:[%s200 + $0x1ce8] sm:$0xff]
        %v1190 = vld [vmem:[%s200 + $0x1cf0] sm:$0xff]
        %v1191 = vld [vmem:[%s200 + $0x1cf8] sm:$0xff]
        %v1192 = vld [vmem:[%s200 + $0x1d00] sm:$0xff]
        %v1193 = vld [vmem:[%s200 + $0x1d08] sm:$0xff]
        %v1194 = vld [vmem:[%s200 + $0x1d10] sm:$0xff]
        %v1195 = vld [vmem:[%s200 + $0x1d18] sm:$0xff]
        %v1196 = vld [vmem:[%s200 + $0x1d20] sm:$0xff]
        %v1197 = vld [vmem:[%s200 + $0x1d28] sm:$0xff]
        %v1198 = vld [vmem:[%s200 + $0x1d30] sm:$0xff]
        %v1199 = vld [vmem:[%s200 + $0x1d38] sm:$0xff]
        %v1200 = vld [vmem:[%s200 + $0x1d40] sm:$0xff]
        %v1201 = vld [vmem:[%s200 + $0x1d48] sm:$0xff]
        %v1202 = vld [vmem:[%s200 + $0x1d50] sm:$0xff]
        %v1203 = vld [vmem:[%s200 + $0x1d58] sm:$0xff]
        %v1204 = vld [vmem:[%s200 + $0x1d60] sm:$0xff]
        %v1205 = vld [vmem:[%s200 + $0x1d68] sm:$0xff]
        %v1206 = vld [vmem:[%s200 + $0x1d70] sm:$0xff]
        %v1207 = vld [vmem:[%s200 + $0x1d78] sm:$0xff]
        %v1208 = vld [vmem:[%s200 + $0x1d80] sm:$0xff]
        %v1209 = vld [vmem:[%s200 + $0x1d88] sm:$0xff]
        %v1210 = vld [vmem:[%s200 + $0x1d90] sm:$0xff]
        %v1211 = vld [vmem:[%s200 + $0x1d98] sm:$0xff]
        %v1212 = vld [vmem:[%s200 + $0x1da0] sm:$0xff]
        %v1213 = vld [vmem:[%s200 + $0x1da8] sm:$0xff]
        %v1214 = vld [vmem:[%s200 + $0x1db0] sm:$0xff]
        %v1215 = vld [vmem:[%s200 + $0x1db8] sm:$0xff]
        %v1216 = vld [vmem:[%s200 + $0x1dc0] sm:$0xff]
        %v1217 = vld [vmem:[%s200 + $0x1dc8] sm:$0xff]
        %v1218 = vld [vmem:[%s200 + $0x1dd0] sm:$0xff]
        %v1219 = vld [vmem:[%s200 + $0x1dd8] sm:$0xff]
        %v1220 = vld [vmem:[%s200 + $0x1de0] sm:$0xff]
        %v1221 = vld [vmem:[%s200 + $0x1de8] sm:$0xff]
        %v1222 = vld [vmem:[%s200 + $0x1df0] sm:$0xff]
        %v1223 = vld [vmem:[%s200 + $0x1df8] sm:$0xff]
        %v1224 = vld [vmem:[%s200 + $0x1e00] sm:$0xff]
        %v1225 = vld [vmem:[%s200 + $0x1e08] sm:$0xff]
        %v1226 = vld [vmem:[%s200 + $0x1e10] sm:$0xff]
        %v1227 = vld [vmem:[%s200 + $0x1e18] sm:$0xff]
        %v1228 = vld [vmem:[%s200 + $0x1e20] sm:$0xff]
        %v1229 = vld [vmem:[%s200 + $0x1e28] sm:$0xff]
        %v1230 = vld [vmem:[%s200 + $0x1e30] sm:$0xff]
        %v1231 = vld [vmem:[%s200 + $0x1e38] sm:$0xff]
        %v1232 = vld [vmem:[%s200 + $0x1e40] sm:$0xff]
        %v1233 = vld [vmem:[%s200 + $0x1e48] sm:$0xff]
        %v1234 = vld [vmem:[%s200 + $0x1e50] sm:$0xff]
        %v1235 = vld [vmem:[%s200 + $0x1e58] sm:$0xff]
        %v1236 = vld [vmem:[%s200 + $0x1e60] sm:$0xff]
        %v1237 = vld [vmem:[%s200 + $0x1e68] sm:$0xff]
        %v1238 = vld [vmem:[%s200 + $0x1e70] sm:$0xff]
        %v1239 = vld [vmem:[%s200 + $0x1e78] sm:$0xff]
        %v1240 = vld [vmem:[%s200 + $0x1e80] sm:$0xff]
        %v1241 = vld [vmem:[%s200 + $0x1e88] sm:$0xff]
        %v1242 = vld [vmem:[%s200 + $0x1e90] sm:$0xff]
        %v1243 = vld [vmem:[%s200 + $0x1e98] sm:$0xff]
        %v1244 = vld [vmem:[%s200 + $0x1ea0] sm:$0xff]
        %v1245 = vld [vmem:[%s200 + $0x1ea8] sm:$0xff]
        %v1246 = vld [vmem:[%s200 + $0x1eb0] sm:$0xff]
        %v1247 = vld [vmem:[%s200 + $0x1eb8] sm:$0xff]
        %v1248 = vld [vmem:[%s200 + $0x1ec0] sm:$0xff]
        %v1249 = vld [vmem:[%s200 + $0x1ec8] sm:$0xff]
        %v1250 = vld [vmem:[%s200 + $0x1ed0] sm:$0xff]
        %v1251 = vld [vmem:[%s200 + $0x1ed8] sm:$0xff]
        %v1252 = vld [vmem:[%s200 + $0x1ee0] sm:$0xff]
        %v1253 = vld [vmem:[%s200 + $0x1ee8] sm:$0xff]
        %v1254 = vld [vmem:[%s200 + $0x1ef0] sm:$0xff]
        %v1255 = vld [vmem:[%s200 + $0x1ef8] sm:$0xff]
        %v1256 = vld [vmem:[%s200 + $0x1f00] sm:$0xff]
        %v1257 = vld [vmem:[%s200 + $0x1f08] sm:$0xff]
        %v1258 = vld [vmem:[%s200 + $0x1f10] sm:$0xff]
        %v1259 = vld [vmem:[%s200 + $0x1f18] sm:$0xff]
        %v1260 = vld [vmem:[%s200 + $0x1f20] sm:$0xff]
        %v1261 = vld [vmem:[%s200 + $0x1f28] sm:$0xff]
        %v1262 = vld [vmem:[%s200 + $0x1f30] sm:$0xff]
        %v1263 = vld [vmem:[%s200 + $0x1f38] sm:$0xff]
        %v1264 = vld [vmem:[%s200 + $0x1f40] sm:$0xff]
        %v1265 = vld [vmem:[%s200 + $0x1f48] sm:$0xff]
        %v1266 = vld [vmem:[%s200 + $0x1f50] sm:$0xff]
        %v1267 = vld [vmem:[%s200 + $0x1f58] sm:$0xff]
        %v1268 = vld [vmem:[%s200 + $0x1f60] sm:$0xff]
        %v1269 = vld [vmem:[%s200 + $0x1f68] sm:$0xff]
        %v1270 = vld [vmem:[%s200 + $0x1f70] sm:$0xff]
        %v1271 = vld [vmem:[%s200 + $0x1f78] sm:$0xff]
        %v1272 = vld [vmem:[%s200 + $0x1f80] sm:$0xff]
        %v1273 = vld [vmem:[%s200 + $0x1f88] sm:$0xff]
        %v1274 = vld [vmem:[%s200 + $0x1f90] sm:$0xff]
        %v1275 = vld [vmem:[%s200 + $0x1f98] sm:$0xff]
        %v1276 = vld [vmem:[%s200 + $0x1fa0] sm:$0xff]
        %v1277 = vld [vmem:[%s200 + $0x1fa8] sm:$0xff]
        %v1278 = vld [vmem:[%s200 + $0x1fb0] sm:$0xff]
        %v1279 = vld [vmem:[%s200 + $0x1fb8] sm:$0xff]
        %v1280 = vld [vmem:[%s200 + $0x1fc0] sm:$0xff]
        %v1281 = vld [vmem:[%s200 + $0x1fc8] sm:$0xff]
        %v1282 = vld [vmem:[%s200 + $0x1fd0] sm:$0xff]
        %v1283 = vld [vmem:[%s200 + $0x1fd8] sm:$0xff]
        %v1284 = vld [vmem:[%s200 + $0x1fe0] sm:$0xff]
        %v1285 = vld [vmem:[%s200 + $0x1fe8] sm:$0xff]
        %v1286 = vld [vmem:[%s200 + $0x1ff0] sm:$0xff]
        %v1287 = vld [vmem:[%s200 + $0x1ff8] sm:$0xff]
        %v1288 = vld [vmem:[%s209] sm:$0xff]
        %v1289 = vld [vmem:[%s209 + $0x8] sm:$0xff]
        %v1290 = vld [vmem:[%s209 + $0x10] sm:$0xff]
        %v1291 = vld [vmem:[%s209 + $0x18] sm:$0xff]
        %v1296 = vlaneseq
        %v1297 = vshrl.u32 %v1296, 7
        %v1298 = vsub.s32 0, %v1297
        %v1299 = vrot.slane %v1288, %v1298
        %v1300 = vlaneseq
        %v1301 = vshrl.u32 %v1300, 7
        %v1302 = vsub.s32 1, %v1301
        %v1303 = vrot.slane %v1288, %v1302
        %v1304 = vlaneseq
        %v1305 = vshrl.u32 %v1304, 7
        %v1306 = vsub.s32 2, %v1305
        %v1307 = vrot.slane %v1288, %v1306
        %v1308 = vlaneseq
        %v1309 = vshrl.u32 %v1308, 7
        %v1310 = vsub.s32 3, %v1309
        %v1311 = vrot.slane %v1288, %v1310
        %v1312 = vlaneseq
        %v1313 = vshrl.u32 %v1312, 7
        %v1314 = vsub.s32 4, %v1313
        %v1315 = vrot.slane %v1288, %v1314
        %v1316 = vlaneseq
        %v1317 = vshrl.u32 %v1316, 7
        %v1318 = vsub.s32 5, %v1317
        %v1319 = vrot.slane %v1288, %v1318
        %v1320 = vlaneseq
        %v1321 = vshrl.u32 %v1320, 7
        %v1322 = vsub.s32 6, %v1321
        %v1323 = vrot.slane %v1288, %v1322
        %v1324 = vlaneseq
        %v1325 = vshrl.u32 %v1324, 7
        %v1326 = vsub.s32 7, %v1325
        %v1327 = vrot.slane %v1288, %v1326
        %v1328 = vlaneseq
        %v1329 = vshrl.u32 %v1328, 7
        %v1330 = vsub.s32 0, %v1329
        %v1331 = vrot.slane %v1289, %v1330
        %v1332 = vlaneseq
        %v1333 = vshrl.u32 %v1332, 7
        %v1334 = vsub.s32 1, %v1333
        %v1335 = vrot.slane %v1289, %v1334
        %v1336 = vlaneseq
        %v1337 = vshrl.u32 %v1336, 7
        %v1338 = vsub.s32 2, %v1337
        %v1339 = vrot.slane %v1289, %v1338
        %v1340 = vlaneseq
        %v1341 = vshrl.u32 %v1340, 7
        %v1342 = vsub.s32 3, %v1341
        %v1343 = vrot.slane %v1289, %v1342
        %v1344 = vlaneseq
        %v1345 = vshrl.u32 %v1344, 7
        %v1346 = vsub.s32 4, %v1345
        %v1347 = vrot.slane %v1289, %v1346
        %v1348 = vlaneseq
        %v1349 = vshrl.u32 %v1348, 7
        %v1350 = vsub.s32 5, %v1349
        %v1351 = vrot.slane %v1289, %v1350
        %v1352 = vlaneseq
        %v1353 = vshrl.u32 %v1352, 7
        %v1354 = vsub.s32 6, %v1353
        %v1355 = vrot.slane %v1289, %v1354
        %v1356 = vlaneseq
        %v1357 = vshrl.u32 %v1356, 7
        %v1358 = vsub.s32 7, %v1357
        %v1359 = vrot.slane %v1289, %v1358
        %v1360 = vlaneseq
        %v1361 = vshrl.u32 %v1360, 7
        %v1362 = vsub.s32 0, %v1361
        %v1363 = vrot.slane %v1290, %v1362
        %v1364 = vlaneseq
        %v1365 = vshrl.u32 %v1364, 7
        %v1366 = vsub.s32 1, %v1365
        %v1367 = vrot.slane %v1290, %v1366
        %v1368 = vlaneseq
        %v1369 = vshrl.u32 %v1368, 7
        %v1370 = vsub.s32 2, %v1369
        %v1371 = vrot.slane %v1290, %v1370
        %v1372 = vlaneseq
        %v1373 = vshrl.u32 %v1372, 7
        %v1374 = vsub.s32 3, %v1373
        %v1375 = vrot.slane %v1290, %v1374
        %v1376 = vlaneseq
        %v1377 = vshrl.u32 %v1376, 7
        %v1378 = vsub.s32 4, %v1377
        %v1379 = vrot.slane %v1290, %v1378
        %v1380 = vlaneseq
        %v1381 = vshrl.u32 %v1380, 7
        %v1382 = vsub.s32 5, %v1381
        %v1383 = vrot.slane %v1290, %v1382
        %v1384 = vlaneseq
        %v1385 = vshrl.u32 %v1384, 7
        %v1386 = vsub.s32 6, %v1385
        %v1387 = vrot.slane %v1290, %v1386
        %v1388 = vlaneseq
        %v1389 = vshrl.u32 %v1388, 7
        %v1390 = vsub.s32 7, %v1389
        %v1391 = vrot.slane %v1290, %v1390
        %v1392 = vlaneseq
        %v1393 = vshrl.u32 %v1392, 7
        %v1394 = vsub.s32 0, %v1393
        %v1395 = vrot.slane %v1291, %v1394
        %v1396 = vlaneseq
        %v1397 = vshrl.u32 %v1396, 7
        %v1398 = vsub.s32 1, %v1397
        %v1399 = vrot.slane %v1291, %v1398
        %v1400 = vlaneseq
        %v1401 = vshrl.u32 %v1400, 7
        %v1402 = vsub.s32 2, %v1401
        %v1403 = vrot.slane %v1291, %v1402
        %v1404 = vlaneseq
        %v1405 = vshrl.u32 %v1404, 7
        %v1406 = vsub.s32 3, %v1405
        %v1407 = vrot.slane %v1291, %v1406
        %v1408 = vlaneseq
        %v1409 = vshrl.u32 %v1408, 7
        %v1410 = vsub.s32 4, %v1409
        %v1411 = vrot.slane %v1291, %v1410
        %v1412 = vlaneseq
        %v1413 = vshrl.u32 %v1412, 7
        %v1414 = vsub.s32 5, %v1413
        %v1415 = vrot.slane %v1291, %v1414
        %v1416 = vlaneseq
        %v1417 = vshrl.u32 %v1416, 7
        %v1418 = vsub.s32 6, %v1417
        %v1419 = vrot.slane %v1291, %v1418
        %v1420 = vlaneseq
        %v1421 = vshrl.u32 %v1420, 7
        %v1422 = vsub.s32 7, %v1421
        %v1423 = vrot.slane %v1291, %v1422
        %v2480 = vunpack.c.l.b16 %v264
        %v2481 = vunpack.c.h.b16 %v264
        %v2482 = vunpack.c.l.b16 %v265
        %v2483 = vunpack.c.h.b16 %v265
        %v2484 = vunpack.c.l.b16 %v266
        %v2485 = vunpack.c.h.b16 %v266
        %v2486 = vunpack.c.l.b16 %v267
        %v2487 = vunpack.c.h.b16 %v267
        %v2488 = vunpack.c.l.b16 %v268
        %v2489 = vunpack.c.h.b16 %v268
        %v2490 = vunpack.c.l.b16 %v269
        %v2491 = vunpack.c.h.b16 %v269
        %v2492 = vunpack.c.l.b16 %v270
        %v2493 = vunpack.c.h.b16 %v270
        %v2494 = vunpack.c.l.b16 %v271
        %v2495 = vunpack.c.h.b16 %v271
        %v2496 = vunpack.c.l.b16 %v272
        %v2497 = vunpack.c.h.b16 %v272
        %v2498 = vunpack.c.l.b16 %v273
        %v2499 = vunpack.c.h.b16 %v273
        %v2500 = vunpack.c.l.b16 %v274
        %v2501 = vunpack.c.h.b16 %v274
        %v2502 = vunpack.c.l.b16 %v275
        %v2503 = vunpack.c.h.b16 %v275
        %v2504 = vunpack.c.l.b16 %v276
        %v2505 = vunpack.c.h.b16 %v276
        %v2506 = vunpack.c.l.b16 %v277
        %v2507 = vunpack.c.h.b16 %v277
        %v2508 = vunpack.c.l.b16 %v278
        %v2509 = vunpack.c.h.b16 %v278
        %v2510 = vunpack.c.l.b16 %v279
        %v2511 = vunpack.c.h.b16 %v279
        %v2512 = vunpack.c.l.b16 %v280
        %v2513 = vunpack.c.h.b16 %v280
        %v2514 = vunpack.c.l.b16 %v281
        %v2515 = vunpack.c.h.b16 %v281
        %v2516 = vunpack.c.l.b16 %v282
        %v2517 = vunpack.c.h.b16 %v282
        %v2518 = vunpack.c.l.b16 %v283
        %v2519 = vunpack.c.h.b16 %v283
        %v2520 = vunpack.c.l.b16 %v284
        %v2521 = vunpack.c.h.b16 %v284
        %v2522 = vunpack.c.l.b16 %v285
        %v2523 = vunpack.c.h.b16 %v285
        %v2524 = vunpack.c.l.b16 %v286
        %v2525 = vunpack.c.h.b16 %v286
        %v2526 = vunpack.c.l.b16 %v287
        %v2527 = vunpack.c.h.b16 %v287
        %v2528 = vunpack.c.l.b16 %v288
        %v2529 = vunpack.c.h.b16 %v288
        %v2530 = vunpack.c.l.b16 %v289
        %v2531 = vunpack.c.h.b16 %v289
        %v2532 = vunpack.c.l.b16 %v290
        %v2533 = vunpack.c.h.b16 %v290
        %v2534 = vunpack.c.l.b16 %v291
        %v2535 = vunpack.c.h.b16 %v291
        %v2536 = vunpack.c.l.b16 %v292
        %v2537 = vunpack.c.h.b16 %v292
        %v2538 = vunpack.c.l.b16 %v293
        %v2539 = vunpack.c.h.b16 %v293
        %v2540 = vunpack.c.l.b16 %v294
        %v2541 = vunpack.c.h.b16 %v294
        %v2542 = vunpack.c.l.b16 %v295
        %v2543 = vunpack.c.h.b16 %v295
        %v2544 = vunpack.c.l.b16 %v296
        %v2545 = vunpack.c.h.b16 %v296
        %v2546 = vunpack.c.l.b16 %v297
        %v2547 = vunpack.c.h.b16 %v297
        %v2548 = vunpack.c.l.b16 %v298
        %v2549 = vunpack.c.h.b16 %v298
        %v2550 = vunpack.c.l.b16 %v299
        %v2551 = vunpack.c.h.b16 %v299
        %v2552 = vunpack.c.l.b16 %v300
        %v2553 = vunpack.c.h.b16 %v300
        %v2554 = vunpack.c.l.b16 %v301
        %v2555 = vunpack.c.h.b16 %v301
        %v2556 = vunpack.c.l.b16 %v302
        %v2557 = vunpack.c.h.b16 %v302
        %v2558 = vunpack.c.l.b16 %v303
        %v2559 = vunpack.c.h.b16 %v303
        %v2560 = vunpack.c.l.b16 %v304
        %v2561 = vunpack.c.h.b16 %v304
        %v2562 = vunpack.c.l.b16 %v305
        %v2563 = vunpack.c.h.b16 %v305
        %v2564 = vunpack.c.l.b16 %v306
        %v2565 = vunpack.c.h.b16 %v306
        %v2566 = vunpack.c.l.b16 %v307
        %v2567 = vunpack.c.h.b16 %v307
        %v2568 = vunpack.c.l.b16 %v308
        %v2569 = vunpack.c.h.b16 %v308
        %v2570 = vunpack.c.l.b16 %v309
        %v2571 = vunpack.c.h.b16 %v309
        %v2572 = vunpack.c.l.b16 %v310
        %v2573 = vunpack.c.h.b16 %v310
        %v2574 = vunpack.c.l.b16 %v311
        %v2575 = vunpack.c.h.b16 %v311
        %v2576 = vunpack.c.l.b16 %v312
        %v2577 = vunpack.c.h.b16 %v312
        %v2578 = vunpack.c.l.b16 %v313
        %v2579 = vunpack.c.h.b16 %v313
        %v2580 = vunpack.c.l.b16 %v314
        %v2581 = vunpack.c.h.b16 %v314
        %v2582 = vunpack.c.l.b16 %v315
        %v2583 = vunpack.c.h.b16 %v315
        %v2584 = vunpack.c.l.b16 %v316
        %v2585 = vunpack.c.h.b16 %v316
        %v2586 = vunpack.c.l.b16 %v317
        %v2587 = vunpack.c.h.b16 %v317
        %v2588 = vunpack.c.l.b16 %v318
        %v2589 = vunpack.c.h.b16 %v318
        %v2590 = vunpack.c.l.b16 %v319
        %v2591 = vunpack.c.h.b16 %v319
        %v2592 = vunpack.c.l.b16 %v320
        %v2593 = vunpack.c.h.b16 %v320
        %v2594 = vunpack.c.l.b16 %v321
        %v2595 = vunpack.c.h.b16 %v321
        %v2596 = vunpack.c.l.b16 %v322
        %v2597 = vunpack.c.h.b16 %v322
        %v2598 = vunpack.c.l.b16 %v323
        %v2599 = vunpack.c.h.b16 %v323
        %v2600 = vunpack.c.l.b16 %v324
        %v2601 = vunpack.c.h.b16 %v324
        %v2602 = vunpack.c.l.b16 %v325
        %v2603 = vunpack.c.h.b16 %v325
        %v2604 = vunpack.c.l.b16 %v326
        %v2605 = vunpack.c.h.b16 %v326
        %v2606 = vunpack.c.l.b16 %v327
        %v2607 = vunpack.c.h.b16 %v327
        %v2608 = vunpack.c.l.b16 %v328
        %v2609 = vunpack.c.h.b16 %v328
        %v2610 = vunpack.c.l.b16 %v329
        %v2611 = vunpack.c.h.b16 %v329
        %v2612 = vunpack.c.l.b16 %v330
        %v2613 = vunpack.c.h.b16 %v330
        %v2614 = vunpack.c.l.b16 %v331
        %v2615 = vunpack.c.h.b16 %v331
        %v2616 = vunpack.c.l.b16 %v332
        %v2617 = vunpack.c.h.b16 %v332
        %v2618 = vunpack.c.l.b16 %v333
        %v2619 = vunpack.c.h.b16 %v333
        %v2620 = vunpack.c.l.b16 %v334
        %v2621 = vunpack.c.h.b16 %v334
        %v2622 = vunpack.c.l.b16 %v335
        %v2623 = vunpack.c.h.b16 %v335
        %v2624 = vunpack.c.l.b16 %v336
        %v2625 = vunpack.c.h.b16 %v336
        %v2626 = vunpack.c.l.b16 %v337
        %v2627 = vunpack.c.h.b16 %v337
        %v2628 = vunpack.c.l.b16 %v338
        %v2629 = vunpack.c.h.b16 %v338
        %v2630 = vunpack.c.l.b16 %v339
        %v2631 = vunpack.c.h.b16 %v339
        %v2632 = vunpack.c.l.b16 %v340
        %v2633 = vunpack.c.h.b16 %v340
        %v2634 = vunpack.c.l.b16 %v341
        %v2635 = vunpack.c.h.b16 %v341
        %v2636 = vunpack.c.l.b16 %v342
        %v2637 = vunpack.c.h.b16 %v342
        %v2638 = vunpack.c.l.b16 %v343
        %v2639 = vunpack.c.h.b16 %v343
        %v2640 = vunpack.c.l.b16 %v344
        %v2641 = vunpack.c.h.b16 %v344
        %v2642 = vunpack.c.l.b16 %v345
        %v2643 = vunpack.c.h.b16 %v345
        %v2644 = vunpack.c.l.b16 %v346
        %v2645 = vunpack.c.h.b16 %v346
        %v2646 = vunpack.c.l.b16 %v347
        %v2647 = vunpack.c.h.b16 %v347
        %v2648 = vunpack.c.l.b16 %v348
        %v2649 = vunpack.c.h.b16 %v348
        %v2650 = vunpack.c.l.b16 %v349
        %v2651 = vunpack.c.h.b16 %v349
        %v2652 = vunpack.c.l.b16 %v350
        %v2653 = vunpack.c.h.b16 %v350
        %v2654 = vunpack.c.l.b16 %v351
        %v2655 = vunpack.c.h.b16 %v351
        %v2656 = vunpack.c.l.b16 %v352
        %v2657 = vunpack.c.h.b16 %v352
        %v2658 = vunpack.c.l.b16 %v353
        %v2659 = vunpack.c.h.b16 %v353
        %v2660 = vunpack.c.l.b16 %v354
        %v2661 = vunpack.c.h.b16 %v354
        %v2662 = vunpack.c.l.b16 %v355
        %v2663 = vunpack.c.h.b16 %v355
        %v2664 = vunpack.c.l.b16 %v356
        %v2665 = vunpack.c.h.b16 %v356
        %v2666 = vunpack.c.l.b16 %v357
        %v2667 = vunpack.c.h.b16 %v357
        %v2668 = vunpack.c.l.b16 %v358
        %v2669 = vunpack.c.h.b16 %v358
        %v2670 = vunpack.c.l.b16 %v359
        %v2671 = vunpack.c.h.b16 %v359
        %v2672 = vunpack.c.l.b16 %v360
        %v2673 = vunpack.c.h.b16 %v360
        %v2674 = vunpack.c.l.b16 %v361
        %v2675 = vunpack.c.h.b16 %v361
        %v2676 = vunpack.c.l.b16 %v362
        %v2677 = vunpack.c.h.b16 %v362
        %v2678 = vunpack.c.l.b16 %v363
        %v2679 = vunpack.c.h.b16 %v363
        %v2680 = vunpack.c.l.b16 %v364
        %v2681 = vunpack.c.h.b16 %v364
        %v2682 = vunpack.c.l.b16 %v365
        %v2683 = vunpack.c.h.b16 %v365
        %v2684 = vunpack.c.l.b16 %v366
        %v2685 = vunpack.c.h.b16 %v366
        %v2686 = vunpack.c.l.b16 %v367
        %v2687 = vunpack.c.h.b16 %v367
        %v2688 = vunpack.c.l.b16 %v368
        %v2689 = vunpack.c.h.b16 %v368
        %v2690 = vunpack.c.l.b16 %v369
        %v2691 = vunpack.c.h.b16 %v369
        %v2692 = vunpack.c.l.b16 %v370
        %v2693 = vunpack.c.h.b16 %v370
        %v2694 = vunpack.c.l.b16 %v371
        %v2695 = vunpack.c.h.b16 %v371
        %v2696 = vunpack.c.l.b16 %v372
        %v2697 = vunpack.c.h.b16 %v372
        %v2698 = vunpack.c.l.b16 %v373
        %v2699 = vunpack.c.h.b16 %v373
        %v2700 = vunpack.c.l.b16 %v374
        %v2701 = vunpack.c.h.b16 %v374
        %v2702 = vunpack.c.l.b16 %v375
        %v2703 = vunpack.c.h.b16 %v375
        %v2704 = vunpack.c.l.b16 %v376
        %v2705 = vunpack.c.h.b16 %v376
        %v2706 = vunpack.c.l.b16 %v377
        %v2707 = vunpack.c.h.b16 %v377
        %v2708 = vunpack.c.l.b16 %v378
        %v2709 = vunpack.c.h.b16 %v378
        %v2710 = vunpack.c.l.b16 %v379
        %v2711 = vunpack.c.h.b16 %v379
        %v2712 = vunpack.c.l.b16 %v380
        %v2713 = vunpack.c.h.b16 %v380
        %v2714 = vunpack.c.l.b16 %v381
        %v2715 = vunpack.c.h.b16 %v381
        %v2716 = vunpack.c.l.b16 %v382
        %v2717 = vunpack.c.h.b16 %v382
        %v2718 = vunpack.c.l.b16 %v383
        %v2719 = vunpack.c.h.b16 %v383
        %v2720 = vunpack.c.l.b16 %v384
        %v2721 = vunpack.c.h.b16 %v384
        %v2722 = vunpack.c.l.b16 %v385
        %v2723 = vunpack.c.h.b16 %v385
        %v2724 = vunpack.c.l.b16 %v386
        %v2725 = vunpack.c.h.b16 %v386
        %v2726 = vunpack.c.l.b16 %v387
        %v2727 = vunpack.c.h.b16 %v387
        %v2728 = vunpack.c.l.b16 %v388
        %v2729 = vunpack.c.h.b16 %v388
        %v2730 = vunpack.c.l.b16 %v389
        %v2731 = vunpack.c.h.b16 %v389
        %v2732 = vunpack.c.l.b16 %v390
        %v2733 = vunpack.c.h.b16 %v390
        %v2734 = vunpack.c.l.b16 %v391
        %v2735 = vunpack.c.h.b16 %v391
        %v2736 = vunpack.c.l.b16 %v392
        %v2737 = vunpack.c.h.b16 %v392
        %v2738 = vunpack.c.l.b16 %v393
        %v2739 = vunpack.c.h.b16 %v393
        %v2740 = vunpack.c.l.b16 %v394
        %v2741 = vunpack.c.h.b16 %v394
        %v2742 = vunpack.c.l.b16 %v395
        %v2743 = vunpack.c.h.b16 %v395
        %v2744 = vunpack.c.l.b16 %v396
        %v2745 = vunpack.c.h.b16 %v396
        %v2746 = vunpack.c.l.b16 %v397
        %v2747 = vunpack.c.h.b16 %v397
        %v2748 = vunpack.c.l.b16 %v398
        %v2749 = vunpack.c.h.b16 %v398
        %v2750 = vunpack.c.l.b16 %v399
        %v2751 = vunpack.c.h.b16 %v399
        %v2752 = vunpack.c.l.b16 %v400
        %v2753 = vunpack.c.h.b16 %v400
        %v2754 = vunpack.c.l.b16 %v401
        %v2755 = vunpack.c.h.b16 %v401
        %v2756 = vunpack.c.l.b16 %v402
        %v2757 = vunpack.c.h.b16 %v402
        %v2758 = vunpack.c.l.b16 %v403
        %v2759 = vunpack.c.h.b16 %v403
        %v2760 = vunpack.c.l.b16 %v404
        %v2761 = vunpack.c.h.b16 %v404
        %v2762 = vunpack.c.l.b16 %v405
        %v2763 = vunpack.c.h.b16 %v405
        %v2764 = vunpack.c.l.b16 %v406
        %v2765 = vunpack.c.h.b16 %v406
        %v2766 = vunpack.c.l.b16 %v407
        %v2767 = vunpack.c.h.b16 %v407
        %v2768 = vunpack.c.l.b16 %v408
        %v2769 = vunpack.c.h.b16 %v408
        %v2770 = vunpack.c.l.b16 %v409
        %v2771 = vunpack.c.h.b16 %v409
        %v2772 = vunpack.c.l.b16 %v410
        %v2773 = vunpack.c.h.b16 %v410
        %v2774 = vunpack.c.l.b16 %v411
        %v2775 = vunpack.c.h.b16 %v411
        %v2776 = vunpack.c.l.b16 %v412
        %v2777 = vunpack.c.h.b16 %v412
        %v2778 = vunpack.c.l.b16 %v413
        %v2779 = vunpack.c.h.b16 %v413
        %v2780 = vunpack.c.l.b16 %v414
        %v2781 = vunpack.c.h.b16 %v414
        %v2782 = vunpack.c.l.b16 %v415
        %v2783 = vunpack.c.h.b16 %v415
        %v2784 = vunpack.c.l.b16 %v416
        %v2785 = vunpack.c.h.b16 %v416
        %v2786 = vunpack.c.l.b16 %v417
        %v2787 = vunpack.c.h.b16 %v417
        %v2788 = vunpack.c.l.b16 %v418
        %v2789 = vunpack.c.h.b16 %v418
        %v2790 = vunpack.c.l.b16 %v419
        %v2791 = vunpack.c.h.b16 %v419
        %v2792 = vunpack.c.l.b16 %v420
        %v2793 = vunpack.c.h.b16 %v420
        %v2794 = vunpack.c.l.b16 %v421
        %v2795 = vunpack.c.h.b16 %v421
        %v2796 = vunpack.c.l.b16 %v422
        %v2797 = vunpack.c.h.b16 %v422
        %v2798 = vunpack.c.l.b16 %v423
        %v2799 = vunpack.c.h.b16 %v423
        %v2800 = vunpack.c.l.b16 %v424
        %v2801 = vunpack.c.h.b16 %v424
        %v2802 = vunpack.c.l.b16 %v425
        %v2803 = vunpack.c.h.b16 %v425
        %v2804 = vunpack.c.l.b16 %v426
        %v2805 = vunpack.c.h.b16 %v426
        %v2806 = vunpack.c.l.b16 %v427
        %v2807 = vunpack.c.h.b16 %v427
        %v2808 = vunpack.c.l.b16 %v428
        %v2809 = vunpack.c.h.b16 %v428
        %v2810 = vunpack.c.l.b16 %v429
        %v2811 = vunpack.c.h.b16 %v429
        %v2812 = vunpack.c.l.b16 %v430
        %v2813 = vunpack.c.h.b16 %v430
        %v2814 = vunpack.c.l.b16 %v431
        %v2815 = vunpack.c.h.b16 %v431
        %v2816 = vunpack.c.l.b16 %v432
        %v2817 = vunpack.c.h.b16 %v432
        %v2818 = vunpack.c.l.b16 %v433
        %v2819 = vunpack.c.h.b16 %v433
        %v2820 = vunpack.c.l.b16 %v434
        %v2821 = vunpack.c.h.b16 %v434
        %v2822 = vunpack.c.l.b16 %v435
        %v2823 = vunpack.c.h.b16 %v435
        %v2824 = vunpack.c.l.b16 %v436
        %v2825 = vunpack.c.h.b16 %v436
        %v2826 = vunpack.c.l.b16 %v437
        %v2827 = vunpack.c.h.b16 %v437
        %v2828 = vunpack.c.l.b16 %v438
        %v2829 = vunpack.c.h.b16 %v438
        %v2830 = vunpack.c.l.b16 %v439
        %v2831 = vunpack.c.h.b16 %v439
        %v2832 = vunpack.c.l.b16 %v440
        %v2833 = vunpack.c.h.b16 %v440
        %v2834 = vunpack.c.l.b16 %v441
        %v2835 = vunpack.c.h.b16 %v441
        %v2836 = vunpack.c.l.b16 %v442
        %v2837 = vunpack.c.h.b16 %v442
        %v2838 = vunpack.c.l.b16 %v443
        %v2839 = vunpack.c.h.b16 %v443
        %v2840 = vunpack.c.l.b16 %v444
        %v2841 = vunpack.c.h.b16 %v444
        %v2842 = vunpack.c.l.b16 %v445
        %v2843 = vunpack.c.h.b16 %v445
        %v2844 = vunpack.c.l.b16 %v446
        %v2845 = vunpack.c.h.b16 %v446
        %v2846 = vunpack.c.l.b16 %v447
        %v2847 = vunpack.c.h.b16 %v447
        %v2848 = vunpack.c.l.b16 %v448
        %v2849 = vunpack.c.h.b16 %v448
        %v2850 = vunpack.c.l.b16 %v449
        %v2851 = vunpack.c.h.b16 %v449
        %v2852 = vunpack.c.l.b16 %v450
        %v2853 = vunpack.c.h.b16 %v450
        %v2854 = vunpack.c.l.b16 %v451
        %v2855 = vunpack.c.h.b16 %v451
        %v2856 = vunpack.c.l.b16 %v452
        %v2857 = vunpack.c.h.b16 %v452
        %v2858 = vunpack.c.l.b16 %v453
        %v2859 = vunpack.c.h.b16 %v453
        %v2860 = vunpack.c.l.b16 %v454
        %v2861 = vunpack.c.h.b16 %v454
        %v2862 = vunpack.c.l.b16 %v455
        %v2863 = vunpack.c.h.b16 %v455
        %v2864 = vunpack.c.l.b16 %v456
        %v2865 = vunpack.c.h.b16 %v456
        %v2866 = vunpack.c.l.b16 %v457
        %v2867 = vunpack.c.h.b16 %v457
        %v2868 = vunpack.c.l.b16 %v458
        %v2869 = vunpack.c.h.b16 %v458
        %v2870 = vunpack.c.l.b16 %v459
        %v2871 = vunpack.c.h.b16 %v459
        %v2872 = vunpack.c.l.b16 %v460
        %v2873 = vunpack.c.h.b16 %v460
        %v2874 = vunpack.c.l.b16 %v461
        %v2875 = vunpack.c.h.b16 %v461
        %v2876 = vunpack.c.l.b16 %v462
        %v2877 = vunpack.c.h.b16 %v462
        %v2878 = vunpack.c.l.b16 %v463
        %v2879 = vunpack.c.h.b16 %v463
        %v2880 = vunpack.c.l.b16 %v464
        %v2881 = vunpack.c.h.b16 %v464
        %v2882 = vunpack.c.l.b16 %v465
        %v2883 = vunpack.c.h.b16 %v465
        %v2884 = vunpack.c.l.b16 %v466
        %v2885 = vunpack.c.h.b16 %v466
        %v2886 = vunpack.c.l.b16 %v467
        %v2887 = vunpack.c.h.b16 %v467
        %v2888 = vunpack.c.l.b16 %v468
        %v2889 = vunpack.c.h.b16 %v468
        %v2890 = vunpack.c.l.b16 %v469
        %v2891 = vunpack.c.h.b16 %v469
        %v2892 = vunpack.c.l.b16 %v470
        %v2893 = vunpack.c.h.b16 %v470
        %v2894 = vunpack.c.l.b16 %v471
        %v2895 = vunpack.c.h.b16 %v471
        %v2896 = vunpack.c.l.b16 %v472
        %v2897 = vunpack.c.h.b16 %v472
        %v2898 = vunpack.c.l.b16 %v473
        %v2899 = vunpack.c.h.b16 %v473
        %v2900 = vunpack.c.l.b16 %v474
        %v2901 = vunpack.c.h.b16 %v474
        %v2902 = vunpack.c.l.b16 %v475
        %v2903 = vunpack.c.h.b16 %v475
        %v2904 = vunpack.c.l.b16 %v476
        %v2905 = vunpack.c.h.b16 %v476
        %v2906 = vunpack.c.l.b16 %v477
        %v2907 = vunpack.c.h.b16 %v477
        %v2908 = vunpack.c.l.b16 %v478
        %v2909 = vunpack.c.h.b16 %v478
        %v2910 = vunpack.c.l.b16 %v479
        %v2911 = vunpack.c.h.b16 %v479
        %v2912 = vunpack.c.l.b16 %v480
        %v2913 = vunpack.c.h.b16 %v480
        %v2914 = vunpack.c.l.b16 %v481
        %v2915 = vunpack.c.h.b16 %v481
        %v2916 = vunpack.c.l.b16 %v482
        %v2917 = vunpack.c.h.b16 %v482
        %v2918 = vunpack.c.l.b16 %v483
        %v2919 = vunpack.c.h.b16 %v483
        %v2920 = vunpack.c.l.b16 %v484
        %v2921 = vunpack.c.h.b16 %v484
        %v2922 = vunpack.c.l.b16 %v485
        %v2923 = vunpack.c.h.b16 %v485
        %v2924 = vunpack.c.l.b16 %v486
        %v2925 = vunpack.c.h.b16 %v486
        %v2926 = vunpack.c.l.b16 %v487
        %v2927 = vunpack.c.h.b16 %v487
        %v2928 = vunpack.c.l.b16 %v488
        %v2929 = vunpack.c.h.b16 %v488
        %v2930 = vunpack.c.l.b16 %v489
        %v2931 = vunpack.c.h.b16 %v489
        %v2932 = vunpack.c.l.b16 %v490
        %v2933 = vunpack.c.h.b16 %v490
        %v2934 = vunpack.c.l.b16 %v491
        %v2935 = vunpack.c.h.b16 %v491
        %v2936 = vunpack.c.l.b16 %v492
        %v2937 = vunpack.c.h.b16 %v492
        %v2938 = vunpack.c.l.b16 %v493
        %v2939 = vunpack.c.h.b16 %v493
        %v2940 = vunpack.c.l.b16 %v494
        %v2941 = vunpack.c.h.b16 %v494
        %v2942 = vunpack.c.l.b16 %v495
        %v2943 = vunpack.c.h.b16 %v495
        %v2944 = vunpack.c.l.b16 %v496
        %v2945 = vunpack.c.h.b16 %v496
        %v2946 = vunpack.c.l.b16 %v497
        %v2947 = vunpack.c.h.b16 %v497
        %v2948 = vunpack.c.l.b16 %v498
        %v2949 = vunpack.c.h.b16 %v498
        %v2950 = vunpack.c.l.b16 %v499
        %v2951 = vunpack.c.h.b16 %v499
        %v2952 = vunpack.c.l.b16 %v500
        %v2953 = vunpack.c.h.b16 %v500
        %v2954 = vunpack.c.l.b16 %v501
        %v2955 = vunpack.c.h.b16 %v501
        %v2956 = vunpack.c.l.b16 %v502
        %v2957 = vunpack.c.h.b16 %v502
        %v2958 = vunpack.c.l.b16 %v503
        %v2959 = vunpack.c.h.b16 %v503
        %v2960 = vunpack.c.l.b16 %v504
        %v2961 = vunpack.c.h.b16 %v504
        %v2962 = vunpack.c.l.b16 %v505
        %v2963 = vunpack.c.h.b16 %v505
        %v2964 = vunpack.c.l.b16 %v506
        %v2965 = vunpack.c.h.b16 %v506
        %v2966 = vunpack.c.l.b16 %v507
        %v2967 = vunpack.c.h.b16 %v507
        %v2968 = vunpack.c.l.b16 %v508
        %v2969 = vunpack.c.h.b16 %v508
        %v2970 = vunpack.c.l.b16 %v509
        %v2971 = vunpack.c.h.b16 %v509
        %v2972 = vunpack.c.l.b16 %v510
        %v2973 = vunpack.c.h.b16 %v510
        %v2974 = vunpack.c.l.b16 %v511
        %v2975 = vunpack.c.h.b16 %v511
        %v2976 = vunpack.c.l.b16 %v512
        %v2977 = vunpack.c.h.b16 %v512
        %v2978 = vunpack.c.l.b16 %v513
        %v2979 = vunpack.c.h.b16 %v513
        %v2980 = vunpack.c.l.b16 %v514
        %v2981 = vunpack.c.h.b16 %v514
        %v2982 = vunpack.c.l.b16 %v515
        %v2983 = vunpack.c.h.b16 %v515
        %v2984 = vunpack.c.l.b16 %v516
        %v2985 = vunpack.c.h.b16 %v516
        %v2986 = vunpack.c.l.b16 %v517
        %v2987 = vunpack.c.h.b16 %v517
        %v2988 = vunpack.c.l.b16 %v518
        %v2989 = vunpack.c.h.b16 %v518
        %v2990 = vunpack.c.l.b16 %v519
        %v2991 = vunpack.c.h.b16 %v519
        %v2992 = vunpack.c.l.b16 %v520
        %v2993 = vunpack.c.h.b16 %v520
        %v2994 = vunpack.c.l.b16 %v521
        %v2995 = vunpack.c.h.b16 %v521
        %v2996 = vunpack.c.l.b16 %v522
        %v2997 = vunpack.c.h.b16 %v522
        %v2998 = vunpack.c.l.b16 %v523
        %v2999 = vunpack.c.h.b16 %v523
        %v3000 = vunpack.c.l.b16 %v524
        %v3001 = vunpack.c.h.b16 %v524
        %v3002 = vunpack.c.l.b16 %v525
        %v3003 = vunpack.c.h.b16 %v525
        %v3004 = vunpack.c.l.b16 %v526
        %v3005 = vunpack.c.h.b16 %v526
        %v3006 = vunpack.c.l.b16 %v527
        %v3007 = vunpack.c.h.b16 %v527
        %v3008 = vunpack.c.l.b16 %v528
        %v3009 = vunpack.c.h.b16 %v528
        %v3010 = vunpack.c.l.b16 %v529
        %v3011 = vunpack.c.h.b16 %v529
        %v3012 = vunpack.c.l.b16 %v530
        %v3013 = vunpack.c.h.b16 %v530
        %v3014 = vunpack.c.l.b16 %v531
        %v3015 = vunpack.c.h.b16 %v531
        %v3016 = vunpack.c.l.b16 %v532
        %v3017 = vunpack.c.h.b16 %v532
        %v3018 = vunpack.c.l.b16 %v533
        %v3019 = vunpack.c.h.b16 %v533
        %v3020 = vunpack.c.l.b16 %v534
        %v3021 = vunpack.c.h.b16 %v534
        %v3022 = vunpack.c.l.b16 %v535
        %v3023 = vunpack.c.h.b16 %v535
        %v3024 = vunpack.c.l.b16 %v536
        %v3025 = vunpack.c.h.b16 %v536
        %v3026 = vunpack.c.l.b16 %v537
        %v3027 = vunpack.c.h.b16 %v537
        %v3028 = vunpack.c.l.b16 %v538
        %v3029 = vunpack.c.h.b16 %v538
        %v3030 = vunpack.c.l.b16 %v539
        %v3031 = vunpack.c.h.b16 %v539
        %v3032 = vunpack.c.l.b16 %v540
        %v3033 = vunpack.c.h.b16 %v540
        %v3034 = vunpack.c.l.b16 %v541
        %v3035 = vunpack.c.h.b16 %v541
        %v3036 = vunpack.c.l.b16 %v542
        %v3037 = vunpack.c.h.b16 %v542
        %v3038 = vunpack.c.l.b16 %v543
        %v3039 = vunpack.c.h.b16 %v543
        %v3040 = vunpack.c.l.b16 %v544
        %v3041 = vunpack.c.h.b16 %v544
        %v3042 = vunpack.c.l.b16 %v545
        %v3043 = vunpack.c.h.b16 %v545
        %v3044 = vunpack.c.l.b16 %v546
        %v3045 = vunpack.c.h.b16 %v546
        %v3046 = vunpack.c.l.b16 %v547
        %v3047 = vunpack.c.h.b16 %v547
        %v3048 = vunpack.c.l.b16 %v548
        %v3049 = vunpack.c.h.b16 %v548
        %v3050 = vunpack.c.l.b16 %v549
        %v3051 = vunpack.c.h.b16 %v549
        %v3052 = vunpack.c.l.b16 %v550
        %v3053 = vunpack.c.h.b16 %v550
        %v3054 = vunpack.c.l.b16 %v551
        %v3055 = vunpack.c.h.b16 %v551
        %v3056 = vunpack.c.l.b16 %v552
        %v3057 = vunpack.c.h.b16 %v552
        %v3058 = vunpack.c.l.b16 %v553
        %v3059 = vunpack.c.h.b16 %v553
        %v3060 = vunpack.c.l.b16 %v554
        %v3061 = vunpack.c.h.b16 %v554
        %v3062 = vunpack.c.l.b16 %v555
        %v3063 = vunpack.c.h.b16 %v555
        %v3064 = vunpack.c.l.b16 %v556
        %v3065 = vunpack.c.h.b16 %v556
        %v3066 = vunpack.c.l.b16 %v557
        %v3067 = vunpack.c.h.b16 %v557
        %v3068 = vunpack.c.l.b16 %v558
        %v3069 = vunpack.c.h.b16 %v558
        %v3070 = vunpack.c.l.b16 %v559
        %v3071 = vunpack.c.h.b16 %v559
        %v3072 = vunpack.c.l.b16 %v560
        %v3073 = vunpack.c.h.b16 %v560
        %v3074 = vunpack.c.l.b16 %v561
        %v3075 = vunpack.c.h.b16 %v561
        %v3076 = vunpack.c.l.b16 %v562
        %v3077 = vunpack.c.h.b16 %v562
        %v3078 = vunpack.c.l.b16 %v563
        %v3079 = vunpack.c.h.b16 %v563
        %v3080 = vunpack.c.l.b16 %v564
        %v3081 = vunpack.c.h.b16 %v564
        %v3082 = vunpack.c.l.b16 %v565
        %v3083 = vunpack.c.h.b16 %v565
        %v3084 = vunpack.c.l.b16 %v566
        %v3085 = vunpack.c.h.b16 %v566
        %v3086 = vunpack.c.l.b16 %v567
        %v3087 = vunpack.c.h.b16 %v567
        %v3088 = vunpack.c.l.b16 %v568
        %v3089 = vunpack.c.h.b16 %v568
        %v3090 = vunpack.c.l.b16 %v569
        %v3091 = vunpack.c.h.b16 %v569
        %v3092 = vunpack.c.l.b16 %v570
        %v3093 = vunpack.c.h.b16 %v570
        %v3094 = vunpack.c.l.b16 %v571
        %v3095 = vunpack.c.h.b16 %v571
        %v3096 = vunpack.c.l.b16 %v572
        %v3097 = vunpack.c.h.b16 %v572
        %v3098 = vunpack.c.l.b16 %v573
        %v3099 = vunpack.c.h.b16 %v573
        %v3100 = vunpack.c.l.b16 %v574
        %v3101 = vunpack.c.h.b16 %v574
        %v3102 = vunpack.c.l.b16 %v575
        %v3103 = vunpack.c.h.b16 %v575
        %v3104 = vunpack.c.l.b16 %v576
        %v3105 = vunpack.c.h.b16 %v576
        %v3106 = vunpack.c.l.b16 %v577
        %v3107 = vunpack.c.h.b16 %v577
        %v3108 = vunpack.c.l.b16 %v578
        %v3109 = vunpack.c.h.b16 %v578
        %v3110 = vunpack.c.l.b16 %v579
        %v3111 = vunpack.c.h.b16 %v579
        %v3112 = vunpack.c.l.b16 %v580
        %v3113 = vunpack.c.h.b16 %v580
        %v3114 = vunpack.c.l.b16 %v581
        %v3115 = vunpack.c.h.b16 %v581
        %v3116 = vunpack.c.l.b16 %v582
        %v3117 = vunpack.c.h.b16 %v582
        %v3118 = vunpack.c.l.b16 %v583
        %v3119 = vunpack.c.h.b16 %v583
        %v3120 = vunpack.c.l.b16 %v584
        %v3121 = vunpack.c.h.b16 %v584
        %v3122 = vunpack.c.l.b16 %v585
        %v3123 = vunpack.c.h.b16 %v585
        %v3124 = vunpack.c.l.b16 %v586
        %v3125 = vunpack.c.h.b16 %v586
        %v3126 = vunpack.c.l.b16 %v587
        %v3127 = vunpack.c.h.b16 %v587
        %v3128 = vunpack.c.l.b16 %v588
        %v3129 = vunpack.c.h.b16 %v588
        %v3130 = vunpack.c.l.b16 %v589
        %v3131 = vunpack.c.h.b16 %v589
        %v3132 = vunpack.c.l.b16 %v590
        %v3133 = vunpack.c.h.b16 %v590
        %v3134 = vunpack.c.l.b16 %v591
        %v3135 = vunpack.c.h.b16 %v591
        %v3136 = vunpack.c.l.b16 %v592
        %v3137 = vunpack.c.h.b16 %v592
        %v3138 = vunpack.c.l.b16 %v593
        %v3139 = vunpack.c.h.b16 %v593
        %v3140 = vunpack.c.l.b16 %v594
        %v3141 = vunpack.c.h.b16 %v594
        %v3142 = vunpack.c.l.b16 %v595
        %v3143 = vunpack.c.h.b16 %v595
        %v3144 = vunpack.c.l.b16 %v596
        %v3145 = vunpack.c.h.b16 %v596
        %v3146 = vunpack.c.l.b16 %v597
        %v3147 = vunpack.c.h.b16 %v597
        %v3148 = vunpack.c.l.b16 %v598
        %v3149 = vunpack.c.h.b16 %v598
        %v3150 = vunpack.c.l.b16 %v599
        %v3151 = vunpack.c.h.b16 %v599
        %v3152 = vunpack.c.l.b16 %v600
        %v3153 = vunpack.c.h.b16 %v600
        %v3154 = vunpack.c.l.b16 %v601
        %v3155 = vunpack.c.h.b16 %v601
        %v3156 = vunpack.c.l.b16 %v602
        %v3157 = vunpack.c.h.b16 %v602
        %v3158 = vunpack.c.l.b16 %v603
        %v3159 = vunpack.c.h.b16 %v603
        %v3160 = vunpack.c.l.b16 %v604
        %v3161 = vunpack.c.h.b16 %v604
        %v3162 = vunpack.c.l.b16 %v605
        %v3163 = vunpack.c.h.b16 %v605
        %v3164 = vunpack.c.l.b16 %v606
        %v3165 = vunpack.c.h.b16 %v606
        %v3166 = vunpack.c.l.b16 %v607
        %v3167 = vunpack.c.h.b16 %v607
        %v3168 = vunpack.c.l.b16 %v608
        %v3169 = vunpack.c.h.b16 %v608
        %v3170 = vunpack.c.l.b16 %v609
        %v3171 = vunpack.c.h.b16 %v609
        %v3172 = vunpack.c.l.b16 %v610
        %v3173 = vunpack.c.h.b16 %v610
        %v3174 = vunpack.c.l.b16 %v611
        %v3175 = vunpack.c.h.b16 %v611
        %v3176 = vunpack.c.l.b16 %v612
        %v3177 = vunpack.c.h.b16 %v612
        %v3178 = vunpack.c.l.b16 %v613
        %v3179 = vunpack.c.h.b16 %v613
        %v3180 = vunpack.c.l.b16 %v614
        %v3181 = vunpack.c.h.b16 %v614
        %v3182 = vunpack.c.l.b16 %v615
        %v3183 = vunpack.c.h.b16 %v615
        %v3184 = vunpack.c.l.b16 %v616
        %v3185 = vunpack.c.h.b16 %v616
        %v3186 = vunpack.c.l.b16 %v617
        %v3187 = vunpack.c.h.b16 %v617
        %v3188 = vunpack.c.l.b16 %v618
        %v3189 = vunpack.c.h.b16 %v618
        %v3190 = vunpack.c.l.b16 %v619
        %v3191 = vunpack.c.h.b16 %v619
        %v3192 = vunpack.c.l.b16 %v620
        %v3193 = vunpack.c.h.b16 %v620
        %v3194 = vunpack.c.l.b16 %v621
        %v3195 = vunpack.c.h.b16 %v621
        %v3196 = vunpack.c.l.b16 %v622
        %v3197 = vunpack.c.h.b16 %v622
        %v3198 = vunpack.c.l.b16 %v623
        %v3199 = vunpack.c.h.b16 %v623
        %v3200 = vunpack.c.l.b16 %v624
        %v3201 = vunpack.c.h.b16 %v624
        %v3202 = vunpack.c.l.b16 %v625
        %v3203 = vunpack.c.h.b16 %v625
        %v3204 = vunpack.c.l.b16 %v626
        %v3205 = vunpack.c.h.b16 %v626
        %v3206 = vunpack.c.l.b16 %v627
        %v3207 = vunpack.c.h.b16 %v627
        %v3208 = vunpack.c.l.b16 %v628
        %v3209 = vunpack.c.h.b16 %v628
        %v3210 = vunpack.c.l.b16 %v629
        %v3211 = vunpack.c.h.b16 %v629
        %v3212 = vunpack.c.l.b16 %v630
        %v3213 = vunpack.c.h.b16 %v630
        %v3214 = vunpack.c.l.b16 %v631
        %v3215 = vunpack.c.h.b16 %v631
        %v3216 = vunpack.c.l.b16 %v632
        %v3217 = vunpack.c.h.b16 %v632
        %v3218 = vunpack.c.l.b16 %v633
        %v3219 = vunpack.c.h.b16 %v633
        %v3220 = vunpack.c.l.b16 %v634
        %v3221 = vunpack.c.h.b16 %v634
        %v3222 = vunpack.c.l.b16 %v635
        %v3223 = vunpack.c.h.b16 %v635
        %v3224 = vunpack.c.l.b16 %v636
        %v3225 = vunpack.c.h.b16 %v636
        %v3226 = vunpack.c.l.b16 %v637
        %v3227 = vunpack.c.h.b16 %v637
        %v3228 = vunpack.c.l.b16 %v638
        %v3229 = vunpack.c.h.b16 %v638
        %v3230 = vunpack.c.l.b16 %v639
        %v3231 = vunpack.c.h.b16 %v639
        %v3232 = vunpack.c.l.b16 %v640
        %v3233 = vunpack.c.h.b16 %v640
        %v3234 = vunpack.c.l.b16 %v641
        %v3235 = vunpack.c.h.b16 %v641
        %v3236 = vunpack.c.l.b16 %v642
        %v3237 = vunpack.c.h.b16 %v642
        %v3238 = vunpack.c.l.b16 %v643
        %v3239 = vunpack.c.h.b16 %v643
        %v3240 = vunpack.c.l.b16 %v644
        %v3241 = vunpack.c.h.b16 %v644
        %v3242 = vunpack.c.l.b16 %v645
        %v3243 = vunpack.c.h.b16 %v645
        %v3244 = vunpack.c.l.b16 %v646
        %v3245 = vunpack.c.h.b16 %v646
        %v3246 = vunpack.c.l.b16 %v647
        %v3247 = vunpack.c.h.b16 %v647
        %v3248 = vunpack.c.l.b16 %v648
        %v3249 = vunpack.c.h.b16 %v648
        %v3250 = vunpack.c.l.b16 %v649
        %v3251 = vunpack.c.h.b16 %v649
        %v3252 = vunpack.c.l.b16 %v650
        %v3253 = vunpack.c.h.b16 %v650
        %v3254 = vunpack.c.l.b16 %v651
        %v3255 = vunpack.c.h.b16 %v651
        %v3256 = vunpack.c.l.b16 %v652
        %v3257 = vunpack.c.h.b16 %v652
        %v3258 = vunpack.c.l.b16 %v653
        %v3259 = vunpack.c.h.b16 %v653
        %v3260 = vunpack.c.l.b16 %v654
        %v3261 = vunpack.c.h.b16 %v654
        %v3262 = vunpack.c.l.b16 %v655
        %v3263 = vunpack.c.h.b16 %v655
        %v3264 = vunpack.c.l.b16 %v656
        %v3265 = vunpack.c.h.b16 %v656
        %v3266 = vunpack.c.l.b16 %v657
        %v3267 = vunpack.c.h.b16 %v657
        %v3268 = vunpack.c.l.b16 %v658
        %v3269 = vunpack.c.h.b16 %v658
        %v3270 = vunpack.c.l.b16 %v659
        %v3271 = vunpack.c.h.b16 %v659
        %v3272 = vunpack.c.l.b16 %v660
        %v3273 = vunpack.c.h.b16 %v660
        %v3274 = vunpack.c.l.b16 %v661
        %v3275 = vunpack.c.h.b16 %v661
        %v3276 = vunpack.c.l.b16 %v662
        %v3277 = vunpack.c.h.b16 %v662
        %v3278 = vunpack.c.l.b16 %v663
        %v3279 = vunpack.c.h.b16 %v663
        %v3280 = vunpack.c.l.b16 %v664
        %v3281 = vunpack.c.h.b16 %v664
        %v3282 = vunpack.c.l.b16 %v665
        %v3283 = vunpack.c.h.b16 %v665
        %v3284 = vunpack.c.l.b16 %v666
        %v3285 = vunpack.c.h.b16 %v666
        %v3286 = vunpack.c.l.b16 %v667
        %v3287 = vunpack.c.h.b16 %v667
        %v3288 = vunpack.c.l.b16 %v668
        %v3289 = vunpack.c.h.b16 %v668
        %v3290 = vunpack.c.l.b16 %v669
        %v3291 = vunpack.c.h.b16 %v669
        %v3292 = vunpack.c.l.b16 %v670
        %v3293 = vunpack.c.h.b16 %v670
        %v3294 = vunpack.c.l.b16 %v671
        %v3295 = vunpack.c.h.b16 %v671
        %v3296 = vunpack.c.l.b16 %v672
        %v3297 = vunpack.c.h.b16 %v672
        %v3298 = vunpack.c.l.b16 %v673
        %v3299 = vunpack.c.h.b16 %v673
        %v3300 = vunpack.c.l.b16 %v674
        %v3301 = vunpack.c.h.b16 %v674
        %v3302 = vunpack.c.l.b16 %v675
        %v3303 = vunpack.c.h.b16 %v675
        %v3304 = vunpack.c.l.b16 %v676
        %v3305 = vunpack.c.h.b16 %v676
        %v3306 = vunpack.c.l.b16 %v677
        %v3307 = vunpack.c.h.b16 %v677
        %v3308 = vunpack.c.l.b16 %v678
        %v3309 = vunpack.c.h.b16 %v678
        %v3310 = vunpack.c.l.b16 %v679
        %v3311 = vunpack.c.h.b16 %v679
        %v3312 = vunpack.c.l.b16 %v680
        %v3313 = vunpack.c.h.b16 %v680
        %v3314 = vunpack.c.l.b16 %v681
        %v3315 = vunpack.c.h.b16 %v681
        %v3316 = vunpack.c.l.b16 %v682
        %v3317 = vunpack.c.h.b16 %v682
        %v3318 = vunpack.c.l.b16 %v683
        %v3319 = vunpack.c.h.b16 %v683
        %v3320 = vunpack.c.l.b16 %v684
        %v3321 = vunpack.c.h.b16 %v684
        %v3322 = vunpack.c.l.b16 %v685
        %v3323 = vunpack.c.h.b16 %v685
        %v3324 = vunpack.c.l.b16 %v686
        %v3325 = vunpack.c.h.b16 %v686
        %v3326 = vunpack.c.l.b16 %v687
        %v3327 = vunpack.c.h.b16 %v687
        %v3328 = vunpack.c.l.b16 %v688
        %v3329 = vunpack.c.h.b16 %v688
        %v3330 = vunpack.c.l.b16 %v689
        %v3331 = vunpack.c.h.b16 %v689
        %v3332 = vunpack.c.l.b16 %v690
        %v3333 = vunpack.c.h.b16 %v690
        %v3334 = vunpack.c.l.b16 %v691
        %v3335 = vunpack.c.h.b16 %v691
        %v3336 = vunpack.c.l.b16 %v692
        %v3337 = vunpack.c.h.b16 %v692
        %v3338 = vunpack.c.l.b16 %v693
        %v3339 = vunpack.c.h.b16 %v693
        %v3340 = vunpack.c.l.b16 %v694
        %v3341 = vunpack.c.h.b16 %v694
        %v3342 = vunpack.c.l.b16 %v695
        %v3343 = vunpack.c.h.b16 %v695
        %v3344 = vunpack.c.l.b16 %v696
        %v3345 = vunpack.c.h.b16 %v696
        %v3346 = vunpack.c.l.b16 %v697
        %v3347 = vunpack.c.h.b16 %v697
        %v3348 = vunpack.c.l.b16 %v698
        %v3349 = vunpack.c.h.b16 %v698
        %v3350 = vunpack.c.l.b16 %v699
        %v3351 = vunpack.c.h.b16 %v699
        %v3352 = vunpack.c.l.b16 %v700
        %v3353 = vunpack.c.h.b16 %v700
        %v3354 = vunpack.c.l.b16 %v701
        %v3355 = vunpack.c.h.b16 %v701
        %v3356 = vunpack.c.l.b16 %v702
        %v3357 = vunpack.c.h.b16 %v702
        %v3358 = vunpack.c.l.b16 %v703
        %v3359 = vunpack.c.h.b16 %v703
        %v3360 = vunpack.c.l.b16 %v704
        %v3361 = vunpack.c.h.b16 %v704
        %v3362 = vunpack.c.l.b16 %v705
        %v3363 = vunpack.c.h.b16 %v705
        %v3364 = vunpack.c.l.b16 %v706
        %v3365 = vunpack.c.h.b16 %v706
        %v3366 = vunpack.c.l.b16 %v707
        %v3367 = vunpack.c.h.b16 %v707
        %v3368 = vunpack.c.l.b16 %v708
        %v3369 = vunpack.c.h.b16 %v708
        %v3370 = vunpack.c.l.b16 %v709
        %v3371 = vunpack.c.h.b16 %v709
        %v3372 = vunpack.c.l.b16 %v710
        %v3373 = vunpack.c.h.b16 %v710
        %v3374 = vunpack.c.l.b16 %v711
        %v3375 = vunpack.c.h.b16 %v711
        %v3376 = vunpack.c.l.b16 %v712
        %v3377 = vunpack.c.h.b16 %v712
        %v3378 = vunpack.c.l.b16 %v713
        %v3379 = vunpack.c.h.b16 %v713
        %v3380 = vunpack.c.l.b16 %v714
        %v3381 = vunpack.c.h.b16 %v714
        %v3382 = vunpack.c.l.b16 %v715
        %v3383 = vunpack.c.h.b16 %v715
        %v3384 = vunpack.c.l.b16 %v716
        %v3385 = vunpack.c.h.b16 %v716
        %v3386 = vunpack.c.l.b16 %v717
        %v3387 = vunpack.c.h.b16 %v717
        %v3388 = vunpack.c.l.b16 %v718
        %v3389 = vunpack.c.h.b16 %v718
        %v3390 = vunpack.c.l.b16 %v719
        %v3391 = vunpack.c.h.b16 %v719
        %v3392 = vunpack.c.l.b16 %v720
        %v3393 = vunpack.c.h.b16 %v720
        %v3394 = vunpack.c.l.b16 %v721
        %v3395 = vunpack.c.h.b16 %v721
        %v3396 = vunpack.c.l.b16 %v722
        %v3397 = vunpack.c.h.b16 %v722
        %v3398 = vunpack.c.l.b16 %v723
        %v3399 = vunpack.c.h.b16 %v723
        %v3400 = vunpack.c.l.b16 %v724
        %v3401 = vunpack.c.h.b16 %v724
        %v3402 = vunpack.c.l.b16 %v725
        %v3403 = vunpack.c.h.b16 %v725
        %v3404 = vunpack.c.l.b16 %v726
        %v3405 = vunpack.c.h.b16 %v726
        %v3406 = vunpack.c.l.b16 %v727
        %v3407 = vunpack.c.h.b16 %v727
        %v3408 = vunpack.c.l.b16 %v728
        %v3409 = vunpack.c.h.b16 %v728
        %v3410 = vunpack.c.l.b16 %v729
        %v3411 = vunpack.c.h.b16 %v729
        %v3412 = vunpack.c.l.b16 %v730
        %v3413 = vunpack.c.h.b16 %v730
        %v3414 = vunpack.c.l.b16 %v731
        %v3415 = vunpack.c.h.b16 %v731
        %v3416 = vunpack.c.l.b16 %v732
        %v3417 = vunpack.c.h.b16 %v732
        %v3418 = vunpack.c.l.b16 %v733
        %v3419 = vunpack.c.h.b16 %v733
        %v3420 = vunpack.c.l.b16 %v734
        %v3421 = vunpack.c.h.b16 %v734
        %v3422 = vunpack.c.l.b16 %v735
        %v3423 = vunpack.c.h.b16 %v735
        %v3424 = vunpack.c.l.b16 %v736
        %v3425 = vunpack.c.h.b16 %v736
        %v3426 = vunpack.c.l.b16 %v737
        %v3427 = vunpack.c.h.b16 %v737
        %v3428 = vunpack.c.l.b16 %v738
        %v3429 = vunpack.c.h.b16 %v738
        %v3430 = vunpack.c.l.b16 %v739
        %v3431 = vunpack.c.h.b16 %v739
        %v3432 = vunpack.c.l.b16 %v740
        %v3433 = vunpack.c.h.b16 %v740
        %v3434 = vunpack.c.l.b16 %v741
        %v3435 = vunpack.c.h.b16 %v741
        %v3436 = vunpack.c.l.b16 %v742
        %v3437 = vunpack.c.h.b16 %v742
        %v3438 = vunpack.c.l.b16 %v743
        %v3439 = vunpack.c.h.b16 %v743
        %v3440 = vunpack.c.l.b16 %v744
        %v3441 = vunpack.c.h.b16 %v744
        %v3442 = vunpack.c.l.b16 %v745
        %v3443 = vunpack.c.h.b16 %v745
        %v3444 = vunpack.c.l.b16 %v746
        %v3445 = vunpack.c.h.b16 %v746
        %v3446 = vunpack.c.l.b16 %v747
        %v3447 = vunpack.c.h.b16 %v747
        %v3448 = vunpack.c.l.b16 %v748
        %v3449 = vunpack.c.h.b16 %v748
        %v3450 = vunpack.c.l.b16 %v749
        %v3451 = vunpack.c.h.b16 %v749
        %v3452 = vunpack.c.l.b16 %v750
        %v3453 = vunpack.c.h.b16 %v750
        %v3454 = vunpack.c.l.b16 %v751
        %v3455 = vunpack.c.h.b16 %v751
        %v3456 = vunpack.c.l.b16 %v752
        %v3457 = vunpack.c.h.b16 %v752
        %v3458 = vunpack.c.l.b16 %v753
        %v3459 = vunpack.c.h.b16 %v753
        %v3460 = vunpack.c.l.b16 %v754
        %v3461 = vunpack.c.h.b16 %v754
        %v3462 = vunpack.c.l.b16 %v755
        %v3463 = vunpack.c.h.b16 %v755
        %v3464 = vunpack.c.l.b16 %v756
        %v3465 = vunpack.c.h.b16 %v756
        %v3466 = vunpack.c.l.b16 %v757
        %v3467 = vunpack.c.h.b16 %v757
        %v3468 = vunpack.c.l.b16 %v758
        %v3469 = vunpack.c.h.b16 %v758
        %v3470 = vunpack.c.l.b16 %v759
        %v3471 = vunpack.c.h.b16 %v759
        %v3472 = vunpack.c.l.b16 %v760
        %v3473 = vunpack.c.h.b16 %v760
        %v3474 = vunpack.c.l.b16 %v761
        %v3475 = vunpack.c.h.b16 %v761
        %v3476 = vunpack.c.l.b16 %v762
        %v3477 = vunpack.c.h.b16 %v762
        %v3478 = vunpack.c.l.b16 %v763
        %v3479 = vunpack.c.h.b16 %v763
        %v3480 = vunpack.c.l.b16 %v764
        %v3481 = vunpack.c.h.b16 %v764
        %v3482 = vunpack.c.l.b16 %v765
        %v3483 = vunpack.c.h.b16 %v765
        %v3484 = vunpack.c.l.b16 %v766
        %v3485 = vunpack.c.h.b16 %v766
        %v3486 = vunpack.c.l.b16 %v767
        %v3487 = vunpack.c.h.b16 %v767
        %v3488 = vunpack.c.l.b16 %v768
        %v3489 = vunpack.c.h.b16 %v768
        %v3490 = vunpack.c.l.b16 %v769
        %v3491 = vunpack.c.h.b16 %v769
        %v3492 = vunpack.c.l.b16 %v770
        %v3493 = vunpack.c.h.b16 %v770
        %v3494 = vunpack.c.l.b16 %v771
        %v3495 = vunpack.c.h.b16 %v771
        %v3496 = vunpack.c.l.b16 %v772
        %v3497 = vunpack.c.h.b16 %v772
        %v3498 = vunpack.c.l.b16 %v773
        %v3499 = vunpack.c.h.b16 %v773
        %v3500 = vunpack.c.l.b16 %v774
        %v3501 = vunpack.c.h.b16 %v774
        %v3502 = vunpack.c.l.b16 %v775
        %v3503 = vunpack.c.h.b16 %v775
        %v3504 = vunpack.c.l.b16 %v776
        %v3505 = vunpack.c.h.b16 %v776
        %v3506 = vunpack.c.l.b16 %v777
        %v3507 = vunpack.c.h.b16 %v777
        %v3508 = vunpack.c.l.b16 %v778
        %v3509 = vunpack.c.h.b16 %v778
        %v3510 = vunpack.c.l.b16 %v779
        %v3511 = vunpack.c.h.b16 %v779
        %v3512 = vunpack.c.l.b16 %v780
        %v3513 = vunpack.c.h.b16 %v780
        %v3514 = vunpack.c.l.b16 %v781
        %v3515 = vunpack.c.h.b16 %v781
        %v3516 = vunpack.c.l.b16 %v782
        %v3517 = vunpack.c.h.b16 %v782
        %v3518 = vunpack.c.l.b16 %v783
        %v3519 = vunpack.c.h.b16 %v783
        %v3520 = vunpack.c.l.b16 %v784
        %v3521 = vunpack.c.h.b16 %v784
        %v3522 = vunpack.c.l.b16 %v785
        %v3523 = vunpack.c.h.b16 %v785
        %v3524 = vunpack.c.l.b16 %v786
        %v3525 = vunpack.c.h.b16 %v786
        %v3526 = vunpack.c.l.b16 %v787
        %v3527 = vunpack.c.h.b16 %v787
        %v3528 = vunpack.c.l.b16 %v788
        %v3529 = vunpack.c.h.b16 %v788
        %v3530 = vunpack.c.l.b16 %v789
        %v3531 = vunpack.c.h.b16 %v789
        %v3532 = vunpack.c.l.b16 %v790
        %v3533 = vunpack.c.h.b16 %v790
        %v3534 = vunpack.c.l.b16 %v791
        %v3535 = vunpack.c.h.b16 %v791
        %v3536 = vunpack.c.l.b16 %v792
        %v3537 = vunpack.c.h.b16 %v792
        %v3538 = vunpack.c.l.b16 %v793
        %v3539 = vunpack.c.h.b16 %v793
        %v3540 = vunpack.c.l.b16 %v794
        %v3541 = vunpack.c.h.b16 %v794
        %v3542 = vunpack.c.l.b16 %v795
        %v3543 = vunpack.c.h.b16 %v795
        %v3544 = vunpack.c.l.b16 %v796
        %v3545 = vunpack.c.h.b16 %v796
        %v3546 = vunpack.c.l.b16 %v797
        %v3547 = vunpack.c.h.b16 %v797
        %v3548 = vunpack.c.l.b16 %v798
        %v3549 = vunpack.c.h.b16 %v798
        %v3550 = vunpack.c.l.b16 %v799
        %v3551 = vunpack.c.h.b16 %v799
        %v3552 = vunpack.c.l.b16 %v800
        %v3553 = vunpack.c.h.b16 %v800
        %v3554 = vunpack.c.l.b16 %v801
        %v3555 = vunpack.c.h.b16 %v801
        %v3556 = vunpack.c.l.b16 %v802
        %v3557 = vunpack.c.h.b16 %v802
        %v3558 = vunpack.c.l.b16 %v803
        %v3559 = vunpack.c.h.b16 %v803
        %v3560 = vunpack.c.l.b16 %v804
        %v3561 = vunpack.c.h.b16 %v804
        %v3562 = vunpack.c.l.b16 %v805
        %v3563 = vunpack.c.h.b16 %v805
        %v3564 = vunpack.c.l.b16 %v806
        %v3565 = vunpack.c.h.b16 %v806
        %v3566 = vunpack.c.l.b16 %v807
        %v3567 = vunpack.c.h.b16 %v807
        %v3568 = vunpack.c.l.b16 %v808
        %v3569 = vunpack.c.h.b16 %v808
        %v3570 = vunpack.c.l.b16 %v809
        %v3571 = vunpack.c.h.b16 %v809
        %v3572 = vunpack.c.l.b16 %v810
        %v3573 = vunpack.c.h.b16 %v810
        %v3574 = vunpack.c.l.b16 %v811
        %v3575 = vunpack.c.h.b16 %v811
        %v3576 = vunpack.c.l.b16 %v812
        %v3577 = vunpack.c.h.b16 %v812
        %v3578 = vunpack.c.l.b16 %v813
        %v3579 = vunpack.c.h.b16 %v813
        %v3580 = vunpack.c.l.b16 %v814
        %v3581 = vunpack.c.h.b16 %v814
        %v3582 = vunpack.c.l.b16 %v815
        %v3583 = vunpack.c.h.b16 %v815
        %v3584 = vunpack.c.l.b16 %v816
        %v3585 = vunpack.c.h.b16 %v816
        %v3586 = vunpack.c.l.b16 %v817
        %v3587 = vunpack.c.h.b16 %v817
        %v3588 = vunpack.c.l.b16 %v818
        %v3589 = vunpack.c.h.b16 %v818
        %v3590 = vunpack.c.l.b16 %v819
        %v3591 = vunpack.c.h.b16 %v819
        %v3592 = vunpack.c.l.b16 %v820
        %v3593 = vunpack.c.h.b16 %v820
        %v3594 = vunpack.c.l.b16 %v821
        %v3595 = vunpack.c.h.b16 %v821
        %v3596 = vunpack.c.l.b16 %v822
        %v3597 = vunpack.c.h.b16 %v822
        %v3598 = vunpack.c.l.b16 %v823
        %v3599 = vunpack.c.h.b16 %v823
        %v3600 = vunpack.c.l.b16 %v824
        %v3601 = vunpack.c.h.b16 %v824
        %v3602 = vunpack.c.l.b16 %v825
        %v3603 = vunpack.c.h.b16 %v825
        %v3604 = vunpack.c.l.b16 %v826
        %v3605 = vunpack.c.h.b16 %v826
        %v3606 = vunpack.c.l.b16 %v827
        %v3607 = vunpack.c.h.b16 %v827
        %v3608 = vunpack.c.l.b16 %v828
        %v3609 = vunpack.c.h.b16 %v828
        %v3610 = vunpack.c.l.b16 %v829
        %v3611 = vunpack.c.h.b16 %v829
        %v3612 = vunpack.c.l.b16 %v830
        %v3613 = vunpack.c.h.b16 %v830
        %v3614 = vunpack.c.l.b16 %v831
        %v3615 = vunpack.c.h.b16 %v831
        %v3616 = vunpack.c.l.b16 %v832
        %v3617 = vunpack.c.h.b16 %v832
        %v3618 = vunpack.c.l.b16 %v833
        %v3619 = vunpack.c.h.b16 %v833
        %v3620 = vunpack.c.l.b16 %v834
        %v3621 = vunpack.c.h.b16 %v834
        %v3622 = vunpack.c.l.b16 %v835
        %v3623 = vunpack.c.h.b16 %v835
        %v3624 = vunpack.c.l.b16 %v836
        %v3625 = vunpack.c.h.b16 %v836
        %v3626 = vunpack.c.l.b16 %v837
        %v3627 = vunpack.c.h.b16 %v837
        %v3628 = vunpack.c.l.b16 %v838
        %v3629 = vunpack.c.h.b16 %v838
        %v3630 = vunpack.c.l.b16 %v839
        %v3631 = vunpack.c.h.b16 %v839
        %v3632 = vunpack.c.l.b16 %v840
        %v3633 = vunpack.c.h.b16 %v840
        %v3634 = vunpack.c.l.b16 %v841
        %v3635 = vunpack.c.h.b16 %v841
        %v3636 = vunpack.c.l.b16 %v842
        %v3637 = vunpack.c.h.b16 %v842
        %v3638 = vunpack.c.l.b16 %v843
        %v3639 = vunpack.c.h.b16 %v843
        %v3640 = vunpack.c.l.b16 %v844
        %v3641 = vunpack.c.h.b16 %v844
        %v3642 = vunpack.c.l.b16 %v845
        %v3643 = vunpack.c.h.b16 %v845
        %v3644 = vunpack.c.l.b16 %v846
        %v3645 = vunpack.c.h.b16 %v846
        %v3646 = vunpack.c.l.b16 %v847
        %v3647 = vunpack.c.h.b16 %v847
        %v3648 = vunpack.c.l.b16 %v848
        %v3649 = vunpack.c.h.b16 %v848
        %v3650 = vunpack.c.l.b16 %v849
        %v3651 = vunpack.c.h.b16 %v849
        %v3652 = vunpack.c.l.b16 %v850
        %v3653 = vunpack.c.h.b16 %v850
        %v3654 = vunpack.c.l.b16 %v851
        %v3655 = vunpack.c.h.b16 %v851
        %v3656 = vunpack.c.l.b16 %v852
        %v3657 = vunpack.c.h.b16 %v852
        %v3658 = vunpack.c.l.b16 %v853
        %v3659 = vunpack.c.h.b16 %v853
        %v3660 = vunpack.c.l.b16 %v854
        %v3661 = vunpack.c.h.b16 %v854
        %v3662 = vunpack.c.l.b16 %v855
        %v3663 = vunpack.c.h.b16 %v855
        %v3664 = vunpack.c.l.b16 %v856
        %v3665 = vunpack.c.h.b16 %v856
        %v3666 = vunpack.c.l.b16 %v857
        %v3667 = vunpack.c.h.b16 %v857
        %v3668 = vunpack.c.l.b16 %v858
        %v3669 = vunpack.c.h.b16 %v858
        %v3670 = vunpack.c.l.b16 %v859
        %v3671 = vunpack.c.h.b16 %v859
        %v3672 = vunpack.c.l.b16 %v860
        %v3673 = vunpack.c.h.b16 %v860
        %v3674 = vunpack.c.l.b16 %v861
        %v3675 = vunpack.c.h.b16 %v861
        %v3676 = vunpack.c.l.b16 %v862
        %v3677 = vunpack.c.h.b16 %v862
        %v3678 = vunpack.c.l.b16 %v863
        %v3679 = vunpack.c.h.b16 %v863
        %v3680 = vunpack.c.l.b16 %v864
        %v3681 = vunpack.c.h.b16 %v864
        %v3682 = vunpack.c.l.b16 %v865
        %v3683 = vunpack.c.h.b16 %v865
        %v3684 = vunpack.c.l.b16 %v866
        %v3685 = vunpack.c.h.b16 %v866
        %v3686 = vunpack.c.l.b16 %v867
        %v3687 = vunpack.c.h.b16 %v867
        %v3688 = vunpack.c.l.b16 %v868
        %v3689 = vunpack.c.h.b16 %v868
        %v3690 = vunpack.c.l.b16 %v869
        %v3691 = vunpack.c.h.b16 %v869
        %v3692 = vunpack.c.l.b16 %v870
        %v3693 = vunpack.c.h.b16 %v870
        %v3694 = vunpack.c.l.b16 %v871
        %v3695 = vunpack.c.h.b16 %v871
        %v3696 = vunpack.c.l.b16 %v872
        %v3697 = vunpack.c.h.b16 %v872
        %v3698 = vunpack.c.l.b16 %v873
        %v3699 = vunpack.c.h.b16 %v873
        %v3700 = vunpack.c.l.b16 %v874
        %v3701 = vunpack.c.h.b16 %v874
        %v3702 = vunpack.c.l.b16 %v875
        %v3703 = vunpack.c.h.b16 %v875
        %v3704 = vunpack.c.l.b16 %v876
        %v3705 = vunpack.c.h.b16 %v876
        %v3706 = vunpack.c.l.b16 %v877
        %v3707 = vunpack.c.h.b16 %v877
        %v3708 = vunpack.c.l.b16 %v878
        %v3709 = vunpack.c.h.b16 %v878
        %v3710 = vunpack.c.l.b16 %v879
        %v3711 = vunpack.c.h.b16 %v879
        %v3712 = vunpack.c.l.b16 %v880
        %v3713 = vunpack.c.h.b16 %v880
        %v3714 = vunpack.c.l.b16 %v881
        %v3715 = vunpack.c.h.b16 %v881
        %v3716 = vunpack.c.l.b16 %v882
        %v3717 = vunpack.c.h.b16 %v882
        %v3718 = vunpack.c.l.b16 %v883
        %v3719 = vunpack.c.h.b16 %v883
        %v3720 = vunpack.c.l.b16 %v884
        %v3721 = vunpack.c.h.b16 %v884
        %v3722 = vunpack.c.l.b16 %v885
        %v3723 = vunpack.c.h.b16 %v885
        %v3724 = vunpack.c.l.b16 %v886
        %v3725 = vunpack.c.h.b16 %v886
        %v3726 = vunpack.c.l.b16 %v887
        %v3727 = vunpack.c.h.b16 %v887
        %v3728 = vunpack.c.l.b16 %v888
        %v3729 = vunpack.c.h.b16 %v888
        %v3730 = vunpack.c.l.b16 %v889
        %v3731 = vunpack.c.h.b16 %v889
        %v3732 = vunpack.c.l.b16 %v890
        %v3733 = vunpack.c.h.b16 %v890
        %v3734 = vunpack.c.l.b16 %v891
        %v3735 = vunpack.c.h.b16 %v891
        %v3736 = vunpack.c.l.b16 %v892
        %v3737 = vunpack.c.h.b16 %v892
        %v3738 = vunpack.c.l.b16 %v893
        %v3739 = vunpack.c.h.b16 %v893
        %v3740 = vunpack.c.l.b16 %v894
        %v3741 = vunpack.c.h.b16 %v894
        %v3742 = vunpack.c.l.b16 %v895
        %v3743 = vunpack.c.h.b16 %v895
        %v3744 = vunpack.c.l.b16 %v896
        %v3745 = vunpack.c.h.b16 %v896
        %v3746 = vunpack.c.l.b16 %v897
        %v3747 = vunpack.c.h.b16 %v897
        %v3748 = vunpack.c.l.b16 %v898
        %v3749 = vunpack.c.h.b16 %v898
        %v3750 = vunpack.c.l.b16 %v899
        %v3751 = vunpack.c.h.b16 %v899
        %v3752 = vunpack.c.l.b16 %v900
        %v3753 = vunpack.c.h.b16 %v900
        %v3754 = vunpack.c.l.b16 %v901
        %v3755 = vunpack.c.h.b16 %v901
        %v3756 = vunpack.c.l.b16 %v902
        %v3757 = vunpack.c.h.b16 %v902
        %v3758 = vunpack.c.l.b16 %v903
        %v3759 = vunpack.c.h.b16 %v903
        %v3760 = vunpack.c.l.b16 %v904
        %v3761 = vunpack.c.h.b16 %v904
        %v3762 = vunpack.c.l.b16 %v905
        %v3763 = vunpack.c.h.b16 %v905
        %v3764 = vunpack.c.l.b16 %v906
        %v3765 = vunpack.c.h.b16 %v906
        %v3766 = vunpack.c.l.b16 %v907
        %v3767 = vunpack.c.h.b16 %v907
        %v3768 = vunpack.c.l.b16 %v908
        %v3769 = vunpack.c.h.b16 %v908
        %v3770 = vunpack.c.l.b16 %v909
        %v3771 = vunpack.c.h.b16 %v909
        %v3772 = vunpack.c.l.b16 %v910
        %v3773 = vunpack.c.h.b16 %v910
        %v3774 = vunpack.c.l.b16 %v911
        %v3775 = vunpack.c.h.b16 %v911
        %v3776 = vunpack.c.l.b16 %v912
        %v3777 = vunpack.c.h.b16 %v912
        %v3778 = vunpack.c.l.b16 %v913
        %v3779 = vunpack.c.h.b16 %v913
        %v3780 = vunpack.c.l.b16 %v914
        %v3781 = vunpack.c.h.b16 %v914
        %v3782 = vunpack.c.l.b16 %v915
        %v3783 = vunpack.c.h.b16 %v915
        %v3784 = vunpack.c.l.b16 %v916
        %v3785 = vunpack.c.h.b16 %v916
        %v3786 = vunpack.c.l.b16 %v917
        %v3787 = vunpack.c.h.b16 %v917
        %v3788 = vunpack.c.l.b16 %v918
        %v3789 = vunpack.c.h.b16 %v918
        %v3790 = vunpack.c.l.b16 %v919
        %v3791 = vunpack.c.h.b16 %v919
        %v3792 = vunpack.c.l.b16 %v920
        %v3793 = vunpack.c.h.b16 %v920
        %v3794 = vunpack.c.l.b16 %v921
        %v3795 = vunpack.c.h.b16 %v921
        %v3796 = vunpack.c.l.b16 %v922
        %v3797 = vunpack.c.h.b16 %v922
        %v3798 = vunpack.c.l.b16 %v923
        %v3799 = vunpack.c.h.b16 %v923
        %v3800 = vunpack.c.l.b16 %v924
        %v3801 = vunpack.c.h.b16 %v924
        %v3802 = vunpack.c.l.b16 %v925
        %v3803 = vunpack.c.h.b16 %v925
        %v3804 = vunpack.c.l.b16 %v926
        %v3805 = vunpack.c.h.b16 %v926
        %v3806 = vunpack.c.l.b16 %v927
        %v3807 = vunpack.c.h.b16 %v927
        %v3808 = vunpack.c.l.b16 %v928
        %v3809 = vunpack.c.h.b16 %v928
        %v3810 = vunpack.c.l.b16 %v929
        %v3811 = vunpack.c.h.b16 %v929
        %v3812 = vunpack.c.l.b16 %v930
        %v3813 = vunpack.c.h.b16 %v930
        %v3814 = vunpack.c.l.b16 %v931
        %v3815 = vunpack.c.h.b16 %v931
        %v3816 = vunpack.c.l.b16 %v932
        %v3817 = vunpack.c.h.b16 %v932
        %v3818 = vunpack.c.l.b16 %v933
        %v3819 = vunpack.c.h.b16 %v933
        %v3820 = vunpack.c.l.b16 %v934
        %v3821 = vunpack.c.h.b16 %v934
        %v3822 = vunpack.c.l.b16 %v935
        %v3823 = vunpack.c.h.b16 %v935
        %v3824 = vunpack.c.l.b16 %v936
        %v3825 = vunpack.c.h.b16 %v936
        %v3826 = vunpack.c.l.b16 %v937
        %v3827 = vunpack.c.h.b16 %v937
        %v3828 = vunpack.c.l.b16 %v938
        %v3829 = vunpack.c.h.b16 %v938
        %v3830 = vunpack.c.l.b16 %v939
        %v3831 = vunpack.c.h.b16 %v939
        %v3832 = vunpack.c.l.b16 %v940
        %v3833 = vunpack.c.h.b16 %v940
        %v3834 = vunpack.c.l.b16 %v941
        %v3835 = vunpack.c.h.b16 %v941
        %v3836 = vunpack.c.l.b16 %v942
        %v3837 = vunpack.c.h.b16 %v942
        %v3838 = vunpack.c.l.b16 %v943
        %v3839 = vunpack.c.h.b16 %v943
        %v3840 = vunpack.c.l.b16 %v944
        %v3841 = vunpack.c.h.b16 %v944
        %v3842 = vunpack.c.l.b16 %v945
        %v3843 = vunpack.c.h.b16 %v945
        %v3844 = vunpack.c.l.b16 %v946
        %v3845 = vunpack.c.h.b16 %v946
        %v3846 = vunpack.c.l.b16 %v947
        %v3847 = vunpack.c.h.b16 %v947
        %v3848 = vunpack.c.l.b16 %v948
        %v3849 = vunpack.c.h.b16 %v948
        %v3850 = vunpack.c.l.b16 %v949
        %v3851 = vunpack.c.h.b16 %v949
        %v3852 = vunpack.c.l.b16 %v950
        %v3853 = vunpack.c.h.b16 %v950
        %v3854 = vunpack.c.l.b16 %v951
        %v3855 = vunpack.c.h.b16 %v951
        %v3856 = vunpack.c.l.b16 %v952
        %v3857 = vunpack.c.h.b16 %v952
        %v3858 = vunpack.c.l.b16 %v953
        %v3859 = vunpack.c.h.b16 %v953
        %v3860 = vunpack.c.l.b16 %v954
        %v3861 = vunpack.c.h.b16 %v954
        %v3862 = vunpack.c.l.b16 %v955
        %v3863 = vunpack.c.h.b16 %v955
        %v3864 = vunpack.c.l.b16 %v956
        %v3865 = vunpack.c.h.b16 %v956
        %v3866 = vunpack.c.l.b16 %v957
        %v3867 = vunpack.c.h.b16 %v957
        %v3868 = vunpack.c.l.b16 %v958
        %v3869 = vunpack.c.h.b16 %v958
        %v3870 = vunpack.c.l.b16 %v959
        %v3871 = vunpack.c.h.b16 %v959
        %v3872 = vunpack.c.l.b16 %v960
        %v3873 = vunpack.c.h.b16 %v960
        %v3874 = vunpack.c.l.b16 %v961
        %v3875 = vunpack.c.h.b16 %v961
        %v3876 = vunpack.c.l.b16 %v962
        %v3877 = vunpack.c.h.b16 %v962
        %v3878 = vunpack.c.l.b16 %v963
        %v3879 = vunpack.c.h.b16 %v963
        %v3880 = vunpack.c.l.b16 %v964
        %v3881 = vunpack.c.h.b16 %v964
        %v3882 = vunpack.c.l.b16 %v965
        %v3883 = vunpack.c.h.b16 %v965
        %v3884 = vunpack.c.l.b16 %v966
        %v3885 = vunpack.c.h.b16 %v966
        %v3886 = vunpack.c.l.b16 %v967
        %v3887 = vunpack.c.h.b16 %v967
        %v3888 = vunpack.c.l.b16 %v968
        %v3889 = vunpack.c.h.b16 %v968
        %v3890 = vunpack.c.l.b16 %v969
        %v3891 = vunpack.c.h.b16 %v969
        %v3892 = vunpack.c.l.b16 %v970
        %v3893 = vunpack.c.h.b16 %v970
        %v3894 = vunpack.c.l.b16 %v971
        %v3895 = vunpack.c.h.b16 %v971
        %v3896 = vunpack.c.l.b16 %v972
        %v3897 = vunpack.c.h.b16 %v972
        %v3898 = vunpack.c.l.b16 %v973
        %v3899 = vunpack.c.h.b16 %v973
        %v3900 = vunpack.c.l.b16 %v974
        %v3901 = vunpack.c.h.b16 %v974
        %v3902 = vunpack.c.l.b16 %v975
        %v3903 = vunpack.c.h.b16 %v975
        %v3904 = vunpack.c.l.b16 %v976
        %v3905 = vunpack.c.h.b16 %v976
        %v3906 = vunpack.c.l.b16 %v977
        %v3907 = vunpack.c.h.b16 %v977
        %v3908 = vunpack.c.l.b16 %v978
        %v3909 = vunpack.c.h.b16 %v978
        %v3910 = vunpack.c.l.b16 %v979
        %v3911 = vunpack.c.h.b16 %v979
        %v3912 = vunpack.c.l.b16 %v980
        %v3913 = vunpack.c.h.b16 %v980
        %v3914 = vunpack.c.l.b16 %v981
        %v3915 = vunpack.c.h.b16 %v981
        %v3916 = vunpack.c.l.b16 %v982
        %v3917 = vunpack.c.h.b16 %v982
        %v3918 = vunpack.c.l.b16 %v983
        %v3919 = vunpack.c.h.b16 %v983
        %v3920 = vunpack.c.l.b16 %v984
        %v3921 = vunpack.c.h.b16 %v984
        %v3922 = vunpack.c.l.b16 %v985
        %v3923 = vunpack.c.h.b16 %v985
        %v3924 = vunpack.c.l.b16 %v986
        %v3925 = vunpack.c.h.b16 %v986
        %v3926 = vunpack.c.l.b16 %v987
        %v3927 = vunpack.c.h.b16 %v987
        %v3928 = vunpack.c.l.b16 %v988
        %v3929 = vunpack.c.h.b16 %v988
        %v3930 = vunpack.c.l.b16 %v989
        %v3931 = vunpack.c.h.b16 %v989
        %v3932 = vunpack.c.l.b16 %v990
        %v3933 = vunpack.c.h.b16 %v990
        %v3934 = vunpack.c.l.b16 %v991
        %v3935 = vunpack.c.h.b16 %v991
        %v3936 = vunpack.c.l.b16 %v992
        %v3937 = vunpack.c.h.b16 %v992
        %v3938 = vunpack.c.l.b16 %v993
        %v3939 = vunpack.c.h.b16 %v993
        %v3940 = vunpack.c.l.b16 %v994
        %v3941 = vunpack.c.h.b16 %v994
        %v3942 = vunpack.c.l.b16 %v995
        %v3943 = vunpack.c.h.b16 %v995
        %v3944 = vunpack.c.l.b16 %v996
        %v3945 = vunpack.c.h.b16 %v996
        %v3946 = vunpack.c.l.b16 %v997
        %v3947 = vunpack.c.h.b16 %v997
        %v3948 = vunpack.c.l.b16 %v998
        %v3949 = vunpack.c.h.b16 %v998
        %v3950 = vunpack.c.l.b16 %v999
        %v3951 = vunpack.c.h.b16 %v999
        %v3952 = vunpack.c.l.b16 %v1000
        %v3953 = vunpack.c.h.b16 %v1000
        %v3954 = vunpack.c.l.b16 %v1001
        %v3955 = vunpack.c.h.b16 %v1001
        %v3956 = vunpack.c.l.b16 %v1002
        %v3957 = vunpack.c.h.b16 %v1002
        %v3958 = vunpack.c.l.b16 %v1003
        %v3959 = vunpack.c.h.b16 %v1003
        %v3960 = vunpack.c.l.b16 %v1004
        %v3961 = vunpack.c.h.b16 %v1004
        %v3962 = vunpack.c.l.b16 %v1005
        %v3963 = vunpack.c.h.b16 %v1005
        %v3964 = vunpack.c.l.b16 %v1006
        %v3965 = vunpack.c.h.b16 %v1006
        %v3966 = vunpack.c.l.b16 %v1007
        %v3967 = vunpack.c.h.b16 %v1007
        %v3968 = vunpack.c.l.b16 %v1008
        %v3969 = vunpack.c.h.b16 %v1008
        %v3970 = vunpack.c.l.b16 %v1009
        %v3971 = vunpack.c.h.b16 %v1009
        %v3972 = vunpack.c.l.b16 %v1010
        %v3973 = vunpack.c.h.b16 %v1010
        %v3974 = vunpack.c.l.b16 %v1011
        %v3975 = vunpack.c.h.b16 %v1011
        %v3976 = vunpack.c.l.b16 %v1012
        %v3977 = vunpack.c.h.b16 %v1012
        %v3978 = vunpack.c.l.b16 %v1013
        %v3979 = vunpack.c.h.b16 %v1013
        %v3980 = vunpack.c.l.b16 %v1014
        %v3981 = vunpack.c.h.b16 %v1014
        %v3982 = vunpack.c.l.b16 %v1015
        %v3983 = vunpack.c.h.b16 %v1015
        %v3984 = vunpack.c.l.b16 %v1016
        %v3985 = vunpack.c.h.b16 %v1016
        %v3986 = vunpack.c.l.b16 %v1017
        %v3987 = vunpack.c.h.b16 %v1017
        %v3988 = vunpack.c.l.b16 %v1018
        %v3989 = vunpack.c.h.b16 %v1018
        %v3990 = vunpack.c.l.b16 %v1019
        %v3991 = vunpack.c.h.b16 %v1019
        %v3992 = vunpack.c.l.b16 %v1020
        %v3993 = vunpack.c.h.b16 %v1020
        %v3994 = vunpack.c.l.b16 %v1021
        %v3995 = vunpack.c.h.b16 %v1021
        %v3996 = vunpack.c.l.b16 %v1022
        %v3997 = vunpack.c.h.b16 %v1022
        %v3998 = vunpack.c.l.b16 %v1023
        %v3999 = vunpack.c.h.b16 %v1023
        %v4000 = vunpack.c.l.b16 %v1024
        %v4001 = vunpack.c.h.b16 %v1024
        %v4002 = vunpack.c.l.b16 %v1025
        %v4003 = vunpack.c.h.b16 %v1025
        %v4004 = vunpack.c.l.b16 %v1026
        %v4005 = vunpack.c.h.b16 %v1026
        %v4006 = vunpack.c.l.b16 %v1027
        %v4007 = vunpack.c.h.b16 %v1027
        %v4008 = vunpack.c.l.b16 %v1028
        %v4009 = vunpack.c.h.b16 %v1028
        %v4010 = vunpack.c.l.b16 %v1029
        %v4011 = vunpack.c.h.b16 %v1029
        %v4012 = vunpack.c.l.b16 %v1030
        %v4013 = vunpack.c.h.b16 %v1030
        %v4014 = vunpack.c.l.b16 %v1031
        %v4015 = vunpack.c.h.b16 %v1031
        %v4016 = vunpack.c.l.b16 %v1032
        %v4017 = vunpack.c.h.b16 %v1032
        %v4018 = vunpack.c.l.b16 %v1033
        %v4019 = vunpack.c.h.b16 %v1033
        %v4020 = vunpack.c.l.b16 %v1034
        %v4021 = vunpack.c.h.b16 %v1034
        %v4022 = vunpack.c.l.b16 %v1035
        %v4023 = vunpack.c.h.b16 %v1035
        %v4024 = vunpack.c.l.b16 %v1036
        %v4025 = vunpack.c.h.b16 %v1036
        %v4026 = vunpack.c.l.b16 %v1037
        %v4027 = vunpack.c.h.b16 %v1037
        %v4028 = vunpack.c.l.b16 %v1038
        %v4029 = vunpack.c.h.b16 %v1038
        %v4030 = vunpack.c.l.b16 %v1039
        %v4031 = vunpack.c.h.b16 %v1039
        %v4032 = vunpack.c.l.b16 %v1040
        %v4033 = vunpack.c.h.b16 %v1040
        %v4034 = vunpack.c.l.b16 %v1041
        %v4035 = vunpack.c.h.b16 %v1041
        %v4036 = vunpack.c.l.b16 %v1042
        %v4037 = vunpack.c.h.b16 %v1042
        %v4038 = vunpack.c.l.b16 %v1043
        %v4039 = vunpack.c.h.b16 %v1043
        %v4040 = vunpack.c.l.b16 %v1044
        %v4041 = vunpack.c.h.b16 %v1044
        %v4042 = vunpack.c.l.b16 %v1045
        %v4043 = vunpack.c.h.b16 %v1045
        %v4044 = vunpack.c.l.b16 %v1046
        %v4045 = vunpack.c.h.b16 %v1046
        %v4046 = vunpack.c.l.b16 %v1047
        %v4047 = vunpack.c.h.b16 %v1047
        %v4048 = vunpack.c.l.b16 %v1048
        %v4049 = vunpack.c.h.b16 %v1048
        %v4050 = vunpack.c.l.b16 %v1049
        %v4051 = vunpack.c.h.b16 %v1049
        %v4052 = vunpack.c.l.b16 %v1050
        %v4053 = vunpack.c.h.b16 %v1050
        %v4054 = vunpack.c.l.b16 %v1051
        %v4055 = vunpack.c.h.b16 %v1051
        %v4056 = vunpack.c.l.b16 %v1052
        %v4057 = vunpack.c.h.b16 %v1052
        %v4058 = vunpack.c.l.b16 %v1053
        %v4059 = vunpack.c.h.b16 %v1053
        %v4060 = vunpack.c.l.b16 %v1054
        %v4061 = vunpack.c.h.b16 %v1054
        %v4062 = vunpack.c.l.b16 %v1055
        %v4063 = vunpack.c.h.b16 %v1055
        %v4064 = vunpack.c.l.b16 %v1056
        %v4065 = vunpack.c.h.b16 %v1056
        %v4066 = vunpack.c.l.b16 %v1057
        %v4067 = vunpack.c.h.b16 %v1057
        %v4068 = vunpack.c.l.b16 %v1058
        %v4069 = vunpack.c.h.b16 %v1058
        %v4070 = vunpack.c.l.b16 %v1059
        %v4071 = vunpack.c.h.b16 %v1059
        %v4072 = vunpack.c.l.b16 %v1060
        %v4073 = vunpack.c.h.b16 %v1060
        %v4074 = vunpack.c.l.b16 %v1061
        %v4075 = vunpack.c.h.b16 %v1061
        %v4076 = vunpack.c.l.b16 %v1062
        %v4077 = vunpack.c.h.b16 %v1062
        %v4078 = vunpack.c.l.b16 %v1063
        %v4079 = vunpack.c.h.b16 %v1063
        %v4080 = vunpack.c.l.b16 %v1064
        %v4081 = vunpack.c.h.b16 %v1064
        %v4082 = vunpack.c.l.b16 %v1065
        %v4083 = vunpack.c.h.b16 %v1065
        %v4084 = vunpack.c.l.b16 %v1066
        %v4085 = vunpack.c.h.b16 %v1066
        %v4086 = vunpack.c.l.b16 %v1067
        %v4087 = vunpack.c.h.b16 %v1067
        %v4088 = vunpack.c.l.b16 %v1068
        %v4089 = vunpack.c.h.b16 %v1068
        %v4090 = vunpack.c.l.b16 %v1069
        %v4091 = vunpack.c.h.b16 %v1069
        %v4092 = vunpack.c.l.b16 %v1070
        %v4093 = vunpack.c.h.b16 %v1070
        %v4094 = vunpack.c.l.b16 %v1071
        %v4095 = vunpack.c.h.b16 %v1071
        %v4096 = vunpack.c.l.b16 %v1072
        %v4097 = vunpack.c.h.b16 %v1072
        %v4098 = vunpack.c.l.b16 %v1073
        %v4099 = vunpack.c.h.b16 %v1073
        %v4100 = vunpack.c.l.b16 %v1074
        %v4101 = vunpack.c.h.b16 %v1074
        %v4102 = vunpack.c.l.b16 %v1075
        %v4103 = vunpack.c.h.b16 %v1075
        %v4104 = vunpack.c.l.b16 %v1076
        %v4105 = vunpack.c.h.b16 %v1076
        %v4106 = vunpack.c.l.b16 %v1077
        %v4107 = vunpack.c.h.b16 %v1077
        %v4108 = vunpack.c.l.b16 %v1078
        %v4109 = vunpack.c.h.b16 %v1078
        %v4110 = vunpack.c.l.b16 %v1079
        %v4111 = vunpack.c.h.b16 %v1079
        %v4112 = vunpack.c.l.b16 %v1080
        %v4113 = vunpack.c.h.b16 %v1080
        %v4114 = vunpack.c.l.b16 %v1081
        %v4115 = vunpack.c.h.b16 %v1081
        %v4116 = vunpack.c.l.b16 %v1082
        %v4117 = vunpack.c.h.b16 %v1082
        %v4118 = vunpack.c.l.b16 %v1083
        %v4119 = vunpack.c.h.b16 %v1083
        %v4120 = vunpack.c.l.b16 %v1084
        %v4121 = vunpack.c.h.b16 %v1084
        %v4122 = vunpack.c.l.b16 %v1085
        %v4123 = vunpack.c.h.b16 %v1085
        %v4124 = vunpack.c.l.b16 %v1086
        %v4125 = vunpack.c.h.b16 %v1086
        %v4126 = vunpack.c.l.b16 %v1087
        %v4127 = vunpack.c.h.b16 %v1087
        %v4128 = vunpack.c.l.b16 %v1088
        %v4129 = vunpack.c.h.b16 %v1088
        %v4130 = vunpack.c.l.b16 %v1089
        %v4131 = vunpack.c.h.b16 %v1089
        %v4132 = vunpack.c.l.b16 %v1090
        %v4133 = vunpack.c.h.b16 %v1090
        %v4134 = vunpack.c.l.b16 %v1091
        %v4135 = vunpack.c.h.b16 %v1091
        %v4136 = vunpack.c.l.b16 %v1092
        %v4137 = vunpack.c.h.b16 %v1092
        %v4138 = vunpack.c.l.b16 %v1093
        %v4139 = vunpack.c.h.b16 %v1093
        %v4140 = vunpack.c.l.b16 %v1094
        %v4141 = vunpack.c.h.b16 %v1094
        %v4142 = vunpack.c.l.b16 %v1095
        %v4143 = vunpack.c.h.b16 %v1095
        %v4144 = vunpack.c.l.b16 %v1096
        %v4145 = vunpack.c.h.b16 %v1096
        %v4146 = vunpack.c.l.b16 %v1097
        %v4147 = vunpack.c.h.b16 %v1097
        %v4148 = vunpack.c.l.b16 %v1098
        %v4149 = vunpack.c.h.b16 %v1098
        %v4150 = vunpack.c.l.b16 %v1099
        %v4151 = vunpack.c.h.b16 %v1099
        %v4152 = vunpack.c.l.b16 %v1100
        %v4153 = vunpack.c.h.b16 %v1100
        %v4154 = vunpack.c.l.b16 %v1101
        %v4155 = vunpack.c.h.b16 %v1101
        %v4156 = vunpack.c.l.b16 %v1102
        %v4157 = vunpack.c.h.b16 %v1102
        %v4158 = vunpack.c.l.b16 %v1103
        %v4159 = vunpack.c.h.b16 %v1103
        %v4160 = vunpack.c.l.b16 %v1104
        %v4161 = vunpack.c.h.b16 %v1104
        %v4162 = vunpack.c.l.b16 %v1105
        %v4163 = vunpack.c.h.b16 %v1105
        %v4164 = vunpack.c.l.b16 %v1106
        %v4165 = vunpack.c.h.b16 %v1106
        %v4166 = vunpack.c.l.b16 %v1107
        %v4167 = vunpack.c.h.b16 %v1107
        %v4168 = vunpack.c.l.b16 %v1108
        %v4169 = vunpack.c.h.b16 %v1108
        %v4170 = vunpack.c.l.b16 %v1109
        %v4171 = vunpack.c.h.b16 %v1109
        %v4172 = vunpack.c.l.b16 %v1110
        %v4173 = vunpack.c.h.b16 %v1110
        %v4174 = vunpack.c.l.b16 %v1111
        %v4175 = vunpack.c.h.b16 %v1111
        %v4176 = vunpack.c.l.b16 %v1112
        %v4177 = vunpack.c.h.b16 %v1112
        %v4178 = vunpack.c.l.b16 %v1113
        %v4179 = vunpack.c.h.b16 %v1113
        %v4180 = vunpack.c.l.b16 %v1114
        %v4181 = vunpack.c.h.b16 %v1114
        %v4182 = vunpack.c.l.b16 %v1115
        %v4183 = vunpack.c.h.b16 %v1115
        %v4184 = vunpack.c.l.b16 %v1116
        %v4185 = vunpack.c.h.b16 %v1116
        %v4186 = vunpack.c.l.b16 %v1117
        %v4187 = vunpack.c.h.b16 %v1117
        %v4188 = vunpack.c.l.b16 %v1118
        %v4189 = vunpack.c.h.b16 %v1118
        %v4190 = vunpack.c.l.b16 %v1119
        %v4191 = vunpack.c.h.b16 %v1119
        %v4192 = vunpack.c.l.b16 %v1120
        %v4193 = vunpack.c.h.b16 %v1120
        %v4194 = vunpack.c.l.b16 %v1121
        %v4195 = vunpack.c.h.b16 %v1121
        %v4196 = vunpack.c.l.b16 %v1122
        %v4197 = vunpack.c.h.b16 %v1122
        %v4198 = vunpack.c.l.b16 %v1123
        %v4199 = vunpack.c.h.b16 %v1123
        %v4200 = vunpack.c.l.b16 %v1124
        %v4201 = vunpack.c.h.b16 %v1124
        %v4202 = vunpack.c.l.b16 %v1125
        %v4203 = vunpack.c.h.b16 %v1125
        %v4204 = vunpack.c.l.b16 %v1126
        %v4205 = vunpack.c.h.b16 %v1126
        %v4206 = vunpack.c.l.b16 %v1127
        %v4207 = vunpack.c.h.b16 %v1127
        %v4208 = vunpack.c.l.b16 %v1128
        %v4209 = vunpack.c.h.b16 %v1128
        %v4210 = vunpack.c.l.b16 %v1129
        %v4211 = vunpack.c.h.b16 %v1129
        %v4212 = vunpack.c.l.b16 %v1130
        %v4213 = vunpack.c.h.b16 %v1130
        %v4214 = vunpack.c.l.b16 %v1131
        %v4215 = vunpack.c.h.b16 %v1131
        %v4216 = vunpack.c.l.b16 %v1132
        %v4217 = vunpack.c.h.b16 %v1132
        %v4218 = vunpack.c.l.b16 %v1133
        %v4219 = vunpack.c.h.b16 %v1133
        %v4220 = vunpack.c.l.b16 %v1134
        %v4221 = vunpack.c.h.b16 %v1134
        %v4222 = vunpack.c.l.b16 %v1135
        %v4223 = vunpack.c.h.b16 %v1135
        %v4224 = vunpack.c.l.b16 %v1136
        %v4225 = vunpack.c.h.b16 %v1136
        %v4226 = vunpack.c.l.b16 %v1137
        %v4227 = vunpack.c.h.b16 %v1137
        %v4228 = vunpack.c.l.b16 %v1138
        %v4229 = vunpack.c.h.b16 %v1138
        %v4230 = vunpack.c.l.b16 %v1139
        %v4231 = vunpack.c.h.b16 %v1139
        %v4232 = vunpack.c.l.b16 %v1140
        %v4233 = vunpack.c.h.b16 %v1140
        %v4234 = vunpack.c.l.b16 %v1141
        %v4235 = vunpack.c.h.b16 %v1141
        %v4236 = vunpack.c.l.b16 %v1142
        %v4237 = vunpack.c.h.b16 %v1142
        %v4238 = vunpack.c.l.b16 %v1143
        %v4239 = vunpack.c.h.b16 %v1143
        %v4240 = vunpack.c.l.b16 %v1144
        %v4241 = vunpack.c.h.b16 %v1144
        %v4242 = vunpack.c.l.b16 %v1145
        %v4243 = vunpack.c.h.b16 %v1145
        %v4244 = vunpack.c.l.b16 %v1146
        %v4245 = vunpack.c.h.b16 %v1146
        %v4246 = vunpack.c.l.b16 %v1147
        %v4247 = vunpack.c.h.b16 %v1147
        %v4248 = vunpack.c.l.b16 %v1148
        %v4249 = vunpack.c.h.b16 %v1148
        %v4250 = vunpack.c.l.b16 %v1149
        %v4251 = vunpack.c.h.b16 %v1149
        %v4252 = vunpack.c.l.b16 %v1150
        %v4253 = vunpack.c.h.b16 %v1150
        %v4254 = vunpack.c.l.b16 %v1151
        %v4255 = vunpack.c.h.b16 %v1151
        %v4256 = vunpack.c.l.b16 %v1152
        %v4257 = vunpack.c.h.b16 %v1152
        %v4258 = vunpack.c.l.b16 %v1153
        %v4259 = vunpack.c.h.b16 %v1153
        %v4260 = vunpack.c.l.b16 %v1154
        %v4261 = vunpack.c.h.b16 %v1154
        %v4262 = vunpack.c.l.b16 %v1155
        %v4263 = vunpack.c.h.b16 %v1155
        %v4264 = vunpack.c.l.b16 %v1156
        %v4265 = vunpack.c.h.b16 %v1156
        %v4266 = vunpack.c.l.b16 %v1157
        %v4267 = vunpack.c.h.b16 %v1157
        %v4268 = vunpack.c.l.b16 %v1158
        %v4269 = vunpack.c.h.b16 %v1158
        %v4270 = vunpack.c.l.b16 %v1159
        %v4271 = vunpack.c.h.b16 %v1159
        %v4272 = vunpack.c.l.b16 %v1160
        %v4273 = vunpack.c.h.b16 %v1160
        %v4274 = vunpack.c.l.b16 %v1161
        %v4275 = vunpack.c.h.b16 %v1161
        %v4276 = vunpack.c.l.b16 %v1162
        %v4277 = vunpack.c.h.b16 %v1162
        %v4278 = vunpack.c.l.b16 %v1163
        %v4279 = vunpack.c.h.b16 %v1163
        %v4280 = vunpack.c.l.b16 %v1164
        %v4281 = vunpack.c.h.b16 %v1164
        %v4282 = vunpack.c.l.b16 %v1165
        %v4283 = vunpack.c.h.b16 %v1165
        %v4284 = vunpack.c.l.b16 %v1166
        %v4285 = vunpack.c.h.b16 %v1166
        %v4286 = vunpack.c.l.b16 %v1167
        %v4287 = vunpack.c.h.b16 %v1167
        %v4288 = vunpack.c.l.b16 %v1168
        %v4289 = vunpack.c.h.b16 %v1168
        %v4290 = vunpack.c.l.b16 %v1169
        %v4291 = vunpack.c.h.b16 %v1169
        %v4292 = vunpack.c.l.b16 %v1170
        %v4293 = vunpack.c.h.b16 %v1170
        %v4294 = vunpack.c.l.b16 %v1171
        %v4295 = vunpack.c.h.b16 %v1171
        %v4296 = vunpack.c.l.b16 %v1172
        %v4297 = vunpack.c.h.b16 %v1172
        %v4298 = vunpack.c.l.b16 %v1173
        %v4299 = vunpack.c.h.b16 %v1173
        %v4300 = vunpack.c.l.b16 %v1174
        %v4301 = vunpack.c.h.b16 %v1174
        %v4302 = vunpack.c.l.b16 %v1175
        %v4303 = vunpack.c.h.b16 %v1175
        %v4304 = vunpack.c.l.b16 %v1176
        %v4305 = vunpack.c.h.b16 %v1176
        %v4306 = vunpack.c.l.b16 %v1177
        %v4307 = vunpack.c.h.b16 %v1177
        %v4308 = vunpack.c.l.b16 %v1178
        %v4309 = vunpack.c.h.b16 %v1178
        %v4310 = vunpack.c.l.b16 %v1179
        %v4311 = vunpack.c.h.b16 %v1179
        %v4312 = vunpack.c.l.b16 %v1180
        %v4313 = vunpack.c.h.b16 %v1180
        %v4314 = vunpack.c.l.b16 %v1181
        %v4315 = vunpack.c.h.b16 %v1181
        %v4316 = vunpack.c.l.b16 %v1182
        %v4317 = vunpack.c.h.b16 %v1182
        %v4318 = vunpack.c.l.b16 %v1183
        %v4319 = vunpack.c.h.b16 %v1183
        %v4320 = vunpack.c.l.b16 %v1184
        %v4321 = vunpack.c.h.b16 %v1184
        %v4322 = vunpack.c.l.b16 %v1185
        %v4323 = vunpack.c.h.b16 %v1185
        %v4324 = vunpack.c.l.b16 %v1186
        %v4325 = vunpack.c.h.b16 %v1186
        %v4326 = vunpack.c.l.b16 %v1187
        %v4327 = vunpack.c.h.b16 %v1187
        %v4328 = vunpack.c.l.b16 %v1188
        %v4329 = vunpack.c.h.b16 %v1188
        %v4330 = vunpack.c.l.b16 %v1189
        %v4331 = vunpack.c.h.b16 %v1189
        %v4332 = vunpack.c.l.b16 %v1190
        %v4333 = vunpack.c.h.b16 %v1190
        %v4334 = vunpack.c.l.b16 %v1191
        %v4335 = vunpack.c.h.b16 %v1191
        %v4336 = vunpack.c.l.b16 %v1192
        %v4337 = vunpack.c.h.b16 %v1192
        %v4338 = vunpack.c.l.b16 %v1193
        %v4339 = vunpack.c.h.b16 %v1193
        %v4340 = vunpack.c.l.b16 %v1194
        %v4341 = vunpack.c.h.b16 %v1194
        %v4342 = vunpack.c.l.b16 %v1195
        %v4343 = vunpack.c.h.b16 %v1195
        %v4344 = vunpack.c.l.b16 %v1196
        %v4345 = vunpack.c.h.b16 %v1196
        %v4346 = vunpack.c.l.b16 %v1197
        %v4347 = vunpack.c.h.b16 %v1197
        %v4348 = vunpack.c.l.b16 %v1198
        %v4349 = vunpack.c.h.b16 %v1198
        %v4350 = vunpack.c.l.b16 %v1199
        %v4351 = vunpack.c.h.b16 %v1199
        %v4352 = vunpack.c.l.b16 %v1200
        %v4353 = vunpack.c.h.b16 %v1200
        %v4354 = vunpack.c.l.b16 %v1201
        %v4355 = vunpack.c.h.b16 %v1201
        %v4356 = vunpack.c.l.b16 %v1202
        %v4357 = vunpack.c.h.b16 %v1202
        %v4358 = vunpack.c.l.b16 %v1203
        %v4359 = vunpack.c.h.b16 %v1203
        %v4360 = vunpack.c.l.b16 %v1204
        %v4361 = vunpack.c.h.b16 %v1204
        %v4362 = vunpack.c.l.b16 %v1205
        %v4363 = vunpack.c.h.b16 %v1205
        %v4364 = vunpack.c.l.b16 %v1206
        %v4365 = vunpack.c.h.b16 %v1206
        %v4366 = vunpack.c.l.b16 %v1207
        %v4367 = vunpack.c.h.b16 %v1207
        %v4368 = vunpack.c.l.b16 %v1208
        %v4369 = vunpack.c.h.b16 %v1208
        %v4370 = vunpack.c.l.b16 %v1209
        %v4371 = vunpack.c.h.b16 %v1209
        %v4372 = vunpack.c.l.b16 %v1210
        %v4373 = vunpack.c.h.b16 %v1210
        %v4374 = vunpack.c.l.b16 %v1211
        %v4375 = vunpack.c.h.b16 %v1211
        %v4376 = vunpack.c.l.b16 %v1212
        %v4377 = vunpack.c.h.b16 %v1212
        %v4378 = vunpack.c.l.b16 %v1213
        %v4379 = vunpack.c.h.b16 %v1213
        %v4380 = vunpack.c.l.b16 %v1214
        %v4381 = vunpack.c.h.b16 %v1214
        %v4382 = vunpack.c.l.b16 %v1215
        %v4383 = vunpack.c.h.b16 %v1215
        %v4384 = vunpack.c.l.b16 %v1216
        %v4385 = vunpack.c.h.b16 %v1216
        %v4386 = vunpack.c.l.b16 %v1217
        %v4387 = vunpack.c.h.b16 %v1217
        %v4388 = vunpack.c.l.b16 %v1218
        %v4389 = vunpack.c.h.b16 %v1218
        %v4390 = vunpack.c.l.b16 %v1219
        %v4391 = vunpack.c.h.b16 %v1219
        %v4392 = vunpack.c.l.b16 %v1220
        %v4393 = vunpack.c.h.b16 %v1220
        %v4394 = vunpack.c.l.b16 %v1221
        %v4395 = vunpack.c.h.b16 %v1221
        %v4396 = vunpack.c.l.b16 %v1222
        %v4397 = vunpack.c.h.b16 %v1222
        %v4398 = vunpack.c.l.b16 %v1223
        %v4399 = vunpack.c.h.b16 %v1223
        %v4400 = vunpack.c.l.b16 %v1224
        %v4401 = vunpack.c.h.b16 %v1224
        %v4402 = vunpack.c.l.b16 %v1225
        %v4403 = vunpack.c.h.b16 %v1225
        %v4404 = vunpack.c.l.b16 %v1226
        %v4405 = vunpack.c.h.b16 %v1226
        %v4406 = vunpack.c.l.b16 %v1227
        %v4407 = vunpack.c.h.b16 %v1227
        %v4408 = vunpack.c.l.b16 %v1228
        %v4409 = vunpack.c.h.b16 %v1228
        %v4410 = vunpack.c.l.b16 %v1229
        %v4411 = vunpack.c.h.b16 %v1229
        %v4412 = vunpack.c.l.b16 %v1230
        %v4413 = vunpack.c.h.b16 %v1230
        %v4414 = vunpack.c.l.b16 %v1231
        %v4415 = vunpack.c.h.b16 %v1231
        %v4416 = vunpack.c.l.b16 %v1232
        %v4417 = vunpack.c.h.b16 %v1232
        %v4418 = vunpack.c.l.b16 %v1233
        %v4419 = vunpack.c.h.b16 %v1233
        %v4420 = vunpack.c.l.b16 %v1234
        %v4421 = vunpack.c.h.b16 %v1234
        %v4422 = vunpack.c.l.b16 %v1235
        %v4423 = vunpack.c.h.b16 %v1235
        %v4424 = vunpack.c.l.b16 %v1236
        %v4425 = vunpack.c.h.b16 %v1236
        %v4426 = vunpack.c.l.b16 %v1237
        %v4427 = vunpack.c.h.b16 %v1237
        %v4428 = vunpack.c.l.b16 %v1238
        %v4429 = vunpack.c.h.b16 %v1238
        %v4430 = vunpack.c.l.b16 %v1239
        %v4431 = vunpack.c.h.b16 %v1239
        %v4432 = vunpack.c.l.b16 %v1240
        %v4433 = vunpack.c.h.b16 %v1240
        %v4434 = vunpack.c.l.b16 %v1241
        %v4435 = vunpack.c.h.b16 %v1241
        %v4436 = vunpack.c.l.b16 %v1242
        %v4437 = vunpack.c.h.b16 %v1242
        %v4438 = vunpack.c.l.b16 %v1243
        %v4439 = vunpack.c.h.b16 %v1243
        %v4440 = vunpack.c.l.b16 %v1244
        %v4441 = vunpack.c.h.b16 %v1244
        %v4442 = vunpack.c.l.b16 %v1245
        %v4443 = vunpack.c.h.b16 %v1245
        %v4444 = vunpack.c.l.b16 %v1246
        %v4445 = vunpack.c.h.b16 %v1246
        %v4446 = vunpack.c.l.b16 %v1247
        %v4447 = vunpack.c.h.b16 %v1247
        %v4448 = vunpack.c.l.b16 %v1248
        %v4449 = vunpack.c.h.b16 %v1248
        %v4450 = vunpack.c.l.b16 %v1249
        %v4451 = vunpack.c.h.b16 %v1249
        %v4452 = vunpack.c.l.b16 %v1250
        %v4453 = vunpack.c.h.b16 %v1250
        %v4454 = vunpack.c.l.b16 %v1251
        %v4455 = vunpack.c.h.b16 %v1251
        %v4456 = vunpack.c.l.b16 %v1252
        %v4457 = vunpack.c.h.b16 %v1252
        %v4458 = vunpack.c.l.b16 %v1253
        %v4459 = vunpack.c.h.b16 %v1253
        %v4460 = vunpack.c.l.b16 %v1254
        %v4461 = vunpack.c.h.b16 %v1254
        %v4462 = vunpack.c.l.b16 %v1255
        %v4463 = vunpack.c.h.b16 %v1255
        %v4464 = vunpack.c.l.b16 %v1256
        %v4465 = vunpack.c.h.b16 %v1256
        %v4466 = vunpack.c.l.b16 %v1257
        %v4467 = vunpack.c.h.b16 %v1257
        %v4468 = vunpack.c.l.b16 %v1258
        %v4469 = vunpack.c.h.b16 %v1258
        %v4470 = vunpack.c.l.b16 %v1259
        %v4471 = vunpack.c.h.b16 %v1259
        %v4472 = vunpack.c.l.b16 %v1260
        %v4473 = vunpack.c.h.b16 %v1260
        %v4474 = vunpack.c.l.b16 %v1261
        %v4475 = vunpack.c.h.b16 %v1261
        %v4476 = vunpack.c.l.b16 %v1262
        %v4477 = vunpack.c.h.b16 %v1262
        %v4478 = vunpack.c.l.b16 %v1263
        %v4479 = vunpack.c.h.b16 %v1263
        %v4480 = vunpack.c.l.b16 %v1264
        %v4481 = vunpack.c.h.b16 %v1264
        %v4482 = vunpack.c.l.b16 %v1265
        %v4483 = vunpack.c.h.b16 %v1265
        %v4484 = vunpack.c.l.b16 %v1266
        %v4485 = vunpack.c.h.b16 %v1266
        %v4486 = vunpack.c.l.b16 %v1267
        %v4487 = vunpack.c.h.b16 %v1267
        %v4488 = vunpack.c.l.b16 %v1268
        %v4489 = vunpack.c.h.b16 %v1268
        %v4490 = vunpack.c.l.b16 %v1269
        %v4491 = vunpack.c.h.b16 %v1269
        %v4492 = vunpack.c.l.b16 %v1270
        %v4493 = vunpack.c.h.b16 %v1270
        %v4494 = vunpack.c.l.b16 %v1271
        %v4495 = vunpack.c.h.b16 %v1271
        %v4496 = vunpack.c.l.b16 %v1272
        %v4497 = vunpack.c.h.b16 %v1272
        %v4498 = vunpack.c.l.b16 %v1273
        %v4499 = vunpack.c.h.b16 %v1273
        %v4500 = vunpack.c.l.b16 %v1274
        %v4501 = vunpack.c.h.b16 %v1274
        %v4502 = vunpack.c.l.b16 %v1275
        %v4503 = vunpack.c.h.b16 %v1275
        %v4504 = vunpack.c.l.b16 %v1276
        %v4505 = vunpack.c.h.b16 %v1276
        %v4506 = vunpack.c.l.b16 %v1277
        %v4507 = vunpack.c.h.b16 %v1277
        %v4508 = vunpack.c.l.b16 %v1278
        %v4509 = vunpack.c.h.b16 %v1278
        %v4510 = vunpack.c.l.b16 %v1279
        %v4511 = vunpack.c.h.b16 %v1279
        %v4512 = vunpack.c.l.b16 %v1280
        %v4513 = vunpack.c.h.b16 %v1280
        %v4514 = vunpack.c.l.b16 %v1281
        %v4515 = vunpack.c.h.b16 %v1281
        %v4516 = vunpack.c.l.b16 %v1282
        %v4517 = vunpack.c.h.b16 %v1282
        %v4518 = vunpack.c.l.b16 %v1283
        %v4519 = vunpack.c.h.b16 %v1283
        %v4520 = vunpack.c.l.b16 %v1284
        %v4521 = vunpack.c.h.b16 %v1284
        %v4522 = vunpack.c.l.b16 %v1285
        %v4523 = vunpack.c.h.b16 %v1285
        %v4524 = vunpack.c.l.b16 %v1286
        %v4525 = vunpack.c.h.b16 %v1286
        %v4526 = vunpack.c.l.b16 %v1287
        %v4527 = vunpack.c.h.b16 %v1287
        %v4528 = vpack.c.b16 %v2512, %v2480
        %v4529 = vpack.c.b16 %v2513, %v2481
        %v4530 = vpack.c.b16 %v2514, %v2482
        %v4531 = vpack.c.b16 %v2515, %v2483
        %v4532 = vpack.c.b16 %v2516, %v2484
        %v4533 = vpack.c.b16 %v2517, %v2485
        %v4534 = vpack.c.b16 %v2518, %v2486
        %v4535 = vpack.c.b16 %v2519, %v2487
        %v4536 = vpack.c.b16 %v2520, %v2488
        %v4537 = vpack.c.b16 %v2521, %v2489
        %v4538 = vpack.c.b16 %v2522, %v2490
        %v4539 = vpack.c.b16 %v2523, %v2491
        %v4540 = vpack.c.b16 %v2524, %v2492
        %v4541 = vpack.c.b16 %v2525, %v2493
        %v4542 = vpack.c.b16 %v2526, %v2494
        %v4543 = vpack.c.b16 %v2527, %v2495
        %v4544 = vpack.c.b16 %v2528, %v2496
        %v4545 = vpack.c.b16 %v2529, %v2497
        %v4546 = vpack.c.b16 %v2530, %v2498
        %v4547 = vpack.c.b16 %v2531, %v2499
        %v4548 = vpack.c.b16 %v2532, %v2500
        %v4549 = vpack.c.b16 %v2533, %v2501
        %v4550 = vpack.c.b16 %v2534, %v2502
        %v4551 = vpack.c.b16 %v2535, %v2503
        %v4552 = vpack.c.b16 %v2536, %v2504
        %v4553 = vpack.c.b16 %v2537, %v2505
        %v4554 = vpack.c.b16 %v2538, %v2506
        %v4555 = vpack.c.b16 %v2539, %v2507
        %v4556 = vpack.c.b16 %v2540, %v2508
        %v4557 = vpack.c.b16 %v2541, %v2509
        %v4558 = vpack.c.b16 %v2542, %v2510
        %v4559 = vpack.c.b16 %v2543, %v2511
        %v4560 = vpack.c.b16 %v2576, %v2544
        %v4561 = vpack.c.b16 %v2577, %v2545
        %v4562 = vpack.c.b16 %v2578, %v2546
        %v4563 = vpack.c.b16 %v2579, %v2547
        %v4564 = vpack.c.b16 %v2580, %v2548
        %v4565 = vpack.c.b16 %v2581, %v2549
        %v4566 = vpack.c.b16 %v2582, %v2550
        %v4567 = vpack.c.b16 %v2583, %v2551
        %v4568 = vpack.c.b16 %v2584, %v2552
        %v4569 = vpack.c.b16 %v2585, %v2553
        %v4570 = vpack.c.b16 %v2586, %v2554
        %v4571 = vpack.c.b16 %v2587, %v2555
        %v4572 = vpack.c.b16 %v2588, %v2556
        %v4573 = vpack.c.b16 %v2589, %v2557
        %v4574 = vpack.c.b16 %v2590, %v2558
        %v4575 = vpack.c.b16 %v2591, %v2559
        %v4576 = vpack.c.b16 %v2592, %v2560
        %v4577 = vpack.c.b16 %v2593, %v2561
        %v4578 = vpack.c.b16 %v2594, %v2562
        %v4579 = vpack.c.b16 %v2595, %v2563
        %v4580 = vpack.c.b16 %v2596, %v2564
        %v4581 = vpack.c.b16 %v2597, %v2565
        %v4582 = vpack.c.b16 %v2598, %v2566
        %v4583 = vpack.c.b16 %v2599, %v2567
        %v4584 = vpack.c.b16 %v2600, %v2568
        %v4585 = vpack.c.b16 %v2601, %v2569
        %v4586 = vpack.c.b16 %v2602, %v2570
        %v4587 = vpack.c.b16 %v2603, %v2571
        %v4588 = vpack.c.b16 %v2604, %v2572
        %v4589 = vpack.c.b16 %v2605, %v2573
        %v4590 = vpack.c.b16 %v2606, %v2574
        %v4591 = vpack.c.b16 %v2607, %v2575
        %v4592 = vpack.c.b16 %v2640, %v2608
        %v4593 = vpack.c.b16 %v2641, %v2609
        %v4594 = vpack.c.b16 %v2642, %v2610
        %v4595 = vpack.c.b16 %v2643, %v2611
        %v4596 = vpack.c.b16 %v2644, %v2612
        %v4597 = vpack.c.b16 %v2645, %v2613
        %v4598 = vpack.c.b16 %v2646, %v2614
        %v4599 = vpack.c.b16 %v2647, %v2615
        %v4600 = vpack.c.b16 %v2648, %v2616
        %v4601 = vpack.c.b16 %v2649, %v2617
        %v4602 = vpack.c.b16 %v2650, %v2618
        %v4603 = vpack.c.b16 %v2651, %v2619
        %v4604 = vpack.c.b16 %v2652, %v2620
        %v4605 = vpack.c.b16 %v2653, %v2621
        %v4606 = vpack.c.b16 %v2654, %v2622
        %v4607 = vpack.c.b16 %v2655, %v2623
        %v4608 = vpack.c.b16 %v2656, %v2624
        %v4609 = vpack.c.b16 %v2657, %v2625
        %v4610 = vpack.c.b16 %v2658, %v2626
        %v4611 = vpack.c.b16 %v2659, %v2627
        %v4612 = vpack.c.b16 %v2660, %v2628
        %v4613 = vpack.c.b16 %v2661, %v2629
        %v4614 = vpack.c.b16 %v2662, %v2630
        %v4615 = vpack.c.b16 %v2663, %v2631
        %v4616 = vpack.c.b16 %v2664, %v2632
        %v4617 = vpack.c.b16 %v2665, %v2633
        %v4618 = vpack.c.b16 %v2666, %v2634
        %v4619 = vpack.c.b16 %v2667, %v2635
        %v4620 = vpack.c.b16 %v2668, %v2636
        %v4621 = vpack.c.b16 %v2669, %v2637
        %v4622 = vpack.c.b16 %v2670, %v2638
        %v4623 = vpack.c.b16 %v2671, %v2639
        %v4624 = vpack.c.b16 %v2704, %v2672
        %v4625 = vpack.c.b16 %v2705, %v2673
        %v4626 = vpack.c.b16 %v2706, %v2674
        %v4627 = vpack.c.b16 %v2707, %v2675
        %v4628 = vpack.c.b16 %v2708, %v2676
        %v4629 = vpack.c.b16 %v2709, %v2677
        %v4630 = vpack.c.b16 %v2710, %v2678
        %v4631 = vpack.c.b16 %v2711, %v2679
        %v4632 = vpack.c.b16 %v2712, %v2680
        %v4633 = vpack.c.b16 %v2713, %v2681
        %v4634 = vpack.c.b16 %v2714, %v2682
        %v4635 = vpack.c.b16 %v2715, %v2683
        %v4636 = vpack.c.b16 %v2716, %v2684
        %v4637 = vpack.c.b16 %v2717, %v2685
        %v4638 = vpack.c.b16 %v2718, %v2686
        %v4639 = vpack.c.b16 %v2719, %v2687
        %v4640 = vpack.c.b16 %v2720, %v2688
        %v4641 = vpack.c.b16 %v2721, %v2689
        %v4642 = vpack.c.b16 %v2722, %v2690
        %v4643 = vpack.c.b16 %v2723, %v2691
        %v4644 = vpack.c.b16 %v2724, %v2692
        %v4645 = vpack.c.b16 %v2725, %v2693
        %v4646 = vpack.c.b16 %v2726, %v2694
        %v4647 = vpack.c.b16 %v2727, %v2695
        %v4648 = vpack.c.b16 %v2728, %v2696
        %v4649 = vpack.c.b16 %v2729, %v2697
        %v4650 = vpack.c.b16 %v2730, %v2698
        %v4651 = vpack.c.b16 %v2731, %v2699
        %v4652 = vpack.c.b16 %v2732, %v2700
        %v4653 = vpack.c.b16 %v2733, %v2701
        %v4654 = vpack.c.b16 %v2734, %v2702
        %v4655 = vpack.c.b16 %v2735, %v2703
        %v4656 = vpack.c.b16 %v2768, %v2736
        %v4657 = vpack.c.b16 %v2769, %v2737
        %v4658 = vpack.c.b16 %v2770, %v2738
        %v4659 = vpack.c.b16 %v2771, %v2739
        %v4660 = vpack.c.b16 %v2772, %v2740
        %v4661 = vpack.c.b16 %v2773, %v2741
        %v4662 = vpack.c.b16 %v2774, %v2742
        %v4663 = vpack.c.b16 %v2775, %v2743
        %v4664 = vpack.c.b16 %v2776, %v2744
        %v4665 = vpack.c.b16 %v2777, %v2745
        %v4666 = vpack.c.b16 %v2778, %v2746
        %v4667 = vpack.c.b16 %v2779, %v2747
        %v4668 = vpack.c.b16 %v2780, %v2748
        %v4669 = vpack.c.b16 %v2781, %v2749
        %v4670 = vpack.c.b16 %v2782, %v2750
        %v4671 = vpack.c.b16 %v2783, %v2751
        %v4672 = vpack.c.b16 %v2784, %v2752
        %v4673 = vpack.c.b16 %v2785, %v2753
        %v4674 = vpack.c.b16 %v2786, %v2754
        %v4675 = vpack.c.b16 %v2787, %v2755
        %v4676 = vpack.c.b16 %v2788, %v2756
        %v4677 = vpack.c.b16 %v2789, %v2757
        %v4678 = vpack.c.b16 %v2790, %v2758
        %v4679 = vpack.c.b16 %v2791, %v2759
        %v4680 = vpack.c.b16 %v2792, %v2760
        %v4681 = vpack.c.b16 %v2793, %v2761
        %v4682 = vpack.c.b16 %v2794, %v2762
        %v4683 = vpack.c.b16 %v2795, %v2763
        %v4684 = vpack.c.b16 %v2796, %v2764
        %v4685 = vpack.c.b16 %v2797, %v2765
        %v4686 = vpack.c.b16 %v2798, %v2766
        %v4687 = vpack.c.b16 %v2799, %v2767
        %v4688 = vpack.c.b16 %v2832, %v2800
        %v4689 = vpack.c.b16 %v2833, %v2801
        %v4690 = vpack.c.b16 %v2834, %v2802
        %v4691 = vpack.c.b16 %v2835, %v2803
        %v4692 = vpack.c.b16 %v2836, %v2804
        %v4693 = vpack.c.b16 %v2837, %v2805
        %v4694 = vpack.c.b16 %v2838, %v2806
        %v4695 = vpack.c.b16 %v2839, %v2807
        %v4696 = vpack.c.b16 %v2840, %v2808
        %v4697 = vpack.c.b16 %v2841, %v2809
        %v4698 = vpack.c.b16 %v2842, %v2810
        %v4699 = vpack.c.b16 %v2843, %v2811
        %v4700 = vpack.c.b16 %v2844, %v2812
        %v4701 = vpack.c.b16 %v2845, %v2813
        %v4702 = vpack.c.b16 %v2846, %v2814
        %v4703 = vpack.c.b16 %v2847, %v2815
        %v4704 = vpack.c.b16 %v2848, %v2816
        %v4705 = vpack.c.b16 %v2849, %v2817
        %v4706 = vpack.c.b16 %v2850, %v2818
        %v4707 = vpack.c.b16 %v2851, %v2819
        %v4708 = vpack.c.b16 %v2852, %v2820
        %v4709 = vpack.c.b16 %v2853, %v2821
        %v4710 = vpack.c.b16 %v2854, %v2822
        %v4711 = vpack.c.b16 %v2855, %v2823
        %v4712 = vpack.c.b16 %v2856, %v2824
        %v4713 = vpack.c.b16 %v2857, %v2825
        %v4714 = vpack.c.b16 %v2858, %v2826
        %v4715 = vpack.c.b16 %v2859, %v2827
        %v4716 = vpack.c.b16 %v2860, %v2828
        %v4717 = vpack.c.b16 %v2861, %v2829
        %v4718 = vpack.c.b16 %v2862, %v2830
        %v4719 = vpack.c.b16 %v2863, %v2831
        %v4720 = vpack.c.b16 %v2896, %v2864
        %v4721 = vpack.c.b16 %v2897, %v2865
        %v4722 = vpack.c.b16 %v2898, %v2866
        %v4723 = vpack.c.b16 %v2899, %v2867
        %v4724 = vpack.c.b16 %v2900, %v2868
        %v4725 = vpack.c.b16 %v2901, %v2869
        %v4726 = vpack.c.b16 %v2902, %v2870
        %v4727 = vpack.c.b16 %v2903, %v2871
        %v4728 = vpack.c.b16 %v2904, %v2872
        %v4729 = vpack.c.b16 %v2905, %v2873
        %v4730 = vpack.c.b16 %v2906, %v2874
        %v4731 = vpack.c.b16 %v2907, %v2875
        %v4732 = vpack.c.b16 %v2908, %v2876
        %v4733 = vpack.c.b16 %v2909, %v2877
        %v4734 = vpack.c.b16 %v2910, %v2878
        %v4735 = vpack.c.b16 %v2911, %v2879
        %v4736 = vpack.c.b16 %v2912, %v2880
        %v4737 = vpack.c.b16 %v2913, %v2881
        %v4738 = vpack.c.b16 %v2914, %v2882
        %v4739 = vpack.c.b16 %v2915, %v2883
        %v4740 = vpack.c.b16 %v2916, %v2884
        %v4741 = vpack.c.b16 %v2917, %v2885
        %v4742 = vpack.c.b16 %v2918, %v2886
        %v4743 = vpack.c.b16 %v2919, %v2887
        %v4744 = vpack.c.b16 %v2920, %v2888
        %v4745 = vpack.c.b16 %v2921, %v2889
        %v4746 = vpack.c.b16 %v2922, %v2890
        %v4747 = vpack.c.b16 %v2923, %v2891
        %v4748 = vpack.c.b16 %v2924, %v2892
        %v4749 = vpack.c.b16 %v2925, %v2893
        %v4750 = vpack.c.b16 %v2926, %v2894
        %v4751 = vpack.c.b16 %v2927, %v2895
        %v4752 = vpack.c.b16 %v2960, %v2928
        %v4753 = vpack.c.b16 %v2961, %v2929
        %v4754 = vpack.c.b16 %v2962, %v2930
        %v4755 = vpack.c.b16 %v2963, %v2931
        %v4756 = vpack.c.b16 %v2964, %v2932
        %v4757 = vpack.c.b16 %v2965, %v2933
        %v4758 = vpack.c.b16 %v2966, %v2934
        %v4759 = vpack.c.b16 %v2967, %v2935
        %v4760 = vpack.c.b16 %v2968, %v2936
        %v4761 = vpack.c.b16 %v2969, %v2937
        %v4762 = vpack.c.b16 %v2970, %v2938
        %v4763 = vpack.c.b16 %v2971, %v2939
        %v4764 = vpack.c.b16 %v2972, %v2940
        %v4765 = vpack.c.b16 %v2973, %v2941
        %v4766 = vpack.c.b16 %v2974, %v2942
        %v4767 = vpack.c.b16 %v2975, %v2943
        %v4768 = vpack.c.b16 %v2976, %v2944
        %v4769 = vpack.c.b16 %v2977, %v2945
        %v4770 = vpack.c.b16 %v2978, %v2946
        %v4771 = vpack.c.b16 %v2979, %v2947
        %v4772 = vpack.c.b16 %v2980, %v2948
        %v4773 = vpack.c.b16 %v2981, %v2949
        %v4774 = vpack.c.b16 %v2982, %v2950
        %v4775 = vpack.c.b16 %v2983, %v2951
        %v4776 = vpack.c.b16 %v2984, %v2952
        %v4777 = vpack.c.b16 %v2985, %v2953
        %v4778 = vpack.c.b16 %v2986, %v2954
        %v4779 = vpack.c.b16 %v2987, %v2955
        %v4780 = vpack.c.b16 %v2988, %v2956
        %v4781 = vpack.c.b16 %v2989, %v2957
        %v4782 = vpack.c.b16 %v2990, %v2958
        %v4783 = vpack.c.b16 %v2991, %v2959
        %v4784 = vpack.c.b16 %v3024, %v2992
        %v4785 = vpack.c.b16 %v3025, %v2993
        %v4786 = vpack.c.b16 %v3026, %v2994
        %v4787 = vpack.c.b16 %v3027, %v2995
        %v4788 = vpack.c.b16 %v3028, %v2996
        %v4789 = vpack.c.b16 %v3029, %v2997
        %v4790 = vpack.c.b16 %v3030, %v2998
        %v4791 = vpack.c.b16 %v3031, %v2999
        %v4792 = vpack.c.b16 %v3032, %v3000
        %v4793 = vpack.c.b16 %v3033, %v3001
        %v4794 = vpack.c.b16 %v3034, %v3002
        %v4795 = vpack.c.b16 %v3035, %v3003
        %v4796 = vpack.c.b16 %v3036, %v3004
        %v4797 = vpack.c.b16 %v3037, %v3005
        %v4798 = vpack.c.b16 %v3038, %v3006
        %v4799 = vpack.c.b16 %v3039, %v3007
        %v4800 = vpack.c.b16 %v3040, %v3008
        %v4801 = vpack.c.b16 %v3041, %v3009
        %v4802 = vpack.c.b16 %v3042, %v3010
        %v4803 = vpack.c.b16 %v3043, %v3011
        %v4804 = vpack.c.b16 %v3044, %v3012
        %v4805 = vpack.c.b16 %v3045, %v3013
        %v4806 = vpack.c.b16 %v3046, %v3014
        %v4807 = vpack.c.b16 %v3047, %v3015
        %v4808 = vpack.c.b16 %v3048, %v3016
        %v4809 = vpack.c.b16 %v3049, %v3017
        %v4810 = vpack.c.b16 %v3050, %v3018
        %v4811 = vpack.c.b16 %v3051, %v3019
        %v4812 = vpack.c.b16 %v3052, %v3020
        %v4813 = vpack.c.b16 %v3053, %v3021
        %v4814 = vpack.c.b16 %v3054, %v3022
        %v4815 = vpack.c.b16 %v3055, %v3023
        %v4816 = vpack.c.b16 %v3088, %v3056
        %v4817 = vpack.c.b16 %v3089, %v3057
        %v4818 = vpack.c.b16 %v3090, %v3058
        %v4819 = vpack.c.b16 %v3091, %v3059
        %v4820 = vpack.c.b16 %v3092, %v3060
        %v4821 = vpack.c.b16 %v3093, %v3061
        %v4822 = vpack.c.b16 %v3094, %v3062
        %v4823 = vpack.c.b16 %v3095, %v3063
        %v4824 = vpack.c.b16 %v3096, %v3064
        %v4825 = vpack.c.b16 %v3097, %v3065
        %v4826 = vpack.c.b16 %v3098, %v3066
        %v4827 = vpack.c.b16 %v3099, %v3067
        %v4828 = vpack.c.b16 %v3100, %v3068
        %v4829 = vpack.c.b16 %v3101, %v3069
        %v4830 = vpack.c.b16 %v3102, %v3070
        %v4831 = vpack.c.b16 %v3103, %v3071
        %v4832 = vpack.c.b16 %v3104, %v3072
        %v4833 = vpack.c.b16 %v3105, %v3073
        %v4834 = vpack.c.b16 %v3106, %v3074
        %v4835 = vpack.c.b16 %v3107, %v3075
        %v4836 = vpack.c.b16 %v3108, %v3076
        %v4837 = vpack.c.b16 %v3109, %v3077
        %v4838 = vpack.c.b16 %v3110, %v3078
        %v4839 = vpack.c.b16 %v3111, %v3079
        %v4840 = vpack.c.b16 %v3112, %v3080
        %v4841 = vpack.c.b16 %v3113, %v3081
        %v4842 = vpack.c.b16 %v3114, %v3082
        %v4843 = vpack.c.b16 %v3115, %v3083
        %v4844 = vpack.c.b16 %v3116, %v3084
        %v4845 = vpack.c.b16 %v3117, %v3085
        %v4846 = vpack.c.b16 %v3118, %v3086
        %v4847 = vpack.c.b16 %v3119, %v3087
        %v4848 = vpack.c.b16 %v3152, %v3120
        %v4849 = vpack.c.b16 %v3153, %v3121
        %v4850 = vpack.c.b16 %v3154, %v3122
        %v4851 = vpack.c.b16 %v3155, %v3123
        %v4852 = vpack.c.b16 %v3156, %v3124
        %v4853 = vpack.c.b16 %v3157, %v3125
        %v4854 = vpack.c.b16 %v3158, %v3126
        %v4855 = vpack.c.b16 %v3159, %v3127
        %v4856 = vpack.c.b16 %v3160, %v3128
        %v4857 = vpack.c.b16 %v3161, %v3129
        %v4858 = vpack.c.b16 %v3162, %v3130
        %v4859 = vpack.c.b16 %v3163, %v3131
        %v4860 = vpack.c.b16 %v3164, %v3132
        %v4861 = vpack.c.b16 %v3165, %v3133
        %v4862 = vpack.c.b16 %v3166, %v3134
        %v4863 = vpack.c.b16 %v3167, %v3135
        %v4864 = vpack.c.b16 %v3168, %v3136
        %v4865 = vpack.c.b16 %v3169, %v3137
        %v4866 = vpack.c.b16 %v3170, %v3138
        %v4867 = vpack.c.b16 %v3171, %v3139
        %v4868 = vpack.c.b16 %v3172, %v3140
        %v4869 = vpack.c.b16 %v3173, %v3141
        %v4870 = vpack.c.b16 %v3174, %v3142
        %v4871 = vpack.c.b16 %v3175, %v3143
        %v4872 = vpack.c.b16 %v3176, %v3144
        %v4873 = vpack.c.b16 %v3177, %v3145
        %v4874 = vpack.c.b16 %v3178, %v3146
        %v4875 = vpack.c.b16 %v3179, %v3147
        %v4876 = vpack.c.b16 %v3180, %v3148
        %v4877 = vpack.c.b16 %v3181, %v3149
        %v4878 = vpack.c.b16 %v3182, %v3150
        %v4879 = vpack.c.b16 %v3183, %v3151
        %v4880 = vpack.c.b16 %v3216, %v3184
        %v4881 = vpack.c.b16 %v3217, %v3185
        %v4882 = vpack.c.b16 %v3218, %v3186
        %v4883 = vpack.c.b16 %v3219, %v3187
        %v4884 = vpack.c.b16 %v3220, %v3188
        %v4885 = vpack.c.b16 %v3221, %v3189
        %v4886 = vpack.c.b16 %v3222, %v3190
        %v4887 = vpack.c.b16 %v3223, %v3191
        %v4888 = vpack.c.b16 %v3224, %v3192
        %v4889 = vpack.c.b16 %v3225, %v3193
        %v4890 = vpack.c.b16 %v3226, %v3194
        %v4891 = vpack.c.b16 %v3227, %v3195
        %v4892 = vpack.c.b16 %v3228, %v3196
        %v4893 = vpack.c.b16 %v3229, %v3197
        %v4894 = vpack.c.b16 %v3230, %v3198
        %v4895 = vpack.c.b16 %v3231, %v3199
        %v4896 = vpack.c.b16 %v3232, %v3200
        %v4897 = vpack.c.b16 %v3233, %v3201
        %v4898 = vpack.c.b16 %v3234, %v3202
        %v4899 = vpack.c.b16 %v3235, %v3203
        %v4900 = vpack.c.b16 %v3236, %v3204
        %v4901 = vpack.c.b16 %v3237, %v3205
        %v4902 = vpack.c.b16 %v3238, %v3206
        %v4903 = vpack.c.b16 %v3239, %v3207
        %v4904 = vpack.c.b16 %v3240, %v3208
        %v4905 = vpack.c.b16 %v3241, %v3209
        %v4906 = vpack.c.b16 %v3242, %v3210
        %v4907 = vpack.c.b16 %v3243, %v3211
        %v4908 = vpack.c.b16 %v3244, %v3212
        %v4909 = vpack.c.b16 %v3245, %v3213
        %v4910 = vpack.c.b16 %v3246, %v3214
        %v4911 = vpack.c.b16 %v3247, %v3215
        %v4912 = vpack.c.b16 %v3280, %v3248
        %v4913 = vpack.c.b16 %v3281, %v3249
        %v4914 = vpack.c.b16 %v3282, %v3250
        %v4915 = vpack.c.b16 %v3283, %v3251
        %v4916 = vpack.c.b16 %v3284, %v3252
        %v4917 = vpack.c.b16 %v3285, %v3253
        %v4918 = vpack.c.b16 %v3286, %v3254
        %v4919 = vpack.c.b16 %v3287, %v3255
        %v4920 = vpack.c.b16 %v3288, %v3256
        %v4921 = vpack.c.b16 %v3289, %v3257
        %v4922 = vpack.c.b16 %v3290, %v3258
        %v4923 = vpack.c.b16 %v3291, %v3259
        %v4924 = vpack.c.b16 %v3292, %v3260
        %v4925 = vpack.c.b16 %v3293, %v3261
        %v4926 = vpack.c.b16 %v3294, %v3262
        %v4927 = vpack.c.b16 %v3295, %v3263
        %v4928 = vpack.c.b16 %v3296, %v3264
        %v4929 = vpack.c.b16 %v3297, %v3265
        %v4930 = vpack.c.b16 %v3298, %v3266
        %v4931 = vpack.c.b16 %v3299, %v3267
        %v4932 = vpack.c.b16 %v3300, %v3268
        %v4933 = vpack.c.b16 %v3301, %v3269
        %v4934 = vpack.c.b16 %v3302, %v3270
        %v4935 = vpack.c.b16 %v3303, %v3271
        %v4936 = vpack.c.b16 %v3304, %v3272
        %v4937 = vpack.c.b16 %v3305, %v3273
        %v4938 = vpack.c.b16 %v3306, %v3274
        %v4939 = vpack.c.b16 %v3307, %v3275
        %v4940 = vpack.c.b16 %v3308, %v3276
        %v4941 = vpack.c.b16 %v3309, %v3277
        %v4942 = vpack.c.b16 %v3310, %v3278
        %v4943 = vpack.c.b16 %v3311, %v3279
        %v4944 = vpack.c.b16 %v3344, %v3312
        %v4945 = vpack.c.b16 %v3345, %v3313
        %v4946 = vpack.c.b16 %v3346, %v3314
        %v4947 = vpack.c.b16 %v3347, %v3315
        %v4948 = vpack.c.b16 %v3348, %v3316
        %v4949 = vpack.c.b16 %v3349, %v3317
        %v4950 = vpack.c.b16 %v3350, %v3318
        %v4951 = vpack.c.b16 %v3351, %v3319
        %v4952 = vpack.c.b16 %v3352, %v3320
        %v4953 = vpack.c.b16 %v3353, %v3321
        %v4954 = vpack.c.b16 %v3354, %v3322
        %v4955 = vpack.c.b16 %v3355, %v3323
        %v4956 = vpack.c.b16 %v3356, %v3324
        %v4957 = vpack.c.b16 %v3357, %v3325
        %v4958 = vpack.c.b16 %v3358, %v3326
        %v4959 = vpack.c.b16 %v3359, %v3327
        %v4960 = vpack.c.b16 %v3360, %v3328
        %v4961 = vpack.c.b16 %v3361, %v3329
        %v4962 = vpack.c.b16 %v3362, %v3330
        %v4963 = vpack.c.b16 %v3363, %v3331
        %v4964 = vpack.c.b16 %v3364, %v3332
        %v4965 = vpack.c.b16 %v3365, %v3333
        %v4966 = vpack.c.b16 %v3366, %v3334
        %v4967 = vpack.c.b16 %v3367, %v3335
        %v4968 = vpack.c.b16 %v3368, %v3336
        %v4969 = vpack.c.b16 %v3369, %v3337
        %v4970 = vpack.c.b16 %v3370, %v3338
        %v4971 = vpack.c.b16 %v3371, %v3339
        %v4972 = vpack.c.b16 %v3372, %v3340
        %v4973 = vpack.c.b16 %v3373, %v3341
        %v4974 = vpack.c.b16 %v3374, %v3342
        %v4975 = vpack.c.b16 %v3375, %v3343
        %v4976 = vpack.c.b16 %v3408, %v3376
        %v4977 = vpack.c.b16 %v3409, %v3377
        %v4978 = vpack.c.b16 %v3410, %v3378
        %v4979 = vpack.c.b16 %v3411, %v3379
        %v4980 = vpack.c.b16 %v3412, %v3380
        %v4981 = vpack.c.b16 %v3413, %v3381
        %v4982 = vpack.c.b16 %v3414, %v3382
        %v4983 = vpack.c.b16 %v3415, %v3383
        %v4984 = vpack.c.b16 %v3416, %v3384
        %v4985 = vpack.c.b16 %v3417, %v3385
        %v4986 = vpack.c.b16 %v3418, %v3386
        %v4987 = vpack.c.b16 %v3419, %v3387
        %v4988 = vpack.c.b16 %v3420, %v3388
        %v4989 = vpack.c.b16 %v3421, %v3389
        %v4990 = vpack.c.b16 %v3422, %v3390
        %v4991 = vpack.c.b16 %v3423, %v3391
        %v4992 = vpack.c.b16 %v3424, %v3392
        %v4993 = vpack.c.b16 %v3425, %v3393
        %v4994 = vpack.c.b16 %v3426, %v3394
        %v4995 = vpack.c.b16 %v3427, %v3395
        %v4996 = vpack.c.b16 %v3428, %v3396
        %v4997 = vpack.c.b16 %v3429, %v3397
        %v4998 = vpack.c.b16 %v3430, %v3398
        %v4999 = vpack.c.b16 %v3431, %v3399
        %v5000 = vpack.c.b16 %v3432, %v3400
        %v5001 = vpack.c.b16 %v3433, %v3401
        %v5002 = vpack.c.b16 %v3434, %v3402
        %v5003 = vpack.c.b16 %v3435, %v3403
        %v5004 = vpack.c.b16 %v3436, %v3404
        %v5005 = vpack.c.b16 %v3437, %v3405
        %v5006 = vpack.c.b16 %v3438, %v3406
        %v5007 = vpack.c.b16 %v3439, %v3407
        %v5008 = vpack.c.b16 %v3472, %v3440
        %v5009 = vpack.c.b16 %v3473, %v3441
        %v5010 = vpack.c.b16 %v3474, %v3442
        %v5011 = vpack.c.b16 %v3475, %v3443
        %v5012 = vpack.c.b16 %v3476, %v3444
        %v5013 = vpack.c.b16 %v3477, %v3445
        %v5014 = vpack.c.b16 %v3478, %v3446
        %v5015 = vpack.c.b16 %v3479, %v3447
        %v5016 = vpack.c.b16 %v3480, %v3448
        %v5017 = vpack.c.b16 %v3481, %v3449
        %v5018 = vpack.c.b16 %v3482, %v3450
        %v5019 = vpack.c.b16 %v3483, %v3451
        %v5020 = vpack.c.b16 %v3484, %v3452
        %v5021 = vpack.c.b16 %v3485, %v3453
        %v5022 = vpack.c.b16 %v3486, %v3454
        %v5023 = vpack.c.b16 %v3487, %v3455
        %v5024 = vpack.c.b16 %v3488, %v3456
        %v5025 = vpack.c.b16 %v3489, %v3457
        %v5026 = vpack.c.b16 %v3490, %v3458
        %v5027 = vpack.c.b16 %v3491, %v3459
        %v5028 = vpack.c.b16 %v3492, %v3460
        %v5029 = vpack.c.b16 %v3493, %v3461
        %v5030 = vpack.c.b16 %v3494, %v3462
        %v5031 = vpack.c.b16 %v3495, %v3463
        %v5032 = vpack.c.b16 %v3496, %v3464
        %v5033 = vpack.c.b16 %v3497, %v3465
        %v5034 = vpack.c.b16 %v3498, %v3466
        %v5035 = vpack.c.b16 %v3499, %v3467
        %v5036 = vpack.c.b16 %v3500, %v3468
        %v5037 = vpack.c.b16 %v3501, %v3469
        %v5038 = vpack.c.b16 %v3502, %v3470
        %v5039 = vpack.c.b16 %v3503, %v3471
        %v5040 = vpack.c.b16 %v3536, %v3504
        %v5041 = vpack.c.b16 %v3537, %v3505
        %v5042 = vpack.c.b16 %v3538, %v3506
        %v5043 = vpack.c.b16 %v3539, %v3507
        %v5044 = vpack.c.b16 %v3540, %v3508
        %v5045 = vpack.c.b16 %v3541, %v3509
        %v5046 = vpack.c.b16 %v3542, %v3510
        %v5047 = vpack.c.b16 %v3543, %v3511
        %v5048 = vpack.c.b16 %v3544, %v3512
        %v5049 = vpack.c.b16 %v3545, %v3513
        %v5050 = vpack.c.b16 %v3546, %v3514
        %v5051 = vpack.c.b16 %v3547, %v3515
        %v5052 = vpack.c.b16 %v3548, %v3516
        %v5053 = vpack.c.b16 %v3549, %v3517
        %v5054 = vpack.c.b16 %v3550, %v3518
        %v5055 = vpack.c.b16 %v3551, %v3519
        %v5056 = vpack.c.b16 %v3552, %v3520
        %v5057 = vpack.c.b16 %v3553, %v3521
        %v5058 = vpack.c.b16 %v3554, %v3522
        %v5059 = vpack.c.b16 %v3555, %v3523
        %v5060 = vpack.c.b16 %v3556, %v3524
        %v5061 = vpack.c.b16 %v3557, %v3525
        %v5062 = vpack.c.b16 %v3558, %v3526
        %v5063 = vpack.c.b16 %v3559, %v3527
        %v5064 = vpack.c.b16 %v3560, %v3528
        %v5065 = vpack.c.b16 %v3561, %v3529
        %v5066 = vpack.c.b16 %v3562, %v3530
        %v5067 = vpack.c.b16 %v3563, %v3531
        %v5068 = vpack.c.b16 %v3564, %v3532
        %v5069 = vpack.c.b16 %v3565, %v3533
        %v5070 = vpack.c.b16 %v3566, %v3534
        %v5071 = vpack.c.b16 %v3567, %v3535
        %v5072 = vpack.c.b16 %v3600, %v3568
        %v5073 = vpack.c.b16 %v3601, %v3569
        %v5074 = vpack.c.b16 %v3602, %v3570
        %v5075 = vpack.c.b16 %v3603, %v3571
        %v5076 = vpack.c.b16 %v3604, %v3572
        %v5077 = vpack.c.b16 %v3605, %v3573
        %v5078 = vpack.c.b16 %v3606, %v3574
        %v5079 = vpack.c.b16 %v3607, %v3575
        %v5080 = vpack.c.b16 %v3608, %v3576
        %v5081 = vpack.c.b16 %v3609, %v3577
        %v5082 = vpack.c.b16 %v3610, %v3578
        %v5083 = vpack.c.b16 %v3611, %v3579
        %v5084 = vpack.c.b16 %v3612, %v3580
        %v5085 = vpack.c.b16 %v3613, %v3581
        %v5086 = vpack.c.b16 %v3614, %v3582
        %v5087 = vpack.c.b16 %v3615, %v3583
        %v5088 = vpack.c.b16 %v3616, %v3584
        %v5089 = vpack.c.b16 %v3617, %v3585
        %v5090 = vpack.c.b16 %v3618, %v3586
        %v5091 = vpack.c.b16 %v3619, %v3587
        %v5092 = vpack.c.b16 %v3620, %v3588
        %v5093 = vpack.c.b16 %v3621, %v3589
        %v5094 = vpack.c.b16 %v3622, %v3590
        %v5095 = vpack.c.b16 %v3623, %v3591
        %v5096 = vpack.c.b16 %v3624, %v3592
        %v5097 = vpack.c.b16 %v3625, %v3593
        %v5098 = vpack.c.b16 %v3626, %v3594
        %v5099 = vpack.c.b16 %v3627, %v3595
        %v5100 = vpack.c.b16 %v3628, %v3596
        %v5101 = vpack.c.b16 %v3629, %v3597
        %v5102 = vpack.c.b16 %v3630, %v3598
        %v5103 = vpack.c.b16 %v3631, %v3599
        %v5104 = vpack.c.b16 %v3664, %v3632
        %v5105 = vpack.c.b16 %v3665, %v3633
        %v5106 = vpack.c.b16 %v3666, %v3634
        %v5107 = vpack.c.b16 %v3667, %v3635
        %v5108 = vpack.c.b16 %v3668, %v3636
        %v5109 = vpack.c.b16 %v3669, %v3637
        %v5110 = vpack.c.b16 %v3670, %v3638
        %v5111 = vpack.c.b16 %v3671, %v3639
        %v5112 = vpack.c.b16 %v3672, %v3640
        %v5113 = vpack.c.b16 %v3673, %v3641
        %v5114 = vpack.c.b16 %v3674, %v3642
        %v5115 = vpack.c.b16 %v3675, %v3643
        %v5116 = vpack.c.b16 %v3676, %v3644
        %v5117 = vpack.c.b16 %v3677, %v3645
        %v5118 = vpack.c.b16 %v3678, %v3646
        %v5119 = vpack.c.b16 %v3679, %v3647
        %v5120 = vpack.c.b16 %v3680, %v3648
        %v5121 = vpack.c.b16 %v3681, %v3649
        %v5122 = vpack.c.b16 %v3682, %v3650
        %v5123 = vpack.c.b16 %v3683, %v3651
        %v5124 = vpack.c.b16 %v3684, %v3652
        %v5125 = vpack.c.b16 %v3685, %v3653
        %v5126 = vpack.c.b16 %v3686, %v3654
        %v5127 = vpack.c.b16 %v3687, %v3655
        %v5128 = vpack.c.b16 %v3688, %v3656
        %v5129 = vpack.c.b16 %v3689, %v3657
        %v5130 = vpack.c.b16 %v3690, %v3658
        %v5131 = vpack.c.b16 %v3691, %v3659
        %v5132 = vpack.c.b16 %v3692, %v3660
        %v5133 = vpack.c.b16 %v3693, %v3661
        %v5134 = vpack.c.b16 %v3694, %v3662
        %v5135 = vpack.c.b16 %v3695, %v3663
        %v5136 = vpack.c.b16 %v3728, %v3696
        %v5137 = vpack.c.b16 %v3729, %v3697
        %v5138 = vpack.c.b16 %v3730, %v3698
        %v5139 = vpack.c.b16 %v3731, %v3699
        %v5140 = vpack.c.b16 %v3732, %v3700
        %v5141 = vpack.c.b16 %v3733, %v3701
        %v5142 = vpack.c.b16 %v3734, %v3702
        %v5143 = vpack.c.b16 %v3735, %v3703
        %v5144 = vpack.c.b16 %v3736, %v3704
        %v5145 = vpack.c.b16 %v3737, %v3705
        %v5146 = vpack.c.b16 %v3738, %v3706
        %v5147 = vpack.c.b16 %v3739, %v3707
        %v5148 = vpack.c.b16 %v3740, %v3708
        %v5149 = vpack.c.b16 %v3741, %v3709
        %v5150 = vpack.c.b16 %v3742, %v3710
        %v5151 = vpack.c.b16 %v3743, %v3711
        %v5152 = vpack.c.b16 %v3744, %v3712
        %v5153 = vpack.c.b16 %v3745, %v3713
        %v5154 = vpack.c.b16 %v3746, %v3714
        %v5155 = vpack.c.b16 %v3747, %v3715
        %v5156 = vpack.c.b16 %v3748, %v3716
        %v5157 = vpack.c.b16 %v3749, %v3717
        %v5158 = vpack.c.b16 %v3750, %v3718
        %v5159 = vpack.c.b16 %v3751, %v3719
        %v5160 = vpack.c.b16 %v3752, %v3720
        %v5161 = vpack.c.b16 %v3753, %v3721
        %v5162 = vpack.c.b16 %v3754, %v3722
        %v5163 = vpack.c.b16 %v3755, %v3723
        %v5164 = vpack.c.b16 %v3756, %v3724
        %v5165 = vpack.c.b16 %v3757, %v3725
        %v5166 = vpack.c.b16 %v3758, %v3726
        %v5167 = vpack.c.b16 %v3759, %v3727
        %v5168 = vpack.c.b16 %v3792, %v3760
        %v5169 = vpack.c.b16 %v3793, %v3761
        %v5170 = vpack.c.b16 %v3794, %v3762
        %v5171 = vpack.c.b16 %v3795, %v3763
        %v5172 = vpack.c.b16 %v3796, %v3764
        %v5173 = vpack.c.b16 %v3797, %v3765
        %v5174 = vpack.c.b16 %v3798, %v3766
        %v5175 = vpack.c.b16 %v3799, %v3767
        %v5176 = vpack.c.b16 %v3800, %v3768
        %v5177 = vpack.c.b16 %v3801, %v3769
        %v5178 = vpack.c.b16 %v3802, %v3770
        %v5179 = vpack.c.b16 %v3803, %v3771
        %v5180 = vpack.c.b16 %v3804, %v3772
        %v5181 = vpack.c.b16 %v3805, %v3773
        %v5182 = vpack.c.b16 %v3806, %v3774
        %v5183 = vpack.c.b16 %v3807, %v3775
        %v5184 = vpack.c.b16 %v3808, %v3776
        %v5185 = vpack.c.b16 %v3809, %v3777
        %v5186 = vpack.c.b16 %v3810, %v3778
        %v5187 = vpack.c.b16 %v3811, %v3779
        %v5188 = vpack.c.b16 %v3812, %v3780
        %v5189 = vpack.c.b16 %v3813, %v3781
        %v5190 = vpack.c.b16 %v3814, %v3782
        %v5191 = vpack.c.b16 %v3815, %v3783
        %v5192 = vpack.c.b16 %v3816, %v3784
        %v5193 = vpack.c.b16 %v3817, %v3785
        %v5194 = vpack.c.b16 %v3818, %v3786
        %v5195 = vpack.c.b16 %v3819, %v3787
        %v5196 = vpack.c.b16 %v3820, %v3788
        %v5197 = vpack.c.b16 %v3821, %v3789
        %v5198 = vpack.c.b16 %v3822, %v3790
        %v5199 = vpack.c.b16 %v3823, %v3791
        %v5200 = vpack.c.b16 %v3856, %v3824
        %v5201 = vpack.c.b16 %v3857, %v3825
        %v5202 = vpack.c.b16 %v3858, %v3826
        %v5203 = vpack.c.b16 %v3859, %v3827
        %v5204 = vpack.c.b16 %v3860, %v3828
        %v5205 = vpack.c.b16 %v3861, %v3829
        %v5206 = vpack.c.b16 %v3862, %v3830
        %v5207 = vpack.c.b16 %v3863, %v3831
        %v5208 = vpack.c.b16 %v3864, %v3832
        %v5209 = vpack.c.b16 %v3865, %v3833
        %v5210 = vpack.c.b16 %v3866, %v3834
        %v5211 = vpack.c.b16 %v3867, %v3835
        %v5212 = vpack.c.b16 %v3868, %v3836
        %v5213 = vpack.c.b16 %v3869, %v3837
        %v5214 = vpack.c.b16 %v3870, %v3838
        %v5215 = vpack.c.b16 %v3871, %v3839
        %v5216 = vpack.c.b16 %v3872, %v3840
        %v5217 = vpack.c.b16 %v3873, %v3841
        %v5218 = vpack.c.b16 %v3874, %v3842
        %v5219 = vpack.c.b16 %v3875, %v3843
        %v5220 = vpack.c.b16 %v3876, %v3844
        %v5221 = vpack.c.b16 %v3877, %v3845
        %v5222 = vpack.c.b16 %v3878, %v3846
        %v5223 = vpack.c.b16 %v3879, %v3847
        %v5224 = vpack.c.b16 %v3880, %v3848
        %v5225 = vpack.c.b16 %v3881, %v3849
        %v5226 = vpack.c.b16 %v3882, %v3850
        %v5227 = vpack.c.b16 %v3883, %v3851
        %v5228 = vpack.c.b16 %v3884, %v3852
        %v5229 = vpack.c.b16 %v3885, %v3853
        %v5230 = vpack.c.b16 %v3886, %v3854
        %v5231 = vpack.c.b16 %v3887, %v3855
        %v5232 = vpack.c.b16 %v3920, %v3888
        %v5233 = vpack.c.b16 %v3921, %v3889
        %v5234 = vpack.c.b16 %v3922, %v3890
        %v5235 = vpack.c.b16 %v3923, %v3891
        %v5236 = vpack.c.b16 %v3924, %v3892
        %v5237 = vpack.c.b16 %v3925, %v3893
        %v5238 = vpack.c.b16 %v3926, %v3894
        %v5239 = vpack.c.b16 %v3927, %v3895
        %v5240 = vpack.c.b16 %v3928, %v3896
        %v5241 = vpack.c.b16 %v3929, %v3897
        %v5242 = vpack.c.b16 %v3930, %v3898
        %v5243 = vpack.c.b16 %v3931, %v3899
        %v5244 = vpack.c.b16 %v3932, %v3900
        %v5245 = vpack.c.b16 %v3933, %v3901
        %v5246 = vpack.c.b16 %v3934, %v3902
        %v5247 = vpack.c.b16 %v3935, %v3903
        %v5248 = vpack.c.b16 %v3936, %v3904
        %v5249 = vpack.c.b16 %v3937, %v3905
        %v5250 = vpack.c.b16 %v3938, %v3906
        %v5251 = vpack.c.b16 %v3939, %v3907
        %v5252 = vpack.c.b16 %v3940, %v3908
        %v5253 = vpack.c.b16 %v3941, %v3909
        %v5254 = vpack.c.b16 %v3942, %v3910
        %v5255 = vpack.c.b16 %v3943, %v3911
        %v5256 = vpack.c.b16 %v3944, %v3912
        %v5257 = vpack.c.b16 %v3945, %v3913
        %v5258 = vpack.c.b16 %v3946, %v3914
        %v5259 = vpack.c.b16 %v3947, %v3915
        %v5260 = vpack.c.b16 %v3948, %v3916
        %v5261 = vpack.c.b16 %v3949, %v3917
        %v5262 = vpack.c.b16 %v3950, %v3918
        %v5263 = vpack.c.b16 %v3951, %v3919
        %v5264 = vpack.c.b16 %v3984, %v3952
        %v5265 = vpack.c.b16 %v3985, %v3953
        %v5266 = vpack.c.b16 %v3986, %v3954
        %v5267 = vpack.c.b16 %v3987, %v3955
        %v5268 = vpack.c.b16 %v3988, %v3956
        %v5269 = vpack.c.b16 %v3989, %v3957
        %v5270 = vpack.c.b16 %v3990, %v3958
        %v5271 = vpack.c.b16 %v3991, %v3959
        %v5272 = vpack.c.b16 %v3992, %v3960
        %v5273 = vpack.c.b16 %v3993, %v3961
        %v5274 = vpack.c.b16 %v3994, %v3962
        %v5275 = vpack.c.b16 %v3995, %v3963
        %v5276 = vpack.c.b16 %v3996, %v3964
        %v5277 = vpack.c.b16 %v3997, %v3965
        %v5278 = vpack.c.b16 %v3998, %v3966
        %v5279 = vpack.c.b16 %v3999, %v3967
        %v5280 = vpack.c.b16 %v4000, %v3968
        %v5281 = vpack.c.b16 %v4001, %v3969
        %v5282 = vpack.c.b16 %v4002, %v3970
        %v5283 = vpack.c.b16 %v4003, %v3971
        %v5284 = vpack.c.b16 %v4004, %v3972
        %v5285 = vpack.c.b16 %v4005, %v3973
        %v5286 = vpack.c.b16 %v4006, %v3974
        %v5287 = vpack.c.b16 %v4007, %v3975
        %v5288 = vpack.c.b16 %v4008, %v3976
        %v5289 = vpack.c.b16 %v4009, %v3977
        %v5290 = vpack.c.b16 %v4010, %v3978
        %v5291 = vpack.c.b16 %v4011, %v3979
        %v5292 = vpack.c.b16 %v4012, %v3980
        %v5293 = vpack.c.b16 %v4013, %v3981
        %v5294 = vpack.c.b16 %v4014, %v3982
        %v5295 = vpack.c.b16 %v4015, %v3983
        %v5296 = vpack.c.b16 %v4048, %v4016
        %v5297 = vpack.c.b16 %v4049, %v4017
        %v5298 = vpack.c.b16 %v4050, %v4018
        %v5299 = vpack.c.b16 %v4051, %v4019
        %v5300 = vpack.c.b16 %v4052, %v4020
        %v5301 = vpack.c.b16 %v4053, %v4021
        %v5302 = vpack.c.b16 %v4054, %v4022
        %v5303 = vpack.c.b16 %v4055, %v4023
        %v5304 = vpack.c.b16 %v4056, %v4024
        %v5305 = vpack.c.b16 %v4057, %v4025
        %v5306 = vpack.c.b16 %v4058, %v4026
        %v5307 = vpack.c.b16 %v4059, %v4027
        %v5308 = vpack.c.b16 %v4060, %v4028
        %v5309 = vpack.c.b16 %v4061, %v4029
        %v5310 = vpack.c.b16 %v4062, %v4030
        %v5311 = vpack.c.b16 %v4063, %v4031
        %v5312 = vpack.c.b16 %v4064, %v4032
        %v5313 = vpack.c.b16 %v4065, %v4033
        %v5314 = vpack.c.b16 %v4066, %v4034
        %v5315 = vpack.c.b16 %v4067, %v4035
        %v5316 = vpack.c.b16 %v4068, %v4036
        %v5317 = vpack.c.b16 %v4069, %v4037
        %v5318 = vpack.c.b16 %v4070, %v4038
        %v5319 = vpack.c.b16 %v4071, %v4039
        %v5320 = vpack.c.b16 %v4072, %v4040
        %v5321 = vpack.c.b16 %v4073, %v4041
        %v5322 = vpack.c.b16 %v4074, %v4042
        %v5323 = vpack.c.b16 %v4075, %v4043
        %v5324 = vpack.c.b16 %v4076, %v4044
        %v5325 = vpack.c.b16 %v4077, %v4045
        %v5326 = vpack.c.b16 %v4078, %v4046
        %v5327 = vpack.c.b16 %v4079, %v4047
        %v5328 = vpack.c.b16 %v4112, %v4080
        %v5329 = vpack.c.b16 %v4113, %v4081
        %v5330 = vpack.c.b16 %v4114, %v4082
        %v5331 = vpack.c.b16 %v4115, %v4083
        %v5332 = vpack.c.b16 %v4116, %v4084
        %v5333 = vpack.c.b16 %v4117, %v4085
        %v5334 = vpack.c.b16 %v4118, %v4086
        %v5335 = vpack.c.b16 %v4119, %v4087
        %v5336 = vpack.c.b16 %v4120, %v4088
        %v5337 = vpack.c.b16 %v4121, %v4089
        %v5338 = vpack.c.b16 %v4122, %v4090
        %v5339 = vpack.c.b16 %v4123, %v4091
        %v5340 = vpack.c.b16 %v4124, %v4092
        %v5341 = vpack.c.b16 %v4125, %v4093
        %v5342 = vpack.c.b16 %v4126, %v4094
        %v5343 = vpack.c.b16 %v4127, %v4095
        %v5344 = vpack.c.b16 %v4128, %v4096
        %v5345 = vpack.c.b16 %v4129, %v4097
        %v5346 = vpack.c.b16 %v4130, %v4098
        %v5347 = vpack.c.b16 %v4131, %v4099
        %v5348 = vpack.c.b16 %v4132, %v4100
        %v5349 = vpack.c.b16 %v4133, %v4101
        %v5350 = vpack.c.b16 %v4134, %v4102
        %v5351 = vpack.c.b16 %v4135, %v4103
        %v5352 = vpack.c.b16 %v4136, %v4104
        %v5353 = vpack.c.b16 %v4137, %v4105
        %v5354 = vpack.c.b16 %v4138, %v4106
        %v5355 = vpack.c.b16 %v4139, %v4107
        %v5356 = vpack.c.b16 %v4140, %v4108
        %v5357 = vpack.c.b16 %v4141, %v4109
        %v5358 = vpack.c.b16 %v4142, %v4110
        %v5359 = vpack.c.b16 %v4143, %v4111
        %v5360 = vpack.c.b16 %v4176, %v4144
        %v5361 = vpack.c.b16 %v4177, %v4145
        %v5362 = vpack.c.b16 %v4178, %v4146
        %v5363 = vpack.c.b16 %v4179, %v4147
        %v5364 = vpack.c.b16 %v4180, %v4148
        %v5365 = vpack.c.b16 %v4181, %v4149
        %v5366 = vpack.c.b16 %v4182, %v4150
        %v5367 = vpack.c.b16 %v4183, %v4151
        %v5368 = vpack.c.b16 %v4184, %v4152
        %v5369 = vpack.c.b16 %v4185, %v4153
        %v5370 = vpack.c.b16 %v4186, %v4154
        %v5371 = vpack.c.b16 %v4187, %v4155
        %v5372 = vpack.c.b16 %v4188, %v4156
        %v5373 = vpack.c.b16 %v4189, %v4157
        %v5374 = vpack.c.b16 %v4190, %v4158
        %v5375 = vpack.c.b16 %v4191, %v4159
        %v5376 = vpack.c.b16 %v4192, %v4160
        %v5377 = vpack.c.b16 %v4193, %v4161
        %v5378 = vpack.c.b16 %v4194, %v4162
        %v5379 = vpack.c.b16 %v4195, %v4163
        %v5380 = vpack.c.b16 %v4196, %v4164
        %v5381 = vpack.c.b16 %v4197, %v4165
        %v5382 = vpack.c.b16 %v4198, %v4166
        %v5383 = vpack.c.b16 %v4199, %v4167
        %v5384 = vpack.c.b16 %v4200, %v4168
        %v5385 = vpack.c.b16 %v4201, %v4169
        %v5386 = vpack.c.b16 %v4202, %v4170
        %v5387 = vpack.c.b16 %v4203, %v4171
        %v5388 = vpack.c.b16 %v4204, %v4172
        %v5389 = vpack.c.b16 %v4205, %v4173
        %v5390 = vpack.c.b16 %v4206, %v4174
        %v5391 = vpack.c.b16 %v4207, %v4175
        %v5392 = vpack.c.b16 %v4240, %v4208
        %v5393 = vpack.c.b16 %v4241, %v4209
        %v5394 = vpack.c.b16 %v4242, %v4210
        %v5395 = vpack.c.b16 %v4243, %v4211
        %v5396 = vpack.c.b16 %v4244, %v4212
        %v5397 = vpack.c.b16 %v4245, %v4213
        %v5398 = vpack.c.b16 %v4246, %v4214
        %v5399 = vpack.c.b16 %v4247, %v4215
        %v5400 = vpack.c.b16 %v4248, %v4216
        %v5401 = vpack.c.b16 %v4249, %v4217
        %v5402 = vpack.c.b16 %v4250, %v4218
        %v5403 = vpack.c.b16 %v4251, %v4219
        %v5404 = vpack.c.b16 %v4252, %v4220
        %v5405 = vpack.c.b16 %v4253, %v4221
        %v5406 = vpack.c.b16 %v4254, %v4222
        %v5407 = vpack.c.b16 %v4255, %v4223
        %v5408 = vpack.c.b16 %v4256, %v4224
        %v5409 = vpack.c.b16 %v4257, %v4225
        %v5410 = vpack.c.b16 %v4258, %v4226
        %v5411 = vpack.c.b16 %v4259, %v4227
        %v5412 = vpack.c.b16 %v4260, %v4228
        %v5413 = vpack.c.b16 %v4261, %v4229
        %v5414 = vpack.c.b16 %v4262, %v4230
        %v5415 = vpack.c.b16 %v4263, %v4231
        %v5416 = vpack.c.b16 %v4264, %v4232
        %v5417 = vpack.c.b16 %v4265, %v4233
        %v5418 = vpack.c.b16 %v4266, %v4234
        %v5419 = vpack.c.b16 %v4267, %v4235
        %v5420 = vpack.c.b16 %v4268, %v4236
        %v5421 = vpack.c.b16 %v4269, %v4237
        %v5422 = vpack.c.b16 %v4270, %v4238
        %v5423 = vpack.c.b16 %v4271, %v4239
        %v5424 = vpack.c.b16 %v4304, %v4272
        %v5425 = vpack.c.b16 %v4305, %v4273
        %v5426 = vpack.c.b16 %v4306, %v4274
        %v5427 = vpack.c.b16 %v4307, %v4275
        %v5428 = vpack.c.b16 %v4308, %v4276
        %v5429 = vpack.c.b16 %v4309, %v4277
        %v5430 = vpack.c.b16 %v4310, %v4278
        %v5431 = vpack.c.b16 %v4311, %v4279
        %v5432 = vpack.c.b16 %v4312, %v4280
        %v5433 = vpack.c.b16 %v4313, %v4281
        %v5434 = vpack.c.b16 %v4314, %v4282
        %v5435 = vpack.c.b16 %v4315, %v4283
        %v5436 = vpack.c.b16 %v4316, %v4284
        %v5437 = vpack.c.b16 %v4317, %v4285
        %v5438 = vpack.c.b16 %v4318, %v4286
        %v5439 = vpack.c.b16 %v4319, %v4287
        %v5440 = vpack.c.b16 %v4320, %v4288
        %v5441 = vpack.c.b16 %v4321, %v4289
        %v5442 = vpack.c.b16 %v4322, %v4290
        %v5443 = vpack.c.b16 %v4323, %v4291
        %v5444 = vpack.c.b16 %v4324, %v4292
        %v5445 = vpack.c.b16 %v4325, %v4293
        %v5446 = vpack.c.b16 %v4326, %v4294
        %v5447 = vpack.c.b16 %v4327, %v4295
        %v5448 = vpack.c.b16 %v4328, %v4296
        %v5449 = vpack.c.b16 %v4329, %v4297
        %v5450 = vpack.c.b16 %v4330, %v4298
        %v5451 = vpack.c.b16 %v4331, %v4299
        %v5452 = vpack.c.b16 %v4332, %v4300
        %v5453 = vpack.c.b16 %v4333, %v4301
        %v5454 = vpack.c.b16 %v4334, %v4302
        %v5455 = vpack.c.b16 %v4335, %v4303
        %v5456 = vpack.c.b16 %v4368, %v4336
        %v5457 = vpack.c.b16 %v4369, %v4337
        %v5458 = vpack.c.b16 %v4370, %v4338
        %v5459 = vpack.c.b16 %v4371, %v4339
        %v5460 = vpack.c.b16 %v4372, %v4340
        %v5461 = vpack.c.b16 %v4373, %v4341
        %v5462 = vpack.c.b16 %v4374, %v4342
        %v5463 = vpack.c.b16 %v4375, %v4343
        %v5464 = vpack.c.b16 %v4376, %v4344
        %v5465 = vpack.c.b16 %v4377, %v4345
        %v5466 = vpack.c.b16 %v4378, %v4346
        %v5467 = vpack.c.b16 %v4379, %v4347
        %v5468 = vpack.c.b16 %v4380, %v4348
        %v5469 = vpack.c.b16 %v4381, %v4349
        %v5470 = vpack.c.b16 %v4382, %v4350
        %v5471 = vpack.c.b16 %v4383, %v4351
        %v5472 = vpack.c.b16 %v4384, %v4352
        %v5473 = vpack.c.b16 %v4385, %v4353
        %v5474 = vpack.c.b16 %v4386, %v4354
        %v5475 = vpack.c.b16 %v4387, %v4355
        %v5476 = vpack.c.b16 %v4388, %v4356
        %v5477 = vpack.c.b16 %v4389, %v4357
        %v5478 = vpack.c.b16 %v4390, %v4358
        %v5479 = vpack.c.b16 %v4391, %v4359
        %v5480 = vpack.c.b16 %v4392, %v4360
        %v5481 = vpack.c.b16 %v4393, %v4361
        %v5482 = vpack.c.b16 %v4394, %v4362
        %v5483 = vpack.c.b16 %v4395, %v4363
        %v5484 = vpack.c.b16 %v4396, %v4364
        %v5485 = vpack.c.b16 %v4397, %v4365
        %v5486 = vpack.c.b16 %v4398, %v4366
        %v5487 = vpack.c.b16 %v4399, %v4367
        %v5488 = vpack.c.b16 %v4432, %v4400
        %v5489 = vpack.c.b16 %v4433, %v4401
        %v5490 = vpack.c.b16 %v4434, %v4402
        %v5491 = vpack.c.b16 %v4435, %v4403
        %v5492 = vpack.c.b16 %v4436, %v4404
        %v5493 = vpack.c.b16 %v4437, %v4405
        %v5494 = vpack.c.b16 %v4438, %v4406
        %v5495 = vpack.c.b16 %v4439, %v4407
        %v5496 = vpack.c.b16 %v4440, %v4408
        %v5497 = vpack.c.b16 %v4441, %v4409
        %v5498 = vpack.c.b16 %v4442, %v4410
        %v5499 = vpack.c.b16 %v4443, %v4411
        %v5500 = vpack.c.b16 %v4444, %v4412
        %v5501 = vpack.c.b16 %v4445, %v4413
        %v5502 = vpack.c.b16 %v4446, %v4414
        %v5503 = vpack.c.b16 %v4447, %v4415
        %v5504 = vpack.c.b16 %v4448, %v4416
        %v5505 = vpack.c.b16 %v4449, %v4417
        %v5506 = vpack.c.b16 %v4450, %v4418
        %v5507 = vpack.c.b16 %v4451, %v4419
        %v5508 = vpack.c.b16 %v4452, %v4420
        %v5509 = vpack.c.b16 %v4453, %v4421
        %v5510 = vpack.c.b16 %v4454, %v4422
        %v5511 = vpack.c.b16 %v4455, %v4423
        %v5512 = vpack.c.b16 %v4456, %v4424
        %v5513 = vpack.c.b16 %v4457, %v4425
        %v5514 = vpack.c.b16 %v4458, %v4426
        %v5515 = vpack.c.b16 %v4459, %v4427
        %v5516 = vpack.c.b16 %v4460, %v4428
        %v5517 = vpack.c.b16 %v4461, %v4429
        %v5518 = vpack.c.b16 %v4462, %v4430
        %v5519 = vpack.c.b16 %v4463, %v4431
        %v5520 = vpack.c.b16 %v4496, %v4464
        %v5521 = vpack.c.b16 %v4497, %v4465
        %v5522 = vpack.c.b16 %v4498, %v4466
        %v5523 = vpack.c.b16 %v4499, %v4467
        %v5524 = vpack.c.b16 %v4500, %v4468
        %v5525 = vpack.c.b16 %v4501, %v4469
        %v5526 = vpack.c.b16 %v4502, %v4470
        %v5527 = vpack.c.b16 %v4503, %v4471
        %v5528 = vpack.c.b16 %v4504, %v4472
        %v5529 = vpack.c.b16 %v4505, %v4473
        %v5530 = vpack.c.b16 %v4506, %v4474
        %v5531 = vpack.c.b16 %v4507, %v4475
        %v5532 = vpack.c.b16 %v4508, %v4476
        %v5533 = vpack.c.b16 %v4509, %v4477
        %v5534 = vpack.c.b16 %v4510, %v4478
        %v5535 = vpack.c.b16 %v4511, %v4479
        %v5536 = vpack.c.b16 %v4512, %v4480
        %v5537 = vpack.c.b16 %v4513, %v4481
        %v5538 = vpack.c.b16 %v4514, %v4482
        %v5539 = vpack.c.b16 %v4515, %v4483
        %v5540 = vpack.c.b16 %v4516, %v4484
        %v5541 = vpack.c.b16 %v4517, %v4485
        %v5542 = vpack.c.b16 %v4518, %v4486
        %v5543 = vpack.c.b16 %v4519, %v4487
        %v5544 = vpack.c.b16 %v4520, %v4488
        %v5545 = vpack.c.b16 %v4521, %v4489
        %v5546 = vpack.c.b16 %v4522, %v4490
        %v5547 = vpack.c.b16 %v4523, %v4491
        %v5548 = vpack.c.b16 %v4524, %v4492
        %v5549 = vpack.c.b16 %v4525, %v4493
        %v5550 = vpack.c.b16 %v4526, %v4494
        %v5551 = vpack.c.b16 %v4527, %v4495
        %6576 = vmatprep.subr.bf16.mxu0 %v4529
        %6577 = vmatpush1.bf16.msra.mxu0 %v4528
        %6578 = vmatprep.subr.bf16.mxu0 %v4561
        %6579 = vmatpush1.bf16.msra.mxu0 %v4560
        %6580 = vmatprep.subr.bf16.mxu0 %v4593
        %6581 = vmatpush1.bf16.msra.mxu0 %v4592
        %6582 = vmatprep.subr.bf16.mxu0 %v4625
        %6583 = vmatpush1.bf16.msra.mxu0 %v4624
        %6584 = vmatprep.subr.bf16.mxu0 %v4657
        %6585 = vmatpush1.bf16.msra.mxu0 %v4656
        %6586 = vmatprep.subr.bf16.mxu0 %v4689
        %6587 = vmatpush1.bf16.msra.mxu0 %v4688
        %6588 = vmatprep.subr.bf16.mxu0 %v4721
        %6589 = vmatpush1.bf16.msra.mxu0 %v4720
        %6590 = vmatprep.subr.bf16.mxu0 %v4753
        %6591 = vmatpush1.bf16.msra.mxu0 %v4752
        %6592 = vmatprep.subr.bf16.mxu0 %v4785
        %6593 = vmatpush1.bf16.msra.mxu0 %v4784
        %6594 = vmatprep.subr.bf16.mxu0 %v4817
        %6595 = vmatpush1.bf16.msra.mxu0 %v4816
        %6596 = vmatprep.subr.bf16.mxu0 %v4849
        %6597 = vmatpush1.bf16.msra.mxu0 %v4848
        %6598 = vmatprep.subr.bf16.mxu0 %v4881
        %6599 = vmatpush1.bf16.msra.mxu0 %v4880
        %6600 = vmatprep.subr.bf16.mxu0 %v4913
        %6601 = vmatpush1.bf16.msra.mxu0 %v4912
        %6602 = vmatprep.subr.bf16.mxu0 %v4945
        %6603 = vmatpush1.bf16.msra.mxu0 %v4944
        %6604 = vmatprep.subr.bf16.mxu0 %v4977
        %6605 = vmatpush1.bf16.msra.mxu0 %v4976
        %6606 = vmatprep.subr.bf16.mxu0 %v5009
        %6607 = vmatpush1.bf16.msra.mxu0 %v5008
        %6608 = vmatprep.mubr.bf16.mxu0 %v261
        %6609 = vmatmul.mubr.bf16.gmra.mrb[0].mxu0 %v260
        %v6610 = vpop.f32.mrb[0].mxu0
        %v6611 = vadd.f32 %v1299, %v6610
        %v6612 = vpop.f32.mrb[0].mxu0
        %v6613 = vadd.f32 %v1303, %v6612
        %v6614 = vpop.f32.mrb[0].mxu0
        %v6615 = vpop.f32.mrb[0].mxu0
        %6616 = vdwg.mxu0
        %6617 = vmatprep.subr.bf16.mxu0 %v5041
        %6618 = vmatpush1.bf16.msra.mxu0 %v5040
        %6619 = vmatprep.subr.bf16.mxu0 %v5073
        %6620 = vmatpush1.bf16.msra.mxu0 %v5072
        %6621 = vmatprep.subr.bf16.mxu0 %v5105
        %6622 = vmatpush1.bf16.msra.mxu0 %v5104
        %6623 = vmatprep.subr.bf16.mxu0 %v5137
        %6624 = vmatpush1.bf16.msra.mxu0 %v5136
        %6625 = vmatprep.subr.bf16.mxu0 %v5169
        %6626 = vmatpush1.bf16.msra.mxu0 %v5168
        %6627 = vmatprep.subr.bf16.mxu0 %v5201
        %6628 = vmatpush1.bf16.msra.mxu0 %v5200
        %6629 = vmatprep.subr.bf16.mxu0 %v5233
        %6630 = vmatpush1.bf16.msra.mxu0 %v5232
        %6631 = vmatprep.subr.bf16.mxu0 %v5265
        %6632 = vmatpush1.bf16.msra.mxu0 %v5264
        %6633 = vmatprep.subr.bf16.mxu0 %v5297
        %6634 = vmatpush1.bf16.msra.mxu0 %v5296
        %6635 = vmatprep.subr.bf16.mxu0 %v5329
        %6636 = vmatpush1.bf16.msra.mxu0 %v5328
        %6637 = vmatprep.subr.bf16.mxu0 %v5361
        %6638 = vmatpush1.bf16.msra.mxu0 %v5360
        %6639 = vmatprep.subr.bf16.mxu0 %v5393
        %6640 = vmatpush1.bf16.msra.mxu0 %v5392
        %6641 = vmatprep.subr.bf16.mxu0 %v5425
        %6642 = vmatpush1.bf16.msra.mxu0 %v5424
        %6643 = vmatprep.subr.bf16.mxu0 %v5457
        %6644 = vmatpush1.bf16.msra.mxu0 %v5456
        %6645 = vmatprep.subr.bf16.mxu0 %v5489
        %6646 = vmatpush1.bf16.msra.mxu0 %v5488
        %6647 = vmatprep.subr.bf16.mxu0 %v5521
        %6648 = vmatpush1.bf16.msra.mxu0 %v5520
        %6649 = vmatprep.mubr.bf16.mxu0 %v263
        %6650 = vmatmul.mubr.bf16.gmra.mrb[0].mxu0 %v262
        %v6651 = vpop.f32.mrb[0].mxu0
        %v6652 = vadd.f32 %v6611, %v6651
        %v6653 = vpop.f32.mrb[0].mxu0
        %v6654 = vadd.f32 %v6613, %v6653
        %v6655 = vpop.f32.mrb[0].mxu0
        %v6656 = vpop.f32.mrb[0].mxu0
        %6657 = vdwg.mxu0
        %6658 = vmatprep.subr.bf16.mxu0 %v4531
        %6659 = vmatpush1.bf16.msra.mxu0 %v4530
        %6660 = vmatprep.subr.bf16.mxu0 %v4563
        %6661 = vmatpush1.bf16.msra.mxu0 %v4562
        %6662 = vmatprep.subr.bf16.mxu0 %v4595
        %6663 = vmatpush1.bf16.msra.mxu0 %v4594
        %6664 = vmatprep.subr.bf16.mxu0 %v4627
        %6665 = vmatpush1.bf16.msra.mxu0 %v4626
        %6666 = vmatprep.subr.bf16.mxu0 %v4659
        %6667 = vmatpush1.bf16.msra.mxu0 %v4658
        %6668 = vmatprep.subr.bf16.mxu0 %v4691
        %6669 = vmatpush1.bf16.msra.mxu0 %v4690
        %6670 = vmatprep.subr.bf16.mxu0 %v4723
        %6671 = vmatpush1.bf16.msra.mxu0 %v4722
        %6672 = vmatprep.subr.bf16.mxu0 %v4755
        %6673 = vmatpush1.bf16.msra.mxu0 %v4754
        %6674 = vmatprep.subr.bf16.mxu0 %v4787
        %6675 = vmatpush1.bf16.msra.mxu0 %v4786
        %6676 = vmatprep.subr.bf16.mxu0 %v4819
        %6677 = vmatpush1.bf16.msra.mxu0 %v4818
        %6678 = vmatprep.subr.bf16.mxu0 %v4851
        %6679 = vmatpush1.bf16.msra.mxu0 %v4850
        %6680 = vmatprep.subr.bf16.mxu0 %v4883
        %6681 = vmatpush1.bf16.msra.mxu0 %v4882
        %6682 = vmatprep.subr.bf16.mxu0 %v4915
        %6683 = vmatpush1.bf16.msra.mxu0 %v4914
        %6684 = vmatprep.subr.bf16.mxu0 %v4947
        %6685 = vmatpush1.bf16.msra.mxu0 %v4946
        %6686 = vmatprep.subr.bf16.mxu0 %v4979
        %6687 = vmatpush1.bf16.msra.mxu0 %v4978
        %6688 = vmatprep.subr.bf16.mxu0 %v5011
        %6689 = vmatpush1.bf16.msra.mxu0 %v5010
        %6690 = vmatprep.mubr.bf16.mxu0 %v261
        %6691 = vmatmul.mubr.bf16.gmra.mrb[0].mxu0 %v260
        %v6692 = vpop.f32.mrb[0].mxu0
        %v6693 = vadd.f32 %v1307, %v6692
        %v6694 = vpop.f32.mrb[0].mxu0
        %v6695 = vadd.f32 %v1311, %v6694
        %v6696 = vpop.f32.mrb[0].mxu0
        %v6697 = vpop.f32.mrb[0].mxu0
        %6698 = vdwg.mxu0
        %6699 = vmatprep.subr.bf16.mxu0 %v5043
        %6700 = vmatpush1.bf16.msra.mxu0 %v5042
        %6701 = vmatprep.subr.bf16.mxu0 %v5075
        %6702 = vmatpush1.bf16.msra.mxu0 %v5074
        %6703 = vmatprep.subr.bf16.mxu0 %v5107
        %6704 = vmatpush1.bf16.msra.mxu0 %v5106
        %6705 = vmatprep.subr.bf16.mxu0 %v5139
        %6706 = vmatpush1.bf16.msra.mxu0 %v5138
        %6707 = vmatprep.subr.bf16.mxu0 %v5171
        %6708 = vmatpush1.bf16.msra.mxu0 %v5170
        %6709 = vmatprep.subr.bf16.mxu0 %v5203
        %6710 = vmatpush1.bf16.msra.mxu0 %v5202
        %6711 = vmatprep.subr.bf16.mxu0 %v5235
        %6712 = vmatpush1.bf16.msra.mxu0 %v5234
        %6713 = vmatprep.subr.bf16.mxu0 %v5267
        %6714 = vmatpush1.bf16.msra.mxu0 %v5266
        %6715 = vmatprep.subr.bf16.mxu0 %v5299
        %6716 = vmatpush1.bf16.msra.mxu0 %v5298
        %6717 = vmatprep.subr.bf16.mxu0 %v5331
        %6718 = vmatpush1.bf16.msra.mxu0 %v5330
        %6719 = vmatprep.subr.bf16.mxu0 %v5363
        %6720 = vmatpush1.bf16.msra.mxu0 %v5362
        %6721 = vmatprep.subr.bf16.mxu0 %v5395
        %6722 = vmatpush1.bf16.msra.mxu0 %v5394
        %6723 = vmatprep.subr.bf16.mxu0 %v5427
        %6724 = vmatpush1.bf16.msra.mxu0 %v5426
        %6725 = vmatprep.subr.bf16.mxu0 %v5459
        %6726 = vmatpush1.bf16.msra.mxu0 %v5458
        %6727 = vmatprep.subr.bf16.mxu0 %v5491
        %6728 = vmatpush1.bf16.msra.mxu0 %v5490
        %6729 = vmatprep.subr.bf16.mxu0 %v5523
        %6730 = vmatpush1.bf16.msra.mxu0 %v5522
        %6731 = vmatprep.mubr.bf16.mxu0 %v263
        %6732 = vmatmul.mubr.bf16.gmra.mrb[0].mxu0 %v262
        %v6733 = vpop.f32.mrb[0].mxu0
        %v6734 = vadd.f32 %v6693, %v6733
        %v6735 = vpop.f32.mrb[0].mxu0
        %v6736 = vadd.f32 %v6695, %v6735
        %v6737 = vpop.f32.mrb[0].mxu0
        %v6738 = vpop.f32.mrb[0].mxu0
        %6739 = vdwg.mxu0
        %6740 = vmatprep.subr.bf16.mxu0 %v4533
        %6741 = vmatpush1.bf16.msra.mxu0 %v4532
        %6742 = vmatprep.subr.bf16.mxu0 %v4565
        %6743 = vmatpush1.bf16.msra.mxu0 %v4564
        %6744 = vmatprep.subr.bf16.mxu0 %v4597
        %6745 = vmatpush1.bf16.msra.mxu0 %v4596
        %6746 = vmatprep.subr.bf16.mxu0 %v4629
        %6747 = vmatpush1.bf16.msra.mxu0 %v4628
        %6748 = vmatprep.subr.bf16.mxu0 %v4661
        %6749 = vmatpush1.bf16.msra.mxu0 %v4660
        %6750 = vmatprep.subr.bf16.mxu0 %v4693
        %6751 = vmatpush1.bf16.msra.mxu0 %v4692
        %6752 = vmatprep.subr.bf16.mxu0 %v4725
        %6753 = vmatpush1.bf16.msra.mxu0 %v4724
        %6754 = vmatprep.subr.bf16.mxu0 %v4757
        %6755 = vmatpush1.bf16.msra.mxu0 %v4756
        %6756 = vmatprep.subr.bf16.mxu0 %v4789
        %6757 = vmatpush1.bf16.msra.mxu0 %v4788
        %6758 = vmatprep.subr.bf16.mxu0 %v4821
        %6759 = vmatpush1.bf16.msra.mxu0 %v4820
        %6760 = vmatprep.subr.bf16.mxu0 %v4853
        %6761 = vmatpush1.bf16.msra.mxu0 %v4852
        %6762 = vmatprep.subr.bf16.mxu0 %v4885
        %6763 = vmatpush1.bf16.msra.mxu0 %v4884
        %6764 = vmatprep.subr.bf16.mxu0 %v4917
        %6765 = vmatpush1.bf16.msra.mxu0 %v4916
        %6766 = vmatprep.subr.bf16.mxu0 %v4949
        %6767 = vmatpush1.bf16.msra.mxu0 %v4948
        %6768 = vmatprep.subr.bf16.mxu0 %v4981
        %6769 = vmatpush1.bf16.msra.mxu0 %v4980
        %6770 = vmatprep.subr.bf16.mxu0 %v5013
        %6771 = vmatpush1.bf16.msra.mxu0 %v5012
        %6772 = vmatprep.mubr.bf16.mxu0 %v261
        %6773 = vmatmul.mubr.bf16.gmra.mrb[0].mxu0 %v260
        %v6774 = vpop.f32.mrb[0].mxu0
        %v6775 = vadd.f32 %v1315, %v6774
        %v6776 = vpop.f32.mrb[0].mxu0
        %v6777 = vadd.f32 %v1319, %v6776
        %v6778 = vpop.f32.mrb[0].mxu0
        %v6779 = vpop.f32.mrb[0].mxu0
        %6780 = vdwg.mxu0
        %6781 = vmatprep.subr.bf16.mxu0 %v5045
        %6782 = vmatpush1.bf16.msra.mxu0 %v5044
        %6783 = vmatprep.subr.bf16.mxu0 %v5077
        %6784 = vmatpush1.bf16.msra.mxu0 %v5076
        %6785 = vmatprep.subr.bf16.mxu0 %v5109
        %6786 = vmatpush1.bf16.msra.mxu0 %v5108
        %6787 = vmatprep.subr.bf16.mxu0 %v5141
        %6788 = vmatpush1.bf16.msra.mxu0 %v5140
        %6789 = vmatprep.subr.bf16.mxu0 %v5173
        %6790 = vmatpush1.bf16.msra.mxu0 %v5172
        %6791 = vmatprep.subr.bf16.mxu0 %v5205
        %6792 = vmatpush1.bf16.msra.mxu0 %v5204
        %6793 = vmatprep.subr.bf16.mxu0 %v5237
        %6794 = vmatpush1.bf16.msra.mxu0 %v5236
        %6795 = vmatprep.subr.bf16.mxu0 %v5269
        %6796 = vmatpush1.bf16.msra.mxu0 %v5268
        %6797 = vmatprep.subr.bf16.mxu0 %v5301
        %6798 = vmatpush1.bf16.msra.mxu0 %v5300
        %6799 = vmatprep.subr.bf16.mxu0 %v5333
        %6800 = vmatpush1.bf16.msra.mxu0 %v5332
        %6801 = vmatprep.subr.bf16.mxu0 %v5365
        %6802 = vmatpush1.bf16.msra.mxu0 %v5364
        %6803 = vmatprep.subr.bf16.mxu0 %v5397
        %6804 = vmatpush1.bf16.msra.mxu0 %v5396
        %6805 = vmatprep.subr.bf16.mxu0 %v5429
        %6806 = vmatpush1.bf16.msra.mxu0 %v5428
        %6807 = vmatprep.subr.bf16.mxu0 %v5461
        %6808 = vmatpush1.bf16.msra.mxu0 %v5460
        %6809 = vmatprep.subr.bf16.mxu0 %v5493
        %6810 = vmatpush1.bf16.msra.mxu0 %v5492
        %6811 = vmatprep.subr.bf16.mxu0 %v5525
        %6812 = vmatpush1.bf16.msra.mxu0 %v5524
        %6813 = vmatprep.mubr.bf16.mxu0 %v263
        %6814 = vmatmul.mubr.bf16.gmra.mrb[0].mxu0 %v262
        %v6815 = vpop.f32.mrb[0].mxu0
        %v6816 = vadd.f32 %v6775, %v6815
        %v6817 = vpop.f32.mrb[0].mxu0
        %v6818 = vadd.f32 %v6777, %v6817
        %v6819 = vpop.f32.mrb[0].mxu0
        %v6820 = vpop.f32.mrb[0].mxu0
        %6821 = vdwg.mxu0
        %6822 = vmatprep.subr.bf16.mxu0 %v4535
        %6823 = vmatpush1.bf16.msra.mxu0 %v4534
        %6824 = vmatprep.subr.bf16.mxu0 %v4567
        %6825 = vmatpush1.bf16.msra.mxu0 %v4566
        %6826 = vmatprep.subr.bf16.mxu0 %v4599
        %6827 = vmatpush1.bf16.msra.mxu0 %v4598
        %6828 = vmatprep.subr.bf16.mxu0 %v4631
        %6829 = vmatpush1.bf16.msra.mxu0 %v4630
        %6830 = vmatprep.subr.bf16.mxu0 %v4663
        %6831 = vmatpush1.bf16.msra.mxu0 %v4662
        %6832 = vmatprep.subr.bf16.mxu0 %v4695
        %6833 = vmatpush1.bf16.msra.mxu0 %v4694
        %6834 = vmatprep.subr.bf16.mxu0 %v4727
        %6835 = vmatpush1.bf16.msra.mxu0 %v4726
        %6836 = vmatprep.subr.bf16.mxu0 %v4759
        %6837 = vmatpush1.bf16.msra.mxu0 %v4758
        %6838 = vmatprep.subr.bf16.mxu0 %v4791
        %6839 = vmatpush1.bf16.msra.mxu0 %v4790
        %6840 = vmatprep.subr.bf16.mxu0 %v4823
        %6841 = vmatpush1.bf16.msra.mxu0 %v4822
        %6842 = vmatprep.subr.bf16.mxu0 %v4855
        %6843 = vmatpush1.bf16.msra.mxu0 %v4854
        %6844 = vmatprep.subr.bf16.mxu0 %v4887
        %6845 = vmatpush1.bf16.msra.mxu0 %v4886
        %6846 = vmatprep.subr.bf16.mxu0 %v4919
        %6847 = vmatpush1.bf16.msra.mxu0 %v4918
        %6848 = vmatprep.subr.bf16.mxu0 %v4951
        %6849 = vmatpush1.bf16.msra.mxu0 %v4950
        %6850 = vmatprep.subr.bf16.mxu0 %v4983
        %6851 = vmatpush1.bf16.msra.mxu0 %v4982
        %6852 = vmatprep.subr.bf16.mxu0 %v5015
        %6853 = vmatpush1.bf16.msra.mxu0 %v5014
        %6854 = vmatprep.mubr.bf16.mxu0 %v261
        %6855 = vmatmul.mubr.bf16.gmra.mrb[0].mxu0 %v260
        %v6856 = vpop.f32.mrb[0].mxu0
        %v6857 = vadd.f32 %v1323, %v6856
        %v6858 = vpop.f32.mrb[0].mxu0
        %v6859 = vadd.f32 %v1327, %v6858
        %v6860 = vpop.f32.mrb[0].mxu0
        %v6861 = vpop.f32.mrb[0].mxu0
        %6862 = vdwg.mxu0
        %6863 = vmatprep.subr.bf16.mxu0 %v5047
        %6864 = vmatpush1.bf16.msra.mxu0 %v5046
        %6865 = vmatprep.subr.bf16.mxu0 %v5079
        %6866 = vmatpush1.bf16.msra.mxu0 %v5078
        %6867 = vmatprep.subr.bf16.mxu0 %v5111
        %6868 = vmatpush1.bf16.msra.mxu0 %v5110
        %6869 = vmatprep.subr.bf16.mxu0 %v5143
        %6870 = vmatpush1.bf16.msra.mxu0 %v5142
        %6871 = vmatprep.subr.bf16.mxu0 %v5175
        %6872 = vmatpush1.bf16.msra.mxu0 %v5174
        %6873 = vmatprep.subr.bf16.mxu0 %v5207
        %6874 = vmatpush1.bf16.msra.mxu0 %v5206
        %6875 = vmatprep.subr.bf16.mxu0 %v5239
        %6876 = vmatpush1.bf16.msra.mxu0 %v5238
        %6877 = vmatprep.subr.bf16.mxu0 %v5271
        %6878 = vmatpush1.bf16.msra.mxu0 %v5270
        %6879 = vmatprep.subr.bf16.mxu0 %v5303
        %6880 = vmatpush1.bf16.msra.mxu0 %v5302
        %6881 = vmatprep.subr.bf16.mxu0 %v5335
        %6882 = vmatpush1.bf16.msra.mxu0 %v5334
        %6883 = vmatprep.subr.bf16.mxu0 %v5367
        %6884 = vmatpush1.bf16.msra.mxu0 %v5366
        %6885 = vmatprep.subr.bf16.mxu0 %v5399
        %6886 = vmatpush1.bf16.msra.mxu0 %v5398
        %6887 = vmatprep.subr.bf16.mxu0 %v5431
        %6888 = vmatpush1.bf16.msra.mxu0 %v5430
        %6889 = vmatprep.subr.bf16.mxu0 %v5463
        %6890 = vmatpush1.bf16.msra.mxu0 %v5462
        %6891 = vmatprep.subr.bf16.mxu0 %v5495
        %6892 = vmatpush1.bf16.msra.mxu0 %v5494
        %6893 = vmatprep.subr.bf16.mxu0 %v5527
        %6894 = vmatpush1.bf16.msra.mxu0 %v5526
        %6895 = vmatprep.mubr.bf16.mxu0 %v263
        %6896 = vmatmul.mubr.bf16.gmra.mrb[0].mxu0 %v262
        %v6897 = vpop.f32.mrb[0].mxu0
        %v6898 = vadd.f32 %v6857, %v6897
        %v6899 = vpop.f32.mrb[0].mxu0
        %v6900 = vadd.f32 %v6859, %v6899
        %v6901 = vpop.f32.mrb[0].mxu0
        %v6902 = vpop.f32.mrb[0].mxu0
        %6903 = vdwg.mxu0
        %6904 = vmatprep.subr.bf16.mxu0 %v4537
        %6905 = vmatpush1.bf16.msra.mxu0 %v4536
        %6906 = vmatprep.subr.bf16.mxu0 %v4569
        %6907 = vmatpush1.bf16.msra.mxu0 %v4568
        %6908 = vmatprep.subr.bf16.mxu0 %v4601
        %6909 = vmatpush1.bf16.msra.mxu0 %v4600
        %6910 = vmatprep.subr.bf16.mxu0 %v4633
        %6911 = vmatpush1.bf16.msra.mxu0 %v4632
        %6912 = vmatprep.subr.bf16.mxu0 %v4665
        %6913 = vmatpush1.bf16.msra.mxu0 %v4664
        %6914 = vmatprep.subr.bf16.mxu0 %v4697
        %6915 = vmatpush1.bf16.msra.mxu0 %v4696
        %6916 = vmatprep.subr.bf16.mxu0 %v4729
        %6917 = vmatpush1.bf16.msra.mxu0 %v4728
        %6918 = vmatprep.subr.bf16.mxu0 %v4761
        %6919 = vmatpush1.bf16.msra.mxu0 %v4760
        %6920 = vmatprep.subr.bf16.mxu0 %v4793
        %6921 = vmatpush1.bf16.msra.mxu0 %v4792
        %6922 = vmatprep.subr.bf16.mxu0 %v4825
        %6923 = vmatpush1.bf16.msra.mxu0 %v4824
        %6924 = vmatprep.subr.bf16.mxu0 %v4857
        %6925 = vmatpush1.bf16.msra.mxu0 %v4856
        %6926 = vmatprep.subr.bf16.mxu0 %v4889
        %6927 = vmatpush1.bf16.msra.mxu0 %v4888
        %6928 = vmatprep.subr.bf16.mxu0 %v4921
        %6929 = vmatpush1.bf16.msra.mxu0 %v4920
        %6930 = vmatprep.subr.bf16.mxu0 %v4953
        %6931 = vmatpush1.bf16.msra.mxu0 %v4952
        %6932 = vmatprep.subr.bf16.mxu0 %v4985
        %6933 = vmatpush1.bf16.msra.mxu0 %v4984
        %6934 = vmatprep.subr.bf16.mxu0 %v5017
        %6935 = vmatpush1.bf16.msra.mxu0 %v5016
        %6936 = vmatprep.mubr.bf16.mxu0 %v261
        %6937 = vmatmul.mubr.bf16.gmra.mrb[0].mxu0 %v260
        %v6938 = vpop.f32.mrb[0].mxu0
        %v6939 = vadd.f32 %v1331, %v6938
        %v6940 = vpop.f32.mrb[0].mxu0
        %v6941 = vadd.f32 %v1335, %v6940
        %v6942 = vpop.f32.mrb[0].mxu0
        %v6943 = vpop.f32.mrb[0].mxu0
        %6944 = vdwg.mxu0
        %6945 = vmatprep.subr.bf16.mxu0 %v5049
        %6946 = vmatpush1.bf16.msra.mxu0 %v5048
        %6947 = vmatprep.subr.bf16.mxu0 %v5081
        %6948 = vmatpush1.bf16.msra.mxu0 %v5080
        %6949 = vmatprep.subr.bf16.mxu0 %v5113
        %6950 = vmatpush1.bf16.msra.mxu0 %v5112
        %6951 = vmatprep.subr.bf16.mxu0 %v5145
        %6952 = vmatpush1.bf16.msra.mxu0 %v5144
        %6953 = vmatprep.subr.bf16.mxu0 %v5177
        %6954 = vmatpush1.bf16.msra.mxu0 %v5176
        %6955 = vmatprep.subr.bf16.mxu0 %v5209
        %6956 = vmatpush1.bf16.msra.mxu0 %v5208
        %6957 = vmatprep.subr.bf16.mxu0 %v5241
        %6958 = vmatpush1.bf16.msra.mxu0 %v5240
        %6959 = vmatprep.subr.bf16.mxu0 %v5273
        %6960 = vmatpush1.bf16.msra.mxu0 %v5272
        %6961 = vmatprep.subr.bf16.mxu0 %v5305
        %6962 = vmatpush1.bf16.msra.mxu0 %v5304
        %6963 = vmatprep.subr.bf16.mxu0 %v5337
        %6964 = vmatpush1.bf16.msra.mxu0 %v5336
        %6965 = vmatprep.subr.bf16.mxu0 %v5369
        %6966 = vmatpush1.bf16.msra.mxu0 %v5368
        %6967 = vmatprep.subr.bf16.mxu0 %v5401
        %6968 = vmatpush1.bf16.msra.mxu0 %v5400
        %6969 = vmatprep.subr.bf16.mxu0 %v5433
        %6970 = vmatpush1.bf16.msra.mxu0 %v5432
        %6971 = vmatprep.subr.bf16.mxu0 %v5465
        %6972 = vmatpush1.bf16.msra.mxu0 %v5464
        %6973 = vmatprep.subr.bf16.mxu0 %v5497
        %6974 = vmatpush1.bf16.msra.mxu0 %v5496
        %6975 = vmatprep.subr.bf16.mxu0 %v5529
        %6976 = vmatpush1.bf16.msra.mxu0 %v5528
        %6977 = vmatprep.mubr.bf16.mxu0 %v263
        %6978 = vmatmul.mubr.bf16.gmra.mrb[0].mxu0 %v262
        %v6979 = vpop.f32.mrb[0].mxu0
        %v6980 = vadd.f32 %v6939, %v6979
        %v6981 = vpop.f32.mrb[0].mxu0
        %v6982 = vadd.f32 %v6941, %v6981
        %v6983 = vpop.f32.mrb[0].mxu0
        %v6984 = vpop.f32.mrb[0].mxu0
        %6985 = vdwg.mxu0
        %6986 = vmatprep.subr.bf16.mxu0 %v4539
        %6987 = vmatpush1.bf16.msra.mxu0 %v4538
        %6988 = vmatprep.subr.bf16.mxu0 %v4571
        %6989 = vmatpush1.bf16.msra.mxu0 %v4570
        %6990 = vmatprep.subr.bf16.mxu0 %v4603
        %6991 = vmatpush1.bf16.msra.mxu0 %v4602
        %6992 = vmatprep.subr.bf16.mxu0 %v4635
        %6993 = vmatpush1.bf16.msra.mxu0 %v4634
        %6994 = vmatprep.subr.bf16.mxu0 %v4667
        %6995 = vmatpush1.bf16.msra.mxu0 %v4666
        %6996 = vmatprep.subr.bf16.mxu0 %v4699
        %6997 = vmatpush1.bf16.msra.mxu0 %v4698
        %6998 = vmatprep.subr.bf16.mxu0 %v4731
        %6999 = vmatpush1.bf16.msra.mxu0 %v4730
        %7000 = vmatprep.subr.bf16.mxu0 %v4763
        %7001 = vmatpush1.bf16.msra.mxu0 %v4762
        %7002 = vmatprep.subr.bf16.mxu0 %v4795
        %7003 = vmatpush1.bf16.msra.mxu0 %v4794
        %7004 = vmatprep.subr.bf16.mxu0 %v4827
        %7005 = vmatpush1.bf16.msra.mxu0 %v4826
        %7006 = vmatprep.subr.bf16.mxu0 %v4859
        %7007 = vmatpush1.bf16.msra.mxu0 %v4858
        %7008 = vmatprep.subr.bf16.mxu0 %v4891
        %7009 = vmatpush1.bf16.msra.mxu0 %v4890
        %7010 = vmatprep.subr.bf16.mxu0 %v4923
        %7011 = vmatpush1.bf16.msra.mxu0 %v4922
        %7012 = vmatprep.subr.bf16.mxu0 %v4955
        %7013 = vmatpush1.bf16.msra.mxu0 %v4954
        %7014 = vmatprep.subr.bf16.mxu0 %v4987
        %7015 = vmatpush1.bf16.msra.mxu0 %v4986
        %7016 = vmatprep.subr.bf16.mxu0 %v5019
        %7017 = vmatpush1.bf16.msra.mxu0 %v5018
        %7018 = vmatprep.mubr.bf16.mxu0 %v261
        %7019 = vmatmul.mubr.bf16.gmra.mrb[0].mxu0 %v260
        %v7020 = vpop.f32.mrb[0].mxu0
        %v7021 = vadd.f32 %v1339, %v7020
        %v7022 = vpop.f32.mrb[0].mxu0
        %v7023 = vadd.f32 %v1343, %v7022
        %v7024 = vpop.f32.mrb[0].mxu0
        %v7025 = vpop.f32.mrb[0].mxu0
        %7026 = vdwg.mxu0
        %7027 = vmatprep.subr.bf16.mxu0 %v5051
        %7028 = vmatpush1.bf16.msra.mxu0 %v5050
        %7029 = vmatprep.subr.bf16.mxu0 %v5083
        %7030 = vmatpush1.bf16.msra.mxu0 %v5082
        %7031 = vmatprep.subr.bf16.mxu0 %v5115
        %7032 = vmatpush1.bf16.msra.mxu0 %v5114
        %7033 = vmatprep.subr.bf16.mxu0 %v5147
        %7034 = vmatpush1.bf16.msra.mxu0 %v5146
        %7035 = vmatprep.subr.bf16.mxu0 %v5179
        %7036 = vmatpush1.bf16.msra.mxu0 %v5178
        %7037 = vmatprep.subr.bf16.mxu0 %v5211
        %7038 = vmatpush1.bf16.msra.mxu0 %v5210
        %7039 = vmatprep.subr.bf16.mxu0 %v5243
        %7040 = vmatpush1.bf16.msra.mxu0 %v5242
        %7041 = vmatprep.subr.bf16.mxu0 %v5275
        %7042 = vmatpush1.bf16.msra.mxu0 %v5274
        %7043 = vmatprep.subr.bf16.mxu0 %v5307
        %7044 = vmatpush1.bf16.msra.mxu0 %v5306
        %7045 = vmatprep.subr.bf16.mxu0 %v5339
        %7046 = vmatpush1.bf16.msra.mxu0 %v5338
        %7047 = vmatprep.subr.bf16.mxu0 %v5371
        %7048 = vmatpush1.bf16.msra.mxu0 %v5370
        %7049 = vmatprep.subr.bf16.mxu0 %v5403
        %7050 = vmatpush1.bf16.msra.mxu0 %v5402
        %7051 = vmatprep.subr.bf16.mxu0 %v5435
        %7052 = vmatpush1.bf16.msra.mxu0 %v5434
        %7053 = vmatprep.subr.bf16.mxu0 %v5467
        %7054 = vmatpush1.bf16.msra.mxu0 %v5466
        %7055 = vmatprep.subr.bf16.mxu0 %v5499
        %7056 = vmatpush1.bf16.msra.mxu0 %v5498
        %7057 = vmatprep.subr.bf16.mxu0 %v5531
        %7058 = vmatpush1.bf16.msra.mxu0 %v5530
        %7059 = vmatprep.mubr.bf16.mxu0 %v263
        %7060 = vmatmul.mubr.bf16.gmra.mrb[0].mxu0 %v262
        %v7061 = vpop.f32.mrb[0].mxu0
        %v7062 = vadd.f32 %v7021, %v7061
        %v7063 = vpop.f32.mrb[0].mxu0
        %v7064 = vadd.f32 %v7023, %v7063
        %v7065 = vpop.f32.mrb[0].mxu0
        %v7066 = vpop.f32.mrb[0].mxu0
        %7067 = vdwg.mxu0
        %7068 = vmatprep.subr.bf16.mxu0 %v4541
        %7069 = vmatpush1.bf16.msra.mxu0 %v4540
        %7070 = vmatprep.subr.bf16.mxu0 %v4573
        %7071 = vmatpush1.bf16.msra.mxu0 %v4572
        %7072 = vmatprep.subr.bf16.mxu0 %v4605
        %7073 = vmatpush1.bf16.msra.mxu0 %v4604
        %7074 = vmatprep.subr.bf16.mxu0 %v4637
        %7075 = vmatpush1.bf16.msra.mxu0 %v4636
        %7076 = vmatprep.subr.bf16.mxu0 %v4669
        %7077 = vmatpush1.bf16.msra.mxu0 %v4668
        %7078 = vmatprep.subr.bf16.mxu0 %v4701
        %7079 = vmatpush1.bf16.msra.mxu0 %v4700
        %7080 = vmatprep.subr.bf16.mxu0 %v4733
        %7081 = vmatpush1.bf16.msra.mxu0 %v4732
        %7082 = vmatprep.subr.bf16.mxu0 %v4765
        %7083 = vmatpush1.bf16.msra.mxu0 %v4764
        %7084 = vmatprep.subr.bf16.mxu0 %v4797
        %7085 = vmatpush1.bf16.msra.mxu0 %v4796
        %7086 = vmatprep.subr.bf16.mxu0 %v4829
        %7087 = vmatpush1.bf16.msra.mxu0 %v4828
        %7088 = vmatprep.subr.bf16.mxu0 %v4861
        %7089 = vmatpush1.bf16.msra.mxu0 %v4860
        %7090 = vmatprep.subr.bf16.mxu0 %v4893
        %7091 = vmatpush1.bf16.msra.mxu0 %v4892
        %7092 = vmatprep.subr.bf16.mxu0 %v4925
        %7093 = vmatpush1.bf16.msra.mxu0 %v4924
        %7094 = vmatprep.subr.bf16.mxu0 %v4957
        %7095 = vmatpush1.bf16.msra.mxu0 %v4956
        %7096 = vmatprep.subr.bf16.mxu0 %v4989
        %7097 = vmatpush1.bf16.msra.mxu0 %v4988
        %7098 = vmatprep.subr.bf16.mxu0 %v5021
        %7099 = vmatpush1.bf16.msra.mxu0 %v5020
        %7100 = vmatprep.mubr.bf16.mxu0 %v261
        %7101 = vmatmul.mubr.bf16.gmra.mrb[0].mxu0 %v260
        %v7102 = vpop.f32.mrb[0].mxu0
        %v7103 = vadd.f32 %v1347, %v7102
        %v7104 = vpop.f32.mrb[0].mxu0
        %v7105 = vadd.f32 %v1351, %v7104
        %v7106 = vpop.f32.mrb[0].mxu0
        %v7107 = vpop.f32.mrb[0].mxu0
        %7108 = vdwg.mxu0
        %7109 = vmatprep.subr.bf16.mxu0 %v5053
        %7110 = vmatpush1.bf16.msra.mxu0 %v5052
        %7111 = vmatprep.subr.bf16.mxu0 %v5085
        %7112 = vmatpush1.bf16.msra.mxu0 %v5084
        %7113 = vmatprep.subr.bf16.mxu0 %v5117
        %7114 = vmatpush1.bf16.msra.mxu0 %v5116
        %7115 = vmatprep.subr.bf16.mxu0 %v5149
        %7116 = vmatpush1.bf16.msra.mxu0 %v5148
        %7117 = vmatprep.subr.bf16.mxu0 %v5181
        %7118 = vmatpush1.bf16.msra.mxu0 %v5180
        %7119 = vmatprep.subr.bf16.mxu0 %v5213
        %7120 = vmatpush1.bf16.msra.mxu0 %v5212
        %7121 = vmatprep.subr.bf16.mxu0 %v5245
        %7122 = vmatpush1.bf16.msra.mxu0 %v5244
        %7123 = vmatprep.subr.bf16.mxu0 %v5277
        %7124 = vmatpush1.bf16.msra.mxu0 %v5276
        %7125 = vmatprep.subr.bf16.mxu0 %v5309
        %7126 = vmatpush1.bf16.msra.mxu0 %v5308
        %7127 = vmatprep.subr.bf16.mxu0 %v5341
        %7128 = vmatpush1.bf16.msra.mxu0 %v5340
        %7129 = vmatprep.subr.bf16.mxu0 %v5373
        %7130 = vmatpush1.bf16.msra.mxu0 %v5372
        %7131 = vmatprep.subr.bf16.mxu0 %v5405
        %7132 = vmatpush1.bf16.msra.mxu0 %v5404
        %7133 = vmatprep.subr.bf16.mxu0 %v5437
        %7134 = vmatpush1.bf16.msra.mxu0 %v5436
        %7135 = vmatprep.subr.bf16.mxu0 %v5469
        %7136 = vmatpush1.bf16.msra.mxu0 %v5468
        %7137 = vmatprep.subr.bf16.mxu0 %v5501
        %7138 = vmatpush1.bf16.msra.mxu0 %v5500
        %7139 = vmatprep.subr.bf16.mxu0 %v5533
        %7140 = vmatpush1.bf16.msra.mxu0 %v5532
        %7141 = vmatprep.mubr.bf16.mxu0 %v263
        %7142 = vmatmul.mubr.bf16.gmra.mrb[0].mxu0 %v262
        %v7143 = vpop.f32.mrb[0].mxu0
        %v7144 = vadd.f32 %v7103, %v7143
        %v7145 = vpop.f32.mrb[0].mxu0
        %v7146 = vadd.f32 %v7105, %v7145
        %v7147 = vpop.f32.mrb[0].mxu0
        %v7148 = vpop.f32.mrb[0].mxu0
        %7149 = vdwg.mxu0
        %7150 = vmatprep.subr.bf16.mxu0 %v4543
        %7151 = vmatpush1.bf16.msra.mxu0 %v4542
        %7152 = vmatprep.subr.bf16.mxu0 %v4575
        %7153 = vmatpush1.bf16.msra.mxu0 %v4574
        %7154 = vmatprep.subr.bf16.mxu0 %v4607
        %7155 = vmatpush1.bf16.msra.mxu0 %v4606
        %7156 = vmatprep.subr.bf16.mxu0 %v4639
        %7157 = vmatpush1.bf16.msra.mxu0 %v4638
        %7158 = vmatprep.subr.bf16.mxu0 %v4671
        %7159 = vmatpush1.bf16.msra.mxu0 %v4670
        %7160 = vmatprep.subr.bf16.mxu0 %v4703
        %7161 = vmatpush1.bf16.msra.mxu0 %v4702
        %7162 = vmatprep.subr.bf16.mxu0 %v4735
        %7163 = vmatpush1.bf16.msra.mxu0 %v4734
        %7164 = vmatprep.subr.bf16.mxu0 %v4767
        %7165 = vmatpush1.bf16.msra.mxu0 %v4766
        %7166 = vmatprep.subr.bf16.mxu0 %v4799
        %7167 = vmatpush1.bf16.msra.mxu0 %v4798
        %7168 = vmatprep.subr.bf16.mxu0 %v4831
        %7169 = vmatpush1.bf16.msra.mxu0 %v4830
        %7170 = vmatprep.subr.bf16.mxu0 %v4863
        %7171 = vmatpush1.bf16.msra.mxu0 %v4862
        %7172 = vmatprep.subr.bf16.mxu0 %v4895
        %7173 = vmatpush1.bf16.msra.mxu0 %v4894
        %7174 = vmatprep.subr.bf16.mxu0 %v4927
        %7175 = vmatpush1.bf16.msra.mxu0 %v4926
        %7176 = vmatprep.subr.bf16.mxu0 %v4959
        %7177 = vmatpush1.bf16.msra.mxu0 %v4958
        %7178 = vmatprep.subr.bf16.mxu0 %v4991
        %7179 = vmatpush1.bf16.msra.mxu0 %v4990
        %7180 = vmatprep.subr.bf16.mxu0 %v5023
        %7181 = vmatpush1.bf16.msra.mxu0 %v5022
        %7182 = vmatprep.mubr.bf16.mxu0 %v261
        %7183 = vmatmul.mubr.bf16.gmra.mrb[0].mxu0 %v260
        %v7184 = vpop.f32.mrb[0].mxu0
        %v7185 = vadd.f32 %v1355, %v7184
        %v7186 = vpop.f32.mrb[0].mxu0
        %v7187 = vadd.f32 %v1359, %v7186
        %v7188 = vpop.f32.mrb[0].mxu0
        %v7189 = vpop.f32.mrb[0].mxu0
        %7190 = vdwg.mxu0
        %7191 = vmatprep.subr.bf16.mxu0 %v5055
        %7192 = vmatpush1.bf16.msra.mxu0 %v5054
        %7193 = vmatprep.subr.bf16.mxu0 %v5087
        %7194 = vmatpush1.bf16.msra.mxu0 %v5086
        %7195 = vmatprep.subr.bf16.mxu0 %v5119
        %7196 = vmatpush1.bf16.msra.mxu0 %v5118
        %7197 = vmatprep.subr.bf16.mxu0 %v5151
        %7198 = vmatpush1.bf16.msra.mxu0 %v5150
        %7199 = vmatprep.subr.bf16.mxu0 %v5183
        %7200 = vmatpush1.bf16.msra.mxu0 %v5182
        %7201 = vmatprep.subr.bf16.mxu0 %v5215
        %7202 = vmatpush1.bf16.msra.mxu0 %v5214
        %7203 = vmatprep.subr.bf16.mxu0 %v5247
        %7204 = vmatpush1.bf16.msra.mxu0 %v5246
        %7205 = vmatprep.subr.bf16.mxu0 %v5279
        %7206 = vmatpush1.bf16.msra.mxu0 %v5278
        %7207 = vmatprep.subr.bf16.mxu0 %v5311
        %7208 = vmatpush1.bf16.msra.mxu0 %v5310
        %7209 = vmatprep.subr.bf16.mxu0 %v5343
        %7210 = vmatpush1.bf16.msra.mxu0 %v5342
        %7211 = vmatprep.subr.bf16.mxu0 %v5375
        %7212 = vmatpush1.bf16.msra.mxu0 %v5374
        %7213 = vmatprep.subr.bf16.mxu0 %v5407
        %7214 = vmatpush1.bf16.msra.mxu0 %v5406
        %7215 = vmatprep.subr.bf16.mxu0 %v5439
        %7216 = vmatpush1.bf16.msra.mxu0 %v5438
        %7217 = vmatprep.subr.bf16.mxu0 %v5471
        %7218 = vmatpush1.bf16.msra.mxu0 %v5470
        %7219 = vmatprep.subr.bf16.mxu0 %v5503
        %7220 = vmatpush1.bf16.msra.mxu0 %v5502
        %7221 = vmatprep.subr.bf16.mxu0 %v5535
        %7222 = vmatpush1.bf16.msra.mxu0 %v5534
        %7223 = vmatprep.mubr.bf16.mxu0 %v263
        %7224 = vmatmul.mubr.bf16.gmra.mrb[0].mxu0 %v262
        %v7225 = vpop.f32.mrb[0].mxu0
        %v7226 = vadd.f32 %v7185, %v7225
        %v7227 = vpop.f32.mrb[0].mxu0
        %v7228 = vadd.f32 %v7187, %v7227
        %v7229 = vpop.f32.mrb[0].mxu0
        %v7230 = vpop.f32.mrb[0].mxu0
        %7231 = vdwg.mxu0
        %7232 = vmatprep.subr.bf16.mxu0 %v4545
        %7233 = vmatpush1.bf16.msra.mxu0 %v4544
        %7234 = vmatprep.subr.bf16.mxu0 %v4577
        %7235 = vmatpush1.bf16.msra.mxu0 %v4576
        %7236 = vmatprep.subr.bf16.mxu0 %v4609
        %7237 = vmatpush1.bf16.msra.mxu0 %v4608
        %7238 = vmatprep.subr.bf16.mxu0 %v4641
        %7239 = vmatpush1.bf16.msra.mxu0 %v4640
        %7240 = vmatprep.subr.bf16.mxu0 %v4673
        %7241 = vmatpush1.bf16.msra.mxu0 %v4672
        %7242 = vmatprep.subr.bf16.mxu0 %v4705
        %7243 = vmatpush1.bf16.msra.mxu0 %v4704
        %7244 = vmatprep.subr.bf16.mxu0 %v4737
        %7245 = vmatpush1.bf16.msra.mxu0 %v4736
        %7246 = vmatprep.subr.bf16.mxu0 %v4769
        %7247 = vmatpush1.bf16.msra.mxu0 %v4768
        %7248 = vmatprep.subr.bf16.mxu0 %v4801
        %7249 = vmatpush1.bf16.msra.mxu0 %v4800
        %7250 = vmatprep.subr.bf16.mxu0 %v4833
        %7251 = vmatpush1.bf16.msra.mxu0 %v4832
        %7252 = vmatprep.subr.bf16.mxu0 %v4865
        %7253 = vmatpush1.bf16.msra.mxu0 %v4864
        %7254 = vmatprep.subr.bf16.mxu0 %v4897
        %7255 = vmatpush1.bf16.msra.mxu0 %v4896
        %7256 = vmatprep.subr.bf16.mxu0 %v4929
        %7257 = vmatpush1.bf16.msra.mxu0 %v4928
        %7258 = vmatprep.subr.bf16.mxu0 %v4961
        %7259 = vmatpush1.bf16.msra.mxu0 %v4960
        %7260 = vmatprep.subr.bf16.mxu0 %v4993
        %7261 = vmatpush1.bf16.msra.mxu0 %v4992
        %7262 = vmatprep.subr.bf16.mxu0 %v5025
        %7263 = vmatpush1.bf16.msra.mxu0 %v5024
        %7264 = vmatprep.mubr.bf16.mxu0 %v261
        %7265 = vmatmul.mubr.bf16.gmra.mrb[0].mxu0 %v260
        %v7266 = vpop.f32.mrb[0].mxu0
        %v7267 = vadd.f32 %v1363, %v7266
        %v7268 = vpop.f32.mrb[0].mxu0
        %v7269 = vadd.f32 %v1367, %v7268
        %v7270 = vpop.f32.mrb[0].mxu0
        %v7271 = vpop.f32.mrb[0].mxu0
        %7272 = vdwg.mxu0
        %7273 = vmatprep.subr.bf16.mxu0 %v5057
        %7274 = vmatpush1.bf16.msra.mxu0 %v5056
        %7275 = vmatprep.subr.bf16.mxu0 %v5089
        %7276 = vmatpush1.bf16.msra.mxu0 %v5088
        %7277 = vmatprep.subr.bf16.mxu0 %v5121
        %7278 = vmatpush1.bf16.msra.mxu0 %v5120
        %7279 = vmatprep.subr.bf16.mxu0 %v5153
        %7280 = vmatpush1.bf16.msra.mxu0 %v5152
        %7281 = vmatprep.subr.bf16.mxu0 %v5185
        %7282 = vmatpush1.bf16.msra.mxu0 %v5184
        %7283 = vmatprep.subr.bf16.mxu0 %v5217
        %7284 = vmatpush1.bf16.msra.mxu0 %v5216
        %7285 = vmatprep.subr.bf16.mxu0 %v5249
        %7286 = vmatpush1.bf16.msra.mxu0 %v5248
        %7287 = vmatprep.subr.bf16.mxu0 %v5281
        %7288 = vmatpush1.bf16.msra.mxu0 %v5280
        %7289 = vmatprep.subr.bf16.mxu0 %v5313
        %7290 = vmatpush1.bf16.msra.mxu0 %v5312
        %7291 = vmatprep.subr.bf16.mxu0 %v5345
        %7292 = vmatpush1.bf16.msra.mxu0 %v5344
        %7293 = vmatprep.subr.bf16.mxu0 %v5377
        %7294 = vmatpush1.bf16.msra.mxu0 %v5376
        %7295 = vmatprep.subr.bf16.mxu0 %v5409
        %7296 = vmatpush1.bf16.msra.mxu0 %v5408
        %7297 = vmatprep.subr.bf16.mxu0 %v5441
        %7298 = vmatpush1.bf16.msra.mxu0 %v5440
        %7299 = vmatprep.subr.bf16.mxu0 %v5473
        %7300 = vmatpush1.bf16.msra.mxu0 %v5472
        %7301 = vmatprep.subr.bf16.mxu0 %v5505
        %7302 = vmatpush1.bf16.msra.mxu0 %v5504
        %7303 = vmatprep.subr.bf16.mxu0 %v5537
        %7304 = vmatpush1.bf16.msra.mxu0 %v5536
        %7305 = vmatprep.mubr.bf16.mxu0 %v263
        %7306 = vmatmul.mubr.bf16.gmra.mrb[0].mxu0 %v262
        %v7307 = vpop.f32.mrb[0].mxu0
        %v7308 = vadd.f32 %v7267, %v7307
        %v7309 = vpop.f32.mrb[0].mxu0
        %v7310 = vadd.f32 %v7269, %v7309
        %v7311 = vpop.f32.mrb[0].mxu0
        %v7312 = vpop.f32.mrb[0].mxu0
        %7313 = vdwg.mxu0
        %7314 = vmatprep.subr.bf16.mxu0 %v4547
        %7315 = vmatpush1.bf16.msra.mxu0 %v4546
        %7316 = vmatprep.subr.bf16.mxu0 %v4579
        %7317 = vmatpush1.bf16.msra.mxu0 %v4578
        %7318 = vmatprep.subr.bf16.mxu0 %v4611
        %7319 = vmatpush1.bf16.msra.mxu0 %v4610
        %7320 = vmatprep.subr.bf16.mxu0 %v4643
        %7321 = vmatpush1.bf16.msra.mxu0 %v4642
        %7322 = vmatprep.subr.bf16.mxu0 %v4675
        %7323 = vmatpush1.bf16.msra.mxu0 %v4674
        %7324 = vmatprep.subr.bf16.mxu0 %v4707
        %7325 = vmatpush1.bf16.msra.mxu0 %v4706
        %7326 = vmatprep.subr.bf16.mxu0 %v4739
        %7327 = vmatpush1.bf16.msra.mxu0 %v4738
        %7328 = vmatprep.subr.bf16.mxu0 %v4771
        %7329 = vmatpush1.bf16.msra.mxu0 %v4770
        %7330 = vmatprep.subr.bf16.mxu0 %v4803
        %7331 = vmatpush1.bf16.msra.mxu0 %v4802
        %7332 = vmatprep.subr.bf16.mxu0 %v4835
        %7333 = vmatpush1.bf16.msra.mxu0 %v4834
        %7334 = vmatprep.subr.bf16.mxu0 %v4867
        %7335 = vmatpush1.bf16.msra.mxu0 %v4866
        %7336 = vmatprep.subr.bf16.mxu0 %v4899
        %7337 = vmatpush1.bf16.msra.mxu0 %v4898
        %7338 = vmatprep.subr.bf16.mxu0 %v4931
        %7339 = vmatpush1.bf16.msra.mxu0 %v4930
        %7340 = vmatprep.subr.bf16.mxu0 %v4963
        %7341 = vmatpush1.bf16.msra.mxu0 %v4962
        %7342 = vmatprep.subr.bf16.mxu0 %v4995
        %7343 = vmatpush1.bf16.msra.mxu0 %v4994
        %7344 = vmatprep.subr.bf16.mxu0 %v5027
        %7345 = vmatpush1.bf16.msra.mxu0 %v5026
        %7346 = vmatprep.mubr.bf16.mxu0 %v261
        %7347 = vmatmul.mubr.bf16.gmra.mrb[0].mxu0 %v260
        %v7348 = vpop.f32.mrb[0].mxu0
        %v7349 = vadd.f32 %v1371, %v7348
        %v7350 = vpop.f32.mrb[0].mxu0
        %v7351 = vadd.f32 %v1375, %v7350
        %v7352 = vpop.f32.mrb[0].mxu0
        %v7353 = vpop.f32.mrb[0].mxu0
        %7354 = vdwg.mxu0
        %7355 = vmatprep.subr.bf16.mxu0 %v5059
        %7356 = vmatpush1.bf16.msra.mxu0 %v5058
        %7357 = vmatprep.subr.bf16.mxu0 %v5091
        %7358 = vmatpush1.bf16.msra.mxu0 %v5090
        %7359 = vmatprep.subr.bf16.mxu0 %v5123
        %7360 = vmatpush1.bf16.msra.mxu0 %v5122
        %7361 = vmatprep.subr.bf16.mxu0 %v5155
        %7362 = vmatpush1.bf16.msra.mxu0 %v5154
        %7363 = vmatprep.subr.bf16.mxu0 %v5187
        %7364 = vmatpush1.bf16.msra.mxu0 %v5186
        %7365 = vmatprep.subr.bf16.mxu0 %v5219
        %7366 = vmatpush1.bf16.msra.mxu0 %v5218
        %7367 = vmatprep.subr.bf16.mxu0 %v5251
        %7368 = vmatpush1.bf16.msra.mxu0 %v5250
        %7369 = vmatprep.subr.bf16.mxu0 %v5283
        %7370 = vmatpush1.bf16.msra.mxu0 %v5282
        %7371 = vmatprep.subr.bf16.mxu0 %v5315
        %7372 = vmatpush1.bf16.msra.mxu0 %v5314
        %7373 = vmatprep.subr.bf16.mxu0 %v5347
        %7374 = vmatpush1.bf16.msra.mxu0 %v5346
        %7375 = vmatprep.subr.bf16.mxu0 %v5379
        %7376 = vmatpush1.bf16.msra.mxu0 %v5378
        %7377 = vmatprep.subr.bf16.mxu0 %v5411
        %7378 = vmatpush1.bf16.msra.mxu0 %v5410
        %7379 = vmatprep.subr.bf16.mxu0 %v5443
        %7380 = vmatpush1.bf16.msra.mxu0 %v5442
        %7381 = vmatprep.subr.bf16.mxu0 %v5475
        %7382 = vmatpush1.bf16.msra.mxu0 %v5474
        %7383 = vmatprep.subr.bf16.mxu0 %v5507
        %7384 = vmatpush1.bf16.msra.mxu0 %v5506
        %7385 = vmatprep.subr.bf16.mxu0 %v5539
        %7386 = vmatpush1.bf16.msra.mxu0 %v5538
        %7387 = vmatprep.mubr.bf16.mxu0 %v263
        %7388 = vmatmul.mubr.bf16.gmra.mrb[0].mxu0 %v262
        %v7389 = vpop.f32.mrb[0].mxu0
        %v7390 = vadd.f32 %v7349, %v7389
        %v7391 = vpop.f32.mrb[0].mxu0
        %v7392 = vadd.f32 %v7351, %v7391
        %v7393 = vpop.f32.mrb[0].mxu0
        %v7394 = vpop.f32.mrb[0].mxu0
        %7395 = vdwg.mxu0
        %7396 = vmatprep.subr.bf16.mxu0 %v4549
        %7397 = vmatpush1.bf16.msra.mxu0 %v4548
        %7398 = vmatprep.subr.bf16.mxu0 %v4581
        %7399 = vmatpush1.bf16.msra.mxu0 %v4580
        %7400 = vmatprep.subr.bf16.mxu0 %v4613
        %7401 = vmatpush1.bf16.msra.mxu0 %v4612
        %7402 = vmatprep.subr.bf16.mxu0 %v4645
        %7403 = vmatpush1.bf16.msra.mxu0 %v4644
        %7404 = vmatprep.subr.bf16.mxu0 %v4677
        %7405 = vmatpush1.bf16.msra.mxu0 %v4676
        %7406 = vmatprep.subr.bf16.mxu0 %v4709
        %7407 = vmatpush1.bf16.msra.mxu0 %v4708
        %7408 = vmatprep.subr.bf16.mxu0 %v4741
        %7409 = vmatpush1.bf16.msra.mxu0 %v4740
        %7410 = vmatprep.subr.bf16.mxu0 %v4773
        %7411 = vmatpush1.bf16.msra.mxu0 %v4772
        %7412 = vmatprep.subr.bf16.mxu0 %v4805
        %7413 = vmatpush1.bf16.msra.mxu0 %v4804
        %7414 = vmatprep.subr.bf16.mxu0 %v4837
        %7415 = vmatpush1.bf16.msra.mxu0 %v4836
        %7416 = vmatprep.subr.bf16.mxu0 %v4869
        %7417 = vmatpush1.bf16.msra.mxu0 %v4868
        %7418 = vmatprep.subr.bf16.mxu0 %v4901
        %7419 = vmatpush1.bf16.msra.mxu0 %v4900
        %7420 = vmatprep.subr.bf16.mxu0 %v4933
        %7421 = vmatpush1.bf16.msra.mxu0 %v4932
        %7422 = vmatprep.subr.bf16.mxu0 %v4965
        %7423 = vmatpush1.bf16.msra.mxu0 %v4964
        %7424 = vmatprep.subr.bf16.mxu0 %v4997
        %7425 = vmatpush1.bf16.msra.mxu0 %v4996
        %7426 = vmatprep.subr.bf16.mxu0 %v5029
        %7427 = vmatpush1.bf16.msra.mxu0 %v5028
        %7428 = vmatprep.mubr.bf16.mxu0 %v261
        %7429 = vmatmul.mubr.bf16.gmra.mrb[0].mxu0 %v260
        %v7430 = vpop.f32.mrb[0].mxu0
        %v7431 = vadd.f32 %v1379, %v7430
        %v7432 = vpop.f32.mrb[0].mxu0
        %v7433 = vadd.f32 %v1383, %v7432
        %v7434 = vpop.f32.mrb[0].mxu0
        %v7435 = vpop.f32.mrb[0].mxu0
        %7436 = vdwg.mxu0
        %7437 = vmatprep.subr.bf16.mxu0 %v5061
        %7438 = vmatpush1.bf16.msra.mxu0 %v5060
        %7439 = vmatprep.subr.bf16.mxu0 %v5093
        %7440 = vmatpush1.bf16.msra.mxu0 %v5092
        %7441 = vmatprep.subr.bf16.mxu0 %v5125
        %7442 = vmatpush1.bf16.msra.mxu0 %v5124
        %7443 = vmatprep.subr.bf16.mxu0 %v5157
        %7444 = vmatpush1.bf16.msra.mxu0 %v5156
        %7445 = vmatprep.subr.bf16.mxu0 %v5189
        %7446 = vmatpush1.bf16.msra.mxu0 %v5188
        %7447 = vmatprep.subr.bf16.mxu0 %v5221
        %7448 = vmatpush1.bf16.msra.mxu0 %v5220
        %7449 = vmatprep.subr.bf16.mxu0 %v5253
        %7450 = vmatpush1.bf16.msra.mxu0 %v5252
        %7451 = vmatprep.subr.bf16.mxu0 %v5285
        %7452 = vmatpush1.bf16.msra.mxu0 %v5284
        %7453 = vmatprep.subr.bf16.mxu0 %v5317
        %7454 = vmatpush1.bf16.msra.mxu0 %v5316
        %7455 = vmatprep.subr.bf16.mxu0 %v5349
        %7456 = vmatpush1.bf16.msra.mxu0 %v5348
        %7457 = vmatprep.subr.bf16.mxu0 %v5381
        %7458 = vmatpush1.bf16.msra.mxu0 %v5380
        %7459 = vmatprep.subr.bf16.mxu0 %v5413
        %7460 = vmatpush1.bf16.msra.mxu0 %v5412
        %7461 = vmatprep.subr.bf16.mxu0 %v5445
        %7462 = vmatpush1.bf16.msra.mxu0 %v5444
        %7463 = vmatprep.subr.bf16.mxu0 %v5477
        %7464 = vmatpush1.bf16.msra.mxu0 %v5476
        %7465 = vmatprep.subr.bf16.mxu0 %v5509
        %7466 = vmatpush1.bf16.msra.mxu0 %v5508
        %7467 = vmatprep.subr.bf16.mxu0 %v5541
        %7468 = vmatpush1.bf16.msra.mxu0 %v5540
        %7469 = vmatprep.mubr.bf16.mxu0 %v263
        %7470 = vmatmul.mubr.bf16.gmra.mrb[0].mxu0 %v262
        %v7471 = vpop.f32.mrb[0].mxu0
        %v7472 = vadd.f32 %v7431, %v7471
        %v7473 = vpop.f32.mrb[0].mxu0
        %v7474 = vadd.f32 %v7433, %v7473
        %v7475 = vpop.f32.mrb[0].mxu0
        %v7476 = vpop.f32.mrb[0].mxu0
        %7477 = vdwg.mxu0
        %7478 = vmatprep.subr.bf16.mxu0 %v4551
        %7479 = vmatpush1.bf16.msra.mxu0 %v4550
        %7480 = vmatprep.subr.bf16.mxu0 %v4583
        %7481 = vmatpush1.bf16.msra.mxu0 %v4582
        %7482 = vmatprep.subr.bf16.mxu0 %v4615
        %7483 = vmatpush1.bf16.msra.mxu0 %v4614
        %7484 = vmatprep.subr.bf16.mxu0 %v4647
        %7485 = vmatpush1.bf16.msra.mxu0 %v4646
        %7486 = vmatprep.subr.bf16.mxu0 %v4679
        %7487 = vmatpush1.bf16.msra.mxu0 %v4678
        %7488 = vmatprep.subr.bf16.mxu0 %v4711
        %7489 = vmatpush1.bf16.msra.mxu0 %v4710
        %7490 = vmatprep.subr.bf16.mxu0 %v4743
        %7491 = vmatpush1.bf16.msra.mxu0 %v4742
        %7492 = vmatprep.subr.bf16.mxu0 %v4775
        %7493 = vmatpush1.bf16.msra.mxu0 %v4774
        %7494 = vmatprep.subr.bf16.mxu0 %v4807
        %7495 = vmatpush1.bf16.msra.mxu0 %v4806
        %7496 = vmatprep.subr.bf16.mxu0 %v4839
        %7497 = vmatpush1.bf16.msra.mxu0 %v4838
        %7498 = vmatprep.subr.bf16.mxu0 %v4871
        %7499 = vmatpush1.bf16.msra.mxu0 %v4870
        %7500 = vmatprep.subr.bf16.mxu0 %v4903
        %7501 = vmatpush1.bf16.msra.mxu0 %v4902
        %7502 = vmatprep.subr.bf16.mxu0 %v4935
        %7503 = vmatpush1.bf16.msra.mxu0 %v4934
        %7504 = vmatprep.subr.bf16.mxu0 %v4967
        %7505 = vmatpush1.bf16.msra.mxu0 %v4966
        %7506 = vmatprep.subr.bf16.mxu0 %v4999
        %7507 = vmatpush1.bf16.msra.mxu0 %v4998
        %7508 = vmatprep.subr.bf16.mxu0 %v5031
        %7509 = vmatpush1.bf16.msra.mxu0 %v5030
        %7510 = vmatprep.mubr.bf16.mxu0 %v261
        %7511 = vmatmul.mubr.bf16.gmra.mrb[0].mxu0 %v260
        %v7512 = vpop.f32.mrb[0].mxu0
        %v7513 = vadd.f32 %v1387, %v7512
        %v7514 = vpop.f32.mrb[0].mxu0
        %v7515 = vadd.f32 %v1391, %v7514
        %v7516 = vpop.f32.mrb[0].mxu0
        %v7517 = vpop.f32.mrb[0].mxu0
        %7518 = vdwg.mxu0
        %7519 = vmatprep.subr.bf16.mxu0 %v5063
        %7520 = vmatpush1.bf16.msra.mxu0 %v5062
        %7521 = vmatprep.subr.bf16.mxu0 %v5095
        %7522 = vmatpush1.bf16.msra.mxu0 %v5094
        %7523 = vmatprep.subr.bf16.mxu0 %v5127
        %7524 = vmatpush1.bf16.msra.mxu0 %v5126
        %7525 = vmatprep.subr.bf16.mxu0 %v5159
        %7526 = vmatpush1.bf16.msra.mxu0 %v5158
        %7527 = vmatprep.subr.bf16.mxu0 %v5191
        %7528 = vmatpush1.bf16.msra.mxu0 %v5190
        %7529 = vmatprep.subr.bf16.mxu0 %v5223
        %7530 = vmatpush1.bf16.msra.mxu0 %v5222
        %7531 = vmatprep.subr.bf16.mxu0 %v5255
        %7532 = vmatpush1.bf16.msra.mxu0 %v5254
        %7533 = vmatprep.subr.bf16.mxu0 %v5287
        %7534 = vmatpush1.bf16.msra.mxu0 %v5286
        %7535 = vmatprep.subr.bf16.mxu0 %v5319
        %7536 = vmatpush1.bf16.msra.mxu0 %v5318
        %7537 = vmatprep.subr.bf16.mxu0 %v5351
        %7538 = vmatpush1.bf16.msra.mxu0 %v5350
        %7539 = vmatprep.subr.bf16.mxu0 %v5383
        %7540 = vmatpush1.bf16.msra.mxu0 %v5382
        %7541 = vmatprep.subr.bf16.mxu0 %v5415
        %7542 = vmatpush1.bf16.msra.mxu0 %v5414
        %7543 = vmatprep.subr.bf16.mxu0 %v5447
        %7544 = vmatpush1.bf16.msra.mxu0 %v5446
        %7545 = vmatprep.subr.bf16.mxu0 %v5479
        %7546 = vmatpush1.bf16.msra.mxu0 %v5478
        %7547 = vmatprep.subr.bf16.mxu0 %v5511
        %7548 = vmatpush1.bf16.msra.mxu0 %v5510
        %7549 = vmatprep.subr.bf16.mxu0 %v5543
        %7550 = vmatpush1.bf16.msra.mxu0 %v5542
        %7551 = vmatprep.mubr.bf16.mxu0 %v263
        %7552 = vmatmul.mubr.bf16.gmra.mrb[0].mxu0 %v262
        %v7553 = vpop.f32.mrb[0].mxu0
        %v7554 = vadd.f32 %v7513, %v7553
        %v7555 = vpop.f32.mrb[0].mxu0
        %v7556 = vadd.f32 %v7515, %v7555
        %v7557 = vpop.f32.mrb[0].mxu0
        %v7558 = vpop.f32.mrb[0].mxu0
        %7559 = vdwg.mxu0
        %7560 = vmatprep.subr.bf16.mxu0 %v4553
        %7561 = vmatpush1.bf16.msra.mxu0 %v4552
        %7562 = vmatprep.subr.bf16.mxu0 %v4585
        %7563 = vmatpush1.bf16.msra.mxu0 %v4584
        %7564 = vmatprep.subr.bf16.mxu0 %v4617
        %7565 = vmatpush1.bf16.msra.mxu0 %v4616
        %7566 = vmatprep.subr.bf16.mxu0 %v4649
        %7567 = vmatpush1.bf16.msra.mxu0 %v4648
        %7568 = vmatprep.subr.bf16.mxu0 %v4681
        %7569 = vmatpush1.bf16.msra.mxu0 %v4680
        %7570 = vmatprep.subr.bf16.mxu0 %v4713
        %7571 = vmatpush1.bf16.msra.mxu0 %v4712
        %7572 = vmatprep.subr.bf16.mxu0 %v4745
        %7573 = vmatpush1.bf16.msra.mxu0 %v4744
        %7574 = vmatprep.subr.bf16.mxu0 %v4777
        %7575 = vmatpush1.bf16.msra.mxu0 %v4776
        %7576 = vmatprep.subr.bf16.mxu0 %v4809
        %7577 = vmatpush1.bf16.msra.mxu0 %v4808
        %7578 = vmatprep.subr.bf16.mxu0 %v4841
        %7579 = vmatpush1.bf16.msra.mxu0 %v4840
        %7580 = vmatprep.subr.bf16.mxu0 %v4873
        %7581 = vmatpush1.bf16.msra.mxu0 %v4872
        %7582 = vmatprep.subr.bf16.mxu0 %v4905
        %7583 = vmatpush1.bf16.msra.mxu0 %v4904
        %7584 = vmatprep.subr.bf16.mxu0 %v4937
        %7585 = vmatpush1.bf16.msra.mxu0 %v4936
        %7586 = vmatprep.subr.bf16.mxu0 %v4969
        %7587 = vmatpush1.bf16.msra.mxu0 %v4968
        %7588 = vmatprep.subr.bf16.mxu0 %v5001
        %7589 = vmatpush1.bf16.msra.mxu0 %v5000
        %7590 = vmatprep.subr.bf16.mxu0 %v5033
        %7591 = vmatpush1.bf16.msra.mxu0 %v5032
        %7592 = vmatprep.mubr.bf16.mxu0 %v261
        %7593 = vmatmul.mubr.bf16.gmra.mrb[0].mxu0 %v260
        %v7594 = vpop.f32.mrb[0].mxu0
        %v7595 = vadd.f32 %v1395, %v7594
        %v7596 = vpop.f32.mrb[0].mxu0
        %v7597 = vadd.f32 %v1399, %v7596
        %v7598 = vpop.f32.mrb[0].mxu0
        %v7599 = vpop.f32.mrb[0].mxu0
        %7600 = vdwg.mxu0
        %7601 = vmatprep.subr.bf16.mxu0 %v5065
        %7602 = vmatpush1.bf16.msra.mxu0 %v5064
        %7603 = vmatprep.subr.bf16.mxu0 %v5097
        %7604 = vmatpush1.bf16.msra.mxu0 %v5096
        %7605 = vmatprep.subr.bf16.mxu0 %v5129
        %7606 = vmatpush1.bf16.msra.mxu0 %v5128
        %7607 = vmatprep.subr.bf16.mxu0 %v5161
        %7608 = vmatpush1.bf16.msra.mxu0 %v5160
        %7609 = vmatprep.subr.bf16.mxu0 %v5193
        %7610 = vmatpush1.bf16.msra.mxu0 %v5192
        %7611 = vmatprep.subr.bf16.mxu0 %v5225
        %7612 = vmatpush1.bf16.msra.mxu0 %v5224
        %7613 = vmatprep.subr.bf16.mxu0 %v5257
        %7614 = vmatpush1.bf16.msra.mxu0 %v5256
        %7615 = vmatprep.subr.bf16.mxu0 %v5289
        %7616 = vmatpush1.bf16.msra.mxu0 %v5288
        %7617 = vmatprep.subr.bf16.mxu0 %v5321
        %7618 = vmatpush1.bf16.msra.mxu0 %v5320
        %7619 = vmatprep.subr.bf16.mxu0 %v5353
        %7620 = vmatpush1.bf16.msra.mxu0 %v5352
        %7621 = vmatprep.subr.bf16.mxu0 %v5385
        %7622 = vmatpush1.bf16.msra.mxu0 %v5384
        %7623 = vmatprep.subr.bf16.mxu0 %v5417
        %7624 = vmatpush1.bf16.msra.mxu0 %v5416
        %7625 = vmatprep.subr.bf16.mxu0 %v5449
        %7626 = vmatpush1.bf16.msra.mxu0 %v5448
        %7627 = vmatprep.subr.bf16.mxu0 %v5481
        %7628 = vmatpush1.bf16.msra.mxu0 %v5480
        %7629 = vmatprep.subr.bf16.mxu0 %v5513
        %7630 = vmatpush1.bf16.msra.mxu0 %v5512
        %7631 = vmatprep.subr.bf16.mxu0 %v5545
        %7632 = vmatpush1.bf16.msra.mxu0 %v5544
        %7633 = vmatprep.mubr.bf16.mxu0 %v263
        %7634 = vmatmul.mubr.bf16.gmra.mrb[0].mxu0 %v262
        %v7635 = vpop.f32.mrb[0].mxu0
        %v7636 = vadd.f32 %v7595, %v7635
        %v7637 = vpop.f32.mrb[0].mxu0
        %v7638 = vadd.f32 %v7597, %v7637
        %v7639 = vpop.f32.mrb[0].mxu0
        %v7640 = vpop.f32.mrb[0].mxu0
        %7641 = vdwg.mxu0
        %7642 = vmatprep.subr.bf16.mxu0 %v4555
        %7643 = vmatpush1.bf16.msra.mxu0 %v4554
        %7644 = vmatprep.subr.bf16.mxu0 %v4587
        %7645 = vmatpush1.bf16.msra.mxu0 %v4586
        %7646 = vmatprep.subr.bf16.mxu0 %v4619
        %7647 = vmatpush1.bf16.msra.mxu0 %v4618
        %7648 = vmatprep.subr.bf16.mxu0 %v4651
        %7649 = vmatpush1.bf16.msra.mxu0 %v4650
        %7650 = vmatprep.subr.bf16.mxu0 %v4683
        %7651 = vmatpush1.bf16.msra.mxu0 %v4682
        %7652 = vmatprep.subr.bf16.mxu0 %v4715
        %7653 = vmatpush1.bf16.msra.mxu0 %v4714
        %7654 = vmatprep.subr.bf16.mxu0 %v4747
        %7655 = vmatpush1.bf16.msra.mxu0 %v4746
        %7656 = vmatprep.subr.bf16.mxu0 %v4779
        %7657 = vmatpush1.bf16.msra.mxu0 %v4778
        %7658 = vmatprep.subr.bf16.mxu0 %v4811
        %7659 = vmatpush1.bf16.msra.mxu0 %v4810
        %7660 = vmatprep.subr.bf16.mxu0 %v4843
        %7661 = vmatpush1.bf16.msra.mxu0 %v4842
        %7662 = vmatprep.subr.bf16.mxu0 %v4875
        %7663 = vmatpush1.bf16.msra.mxu0 %v4874
        %7664 = vmatprep.subr.bf16.mxu0 %v4907
        %7665 = vmatpush1.bf16.msra.mxu0 %v4906
        %7666 = vmatprep.subr.bf16.mxu0 %v4939
        %7667 = vmatpush1.bf16.msra.mxu0 %v4938
        %7668 = vmatprep.subr.bf16.mxu0 %v4971
        %7669 = vmatpush1.bf16.msra.mxu0 %v4970
        %7670 = vmatprep.subr.bf16.mxu0 %v5003
        %7671 = vmatpush1.bf16.msra.mxu0 %v5002
        %7672 = vmatprep.subr.bf16.mxu0 %v5035
        %7673 = vmatpush1.bf16.msra.mxu0 %v5034
        %7674 = vmatprep.mubr.bf16.mxu0 %v261
        %7675 = vmatmul.mubr.bf16.gmra.mrb[0].mxu0 %v260
        %v7676 = vpop.f32.mrb[0].mxu0
        %v7677 = vadd.f32 %v1403, %v7676
        %v7678 = vpop.f32.mrb[0].mxu0
        %v7679 = vadd.f32 %v1407, %v7678
        %v7680 = vpop.f32.mrb[0].mxu0
        %v7681 = vpop.f32.mrb[0].mxu0
        %7682 = vdwg.mxu0
        %7683 = vmatprep.subr.bf16.mxu0 %v5067
        %7684 = vmatpush1.bf16.msra.mxu0 %v5066
        %7685 = vmatprep.subr.bf16.mxu0 %v5099
        %7686 = vmatpush1.bf16.msra.mxu0 %v5098
        %7687 = vmatprep.subr.bf16.mxu0 %v5131
        %7688 = vmatpush1.bf16.msra.mxu0 %v5130
        %7689 = vmatprep.subr.bf16.mxu0 %v5163
        %7690 = vmatpush1.bf16.msra.mxu0 %v5162
        %7691 = vmatprep.subr.bf16.mxu0 %v5195
        %7692 = vmatpush1.bf16.msra.mxu0 %v5194
        %7693 = vmatprep.subr.bf16.mxu0 %v5227
        %7694 = vmatpush1.bf16.msra.mxu0 %v5226
        %7695 = vmatprep.subr.bf16.mxu0 %v5259
        %7696 = vmatpush1.bf16.msra.mxu0 %v5258
        %7697 = vmatprep.subr.bf16.mxu0 %v5291
        %7698 = vmatpush1.bf16.msra.mxu0 %v5290
        %7699 = vmatprep.subr.bf16.mxu0 %v5323
        %7700 = vmatpush1.bf16.msra.mxu0 %v5322
        %7701 = vmatprep.subr.bf16.mxu0 %v5355
        %7702 = vmatpush1.bf16.msra.mxu0 %v5354
        %7703 = vmatprep.subr.bf16.mxu0 %v5387
        %7704 = vmatpush1.bf16.msra.mxu0 %v5386
        %7705 = vmatprep.subr.bf16.mxu0 %v5419
        %7706 = vmatpush1.bf16.msra.mxu0 %v5418
        %7707 = vmatprep.subr.bf16.mxu0 %v5451
        %7708 = vmatpush1.bf16.msra.mxu0 %v5450
        %7709 = vmatprep.subr.bf16.mxu0 %v5483
        %7710 = vmatpush1.bf16.msra.mxu0 %v5482
        %7711 = vmatprep.subr.bf16.mxu0 %v5515
        %7712 = vmatpush1.bf16.msra.mxu0 %v5514
        %7713 = vmatprep.subr.bf16.mxu0 %v5547
        %7714 = vmatpush1.bf16.msra.mxu0 %v5546
        %7715 = vmatprep.mubr.bf16.mxu0 %v263
        %7716 = vmatmul.mubr.bf16.gmra.mrb[0].mxu0 %v262
        %v7717 = vpop.f32.mrb[0].mxu0
        %v7718 = vadd.f32 %v7677, %v7717
        %v7719 = vpop.f32.mrb[0].mxu0
        %v7720 = vadd.f32 %v7679, %v7719
        %v7721 = vpop.f32.mrb[0].mxu0
        %v7722 = vpop.f32.mrb[0].mxu0
        %7723 = vdwg.mxu0
        %7724 = vmatprep.subr.bf16.mxu0 %v4557
        %7725 = vmatpush1.bf16.msra.mxu0 %v4556
        %7726 = vmatprep.subr.bf16.mxu0 %v4589
        %7727 = vmatpush1.bf16.msra.mxu0 %v4588
        %7728 = vmatprep.subr.bf16.mxu0 %v4621
        %7729 = vmatpush1.bf16.msra.mxu0 %v4620
        %7730 = vmatprep.subr.bf16.mxu0 %v4653
        %7731 = vmatpush1.bf16.msra.mxu0 %v4652
        %7732 = vmatprep.subr.bf16.mxu0 %v4685
        %7733 = vmatpush1.bf16.msra.mxu0 %v4684
        %7734 = vmatprep.subr.bf16.mxu0 %v4717
        %7735 = vmatpush1.bf16.msra.mxu0 %v4716
        %7736 = vmatprep.subr.bf16.mxu0 %v4749
        %7737 = vmatpush1.bf16.msra.mxu0 %v4748
        %7738 = vmatprep.subr.bf16.mxu0 %v4781
        %7739 = vmatpush1.bf16.msra.mxu0 %v4780
        %7740 = vmatprep.subr.bf16.mxu0 %v4813
        %7741 = vmatpush1.bf16.msra.mxu0 %v4812
        %7742 = vmatprep.subr.bf16.mxu0 %v4845
        %7743 = vmatpush1.bf16.msra.mxu0 %v4844
        %7744 = vmatprep.subr.bf16.mxu0 %v4877
        %7745 = vmatpush1.bf16.msra.mxu0 %v4876
        %7746 = vmatprep.subr.bf16.mxu0 %v4909
        %7747 = vmatpush1.bf16.msra.mxu0 %v4908
        %7748 = vmatprep.subr.bf16.mxu0 %v4941
        %7749 = vmatpush1.bf16.msra.mxu0 %v4940
        %7750 = vmatprep.subr.bf16.mxu0 %v4973
        %7751 = vmatpush1.bf16.msra.mxu0 %v4972
        %7752 = vmatprep.subr.bf16.mxu0 %v5005
        %7753 = vmatpush1.bf16.msra.mxu0 %v5004
        %7754 = vmatprep.subr.bf16.mxu0 %v5037
        %7755 = vmatpush1.bf16.msra.mxu0 %v5036
        %7756 = vmatprep.mubr.bf16.mxu0 %v261
        %7757 = vmatmul.mubr.bf16.gmra.mrb[0].mxu0 %v260
        %v7758 = vpop.f32.mrb[0].mxu0
        %v7759 = vadd.f32 %v1411, %v7758
        %v7760 = vpop.f32.mrb[0].mxu0
        %v7761 = vadd.f32 %v1415, %v7760
        %v7762 = vpop.f32.mrb[0].mxu0
        %v7763 = vpop.f32.mrb[0].mxu0
        %7764 = vdwg.mxu0
        %7765 = vmatprep.subr.bf16.mxu0 %v5069
        %7766 = vmatpush1.bf16.msra.mxu0 %v5068
        %7767 = vmatprep.subr.bf16.mxu0 %v5101
        %7768 = vmatpush1.bf16.msra.mxu0 %v5100
        %7769 = vmatprep.subr.bf16.mxu0 %v5133
        %7770 = vmatpush1.bf16.msra.mxu0 %v5132
        %7771 = vmatprep.subr.bf16.mxu0 %v5165
        %7772 = vmatpush1.bf16.msra.mxu0 %v5164
        %7773 = vmatprep.subr.bf16.mxu0 %v5197
        %7774 = vmatpush1.bf16.msra.mxu0 %v5196
        %7775 = vmatprep.subr.bf16.mxu0 %v5229
        %7776 = vmatpush1.bf16.msra.mxu0 %v5228
        %7777 = vmatprep.subr.bf16.mxu0 %v5261
        %7778 = vmatpush1.bf16.msra.mxu0 %v5260
        %7779 = vmatprep.subr.bf16.mxu0 %v5293
        %7780 = vmatpush1.bf16.msra.mxu0 %v5292
        %7781 = vmatprep.subr.bf16.mxu0 %v5325
        %7782 = vmatpush1.bf16.msra.mxu0 %v5324
        %7783 = vmatprep.subr.bf16.mxu0 %v5357
        %7784 = vmatpush1.bf16.msra.mxu0 %v5356
        %7785 = vmatprep.subr.bf16.mxu0 %v5389
        %7786 = vmatpush1.bf16.msra.mxu0 %v5388
        %7787 = vmatprep.subr.bf16.mxu0 %v5421
        %7788 = vmatpush1.bf16.msra.mxu0 %v5420
        %7789 = vmatprep.subr.bf16.mxu0 %v5453
        %7790 = vmatpush1.bf16.msra.mxu0 %v5452
        %7791 = vmatprep.subr.bf16.mxu0 %v5485
        %7792 = vmatpush1.bf16.msra.mxu0 %v5484
        %7793 = vmatprep.subr.bf16.mxu0 %v5517
        %7794 = vmatpush1.bf16.msra.mxu0 %v5516
        %7795 = vmatprep.subr.bf16.mxu0 %v5549
        %7796 = vmatpush1.bf16.msra.mxu0 %v5548
        %7797 = vmatprep.mubr.bf16.mxu0 %v263
        %7798 = vmatmul.mubr.bf16.gmra.mrb[0].mxu0 %v262
        %v7799 = vpop.f32.mrb[0].mxu0
        %v7800 = vadd.f32 %v7759, %v7799
        %v7801 = vpop.f32.mrb[0].mxu0
        %v7802 = vadd.f32 %v7761, %v7801
        %v7803 = vpop.f32.mrb[0].mxu0
        %v7804 = vpop.f32.mrb[0].mxu0
        %7805 = vdwg.mxu0
        %7806 = vmatprep.subr.bf16.mxu0 %v4559
        %7807 = vmatpush1.bf16.msra.mxu0 %v4558
        %7808 = vmatprep.subr.bf16.mxu0 %v4591
        %7809 = vmatpush1.bf16.msra.mxu0 %v4590
        %7810 = vmatprep.subr.bf16.mxu0 %v4623
        %7811 = vmatpush1.bf16.msra.mxu0 %v4622
        %7812 = vmatprep.subr.bf16.mxu0 %v4655
        %7813 = vmatpush1.bf16.msra.mxu0 %v4654
        %7814 = vmatprep.subr.bf16.mxu0 %v4687
        %7815 = vmatpush1.bf16.msra.mxu0 %v4686
        %7816 = vmatprep.subr.bf16.mxu0 %v4719
        %7817 = vmatpush1.bf16.msra.mxu0 %v4718
        %7818 = vmatprep.subr.bf16.mxu0 %v4751
        %7819 = vmatpush1.bf16.msra.mxu0 %v4750
        %7820 = vmatprep.subr.bf16.mxu0 %v4783
        %7821 = vmatpush1.bf16.msra.mxu0 %v4782
        %7822 = vmatprep.subr.bf16.mxu0 %v4815
        %7823 = vmatpush1.bf16.msra.mxu0 %v4814
        %7824 = vmatprep.subr.bf16.mxu0 %v4847
        %7825 = vmatpush1.bf16.msra.mxu0 %v4846
        %7826 = vmatprep.subr.bf16.mxu0 %v4879
        %7827 = vmatpush1.bf16.msra.mxu0 %v4878
        %7828 = vmatprep.subr.bf16.mxu0 %v4911
        %7829 = vmatpush1.bf16.msra.mxu0 %v4910
        %7830 = vmatprep.subr.bf16.mxu0 %v4943
        %7831 = vmatpush1.bf16.msra.mxu0 %v4942
        %7832 = vmatprep.subr.bf16.mxu0 %v4975
        %7833 = vmatpush1.bf16.msra.mxu0 %v4974
        %7834 = vmatprep.subr.bf16.mxu0 %v5007
        %7835 = vmatpush1.bf16.msra.mxu0 %v5006
        %7836 = vmatprep.subr.bf16.mxu0 %v5039
        %7837 = vmatpush1.bf16.msra.mxu0 %v5038
        %7838 = vmatprep.mubr.bf16.mxu0 %v261
        %7839 = vmatmul.mubr.bf16.gmra.mrb[0].mxu0 %v260
        %v7840 = vpop.f32.mrb[0].mxu0
        %v7841 = vadd.f32 %v1419, %v7840
        %v7842 = vpop.f32.mrb[0].mxu0
        %v7843 = vadd.f32 %v1423, %v7842
        %v7844 = vpop.f32.mrb[0].mxu0
        %v7845 = vpop.f32.mrb[0].mxu0
        %7846 = vdwg.mxu0
        %7847 = vmatprep.subr.bf16.mxu0 %v5071
        %7848 = vmatpush1.bf16.msra.mxu0 %v5070
        %7849 = vmatprep.subr.bf16.mxu0 %v5103
        %7850 = vmatpush1.bf16.msra.mxu0 %v5102
        %7851 = vmatprep.subr.bf16.mxu0 %v5135
        %7852 = vmatpush1.bf16.msra.mxu0 %v5134
        %7853 = vmatprep.subr.bf16.mxu0 %v5167
        %7854 = vmatpush1.bf16.msra.mxu0 %v5166
        %7855 = vmatprep.subr.bf16.mxu0 %v5199
        %7856 = vmatpush1.bf16.msra.mxu0 %v5198
        %7857 = vmatprep.subr.bf16.mxu0 %v5231
        %7858 = vmatpush1.bf16.msra.mxu0 %v5230
        %7859 = vmatprep.subr.bf16.mxu0 %v5263
        %7860 = vmatpush1.bf16.msra.mxu0 %v5262
        %7861 = vmatprep.subr.bf16.mxu0 %v5295
        %7862 = vmatpush1.bf16.msra.mxu0 %v5294
        %7863 = vmatprep.subr.bf16.mxu0 %v5327
        %7864 = vmatpush1.bf16.msra.mxu0 %v5326
        %7865 = vmatprep.subr.bf16.mxu0 %v5359
        %7866 = vmatpush1.bf16.msra.mxu0 %v5358
        %7867 = vmatprep.subr.bf16.mxu0 %v5391
        %7868 = vmatpush1.bf16.msra.mxu0 %v5390
        %7869 = vmatprep.subr.bf16.mxu0 %v5423
        %7870 = vmatpush1.bf16.msra.mxu0 %v5422
        %7871 = vmatprep.subr.bf16.mxu0 %v5455
        %7872 = vmatpush1.bf16.msra.mxu0 %v5454
        %7873 = vmatprep.subr.bf16.mxu0 %v5487
        %7874 = vmatpush1.bf16.msra.mxu0 %v5486
        %7875 = vmatprep.subr.bf16.mxu0 %v5519
        %7876 = vmatpush1.bf16.msra.mxu0 %v5518
        %7877 = vmatprep.subr.bf16.mxu0 %v5551
        %7878 = vmatpush1.bf16.msra.mxu0 %v5550
        %7879 = vmatprep.mubr.bf16.mxu0 %v263
        %7880 = vmatmul.mubr.bf16.gmra.mrb[0].mxu0 %v262
        %v7881 = vpop.f32.mrb[0].mxu0
        %v7882 = vadd.f32 %v7841, %v7881
        %v7883 = vpop.f32.mrb[0].mxu0
        %v7884 = vadd.f32 %v7843, %v7883
        %v7885 = vpop.f32.mrb[0].mxu0
        %v7886 = vpop.f32.mrb[0].mxu0
        %7887 = vdwg.mxu0
        %v7920 = vcombine.low %v6652, %v6654
        %v7921 = vcombine.low %v6734, %v6736
        %v7923 = vunpack.c.l.s4 1983009808
        %v7924 = vunpack.c.0.s8 %v7923
        %v7925 = vlaneseq
        %v7926 = vshrl.u32 %v7925, 7
        %v7927 = vsub.s32 %v7924, %v7926
        %v7928 = vrot.slane %v7920, %v7927
        %v7930 = vunpack.c.l.s4 1983009808
        %v7931 = vunpack.c.0.s8 %v7930
        %v7932 = vlaneseq
        %v7933 = vshrl.u32 %v7932, 7
        %v7934 = vsub.s32 %v7931, %v7933
        %v7935 = vrot.slane %v7921, %v7934
        %v7936 = vcombine.low %v7928, %v7935
        %v7937 = vcombine.low %v6816, %v6818
        %v7938 = vcombine.low %v6898, %v6900
        %v7940 = vunpack.c.l.s4 1983009808
        %v7941 = vunpack.c.0.s8 %v7940
        %v7942 = vlaneseq
        %v7943 = vshrl.u32 %v7942, 7
        %v7944 = vsub.s32 %v7941, %v7943
        %v7945 = vrot.slane %v7937, %v7944
        %v7947 = vunpack.c.l.s4 1983009808
        %v7948 = vunpack.c.0.s8 %v7947
        %v7949 = vlaneseq
        %v7950 = vshrl.u32 %v7949, 7
        %v7951 = vsub.s32 %v7948, %v7950
        %v7952 = vrot.slane %v7938, %v7951
        %v7953 = vcombine.low %v7945, %v7952
        %v7954 = vcombine.low %v6980, %v6982
        %v7955 = vcombine.low %v7062, %v7064
        %v7957 = vunpack.c.l.s4 1983009808
        %v7958 = vunpack.c.0.s8 %v7957
        %v7959 = vlaneseq
        %v7960 = vshrl.u32 %v7959, 7
        %v7961 = vsub.s32 %v7958, %v7960
        %v7962 = vrot.slane %v7954, %v7961
        %v7964 = vunpack.c.l.s4 1983009808
        %v7965 = vunpack.c.0.s8 %v7964
        %v7966 = vlaneseq
        %v7967 = vshrl.u32 %v7966, 7
        %v7968 = vsub.s32 %v7965, %v7967
        %v7969 = vrot.slane %v7955, %v7968
        %v7970 = vcombine.low %v7962, %v7969
        %v7971 = vcombine.low %v7144, %v7146
        %v7972 = vcombine.low %v7226, %v7228
        %v7974 = vunpack.c.l.s4 1983009808
        %v7975 = vunpack.c.0.s8 %v7974
        %v7976 = vlaneseq
        %v7977 = vshrl.u32 %v7976, 7
        %v7978 = vsub.s32 %v7975, %v7977
        %v7979 = vrot.slane %v7971, %v7978
        %v7981 = vunpack.c.l.s4 1983009808
        %v7982 = vunpack.c.0.s8 %v7981
        %v7983 = vlaneseq
        %v7984 = vshrl.u32 %v7983, 7
        %v7985 = vsub.s32 %v7982, %v7984
        %v7986 = vrot.slane %v7972, %v7985
        %v7987 = vcombine.low %v7979, %v7986
        %v7988 = vcombine.low %v7308, %v7310
        %v7989 = vcombine.low %v7390, %v7392
        %v7991 = vunpack.c.l.s4 1983009808
        %v7992 = vunpack.c.0.s8 %v7991
        %v7993 = vlaneseq
        %v7994 = vshrl.u32 %v7993, 7
        %v7995 = vsub.s32 %v7992, %v7994
        %v7996 = vrot.slane %v7988, %v7995
        %v7998 = vunpack.c.l.s4 1983009808
        %v7999 = vunpack.c.0.s8 %v7998
        %v8000 = vlaneseq
        %v8001 = vshrl.u32 %v8000, 7
        %v8002 = vsub.s32 %v7999, %v8001
        %v8003 = vrot.slane %v7989, %v8002
        %v8004 = vcombine.low %v7996, %v8003
        %v8005 = vcombine.low %v7472, %v7474
        %v8006 = vcombine.low %v7554, %v7556
        %v8008 = vunpack.c.l.s4 1983009808
        %v8009 = vunpack.c.0.s8 %v8008
        %v8010 = vlaneseq
        %v8011 = vshrl.u32 %v8010, 7
        %v8012 = vsub.s32 %v8009, %v8011
        %v8013 = vrot.slane %v8005, %v8012
        %v8015 = vunpack.c.l.s4 1983009808
        %v8016 = vunpack.c.0.s8 %v8015
        %v8017 = vlaneseq
        %v8018 = vshrl.u32 %v8017, 7
        %v8019 = vsub.s32 %v8016, %v8018
        %v8020 = vrot.slane %v8006, %v8019
        %v8021 = vcombine.low %v8013, %v8020
        %v8022 = vcombine.low %v7636, %v7638
        %v8023 = vcombine.low %v7718, %v7720
        %v8025 = vunpack.c.l.s4 1983009808
        %v8026 = vunpack.c.0.s8 %v8025
        %v8027 = vlaneseq
        %v8028 = vshrl.u32 %v8027, 7
        %v8029 = vsub.s32 %v8026, %v8028
        %v8030 = vrot.slane %v8022, %v8029
        %v8032 = vunpack.c.l.s4 1983009808
        %v8033 = vunpack.c.0.s8 %v8032
        %v8034 = vlaneseq
        %v8035 = vshrl.u32 %v8034, 7
        %v8036 = vsub.s32 %v8033, %v8035
        %v8037 = vrot.slane %v8023, %v8036
        %v8038 = vcombine.low %v8030, %v8037
        %v8039 = vcombine.low %v7800, %v7802
        %v8040 = vcombine.low %v7882, %v7884
        %v8042 = vunpack.c.l.s4 1983009808
        %v8043 = vunpack.c.0.s8 %v8042
        %v8044 = vlaneseq
        %v8045 = vshrl.u32 %v8044, 7
        %v8046 = vsub.s32 %v8043, %v8045
        %v8047 = vrot.slane %v8039, %v8046
        %v8049 = vunpack.c.l.s4 1983009808
        %v8050 = vunpack.c.0.s8 %v8049
        %v8051 = vlaneseq
        %v8052 = vshrl.u32 %v8051, 7
        %v8053 = vsub.s32 %v8050, %v8052
        %v8054 = vrot.slane %v8040, %v8053
        %v8055 = vcombine.low %v8047, %v8054
        %8064 = vst [vmem:[%s236] sm:$0xff] %v7936
        %8065 = vst [vmem:[%s236 + $0x8] sm:$0xff] %v7953
        %8066 = vst [vmem:[%s236 + $0x10] sm:$0xff] %v7970
        %8067 = vst [vmem:[%s236 + $0x18] sm:$0xff] %v7987
        %8068 = vst [vmem:[%s236 + $0x20] sm:$0xff] %v8004
        %8069 = vst [vmem:[%s236 + $0x28] sm:$0xff] %v8021
        %8070 = vst [vmem:[%s236 + $0x30] sm:$0xff] %v8038
        %8071 = vst [vmem:[%s236 + $0x38] sm:$0xff] %v8055
        %s8072 = sand.u32 %s102, 1
        %s8073 = scalar_lea.sflag [#allocation4], %s8072
        %s8074 = sand.u32 %s102, 1
        %s8075 = smul.addr %s8074, 64
        %s8076 = scalar_lea.vmem [#allocation8], %s8075
        // Predicated region
        $region45: #{tpu_custom_call.1} parent=31 // pred_check
          %p8077 = pneg %p112
        $region46: #{tpu_custom_call.1} parent=31 // pred_check_branch
          %8079 = sbr.rel (%p8077) target = $region48
        $region47: #{tpu_custom_call.1} parent=31 // pred_region
          %s8081 = ssub.s32 1024, 1024
          %8082 = vsyncadd %s8073, %s8081
          %s8083 = smul.addr %s21, 32
          %s8084 = smul.addr %s8083, 32
          %s8085 = scalar_lea.hbm %s3, %s8084
          %s8087 = sshll.u32 %s8076, 4
          %s8088 = int_to_ptr.vmem [resolvable:$true] %s8087
          %8090 = dma.vmem_to_hbm [thread:$0]  %s8088, 1024, %s8085, %s8073
        $region48: #{tpu_custom_call.1} parent=31 // pred_fallthru
          _
      $region32: #{tpu_custom_call.1} parent=5 // pred_fallthru
        _
      %p8091 = scmp.le.s32.totalorder 2, %s16
      // Predicated region
      $region49: #{tpu_custom_call.1} parent=5 // pred_check
        %p8092 = pneg %p8091
      $region50: #{tpu_custom_call.1} parent=5 // pred_check_branch
        %8094 = sbr.rel (%p8092) target = $region52
      $region51: #{tpu_custom_call.1} parent=5 // pred_region
        %s8095 = ssub.s32 %s16, 2
        // Predicated region
        $region53: #{tpu_custom_call.1} parent=51 // pred_check
          %p8096 = pneg %p118
        $region54: #{tpu_custom_call.1} parent=51 // pred_check_branch
          %8098 = sbr.rel (%p8096) target = $region56
        $region55: #{tpu_custom_call.1} parent=51 // pred_region
          %s8099 = sand.u32 %s103, 1
          %s8100 = scalar_lea.sflag [#allocation4], %s8099
          %s8101 = sand.u32 %s103, 1
          %s8102 = smul.addr %s8101, 64
          %s8103 = scalar_lea.vmem [#allocation8], %s8102
          %8104 = dma.done %s8100, 1024
        $region56: #{tpu_custom_call.1} parent=51 // pred_fallthru
          _
      $region52: #{tpu_custom_call.1} parent=5 // pred_fallthru
        _
    $region6: #{tpu_custom_call.1} parent=1 // loop_footer
      %s20 = sadd.s32 1, %s16
    $region7: #{tpu_custom_call.1} parent=1 // loop_footer_branch
      %15 = sbr.rel target = $region3
    $region8: #{tpu_custom_call.1} parent=1 // loop_exit
      _
    %8105 = vsyncpa [#allocation3], 1
    %s8106 = scalar_lea.sflag [#allocation3], 1
    %8107 = vsyncpa %s8106, 1
    %8108 = vsyncpa [#allocation6], 1
    %s8109 = scalar_lea.sflag [#allocation6], 1
    %8110 = vsyncpa %s8109, 1
    %8111 = vsyncpa [#allocation4], 1
    %s8112 = scalar_lea.sflag [#allocation4], 1
    %8113 = vsyncpa %s8112, 1

</llo_original>
